<compile_context>
chip_gen: v7x
topology: tpu7x:2x2x1
jax: 0.10.0
libtpu: 0.0.40
codegen_flags: <defaults>
</compile_context>

<pallas_src>
import functools
import math

import numpy as np
import jax
import jax.numpy as jnp
from jax import lax
from jax.experimental import pallas as pl
from jax.experimental.pallas import tpu as pltpu

F32 = jnp.float32
BF16 = jnp.bfloat16
NEG_BIG = -1e30          # masking sentinel -- keep this math in f32 (not bf16)


def _round_up(v, m):
    return ((v + m - 1) // m) * m


def _vmem_limit_bytes():
    """Raise the scoped-VMEM cap well above the default, with per-chip headroom."""
    try:
        cap = int(pltpu.get_tpu_info().vmem_capacity_bytes)
    except Exception:
        cap = 64 * 1024 * 1024
    return max(32 * 1024 * 1024, min(96 * 1024 * 1024, (cap * 3) // 4))


def _head_expand(heads, head_dim):
    m = np.zeros((heads, heads * head_dim), np.float32)
    for h in range(heads):
        m[h, h * head_dim:(h + 1) * head_dim] = 1.0
    return jnp.asarray(m)


# ---------------------------------------------------------------------------
# Pallas kernels
# ---------------------------------------------------------------------------
def _conv_fused_kernel(
        x_ref, src_ref, dst_ref, ea_ref, norm_ref, pemax_ref,
        wall_ref, ball_ref, we_ref, bwl_ref, hexp_ref,
        wt_ref, bt_ref, gamma_ref, beta_ref, mean_ref, var_ref,
        o_ref,
        q_sc, k_sc, v_sc, xwl_sc, acc_sc, den_sc, agg_sc,
        *, heads, head_dim):
    """One CustomTransformerConv + Linear + ReLU + BatchNorm(eval) block.

    Grid axis 0 tiles the (padded) edge dimension (a pure reduction).  The
    node-sized state (attention numerator / denominator, weighted-branch
    accumulator, bf16 q/k/v/xwl projections) lives in VMEM scratch across edge
    tiles.  The softmax max is precomputed per edge in an XLA pre-pass, so no
    online-softmax rescaling happens in the hot loop.  Padded / pooled-away
    edges have all-zero one-hot rows, zero edge_attr and zero norm -> inert.
    """
    hc = heads * head_dim
    t = pl.program_id(0)

    mm = lambda a, b: jnp.dot(a, b, preferred_element_type=F32)
    scat = lambda onehot, vals: lax.dot_general(               # edge-axis scatter
        onehot, vals, (((0,), (0,)), ((), ())), preferred_element_type=F32)

    @pl.when(t == 0)
    def _init():
        # Fused projection of all five node-side linears in one MXU pass:
        #   [ q | k | v | skip | x @ W_weighted_linear ]
        proj = mm(x_ref[...], wall_ref[...]) + ball_ref[...]
        q_sc[...] = proj[:, 0 * hc:1 * hc].astype(BF16)
        k_sc[...] = proj[:, 1 * hc:2 * hc].astype(BF16)
        v_sc[...] = proj[:, 2 * hc:3 * hc].astype(BF16)
        xwl_sc[...] = proj[:, 4 * hc:5 * hc].astype(BF16)
        # Fold skip connection + weighted_linear bias into the accumulator init
        # (removes a [P,HC] scratch buffer and two finalize adds).
        agg_sc[...] = proj[:, 3 * hc:4 * hc] + bwl_ref[...]
        acc_sc[...] = jnp.zeros(acc_sc.shape, F32)
        den_sc[...] = jnp.zeros(den_sc.shape, F32)

    src = src_ref[...]                    # [tE, P] bf16 one-hot (exact 0/1)
    dst = dst_ref[...]                    # [tE, P] bf16 one-hot
    ea = ea_ref[...]                      # [tE, De] f32
    norm = norm_ref[...]                  # [tE, 1]  f32
    pe_max = pemax_ref[...]               # [tE, H]  f32 precomputed softmax max
    hexp = hexp_ref[...]                  # [H, HC]  block-ones head expander

    # ---- weighted branch: scatter-add of norm * (x @ Wwl)[src] onto dst ----
    xj_wl = mm(src, xwl_sc[...])                                    # [tE, HC]
    agg_sc[...] += scat(dst, (norm * xj_wl).astype(BF16))           # [P, HC]

    # ---- TransformerConv branch (precomputed-max softmax) -------------------
    e_f = mm(ea, we_ref[...])                                       # [tE, HC]
    q_i = mm(dst, q_sc[...])                                        # [tE, HC]
    k_j = mm(src, k_sc[...]) + e_f
    v_j = mm(src, v_sc[...]) + e_f

    scale = 1.0 / math.sqrt(float(head_dim))
    a = lax.dot_general(q_i * k_j, hexp, (((1,), (1,)), ((), ())),
                        preferred_element_type=F32) * scale         # [tE, H]
    # lane-dense exp: expand per-head logits to the full HC lanes before exp
    alpha = jnp.exp(mm(a - pe_max, hexp))                           # [tE, HC]
    acc_sc[...] += scat(dst, (v_j * alpha).astype(BF16))            # numerator
    den_sc[...] += scat(dst, alpha.astype(BF16))                    # denominator

    @pl.when(t == pl.num_programs(0) - 1)
    def _finalize():
        out_attn = acc_sc[...] / (den_sc[...] + 1e-20)   # exact (once per node)
        conv = agg_sc[...] + out_attn                               # [P, HC]
        # fused epilogue: Linear -> ReLU -> BatchNorm1d (eval / running stats)
        y = mm(conv, wt_ref[...]) + bt_ref[...]                     # [P, emb]
        y = jnp.maximum(y, 0.0)
        o_ref[...] = ((y - mean_ref[...]) * lax.rsqrt(var_ref[...] + 1e-5)
                      * gamma_ref[...] + beta_ref[...])


def _global_pool_kernel(x_ref, boh_ref, cnt_ref, o_ref, *, num_graphs):
    """cat([global_max_pool, global_mean_pool], dim=1) -> single [G, 2F] store."""
    x = x_ref[...]                                                  # [P, F]
    boh = boh_ref[...]                                              # [P, G]
    mean = lax.dot_general(boh, x, (((0,), (0,)), ((), ())),
                           preferred_element_type=F32) / cnt_ref[...]   # exact
    rows = []
    for g in range(num_graphs):                                     # static G
        sel = boh[:, g:g + 1] > 0.0
        rows.append(jnp.max(jnp.where(sel, x, NEG_BIG), axis=0, keepdims=True))
    mx = jnp.concatenate(rows, axis=0)                              # [G, F]
    o_ref[...] = jnp.concatenate([mx, mean], axis=1)                # one store


# ---------------------------------------------------------------------------
# Edge-static data: built ONCE per pooling epoch and reused by every layer
# ---------------------------------------------------------------------------
def build_edge_pack(row, col, edge_valid, edge_attr, edge_weight, num_nodes,
                    edge_tile):
    E = row.shape[0]
    valid_f = edge_valid.astype(F32)
    deg = jnp.zeros((num_nodes,), F32).at[row].add(valid_f)         # degree(row)
    dinv = jnp.where(deg > 0, lax.rsqrt(deg), 0.0)
    norm = jnp.where(edge_valid, dinv[row] * edge_weight * dinv[col], 0.0)

    # Tile size rounded to 16 (bf16 sublane packing); padded edges are inert.
    t_e = _round_up(min(edge_tile, _round_up(E, 16)), 16)
    e_pad = _round_up(E, t_e)
    pad = e_pad - E

    vb = edge_valid.astype(BF16)[:, None]
    src_oh = jax.nn.one_hot(row, num_nodes, dtype=BF16) * vb        # built in bf16
    dst_oh = jax.nn.one_hot(col, num_nodes, dtype=BF16) * vb
    ea_m = edge_attr.astype(F32) * valid_f[:, None]
    norm_p, ea_p = norm, ea_m
    if pad:
        src_oh = jnp.pad(src_oh, ((0, pad), (0, 0)))
        dst_oh = jnp.pad(dst_oh, ((0, pad), (0, 0)))
        ea_p = jnp.pad(ea_m, ((0, pad), (0, 0)))
        norm_p = jnp.pad(norm, ((0, pad),))
    return dict(src_oh=src_oh, dst_oh=dst_oh, ea_pad=ea_p,
                norm_pad=norm_p.reshape(e_pad, 1),
                row=row, col=col, valid=edge_valid, ea_masked=ea_m,
                t_e=t_e, e_pad=e_pad, n_tiles=e_pad // t_e, pad=pad,
                num_nodes=num_nodes)


# ---------------------------------------------------------------------------
# Layer wrapper
# ---------------------------------------------------------------------------
def conv_transf_bn_block(x, pack, conv_p, lin_p, bn_p, *, heads, head_dim):
    """CustomTransformerConv -> Linear -> ReLU -> BatchNorm1d(eval), fused."""
    P, fin = x.shape
    hc = heads * head_dim
    de = pack['ea_pad'].shape[1]
    emb = lin_p['w'].shape[1]
    t_e, e_pad, n_tiles = pack['t_e'], pack['e_pad'], pack['n_tiles']

    # --- cheap XLA pre-pass: per-destination-node softmax max (per head) ----
    # (replaces the in-kernel online softmax; any tight upper bound works)
    wq, wk = conv_p['w_all'][:, :hc], conv_p['w_all'][:, hc:2 * hc]
    bq, bk = conv_p['b_all'][:, :hc], conv_p['b_all'][:, hc:2 * hc]
    q = x @ wq + bq
    k = x @ wk + bk
    ef = pack['ea_masked'] @ conv_p['we']
    logit = ((q[pack['col']] * (k[pack['row']] + ef))
             .reshape(-1, heads, head_dim).sum(-1)) / math.sqrt(float(head_dim))
    logit = jnp.where(pack['valid'][:, None], logit, NEG_BIG)
    node_max = jnp.full((P, heads), NEG_BIG, F32).at[pack['col']].max(logit)
    pe = jnp.where(pack['valid'][:, None], node_max[pack['col']], 0.0)   # [E, H]
    if pack['pad']:
        pe = jnp.pad(pe, ((0, pack['pad']), (0, 0)))

    hexp = _head_expand(heads, head_dim)
    kernel = functools.partial(_conv_fused_kernel, heads=heads, head_dim=head_dim)

    cost = pl.CostEstimate(
        flops=int(2 * e_pad * P * hc * 7 + 2 * P * fin * 5 * hc
                  + 2 * P * hc * emb),
        transcendentals=int(e_pad * hc),
        bytes_accessed=int(4 * P * fin + 2 * e_pad * P * 2
                           + 4 * e_pad * (de + 1 + heads)
                           + 4 * (fin * 5 * hc + 5 * hc + de * hc + hc
                                  + heads * hc + hc * emb + 6 * emb)
                           + 4 * P * emb))

    grid_spec = pltpu.PrefetchScalarGridSpec(
        num_scalar_prefetch=0,
        grid=(n_tiles,),
        in_specs=[
            pl.BlockSpec((P, fin), lambda t: (0, 0)),        # x (resident)
            pl.BlockSpec((t_e, P), lambda t: (t, 0)),        # src one-hot tile
            pl.BlockSpec((t_e, P), lambda t: (t, 0)),        # dst one-hot tile
            pl.BlockSpec((t_e, de), lambda t: (t, 0)),       # edge_attr tile
            pl.BlockSpec((t_e, 1), lambda t: (t, 0)),        # norm tile
            pl.BlockSpec((t_e, heads), lambda t: (t, 0)),    # precomputed max
            pl.BlockSpec((fin, 5 * hc), lambda t: (0, 0)),   # fused projection W
            pl.BlockSpec((1, 5 * hc), lambda t: (0, 0)),     # fused projection b
            pl.BlockSpec((de, hc), lambda t: (0, 0)),        # lin_edge W
            pl.BlockSpec((1, hc), lambda t: (0, 0)),         # weighted_linear b
            pl.BlockSpec((heads, hc), lambda t: (0, 0)),     # head expander
            pl.BlockSpec((hc, emb), lambda t: (0, 0)),       # transf W
            pl.BlockSpec((1, emb), lambda t: (0, 0)),        # transf b
            pl.BlockSpec((1, emb), lambda t: (0, 0)),        # bn gamma
            pl.BlockSpec((1, emb), lambda t: (0, 0)),        # bn beta
            pl.BlockSpec((1, emb), lambda t: (0, 0)),        # bn running mean
            pl.BlockSpec((1, emb), lambda t: (0, 0)),        # bn running var
        ],
        out_specs=pl.BlockSpec((P, emb), lambda t: (0, 0)),
        scratch_shapes=[
            pltpu.VMEM((P, hc), BF16),       # q   (bf16 MXU operands)
            pltpu.VMEM((P, hc), BF16),       # k
            pltpu.VMEM((P, hc), BF16),       # v
            pltpu.VMEM((P, hc), BF16),       # x @ W_weighted
            pltpu.VMEM((P, hc), F32),        # attention numerator
            pltpu.VMEM((P, hc), F32),        # attention denominator
            pltpu.VMEM((P, hc), F32),        # weighted branch + skip + bias
        ])
    return pl.pallas_call(
        kernel,
        grid_spec=grid_spec,
        out_shape=jax.ShapeDtypeStruct((P, emb), F32),
        cost_estimate=cost,
        compiler_params=pltpu.CompilerParams(
            dimension_semantics=("arbitrary",),       # edge axis is a reduction
            vmem_limit_bytes=_vmem_limit_bytes()),
    )(x, pack['src_oh'], pack['dst_oh'], pack['ea_pad'], pack['norm_pad'], pe,
      conv_p['w_all'], conv_p['b_all'], conv_p['we'], conv_p['bwl'], hexp,
      lin_p['w'], lin_p['b'],
      bn_p['gamma'], bn_p['beta'], bn_p['mean'], bn_p['var'])


# ---------------------------------------------------------------------------
# Pooling (device-side, static shapes; dropped edges are masked, not removed)
# ---------------------------------------------------------------------------
def topk_pool(x, row, col, edge_valid, edge_attr, edge_weight, w_pool, sizes,
              ratio):
    """TopKPooling with static per-graph node counts (nodes grouped per graph)."""
    P = x.shape[0]
    w = w_pool.reshape(-1, 1)
    score = jnp.tanh((x @ w)[:, 0] / jnp.sqrt(jnp.sum(w * w)))      # plain jnp

    perms, new_sizes, off = [], [], 0
    for n in sizes:                                   # static per-graph counts
        kk = int(math.ceil(ratio * n))
        _, idx = lax.top_k(score[off:off + n], kk)    # descending, like torch.topk
        perms.append(off + idx)
        new_sizes.append(kk)
        off += n
    perm = jnp.concatenate(perms)
    p_new = int(sum(new_sizes))

    x_new = x[perm] * score[perm][:, None]

    remap = jnp.full((P,), -1, jnp.int32).at[perm].set(
        jnp.arange(p_new, dtype=jnp.int32))
    r2, c2 = remap[row], remap[col]
    valid_new = edge_valid & (r2 >= 0) & (c2 >= 0)
    row_new = jnp.where(valid_new, r2, 0)
    col_new = jnp.where(valid_new, c2, 0)
    # TODO(synk): reference PyTorch reuses the *unfiltered* edge_weight after
    # pooling (would shape-error); we mask it consistently with edge_index.
    ew_new = jnp.where(valid_new, edge_weight, 0.0)
    ea_new = jnp.where(valid_new[:, None], edge_attr, 0.0)
    return x_new, row_new, col_new, valid_new, ea_new, ew_new, tuple(new_sizes)


def global_pool(x, sizes):
    """cat([gmp, gap], dim=1); graph membership is static (contiguous groups)."""
    P, feat = x.shape
    G = len(sizes)
    batch = np.repeat(np.arange(G), np.asarray(sizes, np.int64))
    boh = jnp.asarray(np.eye(G, dtype=np.float32)[batch])               # [P, G]
    cnt = jnp.asarray(np.asarray(sizes, np.float32).reshape(G, 1))      # [G, 1]
    kernel = functools.partial(_global_pool_kernel, num_graphs=G)
    return pl.pallas_call(
        kernel,
        out_shape=jax.ShapeDtypeStruct((G, 2 * feat), F32),
    )(x, boh, cnt)


# ---------------------------------------------------------------------------
# Parameter initialization (deterministic, synthetic)
# ---------------------------------------------------------------------------
def _init_linear(key, fi, fo, bias=True):
    kw, kb = jax.random.split(key)
    w = jax.random.normal(kw, (fi, fo), F32) / math.sqrt(fi)
    b = (jax.random.normal(kb, (1, fo), F32) * 0.01) if bias else None
    return w, b


def _init_conv(key, fin, emb, heads, edge_dim):
    hc = emb * heads
    keys = jax.random.split(key, 6)
    wq, bq = _init_linear(keys[0], fin, hc)
    wk, bk = _init_linear(keys[1], fin, hc)
    wv, bv = _init_linear(keys[2], fin, hc)
    we, _ = _init_linear(keys[3], edge_dim, hc, bias=False)
    wskip, bskip = _init_linear(keys[4], fin, hc)
    wwl, bwl = _init_linear(keys[5], fin, hc)        # lazy weighted_linear
    # Fused projection weights built ONCE at init (hoisted out of the fwd loop)
    w_all = jnp.concatenate([wq, wk, wv, wskip, wwl], axis=1)        # [fin, 5HC]
    b_all = jnp.concatenate([bq, bk, bv, bskip, jnp.zeros((1, hc), F32)], axis=1)
    return dict(w_all=w_all, b_all=b_all, we=we, bwl=bwl)


def _init_bn(emb):
    return dict(gamma=jnp.ones((1, emb), F32), beta=jnp.zeros((1, emb), F32),
                mean=jnp.zeros((1, emb), F32), var=jnp.ones((1, emb), F32))


def init_graph_encoder(key, in_feats, edge_feats, emb, num_layers, heads):
    keys = jax.random.split(key, 3 + 3 * num_layers)
    params = {
        'conv1': _init_conv(keys[0], in_feats, emb, heads, edge_feats),
        'transf1': dict(zip(('w', 'b'), _init_linear(keys[1], emb * heads, emb))),
        'bn1': _init_bn(emb),
        'conv_layers': [], 'transf_layers': [], 'bn_layers': [], 'pool_layers': [],
    }
    for i in range(num_layers):
        params['conv_layers'].append(
            _init_conv(keys[2 + i], emb, emb, heads, edge_feats))
        params['transf_layers'].append(
            dict(zip(('w', 'b'),
                     _init_linear(keys[2 + num_layers + i], emb * heads, emb))))
        params['bn_layers'].append(_init_bn(emb))
        params['pool_layers'].append(
            jax.random.normal(keys[2 + 2 * num_layers + i], (emb,), F32))
    return params


# ---------------------------------------------------------------------------
# GraphEncoder forward (fully jittable; batch assignment is static via
# graph_sizes, so TopKPooling keeps static shapes and no host syncs occur)
# ---------------------------------------------------------------------------
def graph_encoder_forward(params, x, edge_attr, edge_index, edge_weight, *,
                          graph_sizes, n_heads, embedding_size, num_layers,
                          top_k_every_n, top_k_ratio, edge_tile=512):
    H, C = n_heads, embedding_size
    sizes = tuple(int(s) for s in graph_sizes)
    row, col = edge_index[0], edge_index[1]
    valid = jnp.ones(row.shape, jnp.bool_)

    # One-hots / norm / padding are built once per pooling epoch (hoisted).
    pack = build_edge_pack(row, col, valid, edge_attr, edge_weight,
                           x.shape[0], edge_tile)

    x = conv_transf_bn_block(x, pack, params['conv1'], params['transf1'],
                             params['bn1'], heads=H, head_dim=C)
    global_reps = []
    for i in range(num_layers):
        x = conv_transf_bn_block(x, pack, params['conv_layers'][i],
                                 params['transf_layers'][i],
                                 params['bn_layers'][i],
                                 heads=H, head_dim=C)
        if i % top_k_every_n == 0 or i == num_layers - 1:
            (x, row, col, valid, edge_attr, edge_weight, sizes) = topk_pool(
                x, row, col, valid, edge_attr, edge_weight,
                params['pool_layers'][i], sizes, top_k_ratio)
            if i != num_layers - 1:          # last pooling's edges are unused
                pack = build_edge_pack(row, col, valid, edge_attr, edge_weight,
                                       x.shape[0], edge_tile)
            global_reps.append(global_pool(x, sizes))
    out = global_reps[0]
    for r in global_reps[1:]:
        out = out + r
    return out


# ---------------------------------------------------------------------------
# Demo
# ---------------------------------------------------------------------------
def _build_edges(graph_sizes):
    rows, cols = [], []
    off = 0
    for n in graph_sizes:
        for a in range(n):
            for b in range(n):
                if a != b:
                    rows.append(off + a)
                    cols.append(off + b)
        off += n
    return jnp.asarray([rows, cols], dtype=jnp.int32)


if __name__ == "__main__":
    in_feats, edge_feats, emb, n_heads = 8, 4, 16, 4
    num_layers, top_k_every_n, top_k_ratio = 3, 3, 0.5
    graph_sizes = (6, 6)
    N = sum(graph_sizes)
    edge_index = _build_edges(graph_sizes)      # [2, 60] fully connected per graph
    E = edge_index.shape[1]

    key = jax.random.PRNGKey(0)
    kx, ke, kw, kp = jax.random.split(key, 4)
    x = jax.random.normal(kx, (N, in_feats), F32)
    edge_attr = jax.random.normal(ke, (E, edge_feats), F32)
    edge_weight = jax.random.uniform(kw, (E,), F32, minval=0.5, maxval=1.5)
    # batch assignment: nodes are grouped per graph, provided statically via
    # graph_sizes (replaces the dense batch_index tensor to keep shapes static)

    params = init_graph_encoder(kp, in_feats, edge_feats, emb, num_layers, n_heads)

    base = functools.partial(
        graph_encoder_forward,
        graph_sizes=graph_sizes, n_heads=n_heads, embedding_size=emb,
        num_layers=num_layers, top_k_every_n=top_k_every_n,
        top_k_ratio=top_k_ratio)

    # Production-style call: large default edge tile (single tile at demo size).
    fwd = jax.jit(functools.partial(base, edge_tile=512))
    out = jax.block_until_ready(fwd(params, x, edge_attr, edge_index, edge_weight))

    # Small tile run exercises the multi-tile edge-reduction path (2 grid steps)
    # and must agree with the single-tile run up to f32 accumulation order.
    fwd_small = jax.jit(functools.partial(base, edge_tile=32))
    out_small = jax.block_until_ready(
        fwd_small(params, x, edge_attr, edge_index, edge_weight))

    assert out.shape == (len(graph_sizes), 2 * emb)
    assert bool(jnp.all(jnp.isfinite(out)))
    assert bool(jnp.allclose(out, out_small, rtol=2e-3, atol=2e-3))
    print("KERNEL_OK")
</pallas_src>

<mosaic_0001>
module attributes {stable_mosaic.version = 11 : i64} {
  func.func @_conv_fused_kernel(%arg0: i32, %arg1: memref<12x8xf32, #tpu.memory_space<vmem>>, %arg2: memref<64x12xbf16, #tpu.memory_space<vmem>>, %arg3: memref<64x12xbf16, #tpu.memory_space<vmem>>, %arg4: memref<64x4xf32, #tpu.memory_space<vmem>>, %arg5: memref<64x1xf32, #tpu.memory_space<vmem>>, %arg6: memref<64x4xf32, #tpu.memory_space<vmem>>, %arg7: memref<8x320xf32, #tpu.memory_space<vmem>>, %arg8: memref<1x320xf32, #tpu.memory_space<vmem>>, %arg9: memref<4x64xf32, #tpu.memory_space<vmem>>, %arg10: memref<1x64xf32, #tpu.memory_space<vmem>>, %arg11: memref<4x64xf32, #tpu.memory_space<vmem>>, %arg12: memref<64x16xf32, #tpu.memory_space<vmem>>, %arg13: memref<1x16xf32, #tpu.memory_space<vmem>>, %arg14: memref<1x16xf32, #tpu.memory_space<vmem>>, %arg15: memref<1x16xf32, #tpu.memory_space<vmem>>, %arg16: memref<1x16xf32, #tpu.memory_space<vmem>>, %arg17: memref<1x16xf32, #tpu.memory_space<vmem>>, %arg18: memref<12x16xf32, #tpu.memory_space<vmem>>, %arg19: memref<12x64xbf16, #tpu.memory_space<vmem>>, %arg20: memref<12x64xbf16, #tpu.memory_space<vmem>>, %arg21: memref<12x64xbf16, #tpu.memory_space<vmem>>, %arg22: memref<12x64xbf16, #tpu.memory_space<vmem>>, %arg23: memref<12x64xf32, #tpu.memory_space<vmem>>, %arg24: memref<12x64xf32, #tpu.memory_space<vmem>>, %arg25: memref<12x64xf32, #tpu.memory_space<vmem>>) attributes {dimension_semantics = [#tpu.dimension_semantics<arbitrary>], iteration_bounds = array<i64: 1>, scalar_prefetch = 0 : i64, scratch_operands = 7 : i64, tpu.core_type = #tpu.core_type<tc>, window_params = [{pipeline_mode = #tpu.pipeline_mode<synchronous>, transform_indices = @transform_0, window_bounds = array<i64: 12, 8>}, {transform_indices = @transform_1, window_bounds = array<i64: 64, 12>}, {transform_indices = @transform_2, window_bounds = array<i64: 64, 12>}, {transform_indices = @transform_3, window_bounds = array<i64: 64, 4>}, {transform_indices = @transform_4, window_bounds = array<i64: 64, 1>}, {transform_indices = @transform_5, window_bounds = array<i64: 64, 4>}, {pipeline_mode = #tpu.pipeline_mode<synchronous>, transform_indices = @transform_6, window_bounds = array<i64: 8, 320>}, {pipeline_mode = #tpu.pipeline_mode<synchronous>, transform_indices = @transform_7, window_bounds = array<i64: 1, 320>}, {pipeline_mode = #tpu.pipeline_mode<synchronous>, transform_indices = @transform_8, window_bounds = array<i64: 4, 64>}, {pipeline_mode = #tpu.pipeline_mode<synchronous>, transform_indices = @transform_9, window_bounds = array<i64: 1, 64>}, {pipeline_mode = #tpu.pipeline_mode<synchronous>, transform_indices = @transform_10, window_bounds = array<i64: 4, 64>}, {pipeline_mode = #tpu.pipeline_mode<synchronous>, transform_indices = @transform_11, window_bounds = array<i64: 64, 16>}, {pipeline_mode = #tpu.pipeline_mode<synchronous>, transform_indices = @transform_12, window_bounds = array<i64: 1, 16>}, {pipeline_mode = #tpu.pipeline_mode<synchronous>, transform_indices = @transform_13, window_bounds = array<i64: 1, 16>}, {pipeline_mode = #tpu.pipeline_mode<synchronous>, transform_indices = @transform_14, window_bounds = array<i64: 1, 16>}, {pipeline_mode = #tpu.pipeline_mode<synchronous>, transform_indices = @transform_15, window_bounds = array<i64: 1, 16>}, {pipeline_mode = #tpu.pipeline_mode<synchronous>, transform_indices = @transform_16, window_bounds = array<i64: 1, 16>}, {pipeline_mode = #tpu.pipeline_mode<synchronous>, transform_indices = @transform_17, window_bounds = array<i64: 12, 16>}]} {
    %c0_i32 = arith.constant 0 : i32
    %0 = arith.cmpi eq, %arg0, %c0_i32 : i32
    %1 = arith.extui %0 : i1 to i32
    %c0_i32_0 = arith.constant 0 : i32
    %2 = arith.cmpi ne, %1, %c0_i32_0 : i32
    scf.if %2 {
      %c0_46 = arith.constant 0 : index
      %c0_47 = arith.constant 0 : index
      %49 = vector.load %arg1[%c0_46, %c0_47] : memref<12x8xf32, #tpu.memory_space<vmem>>, vector<12x8xf32>
      %c0_48 = arith.constant 0 : index
      %c0_49 = arith.constant 0 : index
      %50 = vector.load %arg7[%c0_48, %c0_49] : memref<8x320xf32, #tpu.memory_space<vmem>>, vector<8x320xf32>
      %cst_50 = arith.constant dense<0.000000e+00> : vector<12x320xf32>
      %51 = tpu.matmul %49, %50, %cst_50 {dimension_numbers = #tpu.dot_dimension_numbers<[1], [0], [0], [1], [0, 0, 1, 1], [], []>} : vector<12x8xf32>, vector<8x320xf32>, vector<12x320xf32> -> vector<12x320xf32>
      %c0_51 = arith.constant 0 : index
      %c0_52 = arith.constant 0 : index
      %52 = vector.load %arg8[%c0_51, %c0_52] : memref<1x320xf32, #tpu.memory_space<vmem>>, vector<1x320xf32>
      %53 = vector.broadcast %52 : vector<1x320xf32> to vector<12x320xf32>
      %54 = arith.addf %51, %53 : vector<12x320xf32>
      %55 = vector.extract_strided_slice %54 {offsets = [0, 0], sizes = [12, 64], strides = [1, 1]} : vector<12x320xf32> to vector<12x64xf32>
      %56 = arith.truncf %55 : vector<12x64xf32> to vector<12x64xbf16>
      %c0_53 = arith.constant 0 : index
      %c0_54 = arith.constant 0 : index
      %57 = vector.load %arg19[%c0_53, %c0_54] : memref<12x64xbf16, #tpu.memory_space<vmem>>, vector<12x64xbf16>
      tpu.vector_store %arg19[%c0_53, %c0_54], %56 {strides = array<i32>} : memref<12x64xbf16, #tpu.memory_space<vmem>>, vector<12x64xbf16>,
      %58 = vector.extract_strided_slice %54 {offsets = [0, 64], sizes = [12, 64], strides = [1, 1]} : vector<12x320xf32> to vector<12x64xf32>
      %59 = arith.truncf %58 : vector<12x64xf32> to vector<12x64xbf16>
      %c0_55 = arith.constant 0 : index
      %c0_56 = arith.constant 0 : index
      %60 = vector.load %arg20[%c0_55, %c0_56] : memref<12x64xbf16, #tpu.memory_space<vmem>>, vector<12x64xbf16>
      tpu.vector_store %arg20[%c0_55, %c0_56], %59 {strides = array<i32>} : memref<12x64xbf16, #tpu.memory_space<vmem>>, vector<12x64xbf16>,
      %61 = vector.extract_strided_slice %54 {offsets = [0, 128], sizes = [12, 64], strides = [1, 1]} : vector<12x320xf32> to vector<12x64xf32>
      %62 = arith.truncf %61 : vector<12x64xf32> to vector<12x64xbf16>
      %c0_57 = arith.constant 0 : index
      %c0_58 = arith.constant 0 : index
      %63 = vector.load %arg21[%c0_57, %c0_58] : memref<12x64xbf16, #tpu.memory_space<vmem>>, vector<12x64xbf16>
      tpu.vector_store %arg21[%c0_57, %c0_58], %62 {strides = array<i32>} : memref<12x64xbf16, #tpu.memory_space<vmem>>, vector<12x64xbf16>,
      %64 = vector.extract_strided_slice %54 {offsets = [0, 256], sizes = [12, 64], strides = [1, 1]} : vector<12x320xf32> to vector<12x64xf32>
      %65 = arith.truncf %64 : vector<12x64xf32> to vector<12x64xbf16>
      %c0_59 = arith.constant 0 : index
      %c0_60 = arith.constant 0 : index
      %66 = vector.load %arg22[%c0_59, %c0_60] : memref<12x64xbf16, #tpu.memory_space<vmem>>, vector<12x64xbf16>
      tpu.vector_store %arg22[%c0_59, %c0_60], %65 {strides = array<i32>} : memref<12x64xbf16, #tpu.memory_space<vmem>>, vector<12x64xbf16>,
      %67 = vector.extract_strided_slice %54 {offsets = [0, 192], sizes = [12, 64], strides = [1, 1]} : vector<12x320xf32> to vector<12x64xf32>
      %c0_61 = arith.constant 0 : index
      %c0_62 = arith.constant 0 : index
      %68 = vector.load %arg10[%c0_61, %c0_62] : memref<1x64xf32, #tpu.memory_space<vmem>>, vector<1x64xf32>
      %69 = vector.broadcast %68 : vector<1x64xf32> to vector<12x64xf32>
      %70 = arith.addf %67, %69 : vector<12x64xf32>
      %c0_63 = arith.constant 0 : index
      %c0_64 = arith.constant 0 : index
      %71 = vector.load %arg25[%c0_63, %c0_64] : memref<12x64xf32, #tpu.memory_space<vmem>>, vector<12x64xf32>
      tpu.vector_store %arg25[%c0_63, %c0_64], %70 {strides = array<i32>} : memref<12x64xf32, #tpu.memory_space<vmem>>, vector<12x64xf32>,
      %cst_65 = arith.constant 0.000000e+00 : f32
      %72 = vector.broadcast %cst_65 : f32 to vector<12x64xf32>
      %c0_66 = arith.constant 0 : index
      %c0_67 = arith.constant 0 : index
      %73 = vector.load %arg23[%c0_66, %c0_67] : memref<12x64xf32, #tpu.memory_space<vmem>>, vector<12x64xf32>
      tpu.vector_store %arg23[%c0_66, %c0_67], %72 {strides = array<i32>} : memref<12x64xf32, #tpu.memory_space<vmem>>, vector<12x64xf32>,
      %cst_68 = arith.constant 0.000000e+00 : f32
      %74 = vector.broadcast %cst_68 : f32 to vector<12x64xf32>
      %c0_69 = arith.constant 0 : index
      %c0_70 = arith.constant 0 : index
      %75 = vector.load %arg24[%c0_69, %c0_70] : memref<12x64xf32, #tpu.memory_space<vmem>>, vector<12x64xf32>
      tpu.vector_store %arg24[%c0_69, %c0_70], %74 {strides = array<i32>} : memref<12x64xf32, #tpu.memory_space<vmem>>, vector<12x64xf32>,
    } else {
    }
    %c0 = arith.constant 0 : index
    %c0_1 = arith.constant 0 : index
    %3 = vector.load %arg2[%c0, %c0_1] : memref<64x12xbf16, #tpu.memory_space<vmem>>, vector<64x12xbf16>
    %c0_2 = arith.constant 0 : index
    %c0_3 = arith.constant 0 : index
    %4 = vector.load %arg3[%c0_2, %c0_3] : memref<64x12xbf16, #tpu.memory_space<vmem>>, vector<64x12xbf16>
    %c0_4 = arith.constant 0 : index
    %c0_5 = arith.constant 0 : index
    %5 = vector.load %arg4[%c0_4, %c0_5] : memref<64x4xf32, #tpu.memory_space<vmem>>, vector<64x4xf32>
    %c0_6 = arith.constant 0 : index
    %c0_7 = arith.constant 0 : index
    %6 = vector.load %arg5[%c0_6, %c0_7] : memref<64x1xf32, #tpu.memory_space<vmem>>, vector<64x1xf32>
    %c0_8 = arith.constant 0 : index
    %c0_9 = arith.constant 0 : index
    %7 = vector.load %arg6[%c0_8, %c0_9] : memref<64x4xf32, #tpu.memory_space<vmem>>, vector<64x4xf32>
    %c0_10 = arith.constant 0 : index
    %c0_11 = arith.constant 0 : index
    %8 = vector.load %arg11[%c0_10, %c0_11] : memref<4x64xf32, #tpu.memory_space<vmem>>, vector<4x64xf32>
    %c0_12 = arith.constant 0 : index
    %c0_13 = arith.constant 0 : index
    %9 = vector.load %arg22[%c0_12, %c0_13] : memref<12x64xbf16, #tpu.memory_space<vmem>>, vector<12x64xbf16>
    %cst = arith.constant dense<0.000000e+00> : vector<64x64xf32>
    %10 = tpu.matmul %3, %9, %cst {dimension_numbers = #tpu.dot_dimension_numbers<[1], [0], [0], [1], [0, 0, 1, 1], [], []>} : vector<64x12xbf16>, vector<12x64xbf16>, vector<64x64xf32> -> vector<64x64xf32>
    %c0_14 = arith.constant 0 : index
    %c0_15 = arith.constant 0 : index
    %11 = vector.load %arg25[%c0_14, %c0_15] : memref<12x64xf32, #tpu.memory_space<vmem>>, vector<12x64xf32>
    %12 = vector.broadcast %6 : vector<64x1xf32> to vector<64x64xf32>
    %13 = arith.mulf %12, %10 : vector<64x64xf32>
    %14 = arith.truncf %13 : vector<64x64xf32> to vector<64x64xbf16>
    %cst_16 = arith.constant dense<0.000000e+00> : vector<12x64xf32>
    %15 = tpu.matmul %4, %14, %cst_16 {dimension_numbers = #tpu.dot_dimension_numbers<[0], [0], [1], [1], [0, 1, 1, 1], [], []>} : vector<64x12xbf16>, vector<64x64xbf16>, vector<12x64xf32> -> vector<12x64xf32>
    %16 = arith.addf %11, %15 : vector<12x64xf32>
    %c0_17 = arith.constant 0 : index
    %c0_18 = arith.constant 0 : index
    %17 = vector.load %arg25[%c0_17, %c0_18] : memref<12x64xf32, #tpu.memory_space<vmem>>, vector<12x64xf32>
    tpu.vector_store %arg25[%c0_17, %c0_18], %16 {strides = array<i32>} : memref<12x64xf32, #tpu.memory_space<vmem>>, vector<12x64xf32>,
    %c0_19 = arith.constant 0 : index
    %c0_20 = arith.constant 0 : index
    %18 = vector.load %arg9[%c0_19, %c0_20] : memref<4x64xf32, #tpu.memory_space<vmem>>, vector<4x64xf32>
    %cst_21 = arith.constant dense<0.000000e+00> : vector<64x64xf32>
    %19 = tpu.matmul %5, %18, %cst_21 {dimension_numbers = #tpu.dot_dimension_numbers<[1], [0], [0], [1], [0, 0, 1, 1], [], []>} : vector<64x4xf32>, vector<4x64xf32>, vector<64x64xf32> -> vector<64x64xf32>
    %c0_22 = arith.constant 0 : index
    %c0_23 = arith.constant 0 : index
    %20 = vector.load %arg19[%c0_22, %c0_23] : memref<12x64xbf16, #tpu.memory_space<vmem>>, vector<12x64xbf16>
    %cst_24 = arith.constant dense<0.000000e+00> : vector<64x64xf32>
    %21 = tpu.matmul %4, %20, %cst_24 {dimension_numbers = #tpu.dot_dimension_numbers<[1], [0], [0], [1], [0, 0, 1, 1], [], []>} : vector<64x12xbf16>, vector<12x64xbf16>, vector<64x64xf32> -> vector<64x64xf32>
    %c0_25 = arith.constant 0 : index
    %c0_26 = arith.constant 0 : index
    %22 = vector.load %arg20[%c0_25, %c0_26] : memref<12x64xbf16, #tpu.memory_space<vmem>>, vector<12x64xbf16>
    %cst_27 = arith.constant dense<0.000000e+00> : vector<64x64xf32>
    %23 = tpu.matmul %3, %22, %cst_27 {dimension_numbers = #tpu.dot_dimension_numbers<[1], [0], [0], [1], [0, 0, 1, 1], [], []>} : vector<64x12xbf16>, vector<12x64xbf16>, vector<64x64xf32> -> vector<64x64xf32>
    %24 = arith.addf %23, %19 : vector<64x64xf32>
    %c0_28 = arith.constant 0 : index
    %c0_29 = arith.constant 0 : index
    %25 = vector.load %arg21[%c0_28, %c0_29] : memref<12x64xbf16, #tpu.memory_space<vmem>>, vector<12x64xbf16>
    %cst_30 = arith.constant dense<0.000000e+00> : vector<64x64xf32>
    %26 = tpu.matmul %3, %25, %cst_30 {dimension_numbers = #tpu.dot_dimension_numbers<[1], [0], [0], [1], [0, 0, 1, 1], [], []>} : vector<64x12xbf16>, vector<12x64xbf16>, vector<64x64xf32> -> vector<64x64xf32>
    %27 = arith.addf %26, %19 : vector<64x64xf32>
    %28 = arith.mulf %21, %24 : vector<64x64xf32>
    %cst_31 = arith.constant dense<0.000000e+00> : vector<64x4xf32>
    %29 = tpu.matmul %28, %8, %cst_31 {dimension_numbers = #tpu.dot_dimension_numbers<[1], [1], [0], [0], [0, 0, 1, 0], [], []>} : vector<64x64xf32>, vector<4x64xf32>, vector<64x4xf32> -> vector<64x4xf32>
    %cst_32 = arith.constant 2.500000e-01 : f32
    %30 = vector.broadcast %cst_32 : f32 to vector<64x4xf32>
    %31 = arith.mulf %29, %30 : vector<64x4xf32>
    %32 = arith.subf %31, %7 : vector<64x4xf32>
    %cst_33 = arith.constant dense<0.000000e+00> : vector<64x64xf32>
    %33 = tpu.matmul %32, %8, %cst_33 {dimension_numbers = #tpu.dot_dimension_numbers<[1], [0], [0], [1], [0, 0, 1, 1], [], []>} : vector<64x4xf32>, vector<4x64xf32>, vector<64x64xf32> -> vector<64x64xf32>
    %34 = math.exp %33 : vector<64x64xf32>
    %c0_34 = arith.constant 0 : index
    %c0_35 = arith.constant 0 : index
    %35 = vector.load %arg23[%c0_34, %c0_35] : memref<12x64xf32, #tpu.memory_space<vmem>>, vector<12x64xf32>
    %36 = arith.mulf %27, %34 : vector<64x64xf32>
    %37 = arith.truncf %36 : vector<64x64xf32> to vector<64x64xbf16>
    %cst_36 = arith.constant dense<0.000000e+00> : vector<12x64xf32>
    %38 = tpu.matmul %4, %37, %cst_36 {dimension_numbers = #tpu.dot_dimension_numbers<[0], [0], [1], [1], [0, 1, 1, 1], [], []>} : vector<64x12xbf16>, vector<64x64xbf16>, vector<12x64xf32> -> vector<12x64xf32>
    %39 = arith.addf %35, %38 : vector<12x64xf32>
    %c0_37 = arith.constant 0 : index
    %c0_38 = arith.constant 0 : index
    %40 = vector.load %arg23[%c0_37, %c0_38] : memref<12x64xf32, #tpu.memory_space<vmem>>, vector<12x64xf32>
    tpu.vector_store %arg23[%c0_37, %c0_38], %39 {strides = array<i32>} : memref<12x64xf32, #tpu.memory_space<vmem>>, vector<12x64xf32>,
    %c0_39 = arith.constant 0 : index
    %c0_40 = arith.constant 0 : index
    %41 = vector.load %arg24[%c0_39, %c0_40] : memref<12x64xf32, #tpu.memory_space<vmem>>, vector<12x64xf32>
    %42 = arith.truncf %34 : vector<64x64xf32> to vector<64x64xbf16>
    %cst_41 = arith.constant dense<0.000000e+00> : vector<12x64xf32>
    %43 = tpu.matmul %4, %42, %cst_41 {dimension_numbers = #tpu.dot_dimension_numbers<[0], [0], [1], [1], [0, 1, 1, 1], [], []>} : vector<64x12xbf16>, vector<64x64xbf16>, vector<12x64xf32> -> vector<12x64xf32>
    %44 = arith.addf %41, %43 : vector<12x64xf32>
    %c0_42 = arith.constant 0 : index
    %c0_43 = arith.constant 0 : index
    %45 = vector.load %arg24[%c0_42, %c0_43] : memref<12x64xf32, #tpu.memory_space<vmem>>, vector<12x64xf32>
    tpu.vector_store %arg24[%c0_42, %c0_43], %44 {strides = array<i32>} : memref<12x64xf32, #tpu.memory_space<vmem>>, vector<12x64xf32>,
    %c0_i32_44 = arith.constant 0 : i32
    %46 = arith.cmpi eq, %arg0, %c0_i32_44 : i32
    %47 = arith.extui %46 : i1 to i32
    %c0_i32_45 = arith.constant 0 : i32
    %48 = arith.cmpi ne, %47, %c0_i32_45 : i32
    scf.if %48 {
      %c0_46 = arith.constant 0 : index
      %c0_47 = arith.constant 0 : index
      %49 = vector.load %arg23[%c0_46, %c0_47] : memref<12x64xf32, #tpu.memory_space<vmem>>, vector<12x64xf32>
      %c0_48 = arith.constant 0 : index
      %c0_49 = arith.constant 0 : index
      %50 = vector.load %arg24[%c0_48, %c0_49] : memref<12x64xf32, #tpu.memory_space<vmem>>, vector<12x64xf32>
      %cst_50 = arith.constant 9.99999968E-21 : f32
      %51 = vector.broadcast %cst_50 : f32 to vector<12x64xf32>
      %52 = arith.addf %50, %51 : vector<12x64xf32>
      %53 = arith.divf %49, %52 : vector<12x64xf32>
      %c0_51 = arith.constant 0 : index
      %c0_52 = arith.constant 0 : index
      %54 = vector.load %arg25[%c0_51, %c0_52] : memref<12x64xf32, #tpu.memory_space<vmem>>, vector<12x64xf32>
      %55 = arith.addf %54, %53 : vector<12x64xf32>
      %c0_53 = arith.constant 0 : index
      %c0_54 = arith.constant 0 : index
      %56 = vector.load %arg12[%c0_53, %c0_54] : memref<64x16xf32, #tpu.memory_space<vmem>>, vector<64x16xf32>
      %cst_55 = arith.constant dense<0.000000e+00> : vector<12x16xf32>
      %57 = tpu.matmul %55, %56, %cst_55 {dimension_numbers = #tpu.dot_dimension_numbers<[1], [0], [0], [1], [0, 0, 1, 1], [], []>} : vector<12x64xf32>, vector<64x16xf32>, vector<12x16xf32> -> vector<12x16xf32>
      %c0_56 = arith.constant 0 : index
      %c0_57 = arith.constant 0 : index
      %58 = vector.load %arg13[%c0_56, %c0_57] : memref<1x16xf32, #tpu.memory_space<vmem>>, vector<1x16xf32>
      %59 = vector.broadcast %58 : vector<1x16xf32> to vector<12x16xf32>
      %60 = arith.addf %57, %59 : vector<12x16xf32>
      %cst_58 = arith.constant 0.000000e+00 : f32
      %61 = vector.broadcast %cst_58 : f32 to vector<12x16xf32>
      %62 = arith.maximumf %60, %61 : vector<12x16xf32>
      %c0_59 = arith.constant 0 : index
      %c0_60 = arith.constant 0 : index
      %63 = vector.load %arg16[%c0_59, %c0_60] : memref<1x16xf32, #tpu.memory_space<vmem>>, vector<1x16xf32>
      %64 = vector.broadcast %63 : vector<1x16xf32> to vector<12x16xf32>
      %65 = arith.subf %62, %64 : vector<12x16xf32>
      %c0_61 = arith.constant 0 : index
      %c0_62 = arith.constant 0 : index
      %66 = vector.load %arg17[%c0_61, %c0_62] : memref<1x16xf32, #tpu.memory_space<vmem>>, vector<1x16xf32>
      %cst_63 = arith.constant 9.99999974E-6 : f32
      %67 = vector.broadcast %cst_63 : f32 to vector<1x16xf32>
      %68 = arith.addf %66, %67 : vector<1x16xf32>
      %69 = math.rsqrt %68 : vector<1x16xf32>
      %70 = vector.broadcast %69 : vector<1x16xf32> to vector<12x16xf32>
      %71 = arith.mulf %65, %70 : vector<12x16xf32>
      %c0_64 = arith.constant 0 : index
      %c0_65 = arith.constant 0 : index
      %72 = vector.load %arg14[%c0_64, %c0_65] : memref<1x16xf32, #tpu.memory_space<vmem>>, vector<1x16xf32>
      %73 = vector.broadcast %72 : vector<1x16xf32> to vector<12x16xf32>
      %74 = arith.mulf %71, %73 : vector<12x16xf32>
      %c0_66 = arith.constant 0 : index
      %c0_67 = arith.constant 0 : index
      %75 = vector.load %arg15[%c0_66, %c0_67] : memref<1x16xf32, #tpu.memory_space<vmem>>, vector<1x16xf32>
      %76 = vector.broadcast %75 : vector<1x16xf32> to vector<12x16xf32>
      %77 = arith.addf %74, %76 : vector<12x16xf32>
      %c0_68 = arith.constant 0 : index
      %c0_69 = arith.constant 0 : index
      %78 = vector.load %arg18[%c0_68, %c0_69] : memref<12x16xf32, #tpu.memory_space<vmem>>, vector<12x16xf32>
      tpu.vector_store %arg18[%c0_68, %c0_69], %77 {strides = array<i32>} : memref<12x16xf32, #tpu.memory_space<vmem>>, vector<12x16xf32>,
    } else {
    }
    return
  }
  func.func @transform_0(%arg0: i32) -> (i32, i32) {
    %c0_i32 = arith.constant 0 : i32
    %c0_i32_0 = arith.constant 0 : i32
    %c0_i32_1 = arith.constant 0 : i32
    return %c0_i32, %c0_i32_0 : i32, i32
  }
  func.func @transform_1(%arg0: i32) -> (i32, i32) {
    %c0_i32 = arith.constant 0 : i32
    %c0_i32_0 = arith.constant 0 : i32
    return %arg0, %c0_i32 : i32, i32
  }
  func.func @transform_2(%arg0: i32) -> (i32, i32) {
    %c0_i32 = arith.constant 0 : i32
    %c0_i32_0 = arith.constant 0 : i32
    return %arg0, %c0_i32 : i32, i32
  }
  func.func @transform_3(%arg0: i32) -> (i32, i32) {
    %c0_i32 = arith.constant 0 : i32
    %c0_i32_0 = arith.constant 0 : i32
    return %arg0, %c0_i32 : i32, i32
  }
  func.func @transform_4(%arg0: i32) -> (i32, i32) {
    %c0_i32 = arith.constant 0 : i32
    %c0_i32_0 = arith.constant 0 : i32
    return %arg0, %c0_i32 : i32, i32
  }
  func.func @transform_5(%arg0: i32) -> (i32, i32) {
    %c0_i32 = arith.constant 0 : i32
    %c0_i32_0 = arith.constant 0 : i32
    return %arg0, %c0_i32 : i32, i32
  }
  func.func @transform_6(%arg0: i32) -> (i32, i32) {
    %c0_i32 = arith.constant 0 : i32
    %c0_i32_0 = arith.constant 0 : i32
    %c0_i32_1 = arith.constant 0 : i32
    return %c0_i32, %c0_i32_0 : i32, i32
  }
  func.func @transform_7(%arg0: i32) -> (i32, i32) {
    %c0_i32 = arith.constant 0 : i32
    %c0_i32_0 = arith.constant 0 : i32
    %c0_i32_1 = arith.constant 0 : i32
    return %c0_i32, %c0_i32_0 : i32, i32
  }
  func.func @transform_8(%arg0: i32) -> (i32, i32) {
    %c0_i32 = arith.constant 0 : i32
    %c0_i32_0 = arith.constant 0 : i32
    %c0_i32_1 = arith.constant 0 : i32
    return %c0_i32, %c0_i32_0 : i32, i32
  }
  func.func @transform_9(%arg0: i32) -> (i32, i32) {
    %c0_i32 = arith.constant 0 : i32
    %c0_i32_0 = arith.constant 0 : i32
    %c0_i32_1 = arith.constant 0 : i32
    return %c0_i32, %c0_i32_0 : i32, i32
  }
  func.func @transform_10(%arg0: i32) -> (i32, i32) {
    %c0_i32 = arith.constant 0 : i32
    %c0_i32_0 = arith.constant 0 : i32
    %c0_i32_1 = arith.constant 0 : i32
    return %c0_i32, %c0_i32_0 : i32, i32
  }
  func.func @transform_11(%arg0: i32) -> (i32, i32) {
    %c0_i32 = arith.constant 0 : i32
    %c0_i32_0 = arith.constant 0 : i32
    %c0_i32_1 = arith.constant 0 : i32
    return %c0_i32, %c0_i32_0 : i32, i32
  }
  func.func @transform_12(%arg0: i32) -> (i32, i32) {
    %c0_i32 = arith.constant 0 : i32
    %c0_i32_0 = arith.constant 0 : i32
    %c0_i32_1 = arith.constant 0 : i32
    return %c0_i32, %c0_i32_0 : i32, i32
  }
  func.func @transform_13(%arg0: i32) -> (i32, i32) {
    %c0_i32 = arith.constant 0 : i32
    %c0_i32_0 = arith.constant 0 : i32
    %c0_i32_1 = arith.constant 0 : i32
    return %c0_i32, %c0_i32_0 : i32, i32
  }
  func.func @transform_14(%arg0: i32) -> (i32, i32) {
    %c0_i32 = arith.constant 0 : i32
    %c0_i32_0 = arith.constant 0 : i32
    %c0_i32_1 = arith.constant 0 : i32
    return %c0_i32, %c0_i32_0 : i32, i32
  }
  func.func @transform_15(%arg0: i32) -> (i32, i32) {
    %c0_i32 = arith.constant 0 : i32
    %c0_i32_0 = arith.constant 0 : i32
    %c0_i32_1 = arith.constant 0 : i32
    return %c0_i32, %c0_i32_0 : i32, i32
  }
  func.func @transform_16(%arg0: i32) -> (i32, i32) {
    %c0_i32 = arith.constant 0 : i32
    %c0_i32_0 = arith.constant 0 : i32
    %c0_i32_1 = arith.constant 0 : i32
    return %c0_i32, %c0_i32_0 : i32, i32
  }
  func.func @transform_17(%arg0: i32) -> (i32, i32) {
    %c0_i32 = arith.constant 0 : i32
    %c0_i32_0 = arith.constant 0 : i32
    %c0_i32_1 = arith.constant 0 : i32
    return %c0_i32, %c0_i32_0 : i32, i32
  }
}

module attributes {stable_mosaic.version = 11 : i64} {
  func.func @_conv_fused_kernel(%arg0: i32, %arg1: memref<12x16xf32, #tpu.memory_space<vmem>>, %arg2: memref<64x12xbf16, #tpu.memory_space<vmem>>, %arg3: memref<64x12xbf16, #tpu.memory_space<vmem>>, %arg4: memref<64x4xf32, #tpu.memory_space<vmem>>, %arg5: memref<64x1xf32, #tpu.memory_space<vmem>>, %arg6: memref<64x4xf32, #tpu.memory_space<vmem>>, %arg7: memref<16x320xf32, #tpu.memory_space<vmem>>, %arg8: memref<1x320xf32, #tpu.memory_space<vmem>>, %arg9: memref<4x64xf32, #tpu.memory_space<vmem>>, %arg10: memref<1x64xf32, #tpu.memory_space<vmem>>, %arg11: memref<4x64xf32, #tpu.memory_space<vmem>>, %arg12: memref<64x16xf32, #tpu.memory_space<vmem>>, %arg13: memref<1x16xf32, #tpu.memory_space<vmem>>, %arg14: memref<1x16xf32, #tpu.memory_space<vmem>>, %arg15: memref<1x16xf32, #tpu.memory_space<vmem>>, %arg16: memref<1x16xf32, #tpu.memory_space<vmem>>, %arg17: memref<1x16xf32, #tpu.memory_space<vmem>>, %arg18: memref<12x16xf32, #tpu.memory_space<vmem>>, %arg19: memref<12x64xbf16, #tpu.memory_space<vmem>>, %arg20: memref<12x64xbf16, #tpu.memory_space<vmem>>, %arg21: memref<12x64xbf16, #tpu.memory_space<vmem>>, %arg22: memref<12x64xbf16, #tpu.memory_space<vmem>>, %arg23: memref<12x64xf32, #tpu.memory_space<vmem>>, %arg24: memref<12x64xf32, #tpu.memory_space<vmem>>, %arg25: memref<12x64xf32, #tpu.memory_space<vmem>>) attributes {dimension_semantics = [#tpu.dimension_semantics<arbitrary>], iteration_bounds = array<i64: 1>, scalar_prefetch = 0 : i64, scratch_operands = 7 : i64, tpu.core_type = #tpu.core_type<tc>, window_params = [{pipeline_mode = #tpu.pipeline_mode<synchronous>, transform_indices = @transform_0, window_bounds = array<i64: 12, 16>}, {transform_indices = @transform_1, window_bounds = array<i64: 64, 12>}, {transform_indices = @transform_2, window_bounds = array<i64: 64, 12>}, {transform_indices = @transform_3, window_bounds = array<i64: 64, 4>}, {transform_indices = @transform_4, window_bounds = array<i64: 64, 1>}, {transform_indices = @transform_5, window_bounds = array<i64: 64, 4>}, {pipeline_mode = #tpu.pipeline_mode<synchronous>, transform_indices = @transform_6, window_bounds = array<i64: 16, 320>}, {pipeline_mode = #tpu.pipeline_mode<synchronous>, transform_indices = @transform_7, window_bounds = array<i64: 1, 320>}, {pipeline_mode = #tpu.pipeline_mode<synchronous>, transform_indices = @transform_8, window_bounds = array<i64: 4, 64>}, {pipeline_mode = #tpu.pipeline_mode<synchronous>, transform_indices = @transform_9, window_bounds = array<i64: 1, 64>}, {pipeline_mode = #tpu.pipeline_mode<synchronous>, transform_indices = @transform_10, window_bounds = array<i64: 4, 64>}, {pipeline_mode = #tpu.pipeline_mode<synchronous>, transform_indices = @transform_11, window_bounds = array<i64: 64, 16>}, {pipeline_mode = #tpu.pipeline_mode<synchronous>, transform_indices = @transform_12, window_bounds = array<i64: 1, 16>}, {pipeline_mode = #tpu.pipeline_mode<synchronous>, transform_indices = @transform_13, window_bounds = array<i64: 1, 16>}, {pipeline_mode = #tpu.pipeline_mode<synchronous>, transform_indices = @transform_14, window_bounds = array<i64: 1, 16>}, {pipeline_mode = #tpu.pipeline_mode<synchronous>, transform_indices = @transform_15, window_bounds = array<i64: 1, 16>}, {pipeline_mode = #tpu.pipeline_mode<synchronous>, transform_indices = @transform_16, window_bounds = array<i64: 1, 16>}, {pipeline_mode = #tpu.pipeline_mode<synchronous>, transform_indices = @transform_17, window_bounds = array<i64: 12, 16>}]} {
    %c0_i32 = arith.constant 0 : i32
    %0 = arith.cmpi eq, %arg0, %c0_i32 : i32
    %1 = arith.extui %0 : i1 to i32
    %c0_i32_0 = arith.constant 0 : i32
    %2 = arith.cmpi ne, %1, %c0_i32_0 : i32
    scf.if %2 {
      %c0_46 = arith.constant 0 : index
      %c0_47 = arith.constant 0 : index
      %49 = vector.load %arg1[%c0_46, %c0_47] : memref<12x16xf32, #tpu.memory_space<vmem>>, vector<12x16xf32>
      %c0_48 = arith.constant 0 : index
      %c0_49 = arith.constant 0 : index
      %50 = vector.load %arg7[%c0_48, %c0_49] : memref<16x320xf32, #tpu.memory_space<vmem>>, vector<16x320xf32>
      %cst_50 = arith.constant dense<0.000000e+00> : vector<12x320xf32>
      %51 = tpu.matmul %49, %50, %cst_50 {dimension_numbers = #tpu.dot_dimension_numbers<[1], [0], [0], [1], [0, 0, 1, 1], [], []>} : vector<12x16xf32>, vector<16x320xf32>, vector<12x320xf32> -> vector<12x320xf32>
      %c0_51 = arith.constant 0 : index
      %c0_52 = arith.constant 0 : index
      %52 = vector.load %arg8[%c0_51, %c0_52] : memref<1x320xf32, #tpu.memory_space<vmem>>, vector<1x320xf32>
      %53 = vector.broadcast %52 : vector<1x320xf32> to vector<12x320xf32>
      %54 = arith.addf %51, %53 : vector<12x320xf32>
      %55 = vector.extract_strided_slice %54 {offsets = [0, 0], sizes = [12, 64], strides = [1, 1]} : vector<12x320xf32> to vector<12x64xf32>
      %56 = arith.truncf %55 : vector<12x64xf32> to vector<12x64xbf16>
      %c0_53 = arith.constant 0 : index
      %c0_54 = arith.constant 0 : index
      %57 = vector.load %arg19[%c0_53, %c0_54] : memref<12x64xbf16, #tpu.memory_space<vmem>>, vector<12x64xbf16>
      tpu.vector_store %arg19[%c0_53, %c0_54], %56 {strides = array<i32>} : memref<12x64xbf16, #tpu.memory_space<vmem>>, vector<12x64xbf16>,
      %58 = vector.extract_strided_slice %54 {offsets = [0, 64], sizes = [12, 64], strides = [1, 1]} : vector<12x320xf32> to vector<12x64xf32>
      %59 = arith.truncf %58 : vector<12x64xf32> to vector<12x64xbf16>
      %c0_55 = arith.constant 0 : index
      %c0_56 = arith.constant 0 : index
      %60 = vector.load %arg20[%c0_55, %c0_56] : memref<12x64xbf16, #tpu.memory_space<vmem>>, vector<12x64xbf16>
      tpu.vector_store %arg20[%c0_55, %c0_56], %59 {strides = array<i32>} : memref<12x64xbf16, #tpu.memory_space<vmem>>, vector<12x64xbf16>,
      %61 = vector.extract_strided_slice %54 {offsets = [0, 128], sizes = [12, 64], strides = [1, 1]} : vector<12x320xf32> to vector<12x64xf32>
      %62 = arith.truncf %61 : vector<12x64xf32> to vector<12x64xbf16>
      %c0_57 = arith.constant 0 : index
      %c0_58 = arith.constant 0 : index
      %63 = vector.load %arg21[%c0_57, %c0_58] : memref<12x64xbf16, #tpu.memory_space<vmem>>, vector<12x64xbf16>
      tpu.vector_store %arg21[%c0_57, %c0_58], %62 {strides = array<i32>} : memref<12x64xbf16, #tpu.memory_space<vmem>>, vector<12x64xbf16>,
      %64 = vector.extract_strided_slice %54 {offsets = [0, 256], sizes = [12, 64], strides = [1, 1]} : vector<12x320xf32> to vector<12x64xf32>
      %65 = arith.truncf %64 : vector<12x64xf32> to vector<12x64xbf16>
      %c0_59 = arith.constant 0 : index
      %c0_60 = arith.constant 0 : index
      %66 = vector.load %arg22[%c0_59, %c0_60] : memref<12x64xbf16, #tpu.memory_space<vmem>>, vector<12x64xbf16>
      tpu.vector_store %arg22[%c0_59, %c0_60], %65 {strides = array<i32>} : memref<12x64xbf16, #tpu.memory_space<vmem>>, vector<12x64xbf16>,
      %67 = vector.extract_strided_slice %54 {offsets = [0, 192], sizes = [12, 64], strides = [1, 1]} : vector<12x320xf32> to vector<12x64xf32>
      %c0_61 = arith.constant 0 : index
      %c0_62 = arith.constant 0 : index
      %68 = vector.load %arg10[%c0_61, %c0_62] : memref<1x64xf32, #tpu.memory_space<vmem>>, vector<1x64xf32>
      %69 = vector.broadcast %68 : vector<1x64xf32> to vector<12x64xf32>
      %70 = arith.addf %67, %69 : vector<12x64xf32>
      %c0_63 = arith.constant 0 : index
      %c0_64 = arith.constant 0 : index
      %71 = vector.load %arg25[%c0_63, %c0_64] : memref<12x64xf32, #tpu.memory_space<vmem>>, vector<12x64xf32>
      tpu.vector_store %arg25[%c0_63, %c0_64], %70 {strides = array<i32>} : memref<12x64xf32, #tpu.memory_space<vmem>>, vector<12x64xf32>,
      %cst_65 = arith.constant 0.000000e+00 : f32
      %72 = vector.broadcast %cst_65 : f32 to vector<12x64xf32>
      %c0_66 = arith.constant 0 : index
      %c0_67 = arith.constant 0 : index
      %73 = vector.load %arg23[%c0_66, %c0_67] : memref<12x64xf32, #tpu.memory_space<vmem>>, vector<12x64xf32>
      tpu.vector_store %arg23[%c0_66, %c0_67], %72 {strides = array<i32>} : memref<12x64xf32, #tpu.memory_space<vmem>>, vector<12x64xf32>,
      %cst_68 = arith.constant 0.000000e+00 : f32
      %74 = vector.broadcast %cst_68 : f32 to vector<12x64xf32>
      %c0_69 = arith.constant 0 : index
      %c0_70 = arith.constant 0 : index
      %75 = vector.load %arg24[%c0_69, %c0_70] : memref<12x64xf32, #tpu.memory_space<vmem>>, vector<12x64xf32>
      tpu.vector_store %arg24[%c0_69, %c0_70], %74 {strides = array<i32>} : memref<12x64xf32, #tpu.memory_space<vmem>>, vector<12x64xf32>,
    } else {
    }
    %c0 = arith.constant 0 : index
    %c0_1 = arith.constant 0 : index
    %3 = vector.load %arg2[%c0, %c0_1] : memref<64x12xbf16, #tpu.memory_space<vmem>>, vector<64x12xbf16>
    %c0_2 = arith.constant 0 : index
    %c0_3 = arith.constant 0 : index
    %4 = vector.load %arg3[%c0_2, %c0_3] : memref<64x12xbf16, #tpu.memory_space<vmem>>, vector<64x12xbf16>
    %c0_4 = arith.constant 0 : index
    %c0_5 = arith.constant 0 : index
    %5 = vector.load %arg4[%c0_4, %c0_5] : memref<64x4xf32, #tpu.memory_space<vmem>>, vector<64x4xf32>
    %c0_6 = arith.constant 0 : index
    %c0_7 = arith.constant 0 : index
    %6 = vector.load %arg5[%c0_6, %c0_7] : memref<64x1xf32, #tpu.memory_space<vmem>>, vector<64x1xf32>
    %c0_8 = arith.constant 0 : index
    %c0_9 = arith.constant 0 : index
    %7 = vector.load %arg6[%c0_8, %c0_9] : memref<64x4xf32, #tpu.memory_space<vmem>>, vector<64x4xf32>
    %c0_10 = arith.constant 0 : index
    %c0_11 = arith.constant 0 : index
    %8 = vector.load %arg11[%c0_10, %c0_11] : memref<4x64xf32, #tpu.memory_space<vmem>>, vector<4x64xf32>
    %c0_12 = arith.constant 0 : index
    %c0_13 = arith.constant 0 : index
    %9 = vector.load %arg22[%c0_12, %c0_13] : memref<12x64xbf16, #tpu.memory_space<vmem>>, vector<12x64xbf16>
    %cst = arith.constant dense<0.000000e+00> : vector<64x64xf32>
    %10 = tpu.matmul %3, %9, %cst {dimension_numbers = #tpu.dot_dimension_numbers<[1], [0], [0], [1], [0, 0, 1, 1], [], []>} : vector<64x12xbf16>, vector<12x64xbf16>, vector<64x64xf32> -> vector<64x64xf32>
    %c0_14 = arith.constant 0 : index
    %c0_15 = arith.constant 0 : index
    %11 = vector.load %arg25[%c0_14, %c0_15] : memref<12x64xf32, #tpu.memory_space<vmem>>, vector<12x64xf32>
    %12 = vector.broadcast %6 : vector<64x1xf32> to vector<64x64xf32>
    %13 = arith.mulf %12, %10 : vector<64x64xf32>
    %14 = arith.truncf %13 : vector<64x64xf32> to vector<64x64xbf16>
    %cst_16 = arith.constant dense<0.000000e+00> : vector<12x64xf32>
    %15 = tpu.matmul %4, %14, %cst_16 {dimension_numbers = #tpu.dot_dimension_numbers<[0], [0], [1], [1], [0, 1, 1, 1], [], []>} : vector<64x12xbf16>, vector<64x64xbf16>, vector<12x64xf32> -> vector<12x64xf32>
    %16 = arith.addf %11, %15 : vector<12x64xf32>
    %c0_17 = arith.constant 0 : index
    %c0_18 = arith.constant 0 : index
    %17 = vector.load %arg25[%c0_17, %c0_18] : memref<12x64xf32, #tpu.memory_space<vmem>>, vector<12x64xf32>
    tpu.vector_store %arg25[%c0_17, %c0_18], %16 {strides = array<i32>} : memref<12x64xf32, #tpu.memory_space<vmem>>, vector<12x64xf32>,
    %c0_19 = arith.constant 0 : index
    %c0_20 = arith.constant 0 : index
    %18 = vector.load %arg9[%c0_19, %c0_20] : memref<4x64xf32, #tpu.memory_space<vmem>>, vector<4x64xf32>
    %cst_21 = arith.constant dense<0.000000e+00> : vector<64x64xf32>
    %19 = tpu.matmul %5, %18, %cst_21 {dimension_numbers = #tpu.dot_dimension_numbers<[1], [0], [0], [1], [0, 0, 1, 1], [], []>} : vector<64x4xf32>, vector<4x64xf32>, vector<64x64xf32> -> vector<64x64xf32>
    %c0_22 = arith.constant 0 : index
    %c0_23 = arith.constant 0 : index
    %20 = vector.load %arg19[%c0_22, %c0_23] : memref<12x64xbf16, #tpu.memory_space<vmem>>, vector<12x64xbf16>
    %cst_24 = arith.constant dense<0.000000e+00> : vector<64x64xf32>
    %21 = tpu.matmul %4, %20, %cst_24 {dimension_numbers = #tpu.dot_dimension_numbers<[1], [0], [0], [1], [0, 0, 1, 1], [], []>} : vector<64x12xbf16>, vector<12x64xbf16>, vector<64x64xf32> -> vector<64x64xf32>
    %c0_25 = arith.constant 0 : index
    %c0_26 = arith.constant 0 : index
    %22 = vector.load %arg20[%c0_25, %c0_26] : memref<12x64xbf16, #tpu.memory_space<vmem>>, vector<12x64xbf16>
    %cst_27 = arith.constant dense<0.000000e+00> : vector<64x64xf32>
    %23 = tpu.matmul %3, %22, %cst_27 {dimension_numbers = #tpu.dot_dimension_numbers<[1], [0], [0], [1], [0, 0, 1, 1], [], []>} : vector<64x12xbf16>, vector<12x64xbf16>, vector<64x64xf32> -> vector<64x64xf32>
    %24 = arith.addf %23, %19 : vector<64x64xf32>
    %c0_28 = arith.constant 0 : index
    %c0_29 = arith.constant 0 : index
    %25 = vector.load %arg21[%c0_28, %c0_29] : memref<12x64xbf16, #tpu.memory_space<vmem>>, vector<12x64xbf16>
    %cst_30 = arith.constant dense<0.000000e+00> : vector<64x64xf32>
    %26 = tpu.matmul %3, %25, %cst_30 {dimension_numbers = #tpu.dot_dimension_numbers<[1], [0], [0], [1], [0, 0, 1, 1], [], []>} : vector<64x12xbf16>, vector<12x64xbf16>, vector<64x64xf32> -> vector<64x64xf32>
    %27 = arith.addf %26, %19 : vector<64x64xf32>
    %28 = arith.mulf %21, %24 : vector<64x64xf32>
    %cst_31 = arith.constant dense<0.000000e+00> : vector<64x4xf32>
    %29 = tpu.matmul %28, %8, %cst_31 {dimension_numbers = #tpu.dot_dimension_numbers<[1], [1], [0], [0], [0, 0, 1, 0], [], []>} : vector<64x64xf32>, vector<4x64xf32>, vector<64x4xf32> -> vector<64x4xf32>
    %cst_32 = arith.constant 2.500000e-01 : f32
    %30 = vector.broadcast %cst_32 : f32 to vector<64x4xf32>
    %31 = arith.mulf %29, %30 : vector<64x4xf32>
    %32 = arith.subf %31, %7 : vector<64x4xf32>
    %cst_33 = arith.constant dense<0.000000e+00> : vector<64x64xf32>
    %33 = tpu.matmul %32, %8, %cst_33 {dimension_numbers = #tpu.dot_dimension_numbers<[1], [0], [0], [1], [0, 0, 1, 1], [], []>} : vector<64x4xf32>, vector<4x64xf32>, vector<64x64xf32> -> vector<64x64xf32>
    %34 = math.exp %33 : vector<64x64xf32>
    %c0_34 = arith.constant 0 : index
    %c0_35 = arith.constant 0 : index
    %35 = vector.load %arg23[%c0_34, %c0_35] : memref<12x64xf32, #tpu.memory_space<vmem>>, vector<12x64xf32>
    %36 = arith.mulf %27, %34 : vector<64x64xf32>
    %37 = arith.truncf %36 : vector<64x64xf32> to vector<64x64xbf16>
    %cst_36 = arith.constant dense<0.000000e+00> : vector<12x64xf32>
    %38 = tpu.matmul %4, %37, %cst_36 {dimension_numbers = #tpu.dot_dimension_numbers<[0], [0], [1], [1], [0, 1, 1, 1], [], []>} : vector<64x12xbf16>, vector<64x64xbf16>, vector<12x64xf32> -> vector<12x64xf32>
    %39 = arith.addf %35, %38 : vector<12x64xf32>
    %c0_37 = arith.constant 0 : index
    %c0_38 = arith.constant 0 : index
    %40 = vector.load %arg23[%c0_37, %c0_38] : memref<12x64xf32, #tpu.memory_space<vmem>>, vector<12x64xf32>
    tpu.vector_store %arg23[%c0_37, %c0_38], %39 {strides = array<i32>} : memref<12x64xf32, #tpu.memory_space<vmem>>, vector<12x64xf32>,
    %c0_39 = arith.constant 0 : index
    %c0_40 = arith.constant 0 : index
    %41 = vector.load %arg24[%c0_39, %c0_40] : memref<12x64xf32, #tpu.memory_space<vmem>>, vector<12x64xf32>
    %42 = arith.truncf %34 : vector<64x64xf32> to vector<64x64xbf16>
    %cst_41 = arith.constant dense<0.000000e+00> : vector<12x64xf32>
    %43 = tpu.matmul %4, %42, %cst_41 {dimension_numbers = #tpu.dot_dimension_numbers<[0], [0], [1], [1], [0, 1, 1, 1], [], []>} : vector<64x12xbf16>, vector<64x64xbf16>, vector<12x64xf32> -> vector<12x64xf32>
    %44 = arith.addf %41, %43 : vector<12x64xf32>
    %c0_42 = arith.constant 0 : index
    %c0_43 = arith.constant 0 : index
    %45 = vector.load %arg24[%c0_42, %c0_43] : memref<12x64xf32, #tpu.memory_space<vmem>>, vector<12x64xf32>
    tpu.vector_store %arg24[%c0_42, %c0_43], %44 {strides = array<i32>} : memref<12x64xf32, #tpu.memory_space<vmem>>, vector<12x64xf32>,
    %c0_i32_44 = arith.constant 0 : i32
    %46 = arith.cmpi eq, %arg0, %c0_i32_44 : i32
    %47 = arith.extui %46 : i1 to i32
    %c0_i32_45 = arith.constant 0 : i32
    %48 = arith.cmpi ne, %47, %c0_i32_45 : i32
    scf.if %48 {
      %c0_46 = arith.constant 0 : index
      %c0_47 = arith.constant 0 : index
      %49 = vector.load %arg23[%c0_46, %c0_47] : memref<12x64xf32, #tpu.memory_space<vmem>>, vector<12x64xf32>
      %c0_48 = arith.constant 0 : index
      %c0_49 = arith.constant 0 : index
      %50 = vector.load %arg24[%c0_48, %c0_49] : memref<12x64xf32, #tpu.memory_space<vmem>>, vector<12x64xf32>
      %cst_50 = arith.constant 9.99999968E-21 : f32
      %51 = vector.broadcast %cst_50 : f32 to vector<12x64xf32>
      %52 = arith.addf %50, %51 : vector<12x64xf32>
      %53 = arith.divf %49, %52 : vector<12x64xf32>
      %c0_51 = arith.constant 0 : index
      %c0_52 = arith.constant 0 : index
      %54 = vector.load %arg25[%c0_51, %c0_52] : memref<12x64xf32, #tpu.memory_space<vmem>>, vector<12x64xf32>
      %55 = arith.addf %54, %53 : vector<12x64xf32>
      %c0_53 = arith.constant 0 : index
      %c0_54 = arith.constant 0 : index
      %56 = vector.load %arg12[%c0_53, %c0_54] : memref<64x16xf32, #tpu.memory_space<vmem>>, vector<64x16xf32>
      %cst_55 = arith.constant dense<0.000000e+00> : vector<12x16xf32>
      %57 = tpu.matmul %55, %56, %cst_55 {dimension_numbers = #tpu.dot_dimension_numbers<[1], [0], [0], [1], [0, 0, 1, 1], [], []>} : vector<12x64xf32>, vector<64x16xf32>, vector<12x16xf32> -> vector<12x16xf32>
      %c0_56 = arith.constant 0 : index
      %c0_57 = arith.constant 0 : index
      %58 = vector.load %arg13[%c0_56, %c0_57] : memref<1x16xf32, #tpu.memory_space<vmem>>, vector<1x16xf32>
      %59 = vector.broadcast %58 : vector<1x16xf32> to vector<12x16xf32>
      %60 = arith.addf %57, %59 : vector<12x16xf32>
      %cst_58 = arith.constant 0.000000e+00 : f32
      %61 = vector.broadcast %cst_58 : f32 to vector<12x16xf32>
      %62 = arith.maximumf %60, %61 : vector<12x16xf32>
      %c0_59 = arith.constant 0 : index
      %c0_60 = arith.constant 0 : index
      %63 = vector.load %arg16[%c0_59, %c0_60] : memref<1x16xf32, #tpu.memory_space<vmem>>, vector<1x16xf32>
      %64 = vector.broadcast %63 : vector<1x16xf32> to vector<12x16xf32>
      %65 = arith.subf %62, %64 : vector<12x16xf32>
      %c0_61 = arith.constant 0 : index
      %c0_62 = arith.constant 0 : index
      %66 = vector.load %arg17[%c0_61, %c0_62] : memref<1x16xf32, #tpu.memory_space<vmem>>, vector<1x16xf32>
      %cst_63 = arith.constant 9.99999974E-6 : f32
      %67 = vector.broadcast %cst_63 : f32 to vector<1x16xf32>
      %68 = arith.addf %66, %67 : vector<1x16xf32>
      %69 = math.rsqrt %68 : vector<1x16xf32>
      %70 = vector.broadcast %69 : vector<1x16xf32> to vector<12x16xf32>
      %71 = arith.mulf %65, %70 : vector<12x16xf32>
      %c0_64 = arith.constant 0 : index
      %c0_65 = arith.constant 0 : index
      %72 = vector.load %arg14[%c0_64, %c0_65] : memref<1x16xf32, #tpu.memory_space<vmem>>, vector<1x16xf32>
      %73 = vector.broadcast %72 : vector<1x16xf32> to vector<12x16xf32>
      %74 = arith.mulf %71, %73 : vector<12x16xf32>
      %c0_66 = arith.constant 0 : index
      %c0_67 = arith.constant 0 : index
      %75 = vector.load %arg15[%c0_66, %c0_67] : memref<1x16xf32, #tpu.memory_space<vmem>>, vector<1x16xf32>
      %76 = vector.broadcast %75 : vector<1x16xf32> to vector<12x16xf32>
      %77 = arith.addf %74, %76 : vector<12x16xf32>
      %c0_68 = arith.constant 0 : index
      %c0_69 = arith.constant 0 : index
      %78 = vector.load %arg18[%c0_68, %c0_69] : memref<12x16xf32, #tpu.memory_space<vmem>>, vector<12x16xf32>
      tpu.vector_store %arg18[%c0_68, %c0_69], %77 {strides = array<i32>} : memref<12x16xf32, #tpu.memory_space<vmem>>, vector<12x16xf32>,
    } else {
    }
    return
  }
  func.func @transform_0(%arg0: i32) -> (i32, i32) {
    %c0_i32 = arith.constant 0 : i32
    %c0_i32_0 = arith.constant 0 : i32
    %c0_i32_1 = arith.constant 0 : i32
    return %c0_i32, %c0_i32_0 : i32, i32
  }
  func.func @transform_1(%arg0: i32) -> (i32, i32) {
    %c0_i32 = arith.constant 0 : i32
    %c0_i32_0 = arith.constant 0 : i32
    return %arg0, %c0_i32 : i32, i32
  }
  func.func @transform_2(%arg0: i32) -> (i32, i32) {
    %c0_i32 = arith.constant 0 : i32
    %c0_i32_0 = arith.constant 0 : i32
    return %arg0, %c0_i32 : i32, i32
  }
  func.func @transform_3(%arg0: i32) -> (i32, i32) {
    %c0_i32 = arith.constant 0 : i32
    %c0_i32_0 = arith.constant 0 : i32
    return %arg0, %c0_i32 : i32, i32
  }
  func.func @transform_4(%arg0: i32) -> (i32, i32) {
    %c0_i32 = arith.constant 0 : i32
    %c0_i32_0 = arith.constant 0 : i32
    return %arg0, %c0_i32 : i32, i32
  }
  func.func @transform_5(%arg0: i32) -> (i32, i32) {
    %c0_i32 = arith.constant 0 : i32
    %c0_i32_0 = arith.constant 0 : i32
    return %arg0, %c0_i32 : i32, i32
  }
  func.func @transform_6(%arg0: i32) -> (i32, i32) {
    %c0_i32 = arith.constant 0 : i32
    %c0_i32_0 = arith.constant 0 : i32
    %c0_i32_1 = arith.constant 0 : i32
    return %c0_i32, %c0_i32_0 : i32, i32
  }
  func.func @transform_7(%arg0: i32) -> (i32, i32) {
    %c0_i32 = arith.constant 0 : i32
    %c0_i32_0 = arith.constant 0 : i32
    %c0_i32_1 = arith.constant 0 : i32
    return %c0_i32, %c0_i32_0 : i32, i32
  }
  func.func @transform_8(%arg0: i32) -> (i32, i32) {
    %c0_i32 = arith.constant 0 : i32
    %c0_i32_0 = arith.constant 0 : i32
    %c0_i32_1 = arith.constant 0 : i32
    return %c0_i32, %c0_i32_0 : i32, i32
  }
  func.func @transform_9(%arg0: i32) -> (i32, i32) {
    %c0_i32 = arith.constant 0 : i32
    %c0_i32_0 = arith.constant 0 : i32
    %c0_i32_1 = arith.constant 0 : i32
    return %c0_i32, %c0_i32_0 : i32, i32
  }
  func.func @transform_10(%arg0: i32) -> (i32, i32) {
    %c0_i32 = arith.constant 0 : i32
    %c0_i32_0 = arith.constant 0 : i32
    %c0_i32_1 = arith.constant 0 : i32
    return %c0_i32, %c0_i32_0 : i32, i32
  }
  func.func @transform_11(%arg0: i32) -> (i32, i32) {
    %c0_i32 = arith.constant 0 : i32
    %c0_i32_0 = arith.constant 0 : i32
    %c0_i32_1 = arith.constant 0 : i32
    return %c0_i32, %c0_i32_0 : i32, i32
  }
  func.func @transform_12(%arg0: i32) -> (i32, i32) {
    %c0_i32 = arith.constant 0 : i32
    %c0_i32_0 = arith.constant 0 : i32
    %c0_i32_1 = arith.constant 0 : i32
    return %c0_i32, %c0_i32_0 : i32, i32
  }
  func.func @transform_13(%arg0: i32) -> (i32, i32) {
    %c0_i32 = arith.constant 0 : i32
    %c0_i32_0 = arith.constant 0 : i32
    %c0_i32_1 = arith.constant 0 : i32
    return %c0_i32, %c0_i32_0 : i32, i32
  }
  func.func @transform_14(%arg0: i32) -> (i32, i32) {
    %c0_i32 = arith.constant 0 : i32
    %c0_i32_0 = arith.constant 0 : i32
    %c0_i32_1 = arith.constant 0 : i32
    return %c0_i32, %c0_i32_0 : i32, i32
  }
  func.func @transform_15(%arg0: i32) -> (i32, i32) {
    %c0_i32 = arith.constant 0 : i32
    %c0_i32_0 = arith.constant 0 : i32
    %c0_i32_1 = arith.constant 0 : i32
    return %c0_i32, %c0_i32_0 : i32, i32
  }
  func.func @transform_16(%arg0: i32) -> (i32, i32) {
    %c0_i32 = arith.constant 0 : i32
    %c0_i32_0 = arith.constant 0 : i32
    %c0_i32_1 = arith.constant 0 : i32
    return %c0_i32, %c0_i32_0 : i32, i32
  }
  func.func @transform_17(%arg0: i32) -> (i32, i32) {
    %c0_i32 = arith.constant 0 : i32
    %c0_i32_0 = arith.constant 0 : i32
    %c0_i32_1 = arith.constant 0 : i32
    return %c0_i32, %c0_i32_0 : i32, i32
  }
}

module attributes {stable_mosaic.version = 11 : i64} {
  func.func @_conv_fused_kernel(%arg0: i32, %arg1: memref<6x16xf32, #tpu.memory_space<vmem>>, %arg2: memref<64x6xbf16, #tpu.memory_space<vmem>>, %arg3: memref<64x6xbf16, #tpu.memory_space<vmem>>, %arg4: memref<64x4xf32, #tpu.memory_space<vmem>>, %arg5: memref<64x1xf32, #tpu.memory_space<vmem>>, %arg6: memref<64x4xf32, #tpu.memory_space<vmem>>, %arg7: memref<16x320xf32, #tpu.memory_space<vmem>>, %arg8: memref<1x320xf32, #tpu.memory_space<vmem>>, %arg9: memref<4x64xf32, #tpu.memory_space<vmem>>, %arg10: memref<1x64xf32, #tpu.memory_space<vmem>>, %arg11: memref<4x64xf32, #tpu.memory_space<vmem>>, %arg12: memref<64x16xf32, #tpu.memory_space<vmem>>, %arg13: memref<1x16xf32, #tpu.memory_space<vmem>>, %arg14: memref<1x16xf32, #tpu.memory_space<vmem>>, %arg15: memref<1x16xf32, #tpu.memory_space<vmem>>, %arg16: memref<1x16xf32, #tpu.memory_space<vmem>>, %arg17: memref<1x16xf32, #tpu.memory_space<vmem>>, %arg18: memref<6x16xf32, #tpu.memory_space<vmem>>, %arg19: memref<6x64xbf16, #tpu.memory_space<vmem>>, %arg20: memref<6x64xbf16, #tpu.memory_space<vmem>>, %arg21: memref<6x64xbf16, #tpu.memory_space<vmem>>, %arg22: memref<6x64xbf16, #tpu.memory_space<vmem>>, %arg23: memref<6x64xf32, #tpu.memory_space<vmem>>, %arg24: memref<6x64xf32, #tpu.memory_space<vmem>>, %arg25: memref<6x64xf32, #tpu.memory_space<vmem>>) attributes {dimension_semantics = [#tpu.dimension_semantics<arbitrary>], iteration_bounds = array<i64: 1>, scalar_prefetch = 0 : i64, scratch_operands = 7 : i64, tpu.core_type = #tpu.core_type<tc>, window_params = [{pipeline_mode = #tpu.pipeline_mode<synchronous>, transform_indices = @transform_0, window_bounds = array<i64: 6, 16>}, {transform_indices = @transform_1, window_bounds = array<i64: 64, 6>}, {transform_indices = @transform_2, window_bounds = array<i64: 64, 6>}, {transform_indices = @transform_3, window_bounds = array<i64: 64, 4>}, {transform_indices = @transform_4, window_bounds = array<i64: 64, 1>}, {transform_indices = @transform_5, window_bounds = array<i64: 64, 4>}, {pipeline_mode = #tpu.pipeline_mode<synchronous>, transform_indices = @transform_6, window_bounds = array<i64: 16, 320>}, {pipeline_mode = #tpu.pipeline_mode<synchronous>, transform_indices = @transform_7, window_bounds = array<i64: 1, 320>}, {pipeline_mode = #tpu.pipeline_mode<synchronous>, transform_indices = @transform_8, window_bounds = array<i64: 4, 64>}, {pipeline_mode = #tpu.pipeline_mode<synchronous>, transform_indices = @transform_9, window_bounds = array<i64: 1, 64>}, {pipeline_mode = #tpu.pipeline_mode<synchronous>, transform_indices = @transform_10, window_bounds = array<i64: 4, 64>}, {pipeline_mode = #tpu.pipeline_mode<synchronous>, transform_indices = @transform_11, window_bounds = array<i64: 64, 16>}, {pipeline_mode = #tpu.pipeline_mode<synchronous>, transform_indices = @transform_12, window_bounds = array<i64: 1, 16>}, {pipeline_mode = #tpu.pipeline_mode<synchronous>, transform_indices = @transform_13, window_bounds = array<i64: 1, 16>}, {pipeline_mode = #tpu.pipeline_mode<synchronous>, transform_indices = @transform_14, window_bounds = array<i64: 1, 16>}, {pipeline_mode = #tpu.pipeline_mode<synchronous>, transform_indices = @transform_15, window_bounds = array<i64: 1, 16>}, {pipeline_mode = #tpu.pipeline_mode<synchronous>, transform_indices = @transform_16, window_bounds = array<i64: 1, 16>}, {pipeline_mode = #tpu.pipeline_mode<synchronous>, transform_indices = @transform_17, window_bounds = array<i64: 6, 16>}]} {
    %c0_i32 = arith.constant 0 : i32
    %0 = arith.cmpi eq, %arg0, %c0_i32 : i32
    %1 = arith.extui %0 : i1 to i32
    %c0_i32_0 = arith.constant 0 : i32
    %2 = arith.cmpi ne, %1, %c0_i32_0 : i32
    scf.if %2 {
      %c0_46 = arith.constant 0 : index
      %c0_47 = arith.constant 0 : index
      %49 = vector.load %arg1[%c0_46, %c0_47] : memref<6x16xf32, #tpu.memory_space<vmem>>, vector<6x16xf32>
      %c0_48 = arith.constant 0 : index
      %c0_49 = arith.constant 0 : index
      %50 = vector.load %arg7[%c0_48, %c0_49] : memref<16x320xf32, #tpu.memory_space<vmem>>, vector<16x320xf32>
      %cst_50 = arith.constant dense<0.000000e+00> : vector<6x320xf32>
      %51 = tpu.matmul %49, %50, %cst_50 {dimension_numbers = #tpu.dot_dimension_numbers<[1], [0], [0], [1], [0, 0, 1, 1], [], []>} : vector<6x16xf32>, vector<16x320xf32>, vector<6x320xf32> -> vector<6x320xf32>
      %c0_51 = arith.constant 0 : index
      %c0_52 = arith.constant 0 : index
      %52 = vector.load %arg8[%c0_51, %c0_52] : memref<1x320xf32, #tpu.memory_space<vmem>>, vector<1x320xf32>
      %53 = vector.broadcast %52 : vector<1x320xf32> to vector<6x320xf32>
      %54 = arith.addf %51, %53 : vector<6x320xf32>
      %55 = vector.extract_strided_slice %54 {offsets = [0, 0], sizes = [6, 64], strides = [1, 1]} : vector<6x320xf32> to vector<6x64xf32>
      %56 = arith.truncf %55 : vector<6x64xf32> to vector<6x64xbf16>
      %c0_53 = arith.constant 0 : index
      %c0_54 = arith.constant 0 : index
      %57 = vector.load %arg19[%c0_53, %c0_54] : memref<6x64xbf16, #tpu.memory_space<vmem>>, vector<6x64xbf16>
      tpu.vector_store %arg19[%c0_53, %c0_54], %56 {strides = array<i32>} : memref<6x64xbf16, #tpu.memory_space<vmem>>, vector<6x64xbf16>,
      %58 = vector.extract_strided_slice %54 {offsets = [0, 64], sizes = [6, 64], strides = [1, 1]} : vector<6x320xf32> to vector<6x64xf32>
      %59 = arith.truncf %58 : vector<6x64xf32> to vector<6x64xbf16>
      %c0_55 = arith.constant 0 : index
      %c0_56 = arith.constant 0 : index
      %60 = vector.load %arg20[%c0_55, %c0_56] : memref<6x64xbf16, #tpu.memory_space<vmem>>, vector<6x64xbf16>
      tpu.vector_store %arg20[%c0_55, %c0_56], %59 {strides = array<i32>} : memref<6x64xbf16, #tpu.memory_space<vmem>>, vector<6x64xbf16>,
      %61 = vector.extract_strided_slice %54 {offsets = [0, 128], sizes = [6, 64], strides = [1, 1]} : vector<6x320xf32> to vector<6x64xf32>
      %62 = arith.truncf %61 : vector<6x64xf32> to vector<6x64xbf16>
      %c0_57 = arith.constant 0 : index
      %c0_58 = arith.constant 0 : index
      %63 = vector.load %arg21[%c0_57, %c0_58] : memref<6x64xbf16, #tpu.memory_space<vmem>>, vector<6x64xbf16>
      tpu.vector_store %arg21[%c0_57, %c0_58], %62 {strides = array<i32>} : memref<6x64xbf16, #tpu.memory_space<vmem>>, vector<6x64xbf16>,
      %64 = vector.extract_strided_slice %54 {offsets = [0, 256], sizes = [6, 64], strides = [1, 1]} : vector<6x320xf32> to vector<6x64xf32>
      %65 = arith.truncf %64 : vector<6x64xf32> to vector<6x64xbf16>
      %c0_59 = arith.constant 0 : index
      %c0_60 = arith.constant 0 : index
      %66 = vector.load %arg22[%c0_59, %c0_60] : memref<6x64xbf16, #tpu.memory_space<vmem>>, vector<6x64xbf16>
      tpu.vector_store %arg22[%c0_59, %c0_60], %65 {strides = array<i32>} : memref<6x64xbf16, #tpu.memory_space<vmem>>, vector<6x64xbf16>,
      %67 = vector.extract_strided_slice %54 {offsets = [0, 192], sizes = [6, 64], strides = [1, 1]} : vector<6x320xf32> to vector<6x64xf32>
      %c0_61 = arith.constant 0 : index
      %c0_62 = arith.constant 0 : index
      %68 = vector.load %arg10[%c0_61, %c0_62] : memref<1x64xf32, #tpu.memory_space<vmem>>, vector<1x64xf32>
      %69 = vector.broadcast %68 : vector<1x64xf32> to vector<6x64xf32>
      %70 = arith.addf %67, %69 : vector<6x64xf32>
      %c0_63 = arith.constant 0 : index
      %c0_64 = arith.constant 0 : index
      %71 = vector.load %arg25[%c0_63, %c0_64] : memref<6x64xf32, #tpu.memory_space<vmem>>, vector<6x64xf32>
      tpu.vector_store %arg25[%c0_63, %c0_64], %70 {strides = array<i32>} : memref<6x64xf32, #tpu.memory_space<vmem>>, vector<6x64xf32>,
      %cst_65 = arith.constant 0.000000e+00 : f32
      %72 = vector.broadcast %cst_65 : f32 to vector<6x64xf32>
      %c0_66 = arith.constant 0 : index
      %c0_67 = arith.constant 0 : index
      %73 = vector.load %arg23[%c0_66, %c0_67] : memref<6x64xf32, #tpu.memory_space<vmem>>, vector<6x64xf32>
      tpu.vector_store %arg23[%c0_66, %c0_67], %72 {strides = array<i32>} : memref<6x64xf32, #tpu.memory_space<vmem>>, vector<6x64xf32>,
      %cst_68 = arith.constant 0.000000e+00 : f32
      %74 = vector.broadcast %cst_68 : f32 to vector<6x64xf32>
      %c0_69 = arith.constant 0 : index
      %c0_70 = arith.constant 0 : index
      %75 = vector.load %arg24[%c0_69, %c0_70] : memref<6x64xf32, #tpu.memory_space<vmem>>, vector<6x64xf32>
      tpu.vector_store %arg24[%c0_69, %c0_70], %74 {strides = array<i32>} : memref<6x64xf32, #tpu.memory_space<vmem>>, vector<6x64xf32>,
    } else {
    }
    %c0 = arith.constant 0 : index
    %c0_1 = arith.constant 0 : index
    %3 = vector.load %arg2[%c0, %c0_1] : memref<64x6xbf16, #tpu.memory_space<vmem>>, vector<64x6xbf16>
    %c0_2 = arith.constant 0 : index
    %c0_3 = arith.constant 0 : index
    %4 = vector.load %arg3[%c0_2, %c0_3] : memref<64x6xbf16, #tpu.memory_space<vmem>>, vector<64x6xbf16>
    %c0_4 = arith.constant 0 : index
    %c0_5 = arith.constant 0 : index
    %5 = vector.load %arg4[%c0_4, %c0_5] : memref<64x4xf32, #tpu.memory_space<vmem>>, vector<64x4xf32>
    %c0_6 = arith.constant 0 : index
    %c0_7 = arith.constant 0 : index
    %6 = vector.load %arg5[%c0_6, %c0_7] : memref<64x1xf32, #tpu.memory_space<vmem>>, vector<64x1xf32>
    %c0_8 = arith.constant 0 : index
    %c0_9 = arith.constant 0 : index
    %7 = vector.load %arg6[%c0_8, %c0_9] : memref<64x4xf32, #tpu.memory_space<vmem>>, vector<64x4xf32>
    %c0_10 = arith.constant 0 : index
    %c0_11 = arith.constant 0 : index
    %8 = vector.load %arg11[%c0_10, %c0_11] : memref<4x64xf32, #tpu.memory_space<vmem>>, vector<4x64xf32>
    %c0_12 = arith.constant 0 : index
    %c0_13 = arith.constant 0 : index
    %9 = vector.load %arg22[%c0_12, %c0_13] : memref<6x64xbf16, #tpu.memory_space<vmem>>, vector<6x64xbf16>
    %cst = arith.constant dense<0.000000e+00> : vector<64x64xf32>
    %10 = tpu.matmul %3, %9, %cst {dimension_numbers = #tpu.dot_dimension_numbers<[1], [0], [0], [1], [0, 0, 1, 1], [], []>} : vector<64x6xbf16>, vector<6x64xbf16>, vector<64x64xf32> -> vector<64x64xf32>
    %c0_14 = arith.constant 0 : index
    %c0_15 = arith.constant 0 : index
    %11 = vector.load %arg25[%c0_14, %c0_15] : memref<6x64xf32, #tpu.memory_space<vmem>>, vector<6x64xf32>
    %12 = vector.broadcast %6 : vector<64x1xf32> to vector<64x64xf32>
    %13 = arith.mulf %12, %10 : vector<64x64xf32>
    %14 = arith.truncf %13 : vector<64x64xf32> to vector<64x64xbf16>
    %cst_16 = arith.constant dense<0.000000e+00> : vector<6x64xf32>
    %15 = tpu.matmul %4, %14, %cst_16 {dimension_numbers = #tpu.dot_dimension_numbers<[0], [0], [1], [1], [0, 1, 1, 1], [], []>} : vector<64x6xbf16>, vector<64x64xbf16>, vector<6x64xf32> -> vector<6x64xf32>
    %16 = arith.addf %11, %15 : vector<6x64xf32>
    %c0_17 = arith.constant 0 : index
    %c0_18 = arith.constant 0 : index
    %17 = vector.load %arg25[%c0_17, %c0_18] : memref<6x64xf32, #tpu.memory_space<vmem>>, vector<6x64xf32>
    tpu.vector_store %arg25[%c0_17, %c0_18], %16 {strides = array<i32>} : memref<6x64xf32, #tpu.memory_space<vmem>>, vector<6x64xf32>,
    %c0_19 = arith.constant 0 : index
    %c0_20 = arith.constant 0 : index
    %18 = vector.load %arg9[%c0_19, %c0_20] : memref<4x64xf32, #tpu.memory_space<vmem>>, vector<4x64xf32>
    %cst_21 = arith.constant dense<0.000000e+00> : vector<64x64xf32>
    %19 = tpu.matmul %5, %18, %cst_21 {dimension_numbers = #tpu.dot_dimension_numbers<[1], [0], [0], [1], [0, 0, 1, 1], [], []>} : vector<64x4xf32>, vector<4x64xf32>, vector<64x64xf32> -> vector<64x64xf32>
    %c0_22 = arith.constant 0 : index
    %c0_23 = arith.constant 0 : index
    %20 = vector.load %arg19[%c0_22, %c0_23] : memref<6x64xbf16, #tpu.memory_space<vmem>>, vector<6x64xbf16>
    %cst_24 = arith.constant dense<0.000000e+00> : vector<64x64xf32>
    %21 = tpu.matmul %4, %20, %cst_24 {dimension_numbers = #tpu.dot_dimension_numbers<[1], [0], [0], [1], [0, 0, 1, 1], [], []>} : vector<64x6xbf16>, vector<6x64xbf16>, vector<64x64xf32> -> vector<64x64xf32>
    %c0_25 = arith.constant 0 : index
    %c0_26 = arith.constant 0 : index
    %22 = vector.load %arg20[%c0_25, %c0_26] : memref<6x64xbf16, #tpu.memory_space<vmem>>, vector<6x64xbf16>
    %cst_27 = arith.constant dense<0.000000e+00> : vector<64x64xf32>
    %23 = tpu.matmul %3, %22, %cst_27 {dimension_numbers = #tpu.dot_dimension_numbers<[1], [0], [0], [1], [0, 0, 1, 1], [], []>} : vector<64x6xbf16>, vector<6x64xbf16>, vector<64x64xf32> -> vector<64x64xf32>
    %24 = arith.addf %23, %19 : vector<64x64xf32>
    %c0_28 = arith.constant 0 : index
    %c0_29 = arith.constant 0 : index
    %25 = vector.load %arg21[%c0_28, %c0_29] : memref<6x64xbf16, #tpu.memory_space<vmem>>, vector<6x64xbf16>
    %cst_30 = arith.constant dense<0.000000e+00> : vector<64x64xf32>
    %26 = tpu.matmul %3, %25, %cst_30 {dimension_numbers = #tpu.dot_dimension_numbers<[1], [0], [0], [1], [0, 0, 1, 1], [], []>} : vector<64x6xbf16>, vector<6x64xbf16>, vector<64x64xf32> -> vector<64x64xf32>
    %27 = arith.addf %26, %19 : vector<64x64xf32>
    %28 = arith.mulf %21, %24 : vector<64x64xf32>
    %cst_31 = arith.constant dense<0.000000e+00> : vector<64x4xf32>
    %29 = tpu.matmul %28, %8, %cst_31 {dimension_numbers = #tpu.dot_dimension_numbers<[1], [1], [0], [0], [0, 0, 1, 0], [], []>} : vector<64x64xf32>, vector<4x64xf32>, vector<64x4xf32> -> vector<64x4xf32>
    %cst_32 = arith.constant 2.500000e-01 : f32
    %30 = vector.broadcast %cst_32 : f32 to vector<64x4xf32>
    %31 = arith.mulf %29, %30 : vector<64x4xf32>
    %32 = arith.subf %31, %7 : vector<64x4xf32>
    %cst_33 = arith.constant dense<0.000000e+00> : vector<64x64xf32>
    %33 = tpu.matmul %32, %8, %cst_33 {dimension_numbers = #tpu.dot_dimension_numbers<[1], [0], [0], [1], [0, 0, 1, 1], [], []>} : vector<64x4xf32>, vector<4x64xf32>, vector<64x64xf32> -> vector<64x64xf32>
    %34 = math.exp %33 : vector<64x64xf32>
    %c0_34 = arith.constant 0 : index
    %c0_35 = arith.constant 0 : index
    %35 = vector.load %arg23[%c0_34, %c0_35] : memref<6x64xf32, #tpu.memory_space<vmem>>, vector<6x64xf32>
    %36 = arith.mulf %27, %34 : vector<64x64xf32>
    %37 = arith.truncf %36 : vector<64x64xf32> to vector<64x64xbf16>
    %cst_36 = arith.constant dense<0.000000e+00> : vector<6x64xf32>
    %38 = tpu.matmul %4, %37, %cst_36 {dimension_numbers = #tpu.dot_dimension_numbers<[0], [0], [1], [1], [0, 1, 1, 1], [], []>} : vector<64x6xbf16>, vector<64x64xbf16>, vector<6x64xf32> -> vector<6x64xf32>
    %39 = arith.addf %35, %38 : vector<6x64xf32>
    %c0_37 = arith.constant 0 : index
    %c0_38 = arith.constant 0 : index
    %40 = vector.load %arg23[%c0_37, %c0_38] : memref<6x64xf32, #tpu.memory_space<vmem>>, vector<6x64xf32>
    tpu.vector_store %arg23[%c0_37, %c0_38], %39 {strides = array<i32>} : memref<6x64xf32, #tpu.memory_space<vmem>>, vector<6x64xf32>,
    %c0_39 = arith.constant 0 : index
    %c0_40 = arith.constant 0 : index
    %41 = vector.load %arg24[%c0_39, %c0_40] : memref<6x64xf32, #tpu.memory_space<vmem>>, vector<6x64xf32>
    %42 = arith.truncf %34 : vector<64x64xf32> to vector<64x64xbf16>
    %cst_41 = arith.constant dense<0.000000e+00> : vector<6x64xf32>
    %43 = tpu.matmul %4, %42, %cst_41 {dimension_numbers = #tpu.dot_dimension_numbers<[0], [0], [1], [1], [0, 1, 1, 1], [], []>} : vector<64x6xbf16>, vector<64x64xbf16>, vector<6x64xf32> -> vector<6x64xf32>
    %44 = arith.addf %41, %43 : vector<6x64xf32>
    %c0_42 = arith.constant 0 : index
    %c0_43 = arith.constant 0 : index
    %45 = vector.load %arg24[%c0_42, %c0_43] : memref<6x64xf32, #tpu.memory_space<vmem>>, vector<6x64xf32>
    tpu.vector_store %arg24[%c0_42, %c0_43], %44 {strides = array<i32>} : memref<6x64xf32, #tpu.memory_space<vmem>>, vector<6x64xf32>,
    %c0_i32_44 = arith.constant 0 : i32
    %46 = arith.cmpi eq, %arg0, %c0_i32_44 : i32
    %47 = arith.extui %46 : i1 to i32
    %c0_i32_45 = arith.constant 0 : i32
    %48 = arith.cmpi ne, %47, %c0_i32_45 : i32
    scf.if %48 {
      %c0_46 = arith.constant 0 : index
      %c0_47 = arith.constant 0 : index
      %49 = vector.load %arg23[%c0_46, %c0_47] : memref<6x64xf32, #tpu.memory_space<vmem>>, vector<6x64xf32>
      %c0_48 = arith.constant 0 : index
      %c0_49 = arith.constant 0 : index
      %50 = vector.load %arg24[%c0_48, %c0_49] : memref<6x64xf32, #tpu.memory_space<vmem>>, vector<6x64xf32>
      %cst_50 = arith.constant 9.99999968E-21 : f32
      %51 = vector.broadcast %cst_50 : f32 to vector<6x64xf32>
      %52 = arith.addf %50, %51 : vector<6x64xf32>
      %53 = arith.divf %49, %52 : vector<6x64xf32>
      %c0_51 = arith.constant 0 : index
      %c0_52 = arith.constant 0 : index
      %54 = vector.load %arg25[%c0_51, %c0_52] : memref<6x64xf32, #tpu.memory_space<vmem>>, vector<6x64xf32>
      %55 = arith.addf %54, %53 : vector<6x64xf32>
      %c0_53 = arith.constant 0 : index
      %c0_54 = arith.constant 0 : index
      %56 = vector.load %arg12[%c0_53, %c0_54] : memref<64x16xf32, #tpu.memory_space<vmem>>, vector<64x16xf32>
      %cst_55 = arith.constant dense<0.000000e+00> : vector<6x16xf32>
      %57 = tpu.matmul %55, %56, %cst_55 {dimension_numbers = #tpu.dot_dimension_numbers<[1], [0], [0], [1], [0, 0, 1, 1], [], []>} : vector<6x64xf32>, vector<64x16xf32>, vector<6x16xf32> -> vector<6x16xf32>
      %c0_56 = arith.constant 0 : index
      %c0_57 = arith.constant 0 : index
      %58 = vector.load %arg13[%c0_56, %c0_57] : memref<1x16xf32, #tpu.memory_space<vmem>>, vector<1x16xf32>
      %59 = vector.broadcast %58 : vector<1x16xf32> to vector<6x16xf32>
      %60 = arith.addf %57, %59 : vector<6x16xf32>
      %cst_58 = arith.constant 0.000000e+00 : f32
      %61 = vector.broadcast %cst_58 : f32 to vector<6x16xf32>
      %62 = arith.maximumf %60, %61 : vector<6x16xf32>
      %c0_59 = arith.constant 0 : index
      %c0_60 = arith.constant 0 : index
      %63 = vector.load %arg16[%c0_59, %c0_60] : memref<1x16xf32, #tpu.memory_space<vmem>>, vector<1x16xf32>
      %64 = vector.broadcast %63 : vector<1x16xf32> to vector<6x16xf32>
      %65 = arith.subf %62, %64 : vector<6x16xf32>
      %c0_61 = arith.constant 0 : index
      %c0_62 = arith.constant 0 : index
      %66 = vector.load %arg17[%c0_61, %c0_62] : memref<1x16xf32, #tpu.memory_space<vmem>>, vector<1x16xf32>
      %cst_63 = arith.constant 9.99999974E-6 : f32
      %67 = vector.broadcast %cst_63 : f32 to vector<1x16xf32>
      %68 = arith.addf %66, %67 : vector<1x16xf32>
      %69 = math.rsqrt %68 : vector<1x16xf32>
      %70 = vector.broadcast %69 : vector<1x16xf32> to vector<6x16xf32>
      %71 = arith.mulf %65, %70 : vector<6x16xf32>
      %c0_64 = arith.constant 0 : index
      %c0_65 = arith.constant 0 : index
      %72 = vector.load %arg14[%c0_64, %c0_65] : memref<1x16xf32, #tpu.memory_space<vmem>>, vector<1x16xf32>
      %73 = vector.broadcast %72 : vector<1x16xf32> to vector<6x16xf32>
      %74 = arith.mulf %71, %73 : vector<6x16xf32>
      %c0_66 = arith.constant 0 : index
      %c0_67 = arith.constant 0 : index
      %75 = vector.load %arg15[%c0_66, %c0_67] : memref<1x16xf32, #tpu.memory_space<vmem>>, vector<1x16xf32>
      %76 = vector.broadcast %75 : vector<1x16xf32> to vector<6x16xf32>
      %77 = arith.addf %74, %76 : vector<6x16xf32>
      %c0_68 = arith.constant 0 : index
      %c0_69 = arith.constant 0 : index
      %78 = vector.load %arg18[%c0_68, %c0_69] : memref<6x16xf32, #tpu.memory_space<vmem>>, vector<6x16xf32>
      tpu.vector_store %arg18[%c0_68, %c0_69], %77 {strides = array<i32>} : memref<6x16xf32, #tpu.memory_space<vmem>>, vector<6x16xf32>,
    } else {
    }
    return
  }
  func.func @transform_0(%arg0: i32) -> (i32, i32) {
    %c0_i32 = arith.constant 0 : i32
    %c0_i32_0 = arith.constant 0 : i32
    %c0_i32_1 = arith.constant 0 : i32
    return %c0_i32, %c0_i32_0 : i32, i32
  }
  func.func @transform_1(%arg0: i32) -> (i32, i32) {
    %c0_i32 = arith.constant 0 : i32
    %c0_i32_0 = arith.constant 0 : i32
    return %arg0, %c0_i32 : i32, i32
  }
  func.func @transform_2(%arg0: i32) -> (i32, i32) {
    %c0_i32 = arith.constant 0 : i32
    %c0_i32_0 = arith.constant 0 : i32
    return %arg0, %c0_i32 : i32, i32
  }
  func.func @transform_3(%arg0: i32) -> (i32, i32) {
    %c0_i32 = arith.constant 0 : i32
    %c0_i32_0 = arith.constant 0 : i32
    return %arg0, %c0_i32 : i32, i32
  }
  func.func @transform_4(%arg0: i32) -> (i32, i32) {
    %c0_i32 = arith.constant 0 : i32
    %c0_i32_0 = arith.constant 0 : i32
    return %arg0, %c0_i32 : i32, i32
  }
  func.func @transform_5(%arg0: i32) -> (i32, i32) {
    %c0_i32 = arith.constant 0 : i32
    %c0_i32_0 = arith.constant 0 : i32
    return %arg0, %c0_i32 : i32, i32
  }
  func.func @transform_6(%arg0: i32) -> (i32, i32) {
    %c0_i32 = arith.constant 0 : i32
    %c0_i32_0 = arith.constant 0 : i32
    %c0_i32_1 = arith.constant 0 : i32
    return %c0_i32, %c0_i32_0 : i32, i32
  }
  func.func @transform_7(%arg0: i32) -> (i32, i32) {
    %c0_i32 = arith.constant 0 : i32
    %c0_i32_0 = arith.constant 0 : i32
    %c0_i32_1 = arith.constant 0 : i32
    return %c0_i32, %c0_i32_0 : i32, i32
  }
  func.func @transform_8(%arg0: i32) -> (i32, i32) {
    %c0_i32 = arith.constant 0 : i32
    %c0_i32_0 = arith.constant 0 : i32
    %c0_i32_1 = arith.constant 0 : i32
    return %c0_i32, %c0_i32_0 : i32, i32
  }
  func.func @transform_9(%arg0: i32) -> (i32, i32) {
    %c0_i32 = arith.constant 0 : i32
    %c0_i32_0 = arith.constant 0 : i32
    %c0_i32_1 = arith.constant 0 : i32
    return %c0_i32, %c0_i32_0 : i32, i32
  }
  func.func @transform_10(%arg0: i32) -> (i32, i32) {
    %c0_i32 = arith.constant 0 : i32
    %c0_i32_0 = arith.constant 0 : i32
    %c0_i32_1 = arith.constant 0 : i32
    return %c0_i32, %c0_i32_0 : i32, i32
  }
  func.func @transform_11(%arg0: i32) -> (i32, i32) {
    %c0_i32 = arith.constant 0 : i32
    %c0_i32_0 = arith.constant 0 : i32
    %c0_i32_1 = arith.constant 0 : i32
    return %c0_i32, %c0_i32_0 : i32, i32
  }
  func.func @transform_12(%arg0: i32) -> (i32, i32) {
    %c0_i32 = arith.constant 0 : i32
    %c0_i32_0 = arith.constant 0 : i32
    %c0_i32_1 = arith.constant 0 : i32
    return %c0_i32, %c0_i32_0 : i32, i32
  }
  func.func @transform_13(%arg0: i32) -> (i32, i32) {
    %c0_i32 = arith.constant 0 : i32
    %c0_i32_0 = arith.constant 0 : i32
    %c0_i32_1 = arith.constant 0 : i32
    return %c0_i32, %c0_i32_0 : i32, i32
  }
  func.func @transform_14(%arg0: i32) -> (i32, i32) {
    %c0_i32 = arith.constant 0 : i32
    %c0_i32_0 = arith.constant 0 : i32
    %c0_i32_1 = arith.constant 0 : i32
    return %c0_i32, %c0_i32_0 : i32, i32
  }
  func.func @transform_15(%arg0: i32) -> (i32, i32) {
    %c0_i32 = arith.constant 0 : i32
    %c0_i32_0 = arith.constant 0 : i32
    %c0_i32_1 = arith.constant 0 : i32
    return %c0_i32, %c0_i32_0 : i32, i32
  }
  func.func @transform_16(%arg0: i32) -> (i32, i32) {
    %c0_i32 = arith.constant 0 : i32
    %c0_i32_0 = arith.constant 0 : i32
    %c0_i32_1 = arith.constant 0 : i32
    return %c0_i32, %c0_i32_0 : i32, i32
  }
  func.func @transform_17(%arg0: i32) -> (i32, i32) {
    %c0_i32 = arith.constant 0 : i32
    %c0_i32_0 = arith.constant 0 : i32
    %c0_i32_1 = arith.constant 0 : i32
    return %c0_i32, %c0_i32_0 : i32, i32
  }
}

module attributes {stable_mosaic.version = 11 : i64} {
  func.func @_global_pool_kernel(%arg0: memref<4x16xf32, #tpu.memory_space<vmem>>, %arg1: memref<4x2xf32, #tpu.memory_space<vmem>>, %arg2: memref<2x1xf32, #tpu.memory_space<vmem>>, %arg3: memref<2x32xf32, #tpu.memory_space<vmem>>) attributes {dimension_semantics = [], scalar_prefetch = 0 : i64, scratch_operands = 0 : i64, tpu.core_type = #tpu.core_type<tc>} {
    %c0 = arith.constant 0 : index
    %c0_0 = arith.constant 0 : index
    %0 = vector.load %arg0[%c0, %c0_0] : memref<4x16xf32, #tpu.memory_space<vmem>>, vector<4x16xf32>
    %c0_1 = arith.constant 0 : index
    %c0_2 = arith.constant 0 : index
    %1 = vector.load %arg1[%c0_1, %c0_2] : memref<4x2xf32, #tpu.memory_space<vmem>>, vector<4x2xf32>
    %cst = arith.constant dense<0.000000e+00> : vector<2x16xf32>
    %2 = tpu.matmul %1, %0, %cst {dimension_numbers = #tpu.dot_dimension_numbers<[0], [0], [1], [1], [0, 1, 1, 1], [], []>} : vector<4x2xf32>, vector<4x16xf32>, vector<2x16xf32> -> vector<2x16xf32>
    %c0_3 = arith.constant 0 : index
    %c0_4 = arith.constant 0 : index
    %3 = vector.load %arg2[%c0_3, %c0_4] : memref<2x1xf32, #tpu.memory_space<vmem>>, vector<2x1xf32>
    %4 = vector.broadcast %3 : vector<2x1xf32> to vector<2x16xf32>
    %5 = arith.divf %2, %4 : vector<2x16xf32>
    %6 = vector.extract_strided_slice %1 {offsets = [0, 0], sizes = [4, 1], strides = [1, 1]} : vector<4x2xf32> to vector<4x1xf32>
    %cst_5 = arith.constant 0.000000e+00 : f32
    %7 = vector.broadcast %cst_5 : f32 to vector<4x1xf32>
    %8 = arith.cmpf ogt, %6, %7 : vector<4x1xf32>
    %cst_6 = arith.constant -1.000000e+30 : f32
    %9 = vector.shape_cast %8 : vector<4x1xi1> to vector<4x1xi1>
    %10 = vector.broadcast %9 : vector<4x1xi1> to vector<4x16xi1>
    %11 = vector.broadcast %cst_6 : f32 to vector<4x16xf32>
    %12 = arith.select %10, %0, %11 : vector<4x16xi1>, vector<4x16xf32>
    %cst_7 = arith.constant dense<0xFF800000> : vector<16xf32>
    %13 = vector.multi_reduction <maximumf>, %12, %cst_7 [0] : vector<4x16xf32> to vector<16xf32>
    %14 = vector.shape_cast %13 : vector<16xf32> to vector<1x16xf32>
    %15 = vector.extract_strided_slice %1 {offsets = [0, 1], sizes = [4, 1], strides = [1, 1]} : vector<4x2xf32> to vector<4x1xf32>
    %cst_8 = arith.constant 0.000000e+00 : f32
    %16 = vector.broadcast %cst_8 : f32 to vector<4x1xf32>
    %17 = arith.cmpf ogt, %15, %16 : vector<4x1xf32>
    %cst_9 = arith.constant -1.000000e+30 : f32
    %18 = vector.shape_cast %17 : vector<4x1xi1> to vector<4x1xi1>
    %19 = vector.broadcast %18 : vector<4x1xi1> to vector<4x16xi1>
    %20 = vector.broadcast %cst_9 : f32 to vector<4x16xf32>
    %21 = arith.select %19, %0, %20 : vector<4x16xi1>, vector<4x16xf32>
    %cst_10 = arith.constant dense<0xFF800000> : vector<16xf32>
    %22 = vector.multi_reduction <maximumf>, %21, %cst_10 [0] : vector<4x16xf32> to vector<16xf32>
    %23 = vector.shape_cast %22 : vector<16xf32> to vector<1x16xf32>
    %24 = tpu.concatenate %14, %23 in 0 : vector<1x16xf32>, vector<1x16xf32> -> vector<2x16xf32>
    %25 = tpu.concatenate %24, %5 in 1 : vector<2x16xf32>, vector<2x16xf32> -> vector<2x32xf32>
    %c0_11 = arith.constant 0 : index
    %c0_12 = arith.constant 0 : index
    %26 = vector.load %arg3[%c0_11, %c0_12] : memref<2x32xf32, #tpu.memory_space<vmem>>, vector<2x32xf32>
    tpu.vector_store %arg3[%c0_11, %c0_12], %25 {strides = array<i32>} : memref<2x32xf32, #tpu.memory_space<vmem>>, vector<2x32xf32>,
    return
  }
}

module attributes {stable_mosaic.version = 11 : i64} {
  func.func @_global_pool_kernel(%arg0: memref<6x16xf32, #tpu.memory_space<vmem>>, %arg1: memref<6x2xf32, #tpu.memory_space<vmem>>, %arg2: memref<2x1xf32, #tpu.memory_space<vmem>>, %arg3: memref<2x32xf32, #tpu.memory_space<vmem>>) attributes {dimension_semantics = [], scalar_prefetch = 0 : i64, scratch_operands = 0 : i64, tpu.core_type = #tpu.core_type<tc>} {
    %c0 = arith.constant 0 : index
    %c0_0 = arith.constant 0 : index
    %0 = vector.load %arg0[%c0, %c0_0] : memref<6x16xf32, #tpu.memory_space<vmem>>, vector<6x16xf32>
    %c0_1 = arith.constant 0 : index
    %c0_2 = arith.constant 0 : index
    %1 = vector.load %arg1[%c0_1, %c0_2] : memref<6x2xf32, #tpu.memory_space<vmem>>, vector<6x2xf32>
    %cst = arith.constant dense<0.000000e+00> : vector<2x16xf32>
    %2 = tpu.matmul %1, %0, %cst {dimension_numbers = #tpu.dot_dimension_numbers<[0], [0], [1], [1], [0, 1, 1, 1], [], []>} : vector<6x2xf32>, vector<6x16xf32>, vector<2x16xf32> -> vector<2x16xf32>
    %c0_3 = arith.constant 0 : index
    %c0_4 = arith.constant 0 : index
    %3 = vector.load %arg2[%c0_3, %c0_4] : memref<2x1xf32, #tpu.memory_space<vmem>>, vector<2x1xf32>
    %4 = vector.broadcast %3 : vector<2x1xf32> to vector<2x16xf32>
    %5 = arith.divf %2, %4 : vector<2x16xf32>
    %6 = vector.extract_strided_slice %1 {offsets = [0, 0], sizes = [6, 1], strides = [1, 1]} : vector<6x2xf32> to vector<6x1xf32>
    %cst_5 = arith.constant 0.000000e+00 : f32
    %7 = vector.broadcast %cst_5 : f32 to vector<6x1xf32>
    %8 = arith.cmpf ogt, %6, %7 : vector<6x1xf32>
    %cst_6 = arith.constant -1.000000e+30 : f32
    %9 = vector.shape_cast %8 : vector<6x1xi1> to vector<6x1xi1>
    %10 = vector.broadcast %9 : vector<6x1xi1> to vector<6x16xi1>
    %11 = vector.broadcast %cst_6 : f32 to vector<6x16xf32>
    %12 = arith.select %10, %0, %11 : vector<6x16xi1>, vector<6x16xf32>
    %cst_7 = arith.constant dense<0xFF800000> : vector<16xf32>
    %13 = vector.multi_reduction <maximumf>, %12, %cst_7 [0] : vector<6x16xf32> to vector<16xf32>
    %14 = vector.shape_cast %13 : vector<16xf32> to vector<1x16xf32>
    %15 = vector.extract_strided_slice %1 {offsets = [0, 1], sizes = [6, 1], strides = [1, 1]} : vector<6x2xf32> to vector<6x1xf32>
    %cst_8 = arith.constant 0.000000e+00 : f32
    %16 = vector.broadcast %cst_8 : f32 to vector<6x1xf32>
    %17 = arith.cmpf ogt, %15, %16 : vector<6x1xf32>
    %cst_9 = arith.constant -1.000000e+30 : f32
    %18 = vector.shape_cast %17 : vector<6x1xi1> to vector<6x1xi1>
    %19 = vector.broadcast %18 : vector<6x1xi1> to vector<6x16xi1>
    %20 = vector.broadcast %cst_9 : f32 to vector<6x16xf32>
    %21 = arith.select %19, %0, %20 : vector<6x16xi1>, vector<6x16xf32>
    %cst_10 = arith.constant dense<0xFF800000> : vector<16xf32>
    %22 = vector.multi_reduction <maximumf>, %21, %cst_10 [0] : vector<6x16xf32> to vector<16xf32>
    %23 = vector.shape_cast %22 : vector<16xf32> to vector<1x16xf32>
    %24 = tpu.concatenate %14, %23 in 0 : vector<1x16xf32>, vector<1x16xf32> -> vector<2x16xf32>
    %25 = tpu.concatenate %24, %5 in 1 : vector<2x16xf32>, vector<2x16xf32> -> vector<2x32xf32>
    %c0_11 = arith.constant 0 : index
    %c0_12 = arith.constant 0 : index
    %26 = vector.load %arg3[%c0_11, %c0_12] : memref<2x32xf32, #tpu.memory_space<vmem>>, vector<2x32xf32>
    tpu.vector_store %arg3[%c0_11, %c0_12], %25 {strides = array<i32>} : memref<2x32xf32, #tpu.memory_space<vmem>>, vector<2x32xf32>,
    return
  }
}

</mosaic_0001>

<llo_original>
// kernel: graph_encoder_forward.7
$region0: #{graph_encoder_forward.7}
  #allocation0 [shape = 'u32[]', space=smem, size = 0x4, offset = 0x4, fixed_abs, tag = 'smem constant byte address 0x4 - core index']
  #allocation1 [shape = 'u32[144,128]{1,0:T(1,128)}', space=vmem, size = 0x12000, scoped, tag = 'internal scratch']
  #allocation2 [shape = 'bf16[12,64]{1,0:T(8,128)(2,1)}', space=vmem, size = 0x1000, scoped, tag = 'scratch operand']
  #allocation3 [shape = 'bf16[12,64]{1,0:T(8,128)(2,1)}', space=vmem, size = 0x1000, scoped, tag = 'scratch operand']
  #allocation4 [shape = 'bf16[12,64]{1,0:T(8,128)(2,1)}', space=vmem, size = 0x1000, scoped, tag = 'scratch operand']
  #allocation5 [shape = 'bf16[12,64]{1,0:T(8,128)(2,1)}', space=vmem, size = 0x1000, scoped, tag = 'scratch operand']
  #allocation6 [shape = 'f32[12,64]{1,0:T(8,128)}', space=vmem, size = 0x2000, scoped, tag = 'scratch operand']
  #allocation7 [shape = 'f32[12,64]{1,0:T(8,128)}', space=vmem, size = 0x2000, scoped, tag = 'scratch operand']
  #allocation8 [shape = 'f32[12,64]{1,0:T(8,128)}', space=vmem, size = 0x2000, scoped, tag = 'scratch operand']
  %s0 = inlined_call_operand.vmem [shape: f32[12,16], index: 0, kind: input, shape index: {}]
  %s1 = inlined_call_operand.vmem [shape: bf16[64,12], index: 1, kind: input, shape index: {}]
  %s2 = inlined_call_operand.vmem [shape: bf16[64,12], index: 2, kind: input, shape index: {}]
  %s3 = inlined_call_operand.vmem [shape: f32[64,4], index: 3, kind: input, shape index: {}]
  %s4 = inlined_call_operand.vmem [shape: f32[64,1], index: 4, kind: input, shape index: {}]
  %s5 = inlined_call_operand.vmem [shape: f32[64,4], index: 5, kind: input, shape index: {}]
  %s6 = inlined_call_operand.vmem [shape: f32[16,320], index: 6, kind: input, shape index: {}]
  %s7 = inlined_call_operand.vmem [shape: f32[1,320], index: 7, kind: input, shape index: {}]
  %s8 = inlined_call_operand.vmem [shape: f32[4,64], index: 8, kind: input, shape index: {}]
  %s9 = inlined_call_operand.vmem [shape: f32[1,64], index: 9, kind: input, shape index: {}]
  %s10 = inlined_call_operand.vmem [shape: f32[4,64], index: 10, kind: input, shape index: {}]
  %s11 = inlined_call_operand.vmem [shape: f32[64,16], index: 11, kind: input, shape index: {}]
  %s12 = inlined_call_operand.vmem [shape: f32[1,16], index: 12, kind: input, shape index: {}]
  %s13 = inlined_call_operand.vmem [shape: f32[1,16], index: 13, kind: input, shape index: {}]
  %s14 = inlined_call_operand.vmem [shape: f32[1,16], index: 14, kind: input, shape index: {}]
  %s15 = inlined_call_operand.vmem [shape: f32[1,16], index: 15, kind: input, shape index: {}]
  %s16 = inlined_call_operand.vmem [shape: f32[1,16], index: 16, kind: input, shape index: {}]
  %s17 = inlined_call_operand.vmem [shape: f32[12,16], index: 17, kind: output, shape index: {}]
  %s18 = sld [smem:[#allocation0]]
  $region86: #{graph_encoder_forward.7} parent=0
    _
  %s20 = ssub.s32 1, %s18
  %s21 = scalar_select 0, %s20, %s18
  // Predicated region
  $region2: #{graph_encoder_forward.7} parent=0 // pred_check
    _
  $region3: #{graph_encoder_forward.7} parent=0 // pred_check_branch
    %23 = sbr.rel (0) target = $region5
  $region4: #{graph_encoder_forward.7} parent=0 // pred_region
    _
  $region5: #{graph_encoder_forward.7} parent=0 // pred_fallthru
    _
  // Predicated region
  $region6: #{graph_encoder_forward.7} parent=0 // pred_check
    _
  $region7: #{graph_encoder_forward.7} parent=0 // pred_check_branch
    %25 = sbr.rel (0) target = $region9
  $region8: #{graph_encoder_forward.7} parent=0 // pred_region
    _
  $region9: #{graph_encoder_forward.7} parent=0 // pred_fallthru
    _
  // Predicated region
  $region10: #{graph_encoder_forward.7} parent=0 // pred_check
    _
  $region11: #{graph_encoder_forward.7} parent=0 // pred_check_branch
    %27 = sbr.rel (0) target = $region13
  $region12: #{graph_encoder_forward.7} parent=0 // pred_region
    _
  $region13: #{graph_encoder_forward.7} parent=0 // pred_fallthru
    _
  // Predicated region
  $region14: #{graph_encoder_forward.7} parent=0 // pred_check
    _
  $region15: #{graph_encoder_forward.7} parent=0 // pred_check_branch
    %29 = sbr.rel (0) target = $region17
  $region16: #{graph_encoder_forward.7} parent=0 // pred_region
    _
  $region17: #{graph_encoder_forward.7} parent=0 // pred_fallthru
    _
  // Predicated region
  $region18: #{graph_encoder_forward.7} parent=0 // pred_check
    _
  $region19: #{graph_encoder_forward.7} parent=0 // pred_check_branch
    %31 = sbr.rel (0) target = $region21
  $region20: #{graph_encoder_forward.7} parent=0 // pred_region
    _
  $region21: #{graph_encoder_forward.7} parent=0 // pred_fallthru
    _
  // Predicated region
  $region22: #{graph_encoder_forward.7} parent=0 // pred_check
    _
  $region23: #{graph_encoder_forward.7} parent=0 // pred_check_branch
    %33 = sbr.rel (0) target = $region25
  $region24: #{graph_encoder_forward.7} parent=0 // pred_region
    _
  $region25: #{graph_encoder_forward.7} parent=0 // pred_fallthru
    _
  // Predicated region
  $region26: #{graph_encoder_forward.7} parent=0 // pred_check
    _
  $region27: #{graph_encoder_forward.7} parent=0 // pred_check_branch
    %35 = sbr.rel (0) target = $region29
  $region28: #{graph_encoder_forward.7} parent=0 // pred_region
    _
  $region29: #{graph_encoder_forward.7} parent=0 // pred_fallthru
    _
  // Predicated region
  $region30: #{graph_encoder_forward.7} parent=0 // pred_check
    _
  $region31: #{graph_encoder_forward.7} parent=0 // pred_check_branch
    %37 = sbr.rel (0) target = $region33
  $region32: #{graph_encoder_forward.7} parent=0 // pred_region
    _
  $region33: #{graph_encoder_forward.7} parent=0 // pred_fallthru
    _
  // Predicated region
  $region34: #{graph_encoder_forward.7} parent=0 // pred_check
    _
  $region35: #{graph_encoder_forward.7} parent=0 // pred_check_branch
    %39 = sbr.rel (0) target = $region37
  $region36: #{graph_encoder_forward.7} parent=0 // pred_region
    _
  $region37: #{graph_encoder_forward.7} parent=0 // pred_fallthru
    _
  // Predicated region
  $region38: #{graph_encoder_forward.7} parent=0 // pred_check
    _
  $region39: #{graph_encoder_forward.7} parent=0 // pred_check_branch
    %41 = sbr.rel (0) target = $region41
  $region40: #{graph_encoder_forward.7} parent=0 // pred_region
    _
  $region41: #{graph_encoder_forward.7} parent=0 // pred_fallthru
    _
  // Predicated region
  $region42: #{graph_encoder_forward.7} parent=0 // pred_check
    _
  $region43: #{graph_encoder_forward.7} parent=0 // pred_check_branch
    %43 = sbr.rel (0) target = $region45
  $region44: #{graph_encoder_forward.7} parent=0 // pred_region
    _
  $region45: #{graph_encoder_forward.7} parent=0 // pred_fallthru
    _
  // Predicated region
  $region46: #{graph_encoder_forward.7} parent=0 // pred_check
    _
  $region47: #{graph_encoder_forward.7} parent=0 // pred_check_branch
    %45 = sbr.rel (0) target = $region49
  $region48: #{graph_encoder_forward.7} parent=0 // pred_region
    _
  $region49: #{graph_encoder_forward.7} parent=0 // pred_fallthru
    _
  // Predicated region
  $region50: #{graph_encoder_forward.7} parent=0 // pred_check
    _
  $region51: #{graph_encoder_forward.7} parent=0 // pred_check_branch
    %47 = sbr.rel (0) target = $region53
  $region52: #{graph_encoder_forward.7} parent=0 // pred_region
    _
  $region53: #{graph_encoder_forward.7} parent=0 // pred_fallthru
    _
  // Predicated region
  $region54: #{graph_encoder_forward.7} parent=0 // pred_check
    _
  $region55: #{graph_encoder_forward.7} parent=0 // pred_check_branch
    %49 = sbr.rel (0) target = $region57
  $region56: #{graph_encoder_forward.7} parent=0 // pred_region
    _
  $region57: #{graph_encoder_forward.7} parent=0 // pred_fallthru
    _
  // Predicated region
  $region58: #{graph_encoder_forward.7} parent=0 // pred_check
    _
  $region59: #{graph_encoder_forward.7} parent=0 // pred_check_branch
    %51 = sbr.rel (0) target = $region61
  $region60: #{graph_encoder_forward.7} parent=0 // pred_region
    _
  $region61: #{graph_encoder_forward.7} parent=0 // pred_fallthru
    _
  // Predicated region
  $region62: #{graph_encoder_forward.7} parent=0 // pred_check
    _
  $region63: #{graph_encoder_forward.7} parent=0 // pred_check_branch
    %53 = sbr.rel (0) target = $region65
  $region64: #{graph_encoder_forward.7} parent=0 // pred_region
    _
  $region65: #{graph_encoder_forward.7} parent=0 // pred_fallthru
    _
  // Predicated region
  $region66: #{graph_encoder_forward.7} parent=0 // pred_check
    _
  $region67: #{graph_encoder_forward.7} parent=0 // pred_check_branch
    %55 = sbr.rel (0) target = $region69
  $region68: #{graph_encoder_forward.7} parent=0 // pred_region
    _
  $region69: #{graph_encoder_forward.7} parent=0 // pred_fallthru
    _
  %p57 = scmp.eq.s32.totalorder 0, 0
  // Predicated region
  $region70: #{graph_encoder_forward.7} parent=0 // pred_check
    %p58 = pneg %p57
  $region71: #{graph_encoder_forward.7} parent=0 // pred_check_branch
    %60 = sbr.rel (%p58) target = $region73
  $region72: #{graph_encoder_forward.7} parent=0 // pred_region
    %v61 = vld [vmem:[%s0] sm:$0xff]
    %v62 = vld [vmem:[%s0 + $0x8] sm:$0xf]
    %v63 = vld [vmem:[%s6] sm:$0xff]
    %v64 = vld [vmem:[%s6 + $0x8] sm:$0xff]
    %v65 = vld [vmem:[%s6 + $0x10] sm:$0xff]
    %v66 = vld [vmem:[%s6 + $0x18] sm:$0xff]
    %v67 = vld [vmem:[%s6 + $0x20] sm:$0xff]
    %v68 = vld [vmem:[%s6 + $0x28] sm:$0xff]
    %v69 = vld [vmem:[%s7] sm:$0x7]
    %v71 = vlaneseq
    %v72 = vshrl.u32 %v71, 7
    %v73 = vsub.s32 0, %v72
    %v74 = vrot.slane %v69, %v73
    %v75 = vlaneseq
    %v76 = vshrl.u32 %v75, 7
    %v77 = vsub.s32 1, %v76
    %v78 = vrot.slane %v69, %v77
    %v79 = vlaneseq
    %v80 = vshrl.u32 %v79, 7
    %v81 = vsub.s32 2, %v80
    %v82 = vrot.slane %v69, %v81
    %vm86 = vcmask 130048
    %v88 = vsel %vm86, %v61, 0
    %v91 = vsel %vm86, %v62, 0
    %93 = vmatprep.subr.mxu0 %v64
    %94 = vmatpush1.msra.mxu0 %v63
    %95 = vmatprep.subr.mxu0 %v67
    %96 = vmatpush1.msra.mxu0 %v66
    %97 = vmatprep.subr.mxu0 0.0
    %98 = vmatpush1.msra.mxu0 0.0
    %99 = vmatprep.subr.mxu0 0.0
    %100 = vmatpush1.msra.mxu0 0.0
    %101 = vmatprep.subr.mxu0 0.0
    %102 = vmatpush1.msra.mxu0 0.0
    %103 = vmatprep.subr.mxu0 0.0
    %104 = vmatpush1.msra.mxu0 0.0
    %105 = vmatprep.subr.mxu0 0.0
    %106 = vmatpush1.msra.mxu0 0.0
    %107 = vmatprep.subr.mxu0 0.0
    %108 = vmatpush1.msra.mxu0 0.0
    %109 = vmatprep.subr.mxu0 0.0
    %110 = vmatpush1.msra.mxu0 0.0
    %111 = vmatprep.subr.mxu0 0.0
    %112 = vmatpush1.msra.mxu0 0.0
    %113 = vmatprep.subr.mxu0 0.0
    %114 = vmatpush1.msra.mxu0 0.0
    %115 = vmatprep.subr.mxu0 0.0
    %116 = vmatpush1.msra.mxu0 0.0
    %117 = vmatprep.subr.mxu0 0.0
    %118 = vmatpush1.msra.mxu0 0.0
    %119 = vmatprep.subr.mxu0 0.0
    %120 = vmatpush1.msra.mxu0 0.0
    %121 = vmatprep.subr.mxu0 0.0
    %122 = vmatpush1.msra.mxu0 0.0
    %123 = vmatprep.subr.mxu0 0.0
    %124 = vmatpush1.msra.mxu0 0.0
    %125 = vmatprep.subr.mxu0 0.0
    %126 = vmatpush1.msra.mxu0 0.0
    %127 = vmatprep.subr.mxu0 0.0
    %128 = vmatpush1.msra.mxu0 0.0
    %129 = vmatprep.subr.mxu0 0.0
    %130 = vmatpush1.msra.mxu0 0.0
    %131 = vmatprep.subr.mxu0 0.0
    %132 = vmatpush1.msra.mxu0 0.0
    %133 = vmatprep.subr.mxu0 0.0
    %134 = vmatpush1.msra.mxu0 0.0
    %135 = vmatprep.subr.mxu0 0.0
    %136 = vmatpush1.msra.mxu0 0.0
    %137 = vmatprep.subr.mxu0 0.0
    %138 = vmatpush1.msra.mxu0 0.0
    %139 = vmatprep.subr.mxu0 0.0
    %140 = vmatpush1.msra.mxu0 0.0
    %141 = vmatprep.subr.mxu0 0.0
    %142 = vmatpush1.msra.mxu0 0.0
    %143 = vmatprep.subr.mxu0 0.0
    %144 = vmatpush1.msra.mxu0 0.0
    %145 = vmatprep.subr.mxu0 0.0
    %146 = vmatpush1.msra.mxu0 0.0
    %147 = vmatprep.subr.mxu0 0.0
    %148 = vmatpush1.msra.mxu0 0.0
    %149 = vmatprep.subr.mxu0 0.0
    %150 = vmatpush1.msra.mxu0 0.0
    %151 = vmatprep.subr.mxu0 0.0
    %152 = vmatpush1.msra.mxu0 0.0
    %153 = vmatprep.subr.mxu0 0.0
    %154 = vmatpush1.msra.mxu0 0.0
    %155 = vmatprep.subr.mxu0 0.0
    %156 = vmatpush1.msra.mxu0 0.0
    %157 = vmatprep.mubr.f32.mxu0 0.0
    %158 = vmatmul.mubr.f32.gmra.mrb[0].mxu0 %v88
    %v159 = vpop.f32.mrb[0].mxu0
    %v160 = vadd.f32 %v74, %v159
    %v161 = vpop.f32.mrb[0].mxu0
    %v162 = vadd.f32 %v78, %v161
    %163 = vmatprep.mubr.f32.mxu0 0.0
    %164 = vmatmul.mubr.f32.gmra.mrb[0].mxu0 %v91
    %v165 = vpop.f32.mrb[0].mxu0
    %v166 = vadd.f32 %v74, %v165
    %v167 = vpop.f32.mrb[0].mxu0
    %v168 = vadd.f32 %v78, %v167
    %169 = vdwg.mxu0
    %170 = vmatprep.subr.mxu0 0.0
    %171 = vmatpush1.msra.mxu0 %v65
    %172 = vmatprep.subr.mxu0 0.0
    %173 = vmatpush1.msra.mxu0 %v68
    %174 = vmatprep.subr.mxu0 0.0
    %175 = vmatpush1.msra.mxu0 0.0
    %176 = vmatprep.subr.mxu0 0.0
    %177 = vmatpush1.msra.mxu0 0.0
    %178 = vmatprep.subr.mxu0 0.0
    %179 = vmatpush1.msra.mxu0 0.0
    %180 = vmatprep.subr.mxu0 0.0
    %181 = vmatpush1.msra.mxu0 0.0
    %182 = vmatprep.subr.mxu0 0.0
    %183 = vmatpush1.msra.mxu0 0.0
    %184 = vmatprep.subr.mxu0 0.0
    %185 = vmatpush1.msra.mxu0 0.0
    %186 = vmatprep.subr.mxu0 0.0
    %187 = vmatpush1.msra.mxu0 0.0
    %188 = vmatprep.subr.mxu0 0.0
    %189 = vmatpush1.msra.mxu0 0.0
    %190 = vmatprep.subr.mxu0 0.0
    %191 = vmatpush1.msra.mxu0 0.0
    %192 = vmatprep.subr.mxu0 0.0
    %193 = vmatpush1.msra.mxu0 0.0
    %194 = vmatprep.subr.mxu0 0.0
    %195 = vmatpush1.msra.mxu0 0.0
    %196 = vmatprep.subr.mxu0 0.0
    %197 = vmatpush1.msra.mxu0 0.0
    %198 = vmatprep.subr.mxu0 0.0
    %199 = vmatpush1.msra.mxu0 0.0
    %200 = vmatprep.subr.mxu0 0.0
    %201 = vmatpush1.msra.mxu0 0.0
    %202 = vmatprep.subr.mxu0 0.0
    %203 = vmatpush1.msra.mxu0 0.0
    %204 = vmatprep.subr.mxu0 0.0
    %205 = vmatpush1.msra.mxu0 0.0
    %206 = vmatprep.subr.mxu0 0.0
    %207 = vmatpush1.msra.mxu0 0.0
    %208 = vmatprep.subr.mxu0 0.0
    %209 = vmatpush1.msra.mxu0 0.0
    %210 = vmatprep.subr.mxu0 0.0
    %211 = vmatpush1.msra.mxu0 0.0
    %212 = vmatprep.subr.mxu0 0.0
    %213 = vmatpush1.msra.mxu0 0.0
    %214 = vmatprep.subr.mxu0 0.0
    %215 = vmatpush1.msra.mxu0 0.0
    %216 = vmatprep.subr.mxu0 0.0
    %217 = vmatpush1.msra.mxu0 0.0
    %218 = vmatprep.subr.mxu0 0.0
    %219 = vmatpush1.msra.mxu0 0.0
    %220 = vmatprep.subr.mxu0 0.0
    %221 = vmatpush1.msra.mxu0 0.0
    %222 = vmatprep.subr.mxu0 0.0
    %223 = vmatpush1.msra.mxu0 0.0
    %224 = vmatprep.subr.mxu0 0.0
    %225 = vmatpush1.msra.mxu0 0.0
    %226 = vmatprep.subr.mxu0 0.0
    %227 = vmatpush1.msra.mxu0 0.0
    %228 = vmatprep.subr.mxu0 0.0
    %229 = vmatpush1.msra.mxu0 0.0
    %230 = vmatprep.subr.mxu0 0.0
    %231 = vmatpush1.msra.mxu0 0.0
    %232 = vmatprep.subr.mxu0 0.0
    %233 = vmatpush1.msra.mxu0 0.0
    %234 = vmatprep.mubr.f32.mxu0 0.0
    %235 = vmatmul.mubr.f32.gmra.mrb[0].mxu0 %v88
    %v236 = vpop.f32.mrb[0].mxu0
    %v237 = vadd.f32 %v82, %v236
    %v238 = vpop.f32.mrb[0].mxu0
    %239 = vmatprep.mubr.f32.mxu0 0.0
    %240 = vmatmul.mubr.f32.gmra.mrb[0].mxu0 %v91
    %v241 = vpop.f32.mrb[0].mxu0
    %v242 = vadd.f32 %v82, %v241
    %v243 = vpop.f32.mrb[0].mxu0
    %244 = vdwg.mxu0
    %v245 = vpack.c.bf16 %v166, %v160
    %v247 = vunpack.c.l.b16 %v245
    %v248 = vunpack.c.h.b16 %v245
    %v249 = vpack.c.b16 %v247, %v247
    %v250 = vpack.c.b16 %v248, %v248
    %vm253 = vcmask 519168
    %254 = vst.msk [vmem:[#allocation2] sm:$0xf] %vm253, %v249
    %vm255 = vcmask 517120
    %256 = vst.msk [vmem:[#allocation2 + $0x4] sm:$0x3] %vm255, %v250
    %257 = vrot.lane.b32.xlu0 %v249, 64
    %v258 = vpop.permute.xlu0 %257
    %259 = vrot.lane.b32.xlu0 %v250, 64
    %v260 = vpop.permute.xlu0 %259
    %263 = vst.msk [vmem:[#allocation3] sm:$0xf] %vm253, %v258
    %264 = vst.msk [vmem:[#allocation3 + $0x4] sm:$0x3] %vm255, %v260
    %v265 = vpack.c.bf16 %v168, %v162
    %v267 = vunpack.c.l.b16 %v265
    %v268 = vunpack.c.h.b16 %v265
    %v269 = vpack.c.b16 %v267, %v267
    %v270 = vpack.c.b16 %v268, %v268
    %273 = vst.msk [vmem:[#allocation4] sm:$0xf] %vm253, %v269
    %274 = vst.msk [vmem:[#allocation4 + $0x4] sm:$0x3] %vm255, %v270
    %v275 = vpack.c.bf16 %v242, %v237
    %v277 = vunpack.c.l.b16 %v275
    %v278 = vunpack.c.h.b16 %v275
    %v279 = vpack.c.b16 %v277, %v277
    %v280 = vpack.c.b16 %v278, %v278
    %283 = vst.msk [vmem:[#allocation5] sm:$0xf] %vm253, %v279
    %284 = vst.msk [vmem:[#allocation5 + $0x4] sm:$0x3] %vm255, %v280
    %v285 = vld [vmem:[%s9] sm:$0x1]
    %v287 = vlaneseq
    %v288 = vshrl.u32 %v287, 7
    %v289 = vsub.s32 0, %v288
    %v290 = vrot.slane %v285, %v289
    %291 = vrot.lane.b32.xlu0 %v290, 64
    %v292 = vpop.permute.xlu0 %291
    %v294 = vadd.f32 %v162, %v292
    %v295 = vadd.f32 %v168, %v292
    %298 = vrot.lane.b32.xlu0 %v294, 64
    %v299 = vpop.permute.xlu0 %298
    %300 = vrot.lane.b32.xlu0 %v295, 64
    %v301 = vpop.permute.xlu0 %300
    %vm304 = vcmask 523264
    %305 = vst.msk [vmem:[#allocation8] sm:$0xff] %vm304, %v299
    %306 = vst.msk [vmem:[#allocation8 + $0x8] sm:$0xf] %vm253, %v301
    %307 = vst.msk [vmem:[#allocation6] sm:$0xff] %vm304, 0.0
    %308 = vst.msk [vmem:[#allocation6 + $0x8] sm:$0xf] %vm253, 0.0
    %309 = vst.msk [vmem:[#allocation7] sm:$0xff] %vm304, 0.0
    %310 = vst.msk [vmem:[#allocation7 + $0x8] sm:$0xf] %vm253, 0.0
  $region73: #{graph_encoder_forward.7} parent=0 // pred_fallthru
    _
  %v311 = vld [vmem:[%s1] sm:$0xf]
  %v312 = vld [vmem:[%s1 + $0x4] sm:$0xf]
  %v313 = vld [vmem:[%s1 + $0x8] sm:$0xf]
  %v314 = vld [vmem:[%s1 + $0xc] sm:$0xf]
  %v315 = vld [vmem:[%s1 + $0x10] sm:$0xf]
  %v316 = vld [vmem:[%s1 + $0x14] sm:$0xf]
  %v317 = vld [vmem:[%s1 + $0x18] sm:$0xf]
  %v318 = vld [vmem:[%s1 + $0x1c] sm:$0xf]
  %v319 = vld [vmem:[%s2] sm:$0xf]
  %v320 = vld [vmem:[%s2 + $0x4] sm:$0xf]
  %v321 = vld [vmem:[%s2 + $0x8] sm:$0xf]
  %v322 = vld [vmem:[%s2 + $0xc] sm:$0xf]
  %v323 = vld [vmem:[%s2 + $0x10] sm:$0xf]
  %v324 = vld [vmem:[%s2 + $0x14] sm:$0xf]
  %v325 = vld [vmem:[%s2 + $0x18] sm:$0xf]
  %v326 = vld [vmem:[%s2 + $0x1c] sm:$0xf]
  %v327 = vld [vmem:[%s3] sm:$0xff]
  %v328 = vld [vmem:[%s3 + $0x8] sm:$0xff]
  %v329 = vld [vmem:[%s3 + $0x10] sm:$0xff]
  %v330 = vld [vmem:[%s3 + $0x18] sm:$0xff]
  %v331 = vld [vmem:[%s3 + $0x20] sm:$0xff]
  %v332 = vld [vmem:[%s3 + $0x28] sm:$0xff]
  %v333 = vld [vmem:[%s3 + $0x30] sm:$0xff]
  %v334 = vld [vmem:[%s3 + $0x38] sm:$0xff]
  %v335 = vld [vmem:[%s4] sm:$0xff]
  %v336 = vld [vmem:[%s4 + $0x8] sm:$0xff]
  %v337 = vld [vmem:[%s4 + $0x10] sm:$0xff]
  %v338 = vld [vmem:[%s4 + $0x18] sm:$0xff]
  %v339 = vld [vmem:[%s4 + $0x20] sm:$0xff]
  %v340 = vld [vmem:[%s4 + $0x28] sm:$0xff]
  %v341 = vld [vmem:[%s4 + $0x30] sm:$0xff]
  %v342 = vld [vmem:[%s4 + $0x38] sm:$0xff]
  %v343 = vld [vmem:[%s5] sm:$0xff]
  %v344 = vld [vmem:[%s5 + $0x8] sm:$0xff]
  %v345 = vld [vmem:[%s5 + $0x10] sm:$0xff]
  %v346 = vld [vmem:[%s5 + $0x18] sm:$0xff]
  %v347 = vld [vmem:[%s5 + $0x20] sm:$0xff]
  %v348 = vld [vmem:[%s5 + $0x28] sm:$0xff]
  %v349 = vld [vmem:[%s5 + $0x30] sm:$0xff]
  %v350 = vld [vmem:[%s5 + $0x38] sm:$0xff]
  %v351 = vld [vmem:[%s10] sm:$0xf]
  %v352 = vld [vmem:[#allocation5] sm:$0xf]
  %v353 = vld [vmem:[#allocation5 + $0x4] sm:$0x3]
  %v362 = vunpack.c.l.b16 %v311
  %v363 = vunpack.c.l.b16 %v312
  %v364 = vunpack.c.l.b16 %v313
  %v365 = vunpack.c.l.b16 %v314
  %v366 = vunpack.c.l.b16 %v315
  %v367 = vunpack.c.l.b16 %v316
  %v368 = vunpack.c.l.b16 %v317
  %v369 = vunpack.c.l.b16 %v318
  %v370 = vpack.c.b16 %v363, %v362
  %v371 = vpack.c.b16 %v365, %v364
  %v372 = vpack.c.b16 %v367, %v366
  %v373 = vpack.c.b16 %v369, %v368
  %v376 = vunpack.c.l.b16 %v352
  %v377 = vunpack.c.l.b16 %v353
  %v378 = vpack.c.b16 %v377, %v376
  %vm379 = vcmask 97280
  %v381 = vsel %vm379, %v370, 0
  %v384 = vsel %vm379, %v371, 0
  %v387 = vsel %vm379, %v372, 0
  %v390 = vsel %vm379, %v373, 0
  %vm392 = vcmask 1045504
  %v394 = vsel %vm392, %v378, 0
  %396 = vmatprep.subr.bf16.mxu0 0
  %397 = vmatpush1.bf16.msra.mxu0 %v394
  %398 = vmatprep.subr.bf16.mxu0 0
  %399 = vmatpush1.bf16.msra.mxu0 0
  %400 = vmatprep.subr.bf16.mxu0 0
  %401 = vmatpush1.bf16.msra.mxu0 0
  %402 = vmatprep.subr.bf16.mxu0 0
  %403 = vmatpush1.bf16.msra.mxu0 0
  %404 = vmatprep.subr.bf16.mxu0 0
  %405 = vmatpush1.bf16.msra.mxu0 0
  %406 = vmatprep.subr.bf16.mxu0 0
  %407 = vmatpush1.bf16.msra.mxu0 0
  %408 = vmatprep.subr.bf16.mxu0 0
  %409 = vmatpush1.bf16.msra.mxu0 0
  %410 = vmatprep.subr.bf16.mxu0 0
  %411 = vmatpush1.bf16.msra.mxu0 0
  %412 = vmatprep.subr.bf16.mxu0 0
  %413 = vmatpush1.bf16.msra.mxu0 0
  %414 = vmatprep.subr.bf16.mxu0 0
  %415 = vmatpush1.bf16.msra.mxu0 0
  %416 = vmatprep.subr.bf16.mxu0 0
  %417 = vmatpush1.bf16.msra.mxu0 0
  %418 = vmatprep.subr.bf16.mxu0 0
  %419 = vmatpush1.bf16.msra.mxu0 0
  %420 = vmatprep.subr.bf16.mxu0 0
  %421 = vmatpush1.bf16.msra.mxu0 0
  %422 = vmatprep.subr.bf16.mxu0 0
  %423 = vmatpush1.bf16.msra.mxu0 0
  %424 = vmatprep.subr.bf16.mxu0 0
  %425 = vmatpush1.bf16.msra.mxu0 0
  %426 = vmatprep.subr.bf16.mxu0 0
  %427 = vmatpush1.bf16.msra.mxu0 0
  %428 = vmatprep.mubr.bf16.mxu0 0
  %429 = vmatmul.mubr.bf16.gmra.mrb[0].mxu0 %v381
  %v430 = vpop.f32.mrb[0].mxu0
  %v431 = vadd.f32 0.0, %v430
  %v432 = vpop.f32.mrb[0].mxu0
  %v433 = vpop.f32.mrb[0].mxu0
  %v434 = vadd.f32 0.0, %v433
  %v435 = vpop.f32.mrb[0].mxu0
  %436 = vmatprep.mubr.bf16.mxu0 0
  %437 = vmatmul.mubr.bf16.gmra.mrb[0].mxu0 %v384
  %v438 = vpop.f32.mrb[0].mxu0
  %v439 = vadd.f32 0.0, %v438
  %v440 = vpop.f32.mrb[0].mxu0
  %v441 = vpop.f32.mrb[0].mxu0
  %v442 = vadd.f32 0.0, %v441
  %v443 = vpop.f32.mrb[0].mxu0
  %444 = vmatprep.mubr.bf16.mxu0 0
  %445 = vmatmul.mubr.bf16.gmra.mrb[0].mxu0 %v387
  %v446 = vpop.f32.mrb[0].mxu0
  %v447 = vadd.f32 0.0, %v446
  %v448 = vpop.f32.mrb[0].mxu0
  %v449 = vpop.f32.mrb[0].mxu0
  %v450 = vadd.f32 0.0, %v449
  %v451 = vpop.f32.mrb[0].mxu0
  %452 = vmatprep.mubr.bf16.mxu0 0
  %453 = vmatmul.mubr.bf16.gmra.mrb[0].mxu0 %v390
  %v454 = vpop.f32.mrb[0].mxu0
  %v455 = vadd.f32 0.0, %v454
  %v456 = vpop.f32.mrb[0].mxu0
  %v457 = vpop.f32.mrb[0].mxu0
  %v458 = vadd.f32 0.0, %v457
  %v459 = vpop.f32.mrb[0].mxu0
  %460 = vdwg.mxu0
  %v461 = vld [vmem:[#allocation8] sm:$0xff]
  %v462 = vld [vmem:[#allocation8 + $0x8] sm:$0xf]
  %464 = vset.pattern.permute.xlu0 0
  %465 = vperm.xlu0 %464, %v335
  %v466 = vpop.permute.xlu0 %465
  %469 = vset.pattern.permute.xlu0 0
  %470 = vperm.xlu0 %469, %v336
  %v471 = vpop.permute.xlu0 %470
  %474 = vset.pattern.permute.xlu0 0
  %475 = vperm.xlu0 %474, %v337
  %v476 = vpop.permute.xlu0 %475
  %479 = vset.pattern.permute.xlu0 0
  %480 = vperm.xlu0 %479, %v338
  %v481 = vpop.permute.xlu0 %480
  %484 = vset.pattern.permute.xlu0 0
  %485 = vperm.xlu0 %484, %v339
  %v486 = vpop.permute.xlu0 %485
  %489 = vset.pattern.permute.xlu0 0
  %490 = vperm.xlu0 %489, %v340
  %v491 = vpop.permute.xlu0 %490
  %494 = vset.pattern.permute.xlu0 0
  %495 = vperm.xlu0 %494, %v341
  %v496 = vpop.permute.xlu0 %495
  %499 = vset.pattern.permute.xlu0 0
  %500 = vperm.xlu0 %499, %v342
  %v501 = vpop.permute.xlu0 %500
  %v503 = vmul.f32 %v466, %v431
  %v504 = vmul.f32 %v471, %v434
  %v505 = vmul.f32 %v476, %v439
  %v506 = vmul.f32 %v481, %v442
  %v507 = vmul.f32 %v486, %v447
  %v508 = vmul.f32 %v491, %v450
  %v509 = vmul.f32 %v496, %v455
  %v510 = vmul.f32 %v501, %v458
  %v511 = vpack.c.bf16 %v504, %v503
  %v512 = vpack.c.bf16 %v506, %v505
  %v513 = vpack.c.bf16 %v508, %v507
  %v514 = vpack.c.bf16 %v510, %v509
  %v523 = vunpack.c.l.b16 %v319
  %v524 = vunpack.c.l.b16 %v320
  %v525 = vunpack.c.l.b16 %v321
  %v526 = vunpack.c.l.b16 %v322
  %v527 = vunpack.c.l.b16 %v323
  %v528 = vunpack.c.l.b16 %v324
  %v529 = vunpack.c.l.b16 %v325
  %v530 = vunpack.c.l.b16 %v326
  %v531 = vpack.c.b16 %v524, %v523
  %v532 = vpack.c.b16 %v526, %v525
  %v533 = vpack.c.b16 %v528, %v527
  %v534 = vpack.c.b16 %v530, %v529
  %539 = vxpose.xlu0.c.b16.start [1/8] %v531, 128
  %540 = vxpose.xlu0.c.b16.cont [2/8] %v532, 128
  %541 = vxpose.xlu0.c.b16.cont [3/8] %v533, 128
  %542 = vxpose.xlu0.c.b16.cont [4/8] %v534, 128
  %543 = vxpose.xlu0.c.b16.cont [5/8] 0, 128
  %544 = vxpose.xlu0.c.b16.cont [6/8] 0, 128
  %545 = vxpose.xlu0.c.b16.cont [7/8] 0, 128
  %546 = vxpose.xlu0.c.b16.end [8/8] 0, 128
  %v547 = vpop.trf.xlu0
  %v548 = vpop.trf.xlu0
  %v549 = vpop.trf.xlu0
  %v550 = vpop.trf.xlu0
  %v551 = vpop.trf.xlu0
  %v552 = vpop.trf.xlu0
  %v553 = vpop.trf.xlu0
  %v554 = vpop.trf.xlu0
  %vm555 = vcmask 523264
  %v557 = vsel %vm555, %v547, 0
  %559 = vmatprep.subr.bf16.mxu0 0
  %560 = vmatpush1.bf16.msra.mxu0 %v511
  %561 = vmatprep.subr.bf16.mxu0 0
  %562 = vmatpush1.bf16.msra.mxu0 %v512
  %563 = vmatprep.subr.bf16.mxu0 0
  %564 = vmatpush1.bf16.msra.mxu0 %v513
  %565 = vmatprep.subr.bf16.mxu0 0
  %566 = vmatpush1.bf16.msra.mxu0 %v514
  %567 = vmatprep.subr.bf16.mxu0 0
  %568 = vmatpush1.bf16.msra.mxu0 0
  %569 = vmatprep.subr.bf16.mxu0 0
  %570 = vmatpush1.bf16.msra.mxu0 0
  %571 = vmatprep.subr.bf16.mxu0 0
  %572 = vmatpush1.bf16.msra.mxu0 0
  %573 = vmatprep.subr.bf16.mxu0 0
  %574 = vmatpush1.bf16.msra.mxu0 0
  %575 = vmatprep.subr.bf16.mxu0 0
  %576 = vmatpush1.bf16.msra.mxu0 0
  %577 = vmatprep.subr.bf16.mxu0 0
  %578 = vmatpush1.bf16.msra.mxu0 0
  %579 = vmatprep.subr.bf16.mxu0 0
  %580 = vmatpush1.bf16.msra.mxu0 0
  %581 = vmatprep.subr.bf16.mxu0 0
  %582 = vmatpush1.bf16.msra.mxu0 0
  %583 = vmatprep.subr.bf16.mxu0 0
  %584 = vmatpush1.bf16.msra.mxu0 0
  %585 = vmatprep.subr.bf16.mxu0 0
  %586 = vmatpush1.bf16.msra.mxu0 0
  %587 = vmatprep.subr.bf16.mxu0 0
  %588 = vmatpush1.bf16.msra.mxu0 0
  %589 = vmatprep.subr.bf16.mxu0 0
  %590 = vmatpush1.bf16.msra.mxu0 0
  %591 = vmatprep.mubr.bf16.mxu0 0
  %592 = vmatmul.mubr.bf16.gmra.mrb[0].mxu0 %v557
  %v593 = vpop.f32.mrb[0].mxu0
  %v594 = vadd.f32 0.0, %v593
  %v595 = vpop.f32.mrb[0].mxu0
  %v596 = vpop.f32.mrb[0].mxu0
  %v597 = vadd.f32 0.0, %v596
  %v598 = vpop.f32.mrb[0].mxu0
  %599 = vdwg.mxu0
  %v600 = vadd.f32 %v461, %v594
  %v601 = vadd.f32 %v462, %v597
  %602 = vst.msk [vmem:[#allocation8] sm:$0xff] %vm555, %v600
  %vm603 = vcmask 519168
  %604 = vst.msk [vmem:[#allocation8 + $0x8] sm:$0xf] %vm603, %v601
  %v605 = vld [vmem:[%s8] sm:$0xf]
  %vm606 = vcmask 31744
  %v608 = vsel %vm606, %v327, 0
  %v611 = vsel %vm606, %v328, 0
  %v614 = vsel %vm606, %v329, 0
  %v617 = vsel %vm606, %v330, 0
  %v620 = vsel %vm606, %v331, 0
  %v623 = vsel %vm606, %v332, 0
  %v626 = vsel %vm606, %v333, 0
  %v629 = vsel %vm606, %v334, 0
  %vm631 = vcmask 1043456
  %v633 = vsel %vm631, %v605, 0
  %635 = vmatprep.subr.mxu0 0.0
  %636 = vmatpush1.msra.mxu0 %v633
  %637 = vmatprep.subr.mxu0 0.0
  %638 = vmatpush1.msra.mxu0 0.0
  %639 = vmatprep.subr.mxu0 0.0
  %640 = vmatpush1.msra.mxu0 0.0
  %641 = vmatprep.subr.mxu0 0.0
  %642 = vmatpush1.msra.mxu0 0.0
  %643 = vmatprep.subr.mxu0 0.0
  %644 = vmatpush1.msra.mxu0 0.0
  %645 = vmatprep.subr.mxu0 0.0
  %646 = vmatpush1.msra.mxu0 0.0
  %647 = vmatprep.subr.mxu0 0.0
  %648 = vmatpush1.msra.mxu0 0.0
  %649 = vmatprep.subr.mxu0 0.0
  %650 = vmatpush1.msra.mxu0 0.0
  %651 = vmatprep.subr.mxu0 0.0
  %652 = vmatpush1.msra.mxu0 0.0
  %653 = vmatprep.subr.mxu0 0.0
  %654 = vmatpush1.msra.mxu0 0.0
  %655 = vmatprep.subr.mxu0 0.0
  %656 = vmatpush1.msra.mxu0 0.0
  %657 = vmatprep.subr.mxu0 0.0
  %658 = vmatpush1.msra.mxu0 0.0
  %659 = vmatprep.subr.mxu0 0.0
  %660 = vmatpush1.msra.mxu0 0.0
  %661 = vmatprep.subr.mxu0 0.0
  %662 = vmatpush1.msra.mxu0 0.0
  %663 = vmatprep.subr.mxu0 0.0
  %664 = vmatpush1.msra.mxu0 0.0
  %665 = vmatprep.subr.mxu0 0.0
  %666 = vmatpush1.msra.mxu0 0.0
  %667 = vmatprep.subr.mxu0 0.0
  %668 = vmatpush1.msra.mxu0 0.0
  %669 = vmatprep.subr.mxu0 0.0
  %670 = vmatpush1.msra.mxu0 0.0
  %671 = vmatprep.subr.mxu0 0.0
  %672 = vmatpush1.msra.mxu0 0.0
  %673 = vmatprep.subr.mxu0 0.0
  %674 = vmatpush1.msra.mxu0 0.0
  %675 = vmatprep.subr.mxu0 0.0
  %676 = vmatpush1.msra.mxu0 0.0
  %677 = vmatprep.subr.mxu0 0.0
  %678 = vmatpush1.msra.mxu0 0.0
  %679 = vmatprep.subr.mxu0 0.0
  %680 = vmatpush1.msra.mxu0 0.0
  %681 = vmatprep.subr.mxu0 0.0
  %682 = vmatpush1.msra.mxu0 0.0
  %683 = vmatprep.subr.mxu0 0.0
  %684 = vmatpush1.msra.mxu0 0.0
  %685 = vmatprep.subr.mxu0 0.0
  %686 = vmatpush1.msra.mxu0 0.0
  %687 = vmatprep.subr.mxu0 0.0
  %688 = vmatpush1.msra.mxu0 0.0
  %689 = vmatprep.subr.mxu0 0.0
  %690 = vmatpush1.msra.mxu0 0.0
  %691 = vmatprep.subr.mxu0 0.0
  %692 = vmatpush1.msra.mxu0 0.0
  %693 = vmatprep.subr.mxu0 0.0
  %694 = vmatpush1.msra.mxu0 0.0
  %695 = vmatprep.subr.mxu0 0.0
  %696 = vmatpush1.msra.mxu0 0.0
  %697 = vmatprep.subr.mxu0 0.0
  %698 = vmatpush1.msra.mxu0 0.0
  %699 = vmatprep.mubr.f32.mxu0 0.0
  %700 = vmatmul.mubr.f32.gmra.mrb[0].mxu0 %v608
  %v701 = vpop.f32.mrb[0].mxu0
  %v702 = vadd.f32 0.0, %v701
  %v703 = vpop.f32.mrb[0].mxu0
  %704 = vmatprep.mubr.f32.mxu0 0.0
  %705 = vmatmul.mubr.f32.gmra.mrb[0].mxu0 %v611
  %v706 = vpop.f32.mrb[0].mxu0
  %v707 = vadd.f32 0.0, %v706
  %v708 = vpop.f32.mrb[0].mxu0
  %709 = vmatprep.mubr.f32.mxu0 0.0
  %710 = vmatmul.mubr.f32.gmra.mrb[0].mxu0 %v614
  %v711 = vpop.f32.mrb[0].mxu0
  %v712 = vadd.f32 0.0, %v711
  %v713 = vpop.f32.mrb[0].mxu0
  %714 = vmatprep.mubr.f32.mxu0 0.0
  %715 = vmatmul.mubr.f32.gmra.mrb[0].mxu0 %v617
  %v716 = vpop.f32.mrb[0].mxu0
  %v717 = vadd.f32 0.0, %v716
  %v718 = vpop.f32.mrb[0].mxu0
  %719 = vmatprep.mubr.f32.mxu0 0.0
  %720 = vmatmul.mubr.f32.gmra.mrb[0].mxu0 %v620
  %v721 = vpop.f32.mrb[0].mxu0
  %v722 = vadd.f32 0.0, %v721
  %v723 = vpop.f32.mrb[0].mxu0
  %724 = vmatprep.mubr.f32.mxu0 0.0
  %725 = vmatmul.mubr.f32.gmra.mrb[0].mxu0 %v623
  %v726 = vpop.f32.mrb[0].mxu0
  %v727 = vadd.f32 0.0, %v726
  %v728 = vpop.f32.mrb[0].mxu0
  %729 = vmatprep.mubr.f32.mxu0 0.0
  %730 = vmatmul.mubr.f32.gmra.mrb[0].mxu0 %v626
  %v731 = vpop.f32.mrb[0].mxu0
  %v732 = vadd.f32 0.0, %v731
  %v733 = vpop.f32.mrb[0].mxu0
  %734 = vmatprep.mubr.f32.mxu0 0.0
  %735 = vmatmul.mubr.f32.gmra.mrb[0].mxu0 %v629
  %v736 = vpop.f32.mrb[0].mxu0
  %v737 = vadd.f32 0.0, %v736
  %v738 = vpop.f32.mrb[0].mxu0
  %739 = vdwg.mxu0
  %v740 = vld [vmem:[#allocation2] sm:$0xf]
  %v741 = vld [vmem:[#allocation2 + $0x4] sm:$0x3]
  %v744 = vunpack.c.l.b16 %v740
  %v745 = vunpack.c.l.b16 %v741
  %v746 = vpack.c.b16 %v745, %v744
  %v748 = vsel %vm379, %v531, 0
  %v751 = vsel %vm379, %v532, 0
  %v754 = vsel %vm379, %v533, 0
  %v757 = vsel %vm379, %v534, 0
  %v760 = vsel %vm392, %v746, 0
  %762 = vmatprep.subr.bf16.mxu0 0
  %763 = vmatpush1.bf16.msra.mxu0 %v760
  %764 = vmatprep.subr.bf16.mxu0 0
  %765 = vmatpush1.bf16.msra.mxu0 0
  %766 = vmatprep.subr.bf16.mxu0 0
  %767 = vmatpush1.bf16.msra.mxu0 0
  %768 = vmatprep.subr.bf16.mxu0 0
  %769 = vmatpush1.bf16.msra.mxu0 0
  %770 = vmatprep.subr.bf16.mxu0 0
  %771 = vmatpush1.bf16.msra.mxu0 0
  %772 = vmatprep.subr.bf16.mxu0 0
  %773 = vmatpush1.bf16.msra.mxu0 0
  %774 = vmatprep.subr.bf16.mxu0 0
  %775 = vmatpush1.bf16.msra.mxu0 0
  %776 = vmatprep.subr.bf16.mxu0 0
  %777 = vmatpush1.bf16.msra.mxu0 0
  %778 = vmatprep.subr.bf16.mxu0 0
  %779 = vmatpush1.bf16.msra.mxu0 0
  %780 = vmatprep.subr.bf16.mxu0 0
  %781 = vmatpush1.bf16.msra.mxu0 0
  %782 = vmatprep.subr.bf16.mxu0 0
  %783 = vmatpush1.bf16.msra.mxu0 0
  %784 = vmatprep.subr.bf16.mxu0 0
  %785 = vmatpush1.bf16.msra.mxu0 0
  %786 = vmatprep.subr.bf16.mxu0 0
  %787 = vmatpush1.bf16.msra.mxu0 0
  %788 = vmatprep.subr.bf16.mxu0 0
  %789 = vmatpush1.bf16.msra.mxu0 0
  %790 = vmatprep.subr.bf16.mxu0 0
  %791 = vmatpush1.bf16.msra.mxu0 0
  %792 = vmatprep.subr.bf16.mxu0 0
  %793 = vmatpush1.bf16.msra.mxu0 0
  %794 = vmatprep.mubr.bf16.mxu0 0
  %795 = vmatmul.mubr.bf16.gmra.mrb[0].mxu0 %v748
  %v796 = vpop.f32.mrb[0].mxu0
  %v797 = vadd.f32 0.0, %v796
  %v798 = vpop.f32.mrb[0].mxu0
  %v799 = vpop.f32.mrb[0].mxu0
  %v800 = vadd.f32 0.0, %v799
  %v801 = vpop.f32.mrb[0].mxu0
  %802 = vmatprep.mubr.bf16.mxu0 0
  %803 = vmatmul.mubr.bf16.gmra.mrb[0].mxu0 %v751
  %v804 = vpop.f32.mrb[0].mxu0
  %v805 = vadd.f32 0.0, %v804
  %v806 = vpop.f32.mrb[0].mxu0
  %v807 = vpop.f32.mrb[0].mxu0
  %v808 = vadd.f32 0.0, %v807
  %v809 = vpop.f32.mrb[0].mxu0
  %810 = vmatprep.mubr.bf16.mxu0 0
  %811 = vmatmul.mubr.bf16.gmra.mrb[0].mxu0 %v754
  %v812 = vpop.f32.mrb[0].mxu0
  %v813 = vadd.f32 0.0, %v812
  %v814 = vpop.f32.mrb[0].mxu0
  %v815 = vpop.f32.mrb[0].mxu0
  %v816 = vadd.f32 0.0, %v815
  %v817 = vpop.f32.mrb[0].mxu0
  %818 = vmatprep.mubr.bf16.mxu0 0
  %819 = vmatmul.mubr.bf16.gmra.mrb[0].mxu0 %v757
  %v820 = vpop.f32.mrb[0].mxu0
  %v821 = vadd.f32 0.0, %v820
  %v822 = vpop.f32.mrb[0].mxu0
  %v823 = vpop.f32.mrb[0].mxu0
  %v824 = vadd.f32 0.0, %v823
  %v825 = vpop.f32.mrb[0].mxu0
  %826 = vdwg.mxu0
  %v827 = vld [vmem:[#allocation3] sm:$0xf]
  %v828 = vld [vmem:[#allocation3 + $0x4] sm:$0x3]
  %v831 = vunpack.c.l.b16 %v827
  %v832 = vunpack.c.l.b16 %v828
  %v833 = vpack.c.b16 %v832, %v831
  %v835 = vsel %vm392, %v833, 0
  %837 = vmatprep.subr.bf16.mxu0 0
  %838 = vmatpush1.bf16.msra.mxu0 %v835
  %839 = vmatprep.subr.bf16.mxu0 0
  %840 = vmatpush1.bf16.msra.mxu0 0
  %841 = vmatprep.subr.bf16.mxu0 0
  %842 = vmatpush1.bf16.msra.mxu0 0
  %843 = vmatprep.subr.bf16.mxu0 0
  %844 = vmatpush1.bf16.msra.mxu0 0
  %845 = vmatprep.subr.bf16.mxu0 0
  %846 = vmatpush1.bf16.msra.mxu0 0
  %847 = vmatprep.subr.bf16.mxu0 0
  %848 = vmatpush1.bf16.msra.mxu0 0
  %849 = vmatprep.subr.bf16.mxu0 0
  %850 = vmatpush1.bf16.msra.mxu0 0
  %851 = vmatprep.subr.bf16.mxu0 0
  %852 = vmatpush1.bf16.msra.mxu0 0
  %853 = vmatprep.subr.bf16.mxu0 0
  %854 = vmatpush1.bf16.msra.mxu0 0
  %855 = vmatprep.subr.bf16.mxu0 0
  %856 = vmatpush1.bf16.msra.mxu0 0
  %857 = vmatprep.subr.bf16.mxu0 0
  %858 = vmatpush1.bf16.msra.mxu0 0
  %859 = vmatprep.subr.bf16.mxu0 0
  %860 = vmatpush1.bf16.msra.mxu0 0
  %861 = vmatprep.subr.bf16.mxu0 0
  %862 = vmatpush1.bf16.msra.mxu0 0
  %863 = vmatprep.subr.bf16.mxu0 0
  %864 = vmatpush1.bf16.msra.mxu0 0
  %865 = vmatprep.subr.bf16.mxu0 0
  %866 = vmatpush1.bf16.msra.mxu0 0
  %867 = vmatprep.subr.bf16.mxu0 0
  %868 = vmatpush1.bf16.msra.mxu0 0
  %869 = vmatprep.mubr.bf16.mxu0 0
  %870 = vmatmul.mubr.bf16.gmra.mrb[0].mxu0 %v381
  %v871 = vpop.f32.mrb[0].mxu0
  %v872 = vadd.f32 %v702, %v871
  %v873 = vpop.f32.mrb[0].mxu0
  %v874 = vpop.f32.mrb[0].mxu0
  %v875 = vadd.f32 %v707, %v874
  %v876 = vpop.f32.mrb[0].mxu0
  %877 = vmatprep.mubr.bf16.mxu0 0
  %878 = vmatmul.mubr.bf16.gmra.mrb[0].mxu0 %v384
  %v879 = vpop.f32.mrb[0].mxu0
  %v880 = vadd.f32 %v712, %v879
  %v881 = vpop.f32.mrb[0].mxu0
  %v882 = vpop.f32.mrb[0].mxu0
  %v883 = vadd.f32 %v717, %v882
  %v884 = vpop.f32.mrb[0].mxu0
  %885 = vmatprep.mubr.bf16.mxu0 0
  %886 = vmatmul.mubr.bf16.gmra.mrb[0].mxu0 %v387
  %v887 = vpop.f32.mrb[0].mxu0
  %v888 = vadd.f32 %v722, %v887
  %v889 = vpop.f32.mrb[0].mxu0
  %v890 = vpop.f32.mrb[0].mxu0
  %v891 = vadd.f32 %v727, %v890
  %v892 = vpop.f32.mrb[0].mxu0
  %893 = vmatprep.mubr.bf16.mxu0 0
  %894 = vmatmul.mubr.bf16.gmra.mrb[0].mxu0 %v390
  %v895 = vpop.f32.mrb[0].mxu0
  %v896 = vadd.f32 %v732, %v895
  %v897 = vpop.f32.mrb[0].mxu0
  %v898 = vpop.f32.mrb[0].mxu0
  %v899 = vadd.f32 %v737, %v898
  %v900 = vpop.f32.mrb[0].mxu0
  %901 = vdwg.mxu0
  %v902 = vld [vmem:[#allocation4] sm:$0xf]
  %v903 = vld [vmem:[#allocation4 + $0x4] sm:$0x3]
  %v906 = vunpack.c.l.b16 %v902
  %v907 = vunpack.c.l.b16 %v903
  %v908 = vpack.c.b16 %v907, %v906
  %v910 = vsel %vm392, %v908, 0
  %912 = vmatprep.subr.bf16.mxu0 0
  %913 = vmatpush1.bf16.msra.mxu0 %v910
  %914 = vmatprep.subr.bf16.mxu0 0
  %915 = vmatpush1.bf16.msra.mxu0 0
  %916 = vmatprep.subr.bf16.mxu0 0
  %917 = vmatpush1.bf16.msra.mxu0 0
  %918 = vmatprep.subr.bf16.mxu0 0
  %919 = vmatpush1.bf16.msra.mxu0 0
  %920 = vmatprep.subr.bf16.mxu0 0
  %921 = vmatpush1.bf16.msra.mxu0 0
  %922 = vmatprep.subr.bf16.mxu0 0
  %923 = vmatpush1.bf16.msra.mxu0 0
  %924 = vmatprep.subr.bf16.mxu0 0
  %925 = vmatpush1.bf16.msra.mxu0 0
  %926 = vmatprep.subr.bf16.mxu0 0
  %927 = vmatpush1.bf16.msra.mxu0 0
  %928 = vmatprep.subr.bf16.mxu0 0
  %929 = vmatpush1.bf16.msra.mxu0 0
  %930 = vmatprep.subr.bf16.mxu0 0
  %931 = vmatpush1.bf16.msra.mxu0 0
  %932 = vmatprep.subr.bf16.mxu0 0
  %933 = vmatpush1.bf16.msra.mxu0 0
  %934 = vmatprep.subr.bf16.mxu0 0
  %935 = vmatpush1.bf16.msra.mxu0 0
  %936 = vmatprep.subr.bf16.mxu0 0
  %937 = vmatpush1.bf16.msra.mxu0 0
  %938 = vmatprep.subr.bf16.mxu0 0
  %939 = vmatpush1.bf16.msra.mxu0 0
  %940 = vmatprep.subr.bf16.mxu0 0
  %941 = vmatpush1.bf16.msra.mxu0 0
  %942 = vmatprep.subr.bf16.mxu0 0
  %943 = vmatpush1.bf16.msra.mxu0 0
  %944 = vmatprep.mubr.bf16.mxu0 0
  %945 = vmatmul.mubr.bf16.gmra.mrb[0].mxu0 %v381
  %v946 = vpop.f32.mrb[0].mxu0
  %v947 = vadd.f32 %v702, %v946
  %v948 = vpop.f32.mrb[0].mxu0
  %v949 = vpop.f32.mrb[0].mxu0
  %v950 = vadd.f32 %v707, %v949
  %v951 = vpop.f32.mrb[0].mxu0
  %952 = vmatprep.mubr.bf16.mxu0 0
  %953 = vmatmul.mubr.bf16.gmra.mrb[0].mxu0 %v384
  %v954 = vpop.f32.mrb[0].mxu0
  %v955 = vadd.f32 %v712, %v954
  %v956 = vpop.f32.mrb[0].mxu0
  %v957 = vpop.f32.mrb[0].mxu0
  %v958 = vadd.f32 %v717, %v957
  %v959 = vpop.f32.mrb[0].mxu0
  %960 = vmatprep.mubr.bf16.mxu0 0
  %961 = vmatmul.mubr.bf16.gmra.mrb[0].mxu0 %v387
  %v962 = vpop.f32.mrb[0].mxu0
  %v963 = vadd.f32 %v722, %v962
  %v964 = vpop.f32.mrb[0].mxu0
  %v965 = vpop.f32.mrb[0].mxu0
  %v966 = vadd.f32 %v727, %v965
  %v967 = vpop.f32.mrb[0].mxu0
  %968 = vmatprep.mubr.bf16.mxu0 0
  %969 = vmatmul.mubr.bf16.gmra.mrb[0].mxu0 %v390
  %v970 = vpop.f32.mrb[0].mxu0
  %v971 = vadd.f32 %v732, %v970
  %v972 = vpop.f32.mrb[0].mxu0
  %v973 = vpop.f32.mrb[0].mxu0
  %v974 = vadd.f32 %v737, %v973
  %v975 = vpop.f32.mrb[0].mxu0
  %976 = vdwg.mxu0
  %v977 = vmul.f32 %v797, %v872
  %v978 = vmul.f32 %v800, %v875
  %v979 = vmul.f32 %v805, %v880
  %v980 = vmul.f32 %v808, %v883
  %v981 = vmul.f32 %v813, %v888
  %v982 = vmul.f32 %v816, %v891
  %v983 = vmul.f32 %v821, %v896
  %v984 = vmul.f32 %v824, %v899
  %v986 = vsel %vm555, %v977, 0
  %v989 = vsel %vm555, %v978, 0
  %v992 = vsel %vm555, %v979, 0
  %v995 = vsel %vm555, %v980, 0
  %v998 = vsel %vm555, %v981, 0
  %v1001 = vsel %vm555, %v982, 0
  %v1004 = vsel %vm555, %v983, 0
  %v1007 = vsel %vm555, %v984, 0
  %v1010 = vsel %vm555, %v351, 0
  %1012 = vmatprep.subr.mxu0 0.0
  %1013 = vmatpush1.xpose.msra.mxu0 %v1010
  %1014 = vmatprep.subr.mxu0 0.0
  %1015 = vmatpush1.xpose.msra.mxu0 0.0
  %1016 = vmatprep.subr.mxu0 0.0
  %1017 = vmatpush1.xpose.msra.mxu0 0.0
  %1018 = vmatprep.subr.mxu0 0.0
  %1019 = vmatpush1.xpose.msra.mxu0 0.0
  %1020 = vmatprep.subr.mxu0 0.0
  %1021 = vmatpush1.xpose.msra.mxu0 0.0
  %1022 = vmatprep.subr.mxu0 0.0
  %1023 = vmatpush1.xpose.msra.mxu0 0.0
  %1024 = vmatprep.subr.mxu0 0.0
  %1025 = vmatpush1.xpose.msra.mxu0 0.0
  %1026 = vmatprep.subr.mxu0 0.0
  %1027 = vmatpush1.xpose.msra.mxu0 0.0
  %1028 = vmatprep.subr.mxu0 0.0
  %1029 = vmatpush1.xpose.msra.mxu0 0.0
  %1030 = vmatprep.subr.mxu0 0.0
  %1031 = vmatpush1.xpose.msra.mxu0 0.0
  %1032 = vmatprep.subr.mxu0 0.0
  %1033 = vmatpush1.xpose.msra.mxu0 0.0
  %1034 = vmatprep.subr.mxu0 0.0
  %1035 = vmatpush1.xpose.msra.mxu0 0.0
  %1036 = vmatprep.subr.mxu0 0.0
  %1037 = vmatpush1.xpose.msra.mxu0 0.0
  %1038 = vmatprep.subr.mxu0 0.0
  %1039 = vmatpush1.xpose.msra.mxu0 0.0
  %1040 = vmatprep.subr.mxu0 0.0
  %1041 = vmatpush1.xpose.msra.mxu0 0.0
  %1042 = vmatprep.subr.mxu0 0.0
  %1043 = vmatpush1.xpose.msra.mxu0 0.0
  %1044 = vmatprep.subr.mxu0 0.0
  %1045 = vmatpush1.xpose.msra.mxu0 0.0
  %1046 = vmatprep.subr.mxu0 0.0
  %1047 = vmatpush1.xpose.msra.mxu0 0.0
  %1048 = vmatprep.subr.mxu0 0.0
  %1049 = vmatpush1.xpose.msra.mxu0 0.0
  %1050 = vmatprep.subr.mxu0 0.0
  %1051 = vmatpush1.xpose.msra.mxu0 0.0
  %1052 = vmatprep.subr.mxu0 0.0
  %1053 = vmatpush1.xpose.msra.mxu0 0.0
  %1054 = vmatprep.subr.mxu0 0.0
  %1055 = vmatpush1.xpose.msra.mxu0 0.0
  %1056 = vmatprep.subr.mxu0 0.0
  %1057 = vmatpush1.xpose.msra.mxu0 0.0
  %1058 = vmatprep.subr.mxu0 0.0
  %1059 = vmatpush1.xpose.msra.mxu0 0.0
  %1060 = vmatprep.subr.mxu0 0.0
  %1061 = vmatpush1.xpose.msra.mxu0 0.0
  %1062 = vmatprep.subr.mxu0 0.0
  %1063 = vmatpush1.xpose.msra.mxu0 0.0
  %1064 = vmatprep.subr.mxu0 0.0
  %1065 = vmatpush1.xpose.msra.mxu0 0.0
  %1066 = vmatprep.subr.mxu0 0.0
  %1067 = vmatpush1.xpose.msra.mxu0 0.0
  %1068 = vmatprep.subr.mxu0 0.0
  %1069 = vmatpush1.xpose.msra.mxu0 0.0
  %1070 = vmatprep.subr.mxu0 0.0
  %1071 = vmatpush1.xpose.msra.mxu0 0.0
  %1072 = vmatprep.subr.mxu0 0.0
  %1073 = vmatpush1.xpose.msra.mxu0 0.0
  %1074 = vmatprep.subr.mxu0 0.0
  %1075 = vmatpush1.xpose.msra.mxu0 0.0
  %1076 = vmatprep.mubr.f32.mxu0 0.0
  %1077 = vmatmul.mubr.f32.gmra.mrb[0].mxu0 %v986
  %v1078 = vpop.f32.mrb[0].mxu0
  %v1079 = vadd.f32 0.0, %v1078
  %v1080 = vpop.f32.mrb[0].mxu0
  %1081 = vmatprep.mubr.f32.mxu0 0.0
  %1082 = vmatmul.mubr.f32.gmra.mrb[0].mxu0 %v989
  %v1083 = vpop.f32.mrb[0].mxu0
  %v1084 = vadd.f32 0.0, %v1083
  %v1085 = vpop.f32.mrb[0].mxu0
  %1086 = vmatprep.mubr.f32.mxu0 0.0
  %1087 = vmatmul.mubr.f32.gmra.mrb[0].mxu0 %v992
  %v1088 = vpop.f32.mrb[0].mxu0
  %v1089 = vadd.f32 0.0, %v1088
  %v1090 = vpop.f32.mrb[0].mxu0
  %1091 = vmatprep.mubr.f32.mxu0 0.0
  %1092 = vmatmul.mubr.f32.gmra.mrb[0].mxu0 %v995
  %v1093 = vpop.f32.mrb[0].mxu0
  %v1094 = vadd.f32 0.0, %v1093
  %v1095 = vpop.f32.mrb[0].mxu0
  %1096 = vmatprep.mubr.f32.mxu0 0.0
  %1097 = vmatmul.mubr.f32.gmra.mrb[0].mxu0 %v998
  %v1098 = vpop.f32.mrb[0].mxu0
  %v1099 = vadd.f32 0.0, %v1098
  %v1100 = vpop.f32.mrb[0].mxu0
  %1101 = vmatprep.mubr.f32.mxu0 0.0
  %1102 = vmatmul.mubr.f32.gmra.mrb[0].mxu0 %v1001
  %v1103 = vpop.f32.mrb[0].mxu0
  %v1104 = vadd.f32 0.0, %v1103
  %v1105 = vpop.f32.mrb[0].mxu0
  %1106 = vmatprep.mubr.f32.mxu0 0.0
  %1107 = vmatmul.mubr.f32.gmra.mrb[0].mxu0 %v1004
  %v1108 = vpop.f32.mrb[0].mxu0
  %v1109 = vadd.f32 0.0, %v1108
  %v1110 = vpop.f32.mrb[0].mxu0
  %1111 = vmatprep.mubr.f32.mxu0 0.0
  %1112 = vmatmul.mubr.f32.gmra.mrb[0].mxu0 %v1007
  %v1113 = vpop.f32.mrb[0].mxu0
  %v1114 = vadd.f32 0.0, %v1113
  %v1115 = vpop.f32.mrb[0].mxu0
  %1116 = vdwg.mxu0
  %v1117 = vmul.f32 %v1079, 0.25
  %v1118 = vmul.f32 %v1084, 0.25
  %v1119 = vmul.f32 %v1089, 0.25
  %v1120 = vmul.f32 %v1094, 0.25
  %v1121 = vmul.f32 %v1099, 0.25
  %v1122 = vmul.f32 %v1104, 0.25
  %v1123 = vmul.f32 %v1109, 0.25
  %v1124 = vmul.f32 %v1114, 0.25
  %v1125 = vsub.f32 %v1117, %v343
  %v1126 = vsub.f32 %v1118, %v344
  %v1127 = vsub.f32 %v1119, %v345
  %v1128 = vsub.f32 %v1120, %v346
  %v1129 = vsub.f32 %v1121, %v347
  %v1130 = vsub.f32 %v1122, %v348
  %v1131 = vsub.f32 %v1123, %v349
  %v1132 = vsub.f32 %v1124, %v350
  %v1134 = vsel %vm606, %v1125, 0
  %v1137 = vsel %vm606, %v1126, 0
  %v1140 = vsel %vm606, %v1127, 0
  %v1143 = vsel %vm606, %v1128, 0
  %v1146 = vsel %vm606, %v1129, 0
  %v1149 = vsel %vm606, %v1130, 0
  %v1152 = vsel %vm606, %v1131, 0
  %v1155 = vsel %vm606, %v1132, 0
  %v1157 = vsel %vm631, %v351, 0
  %1159 = vmatprep.subr.mxu0 0.0
  %1160 = vmatpush1.msra.mxu0 %v1157
  %1161 = vmatprep.subr.mxu0 0.0
  %1162 = vmatpush1.msra.mxu0 0.0
  %1163 = vmatprep.subr.mxu0 0.0
  %1164 = vmatpush1.msra.mxu0 0.0
  %1165 = vmatprep.subr.mxu0 0.0
  %1166 = vmatpush1.msra.mxu0 0.0
  %1167 = vmatprep.subr.mxu0 0.0
  %1168 = vmatpush1.msra.mxu0 0.0
  %1169 = vmatprep.subr.mxu0 0.0
  %1170 = vmatpush1.msra.mxu0 0.0
  %1171 = vmatprep.subr.mxu0 0.0
  %1172 = vmatpush1.msra.mxu0 0.0
  %1173 = vmatprep.subr.mxu0 0.0
  %1174 = vmatpush1.msra.mxu0 0.0
  %1175 = vmatprep.subr.mxu0 0.0
  %1176 = vmatpush1.msra.mxu0 0.0
  %1177 = vmatprep.subr.mxu0 0.0
  %1178 = vmatpush1.msra.mxu0 0.0
  %1179 = vmatprep.subr.mxu0 0.0
  %1180 = vmatpush1.msra.mxu0 0.0
  %1181 = vmatprep.subr.mxu0 0.0
  %1182 = vmatpush1.msra.mxu0 0.0
  %1183 = vmatprep.subr.mxu0 0.0
  %1184 = vmatpush1.msra.mxu0 0.0
  %1185 = vmatprep.subr.mxu0 0.0
  %1186 = vmatpush1.msra.mxu0 0.0
  %1187 = vmatprep.subr.mxu0 0.0
  %1188 = vmatpush1.msra.mxu0 0.0
  %1189 = vmatprep.subr.mxu0 0.0
  %1190 = vmatpush1.msra.mxu0 0.0
  %1191 = vmatprep.subr.mxu0 0.0
  %1192 = vmatpush1.msra.mxu0 0.0
  %1193 = vmatprep.subr.mxu0 0.0
  %1194 = vmatpush1.msra.mxu0 0.0
  %1195 = vmatprep.subr.mxu0 0.0
  %1196 = vmatpush1.msra.mxu0 0.0
  %1197 = vmatprep.subr.mxu0 0.0
  %1198 = vmatpush1.msra.mxu0 0.0
  %1199 = vmatprep.subr.mxu0 0.0
  %1200 = vmatpush1.msra.mxu0 0.0
  %1201 = vmatprep.subr.mxu0 0.0
  %1202 = vmatpush1.msra.mxu0 0.0
  %1203 = vmatprep.subr.mxu0 0.0
  %1204 = vmatpush1.msra.mxu0 0.0
  %1205 = vmatprep.subr.mxu0 0.0
  %1206 = vmatpush1.msra.mxu0 0.0
  %1207 = vmatprep.subr.mxu0 0.0
  %1208 = vmatpush1.msra.mxu0 0.0
  %1209 = vmatprep.subr.mxu0 0.0
  %1210 = vmatpush1.msra.mxu0 0.0
  %1211 = vmatprep.subr.mxu0 0.0
  %1212 = vmatpush1.msra.mxu0 0.0
  %1213 = vmatprep.subr.mxu0 0.0
  %1214 = vmatpush1.msra.mxu0 0.0
  %1215 = vmatprep.subr.mxu0 0.0
  %1216 = vmatpush1.msra.mxu0 0.0
  %1217 = vmatprep.subr.mxu0 0.0
  %1218 = vmatpush1.msra.mxu0 0.0
  %1219 = vmatprep.subr.mxu0 0.0
  %1220 = vmatpush1.msra.mxu0 0.0
  %1221 = vmatprep.subr.mxu0 0.0
  %1222 = vmatpush1.msra.mxu0 0.0
  %1223 = vmatprep.mubr.f32.mxu0 0.0
  %1224 = vmatmul.mubr.f32.gmra.mrb[0].mxu0 %v1134
  %v1225 = vpop.f32.mrb[0].mxu0
  %v1226 = vadd.f32 0.0, %v1225
  %v1227 = vpop.f32.mrb[0].mxu0
  %1228 = vmatprep.mubr.f32.mxu0 0.0
  %1229 = vmatmul.mubr.f32.gmra.mrb[0].mxu0 %v1137
  %v1230 = vpop.f32.mrb[0].mxu0
  %v1231 = vadd.f32 0.0, %v1230
  %v1232 = vpop.f32.mrb[0].mxu0
  %1233 = vmatprep.mubr.f32.mxu0 0.0
  %1234 = vmatmul.mubr.f32.gmra.mrb[0].mxu0 %v1140
  %v1235 = vpop.f32.mrb[0].mxu0
  %v1236 = vadd.f32 0.0, %v1235
  %v1237 = vpop.f32.mrb[0].mxu0
  %1238 = vmatprep.mubr.f32.mxu0 0.0
  %1239 = vmatmul.mubr.f32.gmra.mrb[0].mxu0 %v1143
  %v1240 = vpop.f32.mrb[0].mxu0
  %v1241 = vadd.f32 0.0, %v1240
  %v1242 = vpop.f32.mrb[0].mxu0
  %1243 = vmatprep.mubr.f32.mxu0 0.0
  %1244 = vmatmul.mubr.f32.gmra.mrb[0].mxu0 %v1146
  %v1245 = vpop.f32.mrb[0].mxu0
  %v1246 = vadd.f32 0.0, %v1245
  %v1247 = vpop.f32.mrb[0].mxu0
  %1248 = vmatprep.mubr.f32.mxu0 0.0
  %1249 = vmatmul.mubr.f32.gmra.mrb[0].mxu0 %v1149
  %v1250 = vpop.f32.mrb[0].mxu0
  %v1251 = vadd.f32 0.0, %v1250
  %v1252 = vpop.f32.mrb[0].mxu0
  %1253 = vmatprep.mubr.f32.mxu0 0.0
  %1254 = vmatmul.mubr.f32.gmra.mrb[0].mxu0 %v1152
  %v1255 = vpop.f32.mrb[0].mxu0
  %v1256 = vadd.f32 0.0, %v1255
  %v1257 = vpop.f32.mrb[0].mxu0
  %1258 = vmatprep.mubr.f32.mxu0 0.0
  %1259 = vmatmul.mubr.f32.gmra.mrb[0].mxu0 %v1155
  %v1260 = vpop.f32.mrb[0].mxu0
  %v1261 = vadd.f32 0.0, %v1260
  %v1262 = vpop.f32.mrb[0].mxu0
  %1263 = vdwg.mxu0
  %v1264 = vmul.f32 %v1226, 1.442695
  %v1265 = vpow.pop %v1264
  %v1266 = vmul.f32 %v1231, 1.442695
  %v1267 = vpow.pop %v1266
  %v1268 = vmul.f32 %v1236, 1.442695
  %v1269 = vpow.pop %v1268
  %v1270 = vmul.f32 %v1241, 1.442695
  %v1271 = vpow.pop %v1270
  %v1272 = vmul.f32 %v1246, 1.442695
  %v1273 = vpow.pop %v1272
  %v1274 = vmul.f32 %v1251, 1.442695
  %v1275 = vpow.pop %v1274
  %v1276 = vmul.f32 %v1256, 1.442695
  %v1277 = vpow.pop %v1276
  %v1278 = vmul.f32 %v1261, 1.442695
  %v1279 = vpow.pop %v1278
  %v1280 = vld [vmem:[#allocation6] sm:$0xff]
  %v1281 = vld [vmem:[#allocation6 + $0x8] sm:$0xf]
  %v1282 = vmul.f32 %v947, %v1265
  %v1283 = vmul.f32 %v950, %v1267
  %v1284 = vmul.f32 %v955, %v1269
  %v1285 = vmul.f32 %v958, %v1271
  %v1286 = vmul.f32 %v963, %v1273
  %v1287 = vmul.f32 %v966, %v1275
  %v1288 = vmul.f32 %v971, %v1277
  %v1289 = vmul.f32 %v974, %v1279
  %v1290 = vpack.c.bf16 %v1283, %v1282
  %v1291 = vpack.c.bf16 %v1285, %v1284
  %v1292 = vpack.c.bf16 %v1287, %v1286
  %v1293 = vpack.c.bf16 %v1289, %v1288
  %1294 = vmatprep.subr.bf16.mxu0 0
  %1295 = vmatpush1.bf16.msra.mxu0 %v1290
  %1296 = vmatprep.subr.bf16.mxu0 0
  %1297 = vmatpush1.bf16.msra.mxu0 %v1291
  %1298 = vmatprep.subr.bf16.mxu0 0
  %1299 = vmatpush1.bf16.msra.mxu0 %v1292
  %1300 = vmatprep.subr.bf16.mxu0 0
  %1301 = vmatpush1.bf16.msra.mxu0 %v1293
  %1302 = vmatprep.subr.bf16.mxu0 0
  %1303 = vmatpush1.bf16.msra.mxu0 0
  %1304 = vmatprep.subr.bf16.mxu0 0
  %1305 = vmatpush1.bf16.msra.mxu0 0
  %1306 = vmatprep.subr.bf16.mxu0 0
  %1307 = vmatpush1.bf16.msra.mxu0 0
  %1308 = vmatprep.subr.bf16.mxu0 0
  %1309 = vmatpush1.bf16.msra.mxu0 0
  %1310 = vmatprep.subr.bf16.mxu0 0
  %1311 = vmatpush1.bf16.msra.mxu0 0
  %1312 = vmatprep.subr.bf16.mxu0 0
  %1313 = vmatpush1.bf16.msra.mxu0 0
  %1314 = vmatprep.subr.bf16.mxu0 0
  %1315 = vmatpush1.bf16.msra.mxu0 0
  %1316 = vmatprep.subr.bf16.mxu0 0
  %1317 = vmatpush1.bf16.msra.mxu0 0
  %1318 = vmatprep.subr.bf16.mxu0 0
  %1319 = vmatpush1.bf16.msra.mxu0 0
  %1320 = vmatprep.subr.bf16.mxu0 0
  %1321 = vmatpush1.bf16.msra.mxu0 0
  %1322 = vmatprep.subr.bf16.mxu0 0
  %1323 = vmatpush1.bf16.msra.mxu0 0
  %1324 = vmatprep.subr.bf16.mxu0 0
  %1325 = vmatpush1.bf16.msra.mxu0 0
  %1326 = vmatprep.mubr.bf16.mxu0 0
  %1327 = vmatmul.mubr.bf16.gmra.mrb[0].mxu0 %v557
  %v1328 = vpop.f32.mrb[0].mxu0
  %v1329 = vadd.f32 0.0, %v1328
  %v1330 = vpop.f32.mrb[0].mxu0
  %v1331 = vpop.f32.mrb[0].mxu0
  %v1332 = vadd.f32 0.0, %v1331
  %v1333 = vpop.f32.mrb[0].mxu0
  %1334 = vdwg.mxu0
  %v1335 = vadd.f32 %v1280, %v1329
  %v1336 = vadd.f32 %v1281, %v1332
  %1337 = vst.msk [vmem:[#allocation6] sm:$0xff] %vm555, %v1335
  %1338 = vst.msk [vmem:[#allocation6 + $0x8] sm:$0xf] %vm603, %v1336
  %v1339 = vld [vmem:[#allocation7] sm:$0xff]
  %v1340 = vld [vmem:[#allocation7 + $0x8] sm:$0xf]
  %v1341 = vpack.c.bf16 %v1267, %v1265
  %v1342 = vpack.c.bf16 %v1271, %v1269
  %v1343 = vpack.c.bf16 %v1275, %v1273
  %v1344 = vpack.c.bf16 %v1279, %v1277
  %1345 = vmatprep.subr.bf16.mxu0 0
  %1346 = vmatpush1.bf16.msra.mxu0 %v1341
  %1347 = vmatprep.subr.bf16.mxu0 0
  %1348 = vmatpush1.bf16.msra.mxu0 %v1342
  %1349 = vmatprep.subr.bf16.mxu0 0
  %1350 = vmatpush1.bf16.msra.mxu0 %v1343
  %1351 = vmatprep.subr.bf16.mxu0 0
  %1352 = vmatpush1.bf16.msra.mxu0 %v1344
  %1353 = vmatprep.subr.bf16.mxu0 0
  %1354 = vmatpush1.bf16.msra.mxu0 0
  %1355 = vmatprep.subr.bf16.mxu0 0
  %1356 = vmatpush1.bf16.msra.mxu0 0
  %1357 = vmatprep.subr.bf16.mxu0 0
  %1358 = vmatpush1.bf16.msra.mxu0 0
  %1359 = vmatprep.subr.bf16.mxu0 0
  %1360 = vmatpush1.bf16.msra.mxu0 0
  %1361 = vmatprep.subr.bf16.mxu0 0
  %1362 = vmatpush1.bf16.msra.mxu0 0
  %1363 = vmatprep.subr.bf16.mxu0 0
  %1364 = vmatpush1.bf16.msra.mxu0 0
  %1365 = vmatprep.subr.bf16.mxu0 0
  %1366 = vmatpush1.bf16.msra.mxu0 0
  %1367 = vmatprep.subr.bf16.mxu0 0
  %1368 = vmatpush1.bf16.msra.mxu0 0
  %1369 = vmatprep.subr.bf16.mxu0 0
  %1370 = vmatpush1.bf16.msra.mxu0 0
  %1371 = vmatprep.subr.bf16.mxu0 0
  %1372 = vmatpush1.bf16.msra.mxu0 0
  %1373 = vmatprep.subr.bf16.mxu0 0
  %1374 = vmatpush1.bf16.msra.mxu0 0
  %1375 = vmatprep.subr.bf16.mxu0 0
  %1376 = vmatpush1.bf16.msra.mxu0 0
  %1377 = vmatprep.mubr.bf16.mxu0 0
  %1378 = vmatmul.mubr.bf16.gmra.mrb[0].mxu0 %v557
  %v1379 = vpop.f32.mrb[0].mxu0
  %v1380 = vadd.f32 0.0, %v1379
  %v1381 = vpop.f32.mrb[0].mxu0
  %v1382 = vpop.f32.mrb[0].mxu0
  %v1383 = vadd.f32 0.0, %v1382
  %v1384 = vpop.f32.mrb[0].mxu0
  %1385 = vdwg.mxu0
  %v1386 = vadd.f32 %v1339, %v1380
  %v1387 = vadd.f32 %v1340, %v1383
  %1388 = vst.msk [vmem:[#allocation7] sm:$0xff] %vm555, %v1386
  %1389 = vst.msk [vmem:[#allocation7 + $0x8] sm:$0xf] %vm603, %v1387
  // Predicated region
  $region74: #{graph_encoder_forward.7} parent=0 // pred_check
    %p1390 = pneg %p57
  $region75: #{graph_encoder_forward.7} parent=0 // pred_check_branch
    %1392 = sbr.rel (%p1390) target = $region77
  $region76: #{graph_encoder_forward.7} parent=0 // pred_region
    %v1393 = vld [vmem:[#allocation6] sm:$0xff]
    %v1394 = vld [vmem:[#allocation6 + $0x8] sm:$0xf]
    %v1395 = vld [vmem:[#allocation7] sm:$0xff]
    %v1396 = vld [vmem:[#allocation7 + $0x8] sm:$0xf]
    %v1397 = vadd.f32 %v1395, 1e-20
    %v1398 = vadd.f32 %v1396, 1e-20
    %v1399 = vrcp.pop %v1397
    %v1400 = vmul.f32 %v1393, %v1399
    %v1401 = vrcp.pop %v1398
    %v1402 = vmul.f32 %v1394, %v1401
    %v1403 = vld [vmem:[#allocation8] sm:$0xff]
    %v1404 = vld [vmem:[#allocation8 + $0x8] sm:$0xf]
    %v1405 = vadd.f32 %v1403, %v1400
    %v1406 = vadd.f32 %v1404, %v1402
    %v1407 = vld [vmem:[%s11] sm:$0xff]
    %v1408 = vld [vmem:[%s11 + $0x8] sm:$0xff]
    %v1409 = vld [vmem:[%s11 + $0x10] sm:$0xff]
    %v1410 = vld [vmem:[%s11 + $0x18] sm:$0xff]
    %v1411 = vld [vmem:[%s11 + $0x20] sm:$0xff]
    %v1412 = vld [vmem:[%s11 + $0x28] sm:$0xff]
    %v1413 = vld [vmem:[%s11 + $0x30] sm:$0xff]
    %v1414 = vld [vmem:[%s11 + $0x38] sm:$0xff]
    %v1415 = vld [vmem:[%s12] sm:$0x1]
    %v1417 = vlaneseq
    %v1418 = vshrl.u32 %v1417, 7
    %v1419 = vsub.s32 0, %v1418
    %v1420 = vrot.slane %v1415, %v1419
    %v1423 = vsel %vm555, %v1405, 0
    %v1426 = vsel %vm555, %v1406, 0
    %1428 = vmatprep.subr.mxu0 0.0
    %1429 = vmatpush1.msra.mxu0 %v1407
    %1430 = vmatprep.subr.mxu0 0.0
    %1431 = vmatpush1.msra.mxu0 %v1408
    %1432 = vmatprep.subr.mxu0 0.0
    %1433 = vmatpush1.msra.mxu0 %v1409
    %1434 = vmatprep.subr.mxu0 0.0
    %1435 = vmatpush1.msra.mxu0 %v1410
    %1436 = vmatprep.subr.mxu0 0.0
    %1437 = vmatpush1.msra.mxu0 %v1411
    %1438 = vmatprep.subr.mxu0 0.0
    %1439 = vmatpush1.msra.mxu0 %v1412
    %1440 = vmatprep.subr.mxu0 0.0
    %1441 = vmatpush1.msra.mxu0 %v1413
    %1442 = vmatprep.subr.mxu0 0.0
    %1443 = vmatpush1.msra.mxu0 %v1414
    %1444 = vmatprep.subr.mxu0 0.0
    %1445 = vmatpush1.msra.mxu0 0.0
    %1446 = vmatprep.subr.mxu0 0.0
    %1447 = vmatpush1.msra.mxu0 0.0
    %1448 = vmatprep.subr.mxu0 0.0
    %1449 = vmatpush1.msra.mxu0 0.0
    %1450 = vmatprep.subr.mxu0 0.0
    %1451 = vmatpush1.msra.mxu0 0.0
    %1452 = vmatprep.subr.mxu0 0.0
    %1453 = vmatpush1.msra.mxu0 0.0
    %1454 = vmatprep.subr.mxu0 0.0
    %1455 = vmatpush1.msra.mxu0 0.0
    %1456 = vmatprep.subr.mxu0 0.0
    %1457 = vmatpush1.msra.mxu0 0.0
    %1458 = vmatprep.subr.mxu0 0.0
    %1459 = vmatpush1.msra.mxu0 0.0
    %1460 = vmatprep.subr.mxu0 0.0
    %1461 = vmatpush1.msra.mxu0 0.0
    %1462 = vmatprep.subr.mxu0 0.0
    %1463 = vmatpush1.msra.mxu0 0.0
    %1464 = vmatprep.subr.mxu0 0.0
    %1465 = vmatpush1.msra.mxu0 0.0
    %1466 = vmatprep.subr.mxu0 0.0
    %1467 = vmatpush1.msra.mxu0 0.0
    %1468 = vmatprep.subr.mxu0 0.0
    %1469 = vmatpush1.msra.mxu0 0.0
    %1470 = vmatprep.subr.mxu0 0.0
    %1471 = vmatpush1.msra.mxu0 0.0
    %1472 = vmatprep.subr.mxu0 0.0
    %1473 = vmatpush1.msra.mxu0 0.0
    %1474 = vmatprep.subr.mxu0 0.0
    %1475 = vmatpush1.msra.mxu0 0.0
    %1476 = vmatprep.subr.mxu0 0.0
    %1477 = vmatpush1.msra.mxu0 0.0
    %1478 = vmatprep.subr.mxu0 0.0
    %1479 = vmatpush1.msra.mxu0 0.0
    %1480 = vmatprep.subr.mxu0 0.0
    %1481 = vmatpush1.msra.mxu0 0.0
    %1482 = vmatprep.subr.mxu0 0.0
    %1483 = vmatpush1.msra.mxu0 0.0
    %1484 = vmatprep.subr.mxu0 0.0
    %1485 = vmatpush1.msra.mxu0 0.0
    %1486 = vmatprep.subr.mxu0 0.0
    %1487 = vmatpush1.msra.mxu0 0.0
    %1488 = vmatprep.subr.mxu0 0.0
    %1489 = vmatpush1.msra.mxu0 0.0
    %1490 = vmatprep.subr.mxu0 0.0
    %1491 = vmatpush1.msra.mxu0 0.0
    %1492 = vmatprep.mubr.f32.mxu0 0.0
    %1493 = vmatmul.mubr.f32.gmra.mrb[0].mxu0 %v1423
    %v1494 = vpop.f32.mrb[0].mxu0
    %v1495 = vadd.f32 %v1420, %v1494
    %v1496 = vpop.f32.mrb[0].mxu0
    %1497 = vmatprep.mubr.f32.mxu0 0.0
    %1498 = vmatmul.mubr.f32.gmra.mrb[0].mxu0 %v1426
    %v1499 = vpop.f32.mrb[0].mxu0
    %v1500 = vadd.f32 %v1420, %v1499
    %v1501 = vpop.f32.mrb[0].mxu0
    %1502 = vdwg.mxu0
    %v1503 = vmax.f32 %v1495, 0.0
    %v1504 = vmax.f32 %v1500, 0.0
    %v1505 = vld [vmem:[%s15] sm:$0x1]
    %v1507 = vlaneseq
    %v1508 = vshrl.u32 %v1507, 7
    %v1509 = vsub.s32 0, %v1508
    %v1510 = vrot.slane %v1505, %v1509
    %v1512 = vsub.f32 %v1503, %v1510
    %v1513 = vsub.f32 %v1504, %v1510
    %v1514 = vld [vmem:[%s16] sm:$0x1]
    %v1515 = vadd.f32 %v1514, 1e-05
    %v1516 = vrsqrt.pop %v1515
    %v1518 = vlaneseq
    %v1519 = vshrl.u32 %v1518, 7
    %v1520 = vsub.s32 0, %v1519
    %v1521 = vrot.slane %v1516, %v1520
    %v1523 = vmul.f32 %v1512, %v1521
    %v1524 = vmul.f32 %v1513, %v1521
    %v1525 = vld [vmem:[%s13] sm:$0x1]
    %v1527 = vlaneseq
    %v1528 = vshrl.u32 %v1527, 7
    %v1529 = vsub.s32 0, %v1528
    %v1530 = vrot.slane %v1525, %v1529
    %v1532 = vmul.f32 %v1523, %v1530
    %v1533 = vmul.f32 %v1524, %v1530
    %v1534 = vld [vmem:[%s14] sm:$0x1]
    %v1536 = vlaneseq
    %v1537 = vshrl.u32 %v1536, 7
    %v1538 = vsub.s32 0, %v1537
    %v1539 = vrot.slane %v1534, %v1538
    %v1541 = vadd.f32 %v1532, %v1539
    %v1542 = vadd.f32 %v1533, %v1539
    %vm1543 = vcmask 130048
    %1544 = vst.msk [vmem:[%s17] sm:$0xff] %vm1543, %v1541
    %vm1545 = vcmask 125952
    %1546 = vst.msk [vmem:[%s17 + $0x8] sm:$0xf] %vm1545, %v1542
  $region77: #{graph_encoder_forward.7} parent=0 // pred_fallthru
    _
  // Predicated region
  $region78: #{graph_encoder_forward.7} parent=0 // pred_check
    _
  $region79: #{graph_encoder_forward.7} parent=0 // pred_check_branch
    %1548 = sbr.rel (0) target = $region81
  $region80: #{graph_encoder_forward.7} parent=0 // pred_region
    _
  $region81: #{graph_encoder_forward.7} parent=0 // pred_fallthru
    _
  // Predicated region
  $region82: #{graph_encoder_forward.7} parent=0 // pred_check
    _
  $region83: #{graph_encoder_forward.7} parent=0 // pred_check_branch
    %1550 = sbr.rel (0) target = $region85
  $region84: #{graph_encoder_forward.7} parent=0 // pred_region
    _
  $region85: #{graph_encoder_forward.7} parent=0 // pred_fallthru
    _

// kernel: graph_encoder_forward.6
$region0: #{graph_encoder_forward.6}
  #allocation0 [shape = 'u32[]', space=smem, size = 0x4, offset = 0x4, fixed_abs, tag = 'smem constant byte address 0x4 - core index']
  #allocation1 [shape = 'u32[144,128]{1,0:T(1,128)}', space=vmem, size = 0x12000, scoped, tag = 'internal scratch']
  #allocation2 [shape = 'bf16[12,64]{1,0:T(8,128)(2,1)}', space=vmem, size = 0x1000, scoped, tag = 'scratch operand']
  #allocation3 [shape = 'bf16[12,64]{1,0:T(8,128)(2,1)}', space=vmem, size = 0x1000, scoped, tag = 'scratch operand']
  #allocation4 [shape = 'bf16[12,64]{1,0:T(8,128)(2,1)}', space=vmem, size = 0x1000, scoped, tag = 'scratch operand']
  #allocation5 [shape = 'bf16[12,64]{1,0:T(8,128)(2,1)}', space=vmem, size = 0x1000, scoped, tag = 'scratch operand']
  #allocation6 [shape = 'f32[12,64]{1,0:T(8,128)}', space=vmem, size = 0x2000, scoped, tag = 'scratch operand']
  #allocation7 [shape = 'f32[12,64]{1,0:T(8,128)}', space=vmem, size = 0x2000, scoped, tag = 'scratch operand']
  #allocation8 [shape = 'f32[12,64]{1,0:T(8,128)}', space=vmem, size = 0x2000, scoped, tag = 'scratch operand']
  %s0 = inlined_call_operand.vmem [shape: f32[12,8], index: 0, kind: input, shape index: {}]
  %s1 = inlined_call_operand.vmem [shape: bf16[64,12], index: 1, kind: input, shape index: {}]
  %s2 = inlined_call_operand.vmem [shape: bf16[64,12], index: 2, kind: input, shape index: {}]
  %s3 = inlined_call_operand.vmem [shape: f32[64,4], index: 3, kind: input, shape index: {}]
  %s4 = inlined_call_operand.vmem [shape: f32[64,1], index: 4, kind: input, shape index: {}]
  %s5 = inlined_call_operand.vmem [shape: f32[64,4], index: 5, kind: input, shape index: {}]
  %s6 = inlined_call_operand.vmem [shape: f32[8,320], index: 6, kind: input, shape index: {}]
  %s7 = inlined_call_operand.vmem [shape: f32[1,320], index: 7, kind: input, shape index: {}]
  %s8 = inlined_call_operand.vmem [shape: f32[4,64], index: 8, kind: input, shape index: {}]
  %s9 = inlined_call_operand.vmem [shape: f32[1,64], index: 9, kind: input, shape index: {}]
  %s10 = inlined_call_operand.vmem [shape: f32[4,64], index: 10, kind: input, shape index: {}]
  %s11 = inlined_call_operand.vmem [shape: f32[64,16], index: 11, kind: input, shape index: {}]
  %s12 = inlined_call_operand.vmem [shape: f32[1,16], index: 12, kind: input, shape index: {}]
  %s13 = inlined_call_operand.vmem [shape: f32[1,16], index: 13, kind: input, shape index: {}]
  %s14 = inlined_call_operand.vmem [shape: f32[1,16], index: 14, kind: input, shape index: {}]
  %s15 = inlined_call_operand.vmem [shape: f32[1,16], index: 15, kind: input, shape index: {}]
  %s16 = inlined_call_operand.vmem [shape: f32[1,16], index: 16, kind: input, shape index: {}]
  %s17 = inlined_call_operand.vmem [shape: f32[12,16], index: 17, kind: output, shape index: {}]
  %s18 = sld [smem:[#allocation0]]
  $region86: #{graph_encoder_forward.6} parent=0
    _
  %s20 = ssub.s32 1, %s18
  %s21 = scalar_select 0, %s20, %s18
  // Predicated region
  $region2: #{graph_encoder_forward.6} parent=0 // pred_check
    _
  $region3: #{graph_encoder_forward.6} parent=0 // pred_check_branch
    %23 = sbr.rel (0) target = $region5
  $region4: #{graph_encoder_forward.6} parent=0 // pred_region
    _
  $region5: #{graph_encoder_forward.6} parent=0 // pred_fallthru
    _
  // Predicated region
  $region6: #{graph_encoder_forward.6} parent=0 // pred_check
    _
  $region7: #{graph_encoder_forward.6} parent=0 // pred_check_branch
    %25 = sbr.rel (0) target = $region9
  $region8: #{graph_encoder_forward.6} parent=0 // pred_region
    _
  $region9: #{graph_encoder_forward.6} parent=0 // pred_fallthru
    _
  // Predicated region
  $region10: #{graph_encoder_forward.6} parent=0 // pred_check
    _
  $region11: #{graph_encoder_forward.6} parent=0 // pred_check_branch
    %27 = sbr.rel (0) target = $region13
  $region12: #{graph_encoder_forward.6} parent=0 // pred_region
    _
  $region13: #{graph_encoder_forward.6} parent=0 // pred_fallthru
    _
  // Predicated region
  $region14: #{graph_encoder_forward.6} parent=0 // pred_check
    _
  $region15: #{graph_encoder_forward.6} parent=0 // pred_check_branch
    %29 = sbr.rel (0) target = $region17
  $region16: #{graph_encoder_forward.6} parent=0 // pred_region
    _
  $region17: #{graph_encoder_forward.6} parent=0 // pred_fallthru
    _
  // Predicated region
  $region18: #{graph_encoder_forward.6} parent=0 // pred_check
    _
  $region19: #{graph_encoder_forward.6} parent=0 // pred_check_branch
    %31 = sbr.rel (0) target = $region21
  $region20: #{graph_encoder_forward.6} parent=0 // pred_region
    _
  $region21: #{graph_encoder_forward.6} parent=0 // pred_fallthru
    _
  // Predicated region
  $region22: #{graph_encoder_forward.6} parent=0 // pred_check
    _
  $region23: #{graph_encoder_forward.6} parent=0 // pred_check_branch
    %33 = sbr.rel (0) target = $region25
  $region24: #{graph_encoder_forward.6} parent=0 // pred_region
    _
  $region25: #{graph_encoder_forward.6} parent=0 // pred_fallthru
    _
  // Predicated region
  $region26: #{graph_encoder_forward.6} parent=0 // pred_check
    _
  $region27: #{graph_encoder_forward.6} parent=0 // pred_check_branch
    %35 = sbr.rel (0) target = $region29
  $region28: #{graph_encoder_forward.6} parent=0 // pred_region
    _
  $region29: #{graph_encoder_forward.6} parent=0 // pred_fallthru
    _
  // Predicated region
  $region30: #{graph_encoder_forward.6} parent=0 // pred_check
    _
  $region31: #{graph_encoder_forward.6} parent=0 // pred_check_branch
    %37 = sbr.rel (0) target = $region33
  $region32: #{graph_encoder_forward.6} parent=0 // pred_region
    _
  $region33: #{graph_encoder_forward.6} parent=0 // pred_fallthru
    _
  // Predicated region
  $region34: #{graph_encoder_forward.6} parent=0 // pred_check
    _
  $region35: #{graph_encoder_forward.6} parent=0 // pred_check_branch
    %39 = sbr.rel (0) target = $region37
  $region36: #{graph_encoder_forward.6} parent=0 // pred_region
    _
  $region37: #{graph_encoder_forward.6} parent=0 // pred_fallthru
    _
  // Predicated region
  $region38: #{graph_encoder_forward.6} parent=0 // pred_check
    _
  $region39: #{graph_encoder_forward.6} parent=0 // pred_check_branch
    %41 = sbr.rel (0) target = $region41
  $region40: #{graph_encoder_forward.6} parent=0 // pred_region
    _
  $region41: #{graph_encoder_forward.6} parent=0 // pred_fallthru
    _
  // Predicated region
  $region42: #{graph_encoder_forward.6} parent=0 // pred_check
    _
  $region43: #{graph_encoder_forward.6} parent=0 // pred_check_branch
    %43 = sbr.rel (0) target = $region45
  $region44: #{graph_encoder_forward.6} parent=0 // pred_region
    _
  $region45: #{graph_encoder_forward.6} parent=0 // pred_fallthru
    _
  // Predicated region
  $region46: #{graph_encoder_forward.6} parent=0 // pred_check
    _
  $region47: #{graph_encoder_forward.6} parent=0 // pred_check_branch
    %45 = sbr.rel (0) target = $region49
  $region48: #{graph_encoder_forward.6} parent=0 // pred_region
    _
  $region49: #{graph_encoder_forward.6} parent=0 // pred_fallthru
    _
  // Predicated region
  $region50: #{graph_encoder_forward.6} parent=0 // pred_check
    _
  $region51: #{graph_encoder_forward.6} parent=0 // pred_check_branch
    %47 = sbr.rel (0) target = $region53
  $region52: #{graph_encoder_forward.6} parent=0 // pred_region
    _
  $region53: #{graph_encoder_forward.6} parent=0 // pred_fallthru
    _
  // Predicated region
  $region54: #{graph_encoder_forward.6} parent=0 // pred_check
    _
  $region55: #{graph_encoder_forward.6} parent=0 // pred_check_branch
    %49 = sbr.rel (0) target = $region57
  $region56: #{graph_encoder_forward.6} parent=0 // pred_region
    _
  $region57: #{graph_encoder_forward.6} parent=0 // pred_fallthru
    _
  // Predicated region
  $region58: #{graph_encoder_forward.6} parent=0 // pred_check
    _
  $region59: #{graph_encoder_forward.6} parent=0 // pred_check_branch
    %51 = sbr.rel (0) target = $region61
  $region60: #{graph_encoder_forward.6} parent=0 // pred_region
    _
  $region61: #{graph_encoder_forward.6} parent=0 // pred_fallthru
    _
  // Predicated region
  $region62: #{graph_encoder_forward.6} parent=0 // pred_check
    _
  $region63: #{graph_encoder_forward.6} parent=0 // pred_check_branch
    %53 = sbr.rel (0) target = $region65
  $region64: #{graph_encoder_forward.6} parent=0 // pred_region
    _
  $region65: #{graph_encoder_forward.6} parent=0 // pred_fallthru
    _
  // Predicated region
  $region66: #{graph_encoder_forward.6} parent=0 // pred_check
    _
  $region67: #{graph_encoder_forward.6} parent=0 // pred_check_branch
    %55 = sbr.rel (0) target = $region69
  $region68: #{graph_encoder_forward.6} parent=0 // pred_region
    _
  $region69: #{graph_encoder_forward.6} parent=0 // pred_fallthru
    _
  %p57 = scmp.eq.s32.totalorder 0, 0
  // Predicated region
  $region70: #{graph_encoder_forward.6} parent=0 // pred_check
    %p58 = pneg %p57
  $region71: #{graph_encoder_forward.6} parent=0 // pred_check_branch
    %60 = sbr.rel (%p58) target = $region73
  $region72: #{graph_encoder_forward.6} parent=0 // pred_region
    %v61 = vld [vmem:[%s0] sm:$0xff]
    %v62 = vld [vmem:[%s0 + $0x8] sm:$0xf]
    %v63 = vld [vmem:[%s6] sm:$0xff]
    %v64 = vld [vmem:[%s6 + $0x8] sm:$0xff]
    %v65 = vld [vmem:[%s6 + $0x10] sm:$0xff]
    %v66 = vld [vmem:[%s7] sm:$0x7]
    %v68 = vlaneseq
    %v69 = vshrl.u32 %v68, 7
    %v70 = vsub.s32 0, %v69
    %v71 = vrot.slane %v66, %v70
    %v72 = vlaneseq
    %v73 = vshrl.u32 %v72, 7
    %v74 = vsub.s32 1, %v73
    %v75 = vrot.slane %v66, %v74
    %v76 = vlaneseq
    %v77 = vshrl.u32 %v76, 7
    %v78 = vsub.s32 2, %v77
    %v79 = vrot.slane %v66, %v78
    %vm83 = vcmask 64512
    %v85 = vsel %vm83, %v61, 0
    %v88 = vsel %vm83, %v62, 0
    %90 = vmatprep.subr.mxu0 %v64
    %91 = vmatpush1.msra.mxu0 %v63
    %92 = vmatprep.subr.mxu0 0.0
    %93 = vmatpush1.msra.mxu0 0.0
    %94 = vmatprep.subr.mxu0 0.0
    %95 = vmatpush1.msra.mxu0 0.0
    %96 = vmatprep.subr.mxu0 0.0
    %97 = vmatpush1.msra.mxu0 0.0
    %98 = vmatprep.subr.mxu0 0.0
    %99 = vmatpush1.msra.mxu0 0.0
    %100 = vmatprep.subr.mxu0 0.0
    %101 = vmatpush1.msra.mxu0 0.0
    %102 = vmatprep.subr.mxu0 0.0
    %103 = vmatpush1.msra.mxu0 0.0
    %104 = vmatprep.subr.mxu0 0.0
    %105 = vmatpush1.msra.mxu0 0.0
    %106 = vmatprep.subr.mxu0 0.0
    %107 = vmatpush1.msra.mxu0 0.0
    %108 = vmatprep.subr.mxu0 0.0
    %109 = vmatpush1.msra.mxu0 0.0
    %110 = vmatprep.subr.mxu0 0.0
    %111 = vmatpush1.msra.mxu0 0.0
    %112 = vmatprep.subr.mxu0 0.0
    %113 = vmatpush1.msra.mxu0 0.0
    %114 = vmatprep.subr.mxu0 0.0
    %115 = vmatpush1.msra.mxu0 0.0
    %116 = vmatprep.subr.mxu0 0.0
    %117 = vmatpush1.msra.mxu0 0.0
    %118 = vmatprep.subr.mxu0 0.0
    %119 = vmatpush1.msra.mxu0 0.0
    %120 = vmatprep.subr.mxu0 0.0
    %121 = vmatpush1.msra.mxu0 0.0
    %122 = vmatprep.subr.mxu0 0.0
    %123 = vmatpush1.msra.mxu0 0.0
    %124 = vmatprep.subr.mxu0 0.0
    %125 = vmatpush1.msra.mxu0 0.0
    %126 = vmatprep.subr.mxu0 0.0
    %127 = vmatpush1.msra.mxu0 0.0
    %128 = vmatprep.subr.mxu0 0.0
    %129 = vmatpush1.msra.mxu0 0.0
    %130 = vmatprep.subr.mxu0 0.0
    %131 = vmatpush1.msra.mxu0 0.0
    %132 = vmatprep.subr.mxu0 0.0
    %133 = vmatpush1.msra.mxu0 0.0
    %134 = vmatprep.subr.mxu0 0.0
    %135 = vmatpush1.msra.mxu0 0.0
    %136 = vmatprep.subr.mxu0 0.0
    %137 = vmatpush1.msra.mxu0 0.0
    %138 = vmatprep.subr.mxu0 0.0
    %139 = vmatpush1.msra.mxu0 0.0
    %140 = vmatprep.subr.mxu0 0.0
    %141 = vmatpush1.msra.mxu0 0.0
    %142 = vmatprep.subr.mxu0 0.0
    %143 = vmatpush1.msra.mxu0 0.0
    %144 = vmatprep.subr.mxu0 0.0
    %145 = vmatpush1.msra.mxu0 0.0
    %146 = vmatprep.subr.mxu0 0.0
    %147 = vmatpush1.msra.mxu0 0.0
    %148 = vmatprep.subr.mxu0 0.0
    %149 = vmatpush1.msra.mxu0 0.0
    %150 = vmatprep.subr.mxu0 0.0
    %151 = vmatpush1.msra.mxu0 0.0
    %152 = vmatprep.subr.mxu0 0.0
    %153 = vmatpush1.msra.mxu0 0.0
    %154 = vmatprep.mubr.f32.mxu0 0.0
    %155 = vmatmul.mubr.f32.gmra.mrb[0].mxu0 %v85
    %v156 = vpop.f32.mrb[0].mxu0
    %v157 = vadd.f32 %v71, %v156
    %v158 = vpop.f32.mrb[0].mxu0
    %v159 = vadd.f32 %v75, %v158
    %160 = vmatprep.mubr.f32.mxu0 0.0
    %161 = vmatmul.mubr.f32.gmra.mrb[0].mxu0 %v88
    %v162 = vpop.f32.mrb[0].mxu0
    %v163 = vadd.f32 %v71, %v162
    %v164 = vpop.f32.mrb[0].mxu0
    %v165 = vadd.f32 %v75, %v164
    %166 = vdwg.mxu0
    %167 = vmatprep.subr.mxu0 0.0
    %168 = vmatpush1.msra.mxu0 %v65
    %169 = vmatprep.subr.mxu0 0.0
    %170 = vmatpush1.msra.mxu0 0.0
    %171 = vmatprep.subr.mxu0 0.0
    %172 = vmatpush1.msra.mxu0 0.0
    %173 = vmatprep.subr.mxu0 0.0
    %174 = vmatpush1.msra.mxu0 0.0
    %175 = vmatprep.subr.mxu0 0.0
    %176 = vmatpush1.msra.mxu0 0.0
    %177 = vmatprep.subr.mxu0 0.0
    %178 = vmatpush1.msra.mxu0 0.0
    %179 = vmatprep.subr.mxu0 0.0
    %180 = vmatpush1.msra.mxu0 0.0
    %181 = vmatprep.subr.mxu0 0.0
    %182 = vmatpush1.msra.mxu0 0.0
    %183 = vmatprep.subr.mxu0 0.0
    %184 = vmatpush1.msra.mxu0 0.0
    %185 = vmatprep.subr.mxu0 0.0
    %186 = vmatpush1.msra.mxu0 0.0
    %187 = vmatprep.subr.mxu0 0.0
    %188 = vmatpush1.msra.mxu0 0.0
    %189 = vmatprep.subr.mxu0 0.0
    %190 = vmatpush1.msra.mxu0 0.0
    %191 = vmatprep.subr.mxu0 0.0
    %192 = vmatpush1.msra.mxu0 0.0
    %193 = vmatprep.subr.mxu0 0.0
    %194 = vmatpush1.msra.mxu0 0.0
    %195 = vmatprep.subr.mxu0 0.0
    %196 = vmatpush1.msra.mxu0 0.0
    %197 = vmatprep.subr.mxu0 0.0
    %198 = vmatpush1.msra.mxu0 0.0
    %199 = vmatprep.subr.mxu0 0.0
    %200 = vmatpush1.msra.mxu0 0.0
    %201 = vmatprep.subr.mxu0 0.0
    %202 = vmatpush1.msra.mxu0 0.0
    %203 = vmatprep.subr.mxu0 0.0
    %204 = vmatpush1.msra.mxu0 0.0
    %205 = vmatprep.subr.mxu0 0.0
    %206 = vmatpush1.msra.mxu0 0.0
    %207 = vmatprep.subr.mxu0 0.0
    %208 = vmatpush1.msra.mxu0 0.0
    %209 = vmatprep.subr.mxu0 0.0
    %210 = vmatpush1.msra.mxu0 0.0
    %211 = vmatprep.subr.mxu0 0.0
    %212 = vmatpush1.msra.mxu0 0.0
    %213 = vmatprep.subr.mxu0 0.0
    %214 = vmatpush1.msra.mxu0 0.0
    %215 = vmatprep.subr.mxu0 0.0
    %216 = vmatpush1.msra.mxu0 0.0
    %217 = vmatprep.subr.mxu0 0.0
    %218 = vmatpush1.msra.mxu0 0.0
    %219 = vmatprep.subr.mxu0 0.0
    %220 = vmatpush1.msra.mxu0 0.0
    %221 = vmatprep.subr.mxu0 0.0
    %222 = vmatpush1.msra.mxu0 0.0
    %223 = vmatprep.subr.mxu0 0.0
    %224 = vmatpush1.msra.mxu0 0.0
    %225 = vmatprep.subr.mxu0 0.0
    %226 = vmatpush1.msra.mxu0 0.0
    %227 = vmatprep.subr.mxu0 0.0
    %228 = vmatpush1.msra.mxu0 0.0
    %229 = vmatprep.subr.mxu0 0.0
    %230 = vmatpush1.msra.mxu0 0.0
    %231 = vmatprep.mubr.f32.mxu0 0.0
    %232 = vmatmul.mubr.f32.gmra.mrb[0].mxu0 %v85
    %v233 = vpop.f32.mrb[0].mxu0
    %v234 = vadd.f32 %v79, %v233
    %v235 = vpop.f32.mrb[0].mxu0
    %236 = vmatprep.mubr.f32.mxu0 0.0
    %237 = vmatmul.mubr.f32.gmra.mrb[0].mxu0 %v88
    %v238 = vpop.f32.mrb[0].mxu0
    %v239 = vadd.f32 %v79, %v238
    %v240 = vpop.f32.mrb[0].mxu0
    %241 = vdwg.mxu0
    %v242 = vpack.c.bf16 %v163, %v157
    %v244 = vunpack.c.l.b16 %v242
    %v245 = vunpack.c.h.b16 %v242
    %v246 = vpack.c.b16 %v244, %v244
    %v247 = vpack.c.b16 %v245, %v245
    %vm250 = vcmask 519168
    %251 = vst.msk [vmem:[#allocation2] sm:$0xf] %vm250, %v246
    %vm252 = vcmask 517120
    %253 = vst.msk [vmem:[#allocation2 + $0x4] sm:$0x3] %vm252, %v247
    %254 = vrot.lane.b32.xlu0 %v246, 64
    %v255 = vpop.permute.xlu0 %254
    %256 = vrot.lane.b32.xlu0 %v247, 64
    %v257 = vpop.permute.xlu0 %256
    %260 = vst.msk [vmem:[#allocation3] sm:$0xf] %vm250, %v255
    %261 = vst.msk [vmem:[#allocation3 + $0x4] sm:$0x3] %vm252, %v257
    %v262 = vpack.c.bf16 %v165, %v159
    %v264 = vunpack.c.l.b16 %v262
    %v265 = vunpack.c.h.b16 %v262
    %v266 = vpack.c.b16 %v264, %v264
    %v267 = vpack.c.b16 %v265, %v265
    %270 = vst.msk [vmem:[#allocation4] sm:$0xf] %vm250, %v266
    %271 = vst.msk [vmem:[#allocation4 + $0x4] sm:$0x3] %vm252, %v267
    %v272 = vpack.c.bf16 %v239, %v234
    %v274 = vunpack.c.l.b16 %v272
    %v275 = vunpack.c.h.b16 %v272
    %v276 = vpack.c.b16 %v274, %v274
    %v277 = vpack.c.b16 %v275, %v275
    %280 = vst.msk [vmem:[#allocation5] sm:$0xf] %vm250, %v276
    %281 = vst.msk [vmem:[#allocation5 + $0x4] sm:$0x3] %vm252, %v277
    %v282 = vld [vmem:[%s9] sm:$0x1]
    %v284 = vlaneseq
    %v285 = vshrl.u32 %v284, 7
    %v286 = vsub.s32 0, %v285
    %v287 = vrot.slane %v282, %v286
    %288 = vrot.lane.b32.xlu0 %v287, 64
    %v289 = vpop.permute.xlu0 %288
    %v291 = vadd.f32 %v159, %v289
    %v292 = vadd.f32 %v165, %v289
    %295 = vrot.lane.b32.xlu0 %v291, 64
    %v296 = vpop.permute.xlu0 %295
    %297 = vrot.lane.b32.xlu0 %v292, 64
    %v298 = vpop.permute.xlu0 %297
    %vm301 = vcmask 523264
    %302 = vst.msk [vmem:[#allocation8] sm:$0xff] %vm301, %v296
    %303 = vst.msk [vmem:[#allocation8 + $0x8] sm:$0xf] %vm250, %v298
    %304 = vst.msk [vmem:[#allocation6] sm:$0xff] %vm301, 0.0
    %305 = vst.msk [vmem:[#allocation6 + $0x8] sm:$0xf] %vm250, 0.0
    %306 = vst.msk [vmem:[#allocation7] sm:$0xff] %vm301, 0.0
    %307 = vst.msk [vmem:[#allocation7 + $0x8] sm:$0xf] %vm250, 0.0
  $region73: #{graph_encoder_forward.6} parent=0 // pred_fallthru
    _
  %v308 = vld [vmem:[%s1] sm:$0xf]
  %v309 = vld [vmem:[%s1 + $0x4] sm:$0xf]
  %v310 = vld [vmem:[%s1 + $0x8] sm:$0xf]
  %v311 = vld [vmem:[%s1 + $0xc] sm:$0xf]
  %v312 = vld [vmem:[%s1 + $0x10] sm:$0xf]
  %v313 = vld [vmem:[%s1 + $0x14] sm:$0xf]
  %v314 = vld [vmem:[%s1 + $0x18] sm:$0xf]
  %v315 = vld [vmem:[%s1 + $0x1c] sm:$0xf]
  %v316 = vld [vmem:[%s2] sm:$0xf]
  %v317 = vld [vmem:[%s2 + $0x4] sm:$0xf]
  %v318 = vld [vmem:[%s2 + $0x8] sm:$0xf]
  %v319 = vld [vmem:[%s2 + $0xc] sm:$0xf]
  %v320 = vld [vmem:[%s2 + $0x10] sm:$0xf]
  %v321 = vld [vmem:[%s2 + $0x14] sm:$0xf]
  %v322 = vld [vmem:[%s2 + $0x18] sm:$0xf]
  %v323 = vld [vmem:[%s2 + $0x1c] sm:$0xf]
  %v324 = vld [vmem:[%s3] sm:$0xff]
  %v325 = vld [vmem:[%s3 + $0x8] sm:$0xff]
  %v326 = vld [vmem:[%s3 + $0x10] sm:$0xff]
  %v327 = vld [vmem:[%s3 + $0x18] sm:$0xff]
  %v328 = vld [vmem:[%s3 + $0x20] sm:$0xff]
  %v329 = vld [vmem:[%s3 + $0x28] sm:$0xff]
  %v330 = vld [vmem:[%s3 + $0x30] sm:$0xff]
  %v331 = vld [vmem:[%s3 + $0x38] sm:$0xff]
  %v332 = vld [vmem:[%s4] sm:$0xff]
  %v333 = vld [vmem:[%s4 + $0x8] sm:$0xff]
  %v334 = vld [vmem:[%s4 + $0x10] sm:$0xff]
  %v335 = vld [vmem:[%s4 + $0x18] sm:$0xff]
  %v336 = vld [vmem:[%s4 + $0x20] sm:$0xff]
  %v337 = vld [vmem:[%s4 + $0x28] sm:$0xff]
  %v338 = vld [vmem:[%s4 + $0x30] sm:$0xff]
  %v339 = vld [vmem:[%s4 + $0x38] sm:$0xff]
  %v340 = vld [vmem:[%s5] sm:$0xff]
  %v341 = vld [vmem:[%s5 + $0x8] sm:$0xff]
  %v342 = vld [vmem:[%s5 + $0x10] sm:$0xff]
  %v343 = vld [vmem:[%s5 + $0x18] sm:$0xff]
  %v344 = vld [vmem:[%s5 + $0x20] sm:$0xff]
  %v345 = vld [vmem:[%s5 + $0x28] sm:$0xff]
  %v346 = vld [vmem:[%s5 + $0x30] sm:$0xff]
  %v347 = vld [vmem:[%s5 + $0x38] sm:$0xff]
  %v348 = vld [vmem:[%s10] sm:$0xf]
  %v349 = vld [vmem:[#allocation5] sm:$0xf]
  %v350 = vld [vmem:[#allocation5 + $0x4] sm:$0x3]
  %v359 = vunpack.c.l.b16 %v308
  %v360 = vunpack.c.l.b16 %v309
  %v361 = vunpack.c.l.b16 %v310
  %v362 = vunpack.c.l.b16 %v311
  %v363 = vunpack.c.l.b16 %v312
  %v364 = vunpack.c.l.b16 %v313
  %v365 = vunpack.c.l.b16 %v314
  %v366 = vunpack.c.l.b16 %v315
  %v367 = vpack.c.b16 %v360, %v359
  %v368 = vpack.c.b16 %v362, %v361
  %v369 = vpack.c.b16 %v364, %v363
  %v370 = vpack.c.b16 %v366, %v365
  %v373 = vunpack.c.l.b16 %v349
  %v374 = vunpack.c.l.b16 %v350
  %v375 = vpack.c.b16 %v374, %v373
  %vm376 = vcmask 97280
  %v378 = vsel %vm376, %v367, 0
  %v381 = vsel %vm376, %v368, 0
  %v384 = vsel %vm376, %v369, 0
  %v387 = vsel %vm376, %v370, 0
  %vm389 = vcmask 1045504
  %v391 = vsel %vm389, %v375, 0
  %393 = vmatprep.subr.bf16.mxu0 0
  %394 = vmatpush1.bf16.msra.mxu0 %v391
  %395 = vmatprep.subr.bf16.mxu0 0
  %396 = vmatpush1.bf16.msra.mxu0 0
  %397 = vmatprep.subr.bf16.mxu0 0
  %398 = vmatpush1.bf16.msra.mxu0 0
  %399 = vmatprep.subr.bf16.mxu0 0
  %400 = vmatpush1.bf16.msra.mxu0 0
  %401 = vmatprep.subr.bf16.mxu0 0
  %402 = vmatpush1.bf16.msra.mxu0 0
  %403 = vmatprep.subr.bf16.mxu0 0
  %404 = vmatpush1.bf16.msra.mxu0 0
  %405 = vmatprep.subr.bf16.mxu0 0
  %406 = vmatpush1.bf16.msra.mxu0 0
  %407 = vmatprep.subr.bf16.mxu0 0
  %408 = vmatpush1.bf16.msra.mxu0 0
  %409 = vmatprep.subr.bf16.mxu0 0
  %410 = vmatpush1.bf16.msra.mxu0 0
  %411 = vmatprep.subr.bf16.mxu0 0
  %412 = vmatpush1.bf16.msra.mxu0 0
  %413 = vmatprep.subr.bf16.mxu0 0
  %414 = vmatpush1.bf16.msra.mxu0 0
  %415 = vmatprep.subr.bf16.mxu0 0
  %416 = vmatpush1.bf16.msra.mxu0 0
  %417 = vmatprep.subr.bf16.mxu0 0
  %418 = vmatpush1.bf16.msra.mxu0 0
  %419 = vmatprep.subr.bf16.mxu0 0
  %420 = vmatpush1.bf16.msra.mxu0 0
  %421 = vmatprep.subr.bf16.mxu0 0
  %422 = vmatpush1.bf16.msra.mxu0 0
  %423 = vmatprep.subr.bf16.mxu0 0
  %424 = vmatpush1.bf16.msra.mxu0 0
  %425 = vmatprep.mubr.bf16.mxu0 0
  %426 = vmatmul.mubr.bf16.gmra.mrb[0].mxu0 %v378
  %v427 = vpop.f32.mrb[0].mxu0
  %v428 = vadd.f32 0.0, %v427
  %v429 = vpop.f32.mrb[0].mxu0
  %v430 = vpop.f32.mrb[0].mxu0
  %v431 = vadd.f32 0.0, %v430
  %v432 = vpop.f32.mrb[0].mxu0
  %433 = vmatprep.mubr.bf16.mxu0 0
  %434 = vmatmul.mubr.bf16.gmra.mrb[0].mxu0 %v381
  %v435 = vpop.f32.mrb[0].mxu0
  %v436 = vadd.f32 0.0, %v435
  %v437 = vpop.f32.mrb[0].mxu0
  %v438 = vpop.f32.mrb[0].mxu0
  %v439 = vadd.f32 0.0, %v438
  %v440 = vpop.f32.mrb[0].mxu0
  %441 = vmatprep.mubr.bf16.mxu0 0
  %442 = vmatmul.mubr.bf16.gmra.mrb[0].mxu0 %v384
  %v443 = vpop.f32.mrb[0].mxu0
  %v444 = vadd.f32 0.0, %v443
  %v445 = vpop.f32.mrb[0].mxu0
  %v446 = vpop.f32.mrb[0].mxu0
  %v447 = vadd.f32 0.0, %v446
  %v448 = vpop.f32.mrb[0].mxu0
  %449 = vmatprep.mubr.bf16.mxu0 0
  %450 = vmatmul.mubr.bf16.gmra.mrb[0].mxu0 %v387
  %v451 = vpop.f32.mrb[0].mxu0
  %v452 = vadd.f32 0.0, %v451
  %v453 = vpop.f32.mrb[0].mxu0
  %v454 = vpop.f32.mrb[0].mxu0
  %v455 = vadd.f32 0.0, %v454
  %v456 = vpop.f32.mrb[0].mxu0
  %457 = vdwg.mxu0
  %v458 = vld [vmem:[#allocation8] sm:$0xff]
  %v459 = vld [vmem:[#allocation8 + $0x8] sm:$0xf]
  %461 = vset.pattern.permute.xlu0 0
  %462 = vperm.xlu0 %461, %v332
  %v463 = vpop.permute.xlu0 %462
  %466 = vset.pattern.permute.xlu0 0
  %467 = vperm.xlu0 %466, %v333
  %v468 = vpop.permute.xlu0 %467
  %471 = vset.pattern.permute.xlu0 0
  %472 = vperm.xlu0 %471, %v334
  %v473 = vpop.permute.xlu0 %472
  %476 = vset.pattern.permute.xlu0 0
  %477 = vperm.xlu0 %476, %v335
  %v478 = vpop.permute.xlu0 %477
  %481 = vset.pattern.permute.xlu0 0
  %482 = vperm.xlu0 %481, %v336
  %v483 = vpop.permute.xlu0 %482
  %486 = vset.pattern.permute.xlu0 0
  %487 = vperm.xlu0 %486, %v337
  %v488 = vpop.permute.xlu0 %487
  %491 = vset.pattern.permute.xlu0 0
  %492 = vperm.xlu0 %491, %v338
  %v493 = vpop.permute.xlu0 %492
  %496 = vset.pattern.permute.xlu0 0
  %497 = vperm.xlu0 %496, %v339
  %v498 = vpop.permute.xlu0 %497
  %v500 = vmul.f32 %v463, %v428
  %v501 = vmul.f32 %v468, %v431
  %v502 = vmul.f32 %v473, %v436
  %v503 = vmul.f32 %v478, %v439
  %v504 = vmul.f32 %v483, %v444
  %v505 = vmul.f32 %v488, %v447
  %v506 = vmul.f32 %v493, %v452
  %v507 = vmul.f32 %v498, %v455
  %v508 = vpack.c.bf16 %v501, %v500
  %v509 = vpack.c.bf16 %v503, %v502
  %v510 = vpack.c.bf16 %v505, %v504
  %v511 = vpack.c.bf16 %v507, %v506
  %v520 = vunpack.c.l.b16 %v316
  %v521 = vunpack.c.l.b16 %v317
  %v522 = vunpack.c.l.b16 %v318
  %v523 = vunpack.c.l.b16 %v319
  %v524 = vunpack.c.l.b16 %v320
  %v525 = vunpack.c.l.b16 %v321
  %v526 = vunpack.c.l.b16 %v322
  %v527 = vunpack.c.l.b16 %v323
  %v528 = vpack.c.b16 %v521, %v520
  %v529 = vpack.c.b16 %v523, %v522
  %v530 = vpack.c.b16 %v525, %v524
  %v531 = vpack.c.b16 %v527, %v526
  %536 = vxpose.xlu0.c.b16.start [1/8] %v528, 128
  %537 = vxpose.xlu0.c.b16.cont [2/8] %v529, 128
  %538 = vxpose.xlu0.c.b16.cont [3/8] %v530, 128
  %539 = vxpose.xlu0.c.b16.cont [4/8] %v531, 128
  %540 = vxpose.xlu0.c.b16.cont [5/8] 0, 128
  %541 = vxpose.xlu0.c.b16.cont [6/8] 0, 128
  %542 = vxpose.xlu0.c.b16.cont [7/8] 0, 128
  %543 = vxpose.xlu0.c.b16.end [8/8] 0, 128
  %v544 = vpop.trf.xlu0
  %v545 = vpop.trf.xlu0
  %v546 = vpop.trf.xlu0
  %v547 = vpop.trf.xlu0
  %v548 = vpop.trf.xlu0
  %v549 = vpop.trf.xlu0
  %v550 = vpop.trf.xlu0
  %v551 = vpop.trf.xlu0
  %vm552 = vcmask 523264
  %v554 = vsel %vm552, %v544, 0
  %556 = vmatprep.subr.bf16.mxu0 0
  %557 = vmatpush1.bf16.msra.mxu0 %v508
  %558 = vmatprep.subr.bf16.mxu0 0
  %559 = vmatpush1.bf16.msra.mxu0 %v509
  %560 = vmatprep.subr.bf16.mxu0 0
  %561 = vmatpush1.bf16.msra.mxu0 %v510
  %562 = vmatprep.subr.bf16.mxu0 0
  %563 = vmatpush1.bf16.msra.mxu0 %v511
  %564 = vmatprep.subr.bf16.mxu0 0
  %565 = vmatpush1.bf16.msra.mxu0 0
  %566 = vmatprep.subr.bf16.mxu0 0
  %567 = vmatpush1.bf16.msra.mxu0 0
  %568 = vmatprep.subr.bf16.mxu0 0
  %569 = vmatpush1.bf16.msra.mxu0 0
  %570 = vmatprep.subr.bf16.mxu0 0
  %571 = vmatpush1.bf16.msra.mxu0 0
  %572 = vmatprep.subr.bf16.mxu0 0
  %573 = vmatpush1.bf16.msra.mxu0 0
  %574 = vmatprep.subr.bf16.mxu0 0
  %575 = vmatpush1.bf16.msra.mxu0 0
  %576 = vmatprep.subr.bf16.mxu0 0
  %577 = vmatpush1.bf16.msra.mxu0 0
  %578 = vmatprep.subr.bf16.mxu0 0
  %579 = vmatpush1.bf16.msra.mxu0 0
  %580 = vmatprep.subr.bf16.mxu0 0
  %581 = vmatpush1.bf16.msra.mxu0 0
  %582 = vmatprep.subr.bf16.mxu0 0
  %583 = vmatpush1.bf16.msra.mxu0 0
  %584 = vmatprep.subr.bf16.mxu0 0
  %585 = vmatpush1.bf16.msra.mxu0 0
  %586 = vmatprep.subr.bf16.mxu0 0
  %587 = vmatpush1.bf16.msra.mxu0 0
  %588 = vmatprep.mubr.bf16.mxu0 0
  %589 = vmatmul.mubr.bf16.gmra.mrb[0].mxu0 %v554
  %v590 = vpop.f32.mrb[0].mxu0
  %v591 = vadd.f32 0.0, %v590
  %v592 = vpop.f32.mrb[0].mxu0
  %v593 = vpop.f32.mrb[0].mxu0
  %v594 = vadd.f32 0.0, %v593
  %v595 = vpop.f32.mrb[0].mxu0
  %596 = vdwg.mxu0
  %v597 = vadd.f32 %v458, %v591
  %v598 = vadd.f32 %v459, %v594
  %599 = vst.msk [vmem:[#allocation8] sm:$0xff] %vm552, %v597
  %vm600 = vcmask 519168
  %601 = vst.msk [vmem:[#allocation8 + $0x8] sm:$0xf] %vm600, %v598
  %v602 = vld [vmem:[%s8] sm:$0xf]
  %vm603 = vcmask 31744
  %v605 = vsel %vm603, %v324, 0
  %v608 = vsel %vm603, %v325, 0
  %v611 = vsel %vm603, %v326, 0
  %v614 = vsel %vm603, %v327, 0
  %v617 = vsel %vm603, %v328, 0
  %v620 = vsel %vm603, %v329, 0
  %v623 = vsel %vm603, %v330, 0
  %v626 = vsel %vm603, %v331, 0
  %vm628 = vcmask 1043456
  %v630 = vsel %vm628, %v602, 0
  %632 = vmatprep.subr.mxu0 0.0
  %633 = vmatpush1.msra.mxu0 %v630
  %634 = vmatprep.subr.mxu0 0.0
  %635 = vmatpush1.msra.mxu0 0.0
  %636 = vmatprep.subr.mxu0 0.0
  %637 = vmatpush1.msra.mxu0 0.0
  %638 = vmatprep.subr.mxu0 0.0
  %639 = vmatpush1.msra.mxu0 0.0
  %640 = vmatprep.subr.mxu0 0.0
  %641 = vmatpush1.msra.mxu0 0.0
  %642 = vmatprep.subr.mxu0 0.0
  %643 = vmatpush1.msra.mxu0 0.0
  %644 = vmatprep.subr.mxu0 0.0
  %645 = vmatpush1.msra.mxu0 0.0
  %646 = vmatprep.subr.mxu0 0.0
  %647 = vmatpush1.msra.mxu0 0.0
  %648 = vmatprep.subr.mxu0 0.0
  %649 = vmatpush1.msra.mxu0 0.0
  %650 = vmatprep.subr.mxu0 0.0
  %651 = vmatpush1.msra.mxu0 0.0
  %652 = vmatprep.subr.mxu0 0.0
  %653 = vmatpush1.msra.mxu0 0.0
  %654 = vmatprep.subr.mxu0 0.0
  %655 = vmatpush1.msra.mxu0 0.0
  %656 = vmatprep.subr.mxu0 0.0
  %657 = vmatpush1.msra.mxu0 0.0
  %658 = vmatprep.subr.mxu0 0.0
  %659 = vmatpush1.msra.mxu0 0.0
  %660 = vmatprep.subr.mxu0 0.0
  %661 = vmatpush1.msra.mxu0 0.0
  %662 = vmatprep.subr.mxu0 0.0
  %663 = vmatpush1.msra.mxu0 0.0
  %664 = vmatprep.subr.mxu0 0.0
  %665 = vmatpush1.msra.mxu0 0.0
  %666 = vmatprep.subr.mxu0 0.0
  %667 = vmatpush1.msra.mxu0 0.0
  %668 = vmatprep.subr.mxu0 0.0
  %669 = vmatpush1.msra.mxu0 0.0
  %670 = vmatprep.subr.mxu0 0.0
  %671 = vmatpush1.msra.mxu0 0.0
  %672 = vmatprep.subr.mxu0 0.0
  %673 = vmatpush1.msra.mxu0 0.0
  %674 = vmatprep.subr.mxu0 0.0
  %675 = vmatpush1.msra.mxu0 0.0
  %676 = vmatprep.subr.mxu0 0.0
  %677 = vmatpush1.msra.mxu0 0.0
  %678 = vmatprep.subr.mxu0 0.0
  %679 = vmatpush1.msra.mxu0 0.0
  %680 = vmatprep.subr.mxu0 0.0
  %681 = vmatpush1.msra.mxu0 0.0
  %682 = vmatprep.subr.mxu0 0.0
  %683 = vmatpush1.msra.mxu0 0.0
  %684 = vmatprep.subr.mxu0 0.0
  %685 = vmatpush1.msra.mxu0 0.0
  %686 = vmatprep.subr.mxu0 0.0
  %687 = vmatpush1.msra.mxu0 0.0
  %688 = vmatprep.subr.mxu0 0.0
  %689 = vmatpush1.msra.mxu0 0.0
  %690 = vmatprep.subr.mxu0 0.0
  %691 = vmatpush1.msra.mxu0 0.0
  %692 = vmatprep.subr.mxu0 0.0
  %693 = vmatpush1.msra.mxu0 0.0
  %694 = vmatprep.subr.mxu0 0.0
  %695 = vmatpush1.msra.mxu0 0.0
  %696 = vmatprep.mubr.f32.mxu0 0.0
  %697 = vmatmul.mubr.f32.gmra.mrb[0].mxu0 %v605
  %v698 = vpop.f32.mrb[0].mxu0
  %v699 = vadd.f32 0.0, %v698
  %v700 = vpop.f32.mrb[0].mxu0
  %701 = vmatprep.mubr.f32.mxu0 0.0
  %702 = vmatmul.mubr.f32.gmra.mrb[0].mxu0 %v608
  %v703 = vpop.f32.mrb[0].mxu0
  %v704 = vadd.f32 0.0, %v703
  %v705 = vpop.f32.mrb[0].mxu0
  %706 = vmatprep.mubr.f32.mxu0 0.0
  %707 = vmatmul.mubr.f32.gmra.mrb[0].mxu0 %v611
  %v708 = vpop.f32.mrb[0].mxu0
  %v709 = vadd.f32 0.0, %v708
  %v710 = vpop.f32.mrb[0].mxu0
  %711 = vmatprep.mubr.f32.mxu0 0.0
  %712 = vmatmul.mubr.f32.gmra.mrb[0].mxu0 %v614
  %v713 = vpop.f32.mrb[0].mxu0
  %v714 = vadd.f32 0.0, %v713
  %v715 = vpop.f32.mrb[0].mxu0
  %716 = vmatprep.mubr.f32.mxu0 0.0
  %717 = vmatmul.mubr.f32.gmra.mrb[0].mxu0 %v617
  %v718 = vpop.f32.mrb[0].mxu0
  %v719 = vadd.f32 0.0, %v718
  %v720 = vpop.f32.mrb[0].mxu0
  %721 = vmatprep.mubr.f32.mxu0 0.0
  %722 = vmatmul.mubr.f32.gmra.mrb[0].mxu0 %v620
  %v723 = vpop.f32.mrb[0].mxu0
  %v724 = vadd.f32 0.0, %v723
  %v725 = vpop.f32.mrb[0].mxu0
  %726 = vmatprep.mubr.f32.mxu0 0.0
  %727 = vmatmul.mubr.f32.gmra.mrb[0].mxu0 %v623
  %v728 = vpop.f32.mrb[0].mxu0
  %v729 = vadd.f32 0.0, %v728
  %v730 = vpop.f32.mrb[0].mxu0
  %731 = vmatprep.mubr.f32.mxu0 0.0
  %732 = vmatmul.mubr.f32.gmra.mrb[0].mxu0 %v626
  %v733 = vpop.f32.mrb[0].mxu0
  %v734 = vadd.f32 0.0, %v733
  %v735 = vpop.f32.mrb[0].mxu0
  %736 = vdwg.mxu0
  %v737 = vld [vmem:[#allocation2] sm:$0xf]
  %v738 = vld [vmem:[#allocation2 + $0x4] sm:$0x3]
  %v741 = vunpack.c.l.b16 %v737
  %v742 = vunpack.c.l.b16 %v738
  %v743 = vpack.c.b16 %v742, %v741
  %v745 = vsel %vm376, %v528, 0
  %v748 = vsel %vm376, %v529, 0
  %v751 = vsel %vm376, %v530, 0
  %v754 = vsel %vm376, %v531, 0
  %v757 = vsel %vm389, %v743, 0
  %759 = vmatprep.subr.bf16.mxu0 0
  %760 = vmatpush1.bf16.msra.mxu0 %v757
  %761 = vmatprep.subr.bf16.mxu0 0
  %762 = vmatpush1.bf16.msra.mxu0 0
  %763 = vmatprep.subr.bf16.mxu0 0
  %764 = vmatpush1.bf16.msra.mxu0 0
  %765 = vmatprep.subr.bf16.mxu0 0
  %766 = vmatpush1.bf16.msra.mxu0 0
  %767 = vmatprep.subr.bf16.mxu0 0
  %768 = vmatpush1.bf16.msra.mxu0 0
  %769 = vmatprep.subr.bf16.mxu0 0
  %770 = vmatpush1.bf16.msra.mxu0 0
  %771 = vmatprep.subr.bf16.mxu0 0
  %772 = vmatpush1.bf16.msra.mxu0 0
  %773 = vmatprep.subr.bf16.mxu0 0
  %774 = vmatpush1.bf16.msra.mxu0 0
  %775 = vmatprep.subr.bf16.mxu0 0
  %776 = vmatpush1.bf16.msra.mxu0 0
  %777 = vmatprep.subr.bf16.mxu0 0
  %778 = vmatpush1.bf16.msra.mxu0 0
  %779 = vmatprep.subr.bf16.mxu0 0
  %780 = vmatpush1.bf16.msra.mxu0 0
  %781 = vmatprep.subr.bf16.mxu0 0
  %782 = vmatpush1.bf16.msra.mxu0 0
  %783 = vmatprep.subr.bf16.mxu0 0
  %784 = vmatpush1.bf16.msra.mxu0 0
  %785 = vmatprep.subr.bf16.mxu0 0
  %786 = vmatpush1.bf16.msra.mxu0 0
  %787 = vmatprep.subr.bf16.mxu0 0
  %788 = vmatpush1.bf16.msra.mxu0 0
  %789 = vmatprep.subr.bf16.mxu0 0
  %790 = vmatpush1.bf16.msra.mxu0 0
  %791 = vmatprep.mubr.bf16.mxu0 0
  %792 = vmatmul.mubr.bf16.gmra.mrb[0].mxu0 %v745
  %v793 = vpop.f32.mrb[0].mxu0
  %v794 = vadd.f32 0.0, %v793
  %v795 = vpop.f32.mrb[0].mxu0
  %v796 = vpop.f32.mrb[0].mxu0
  %v797 = vadd.f32 0.0, %v796
  %v798 = vpop.f32.mrb[0].mxu0
  %799 = vmatprep.mubr.bf16.mxu0 0
  %800 = vmatmul.mubr.bf16.gmra.mrb[0].mxu0 %v748
  %v801 = vpop.f32.mrb[0].mxu0
  %v802 = vadd.f32 0.0, %v801
  %v803 = vpop.f32.mrb[0].mxu0
  %v804 = vpop.f32.mrb[0].mxu0
  %v805 = vadd.f32 0.0, %v804
  %v806 = vpop.f32.mrb[0].mxu0
  %807 = vmatprep.mubr.bf16.mxu0 0
  %808 = vmatmul.mubr.bf16.gmra.mrb[0].mxu0 %v751
  %v809 = vpop.f32.mrb[0].mxu0
  %v810 = vadd.f32 0.0, %v809
  %v811 = vpop.f32.mrb[0].mxu0
  %v812 = vpop.f32.mrb[0].mxu0
  %v813 = vadd.f32 0.0, %v812
  %v814 = vpop.f32.mrb[0].mxu0
  %815 = vmatprep.mubr.bf16.mxu0 0
  %816 = vmatmul.mubr.bf16.gmra.mrb[0].mxu0 %v754
  %v817 = vpop.f32.mrb[0].mxu0
  %v818 = vadd.f32 0.0, %v817
  %v819 = vpop.f32.mrb[0].mxu0
  %v820 = vpop.f32.mrb[0].mxu0
  %v821 = vadd.f32 0.0, %v820
  %v822 = vpop.f32.mrb[0].mxu0
  %823 = vdwg.mxu0
  %v824 = vld [vmem:[#allocation3] sm:$0xf]
  %v825 = vld [vmem:[#allocation3 + $0x4] sm:$0x3]
  %v828 = vunpack.c.l.b16 %v824
  %v829 = vunpack.c.l.b16 %v825
  %v830 = vpack.c.b16 %v829, %v828
  %v832 = vsel %vm389, %v830, 0
  %834 = vmatprep.subr.bf16.mxu0 0
  %835 = vmatpush1.bf16.msra.mxu0 %v832
  %836 = vmatprep.subr.bf16.mxu0 0
  %837 = vmatpush1.bf16.msra.mxu0 0
  %838 = vmatprep.subr.bf16.mxu0 0
  %839 = vmatpush1.bf16.msra.mxu0 0
  %840 = vmatprep.subr.bf16.mxu0 0
  %841 = vmatpush1.bf16.msra.mxu0 0
  %842 = vmatprep.subr.bf16.mxu0 0
  %843 = vmatpush1.bf16.msra.mxu0 0
  %844 = vmatprep.subr.bf16.mxu0 0
  %845 = vmatpush1.bf16.msra.mxu0 0
  %846 = vmatprep.subr.bf16.mxu0 0
  %847 = vmatpush1.bf16.msra.mxu0 0
  %848 = vmatprep.subr.bf16.mxu0 0
  %849 = vmatpush1.bf16.msra.mxu0 0
  %850 = vmatprep.subr.bf16.mxu0 0
  %851 = vmatpush1.bf16.msra.mxu0 0
  %852 = vmatprep.subr.bf16.mxu0 0
  %853 = vmatpush1.bf16.msra.mxu0 0
  %854 = vmatprep.subr.bf16.mxu0 0
  %855 = vmatpush1.bf16.msra.mxu0 0
  %856 = vmatprep.subr.bf16.mxu0 0
  %857 = vmatpush1.bf16.msra.mxu0 0
  %858 = vmatprep.subr.bf16.mxu0 0
  %859 = vmatpush1.bf16.msra.mxu0 0
  %860 = vmatprep.subr.bf16.mxu0 0
  %861 = vmatpush1.bf16.msra.mxu0 0
  %862 = vmatprep.subr.bf16.mxu0 0
  %863 = vmatpush1.bf16.msra.mxu0 0
  %864 = vmatprep.subr.bf16.mxu0 0
  %865 = vmatpush1.bf16.msra.mxu0 0
  %866 = vmatprep.mubr.bf16.mxu0 0
  %867 = vmatmul.mubr.bf16.gmra.mrb[0].mxu0 %v378
  %v868 = vpop.f32.mrb[0].mxu0
  %v869 = vadd.f32 %v699, %v868
  %v870 = vpop.f32.mrb[0].mxu0
  %v871 = vpop.f32.mrb[0].mxu0
  %v872 = vadd.f32 %v704, %v871
  %v873 = vpop.f32.mrb[0].mxu0
  %874 = vmatprep.mubr.bf16.mxu0 0
  %875 = vmatmul.mubr.bf16.gmra.mrb[0].mxu0 %v381
  %v876 = vpop.f32.mrb[0].mxu0
  %v877 = vadd.f32 %v709, %v876
  %v878 = vpop.f32.mrb[0].mxu0
  %v879 = vpop.f32.mrb[0].mxu0
  %v880 = vadd.f32 %v714, %v879
  %v881 = vpop.f32.mrb[0].mxu0
  %882 = vmatprep.mubr.bf16.mxu0 0
  %883 = vmatmul.mubr.bf16.gmra.mrb[0].mxu0 %v384
  %v884 = vpop.f32.mrb[0].mxu0
  %v885 = vadd.f32 %v719, %v884
  %v886 = vpop.f32.mrb[0].mxu0
  %v887 = vpop.f32.mrb[0].mxu0
  %v888 = vadd.f32 %v724, %v887
  %v889 = vpop.f32.mrb[0].mxu0
  %890 = vmatprep.mubr.bf16.mxu0 0
  %891 = vmatmul.mubr.bf16.gmra.mrb[0].mxu0 %v387
  %v892 = vpop.f32.mrb[0].mxu0
  %v893 = vadd.f32 %v729, %v892
  %v894 = vpop.f32.mrb[0].mxu0
  %v895 = vpop.f32.mrb[0].mxu0
  %v896 = vadd.f32 %v734, %v895
  %v897 = vpop.f32.mrb[0].mxu0
  %898 = vdwg.mxu0
  %v899 = vld [vmem:[#allocation4] sm:$0xf]
  %v900 = vld [vmem:[#allocation4 + $0x4] sm:$0x3]
  %v903 = vunpack.c.l.b16 %v899
  %v904 = vunpack.c.l.b16 %v900
  %v905 = vpack.c.b16 %v904, %v903
  %v907 = vsel %vm389, %v905, 0
  %909 = vmatprep.subr.bf16.mxu0 0
  %910 = vmatpush1.bf16.msra.mxu0 %v907
  %911 = vmatprep.subr.bf16.mxu0 0
  %912 = vmatpush1.bf16.msra.mxu0 0
  %913 = vmatprep.subr.bf16.mxu0 0
  %914 = vmatpush1.bf16.msra.mxu0 0
  %915 = vmatprep.subr.bf16.mxu0 0
  %916 = vmatpush1.bf16.msra.mxu0 0
  %917 = vmatprep.subr.bf16.mxu0 0
  %918 = vmatpush1.bf16.msra.mxu0 0
  %919 = vmatprep.subr.bf16.mxu0 0
  %920 = vmatpush1.bf16.msra.mxu0 0
  %921 = vmatprep.subr.bf16.mxu0 0
  %922 = vmatpush1.bf16.msra.mxu0 0
  %923 = vmatprep.subr.bf16.mxu0 0
  %924 = vmatpush1.bf16.msra.mxu0 0
  %925 = vmatprep.subr.bf16.mxu0 0
  %926 = vmatpush1.bf16.msra.mxu0 0
  %927 = vmatprep.subr.bf16.mxu0 0
  %928 = vmatpush1.bf16.msra.mxu0 0
  %929 = vmatprep.subr.bf16.mxu0 0
  %930 = vmatpush1.bf16.msra.mxu0 0
  %931 = vmatprep.subr.bf16.mxu0 0
  %932 = vmatpush1.bf16.msra.mxu0 0
  %933 = vmatprep.subr.bf16.mxu0 0
  %934 = vmatpush1.bf16.msra.mxu0 0
  %935 = vmatprep.subr.bf16.mxu0 0
  %936 = vmatpush1.bf16.msra.mxu0 0
  %937 = vmatprep.subr.bf16.mxu0 0
  %938 = vmatpush1.bf16.msra.mxu0 0
  %939 = vmatprep.subr.bf16.mxu0 0
  %940 = vmatpush1.bf16.msra.mxu0 0
  %941 = vmatprep.mubr.bf16.mxu0 0
  %942 = vmatmul.mubr.bf16.gmra.mrb[0].mxu0 %v378
  %v943 = vpop.f32.mrb[0].mxu0
  %v944 = vadd.f32 %v699, %v943
  %v945 = vpop.f32.mrb[0].mxu0
  %v946 = vpop.f32.mrb[0].mxu0
  %v947 = vadd.f32 %v704, %v946
  %v948 = vpop.f32.mrb[0].mxu0
  %949 = vmatprep.mubr.bf16.mxu0 0
  %950 = vmatmul.mubr.bf16.gmra.mrb[0].mxu0 %v381
  %v951 = vpop.f32.mrb[0].mxu0
  %v952 = vadd.f32 %v709, %v951
  %v953 = vpop.f32.mrb[0].mxu0
  %v954 = vpop.f32.mrb[0].mxu0
  %v955 = vadd.f32 %v714, %v954
  %v956 = vpop.f32.mrb[0].mxu0
  %957 = vmatprep.mubr.bf16.mxu0 0
  %958 = vmatmul.mubr.bf16.gmra.mrb[0].mxu0 %v384
  %v959 = vpop.f32.mrb[0].mxu0
  %v960 = vadd.f32 %v719, %v959
  %v961 = vpop.f32.mrb[0].mxu0
  %v962 = vpop.f32.mrb[0].mxu0
  %v963 = vadd.f32 %v724, %v962
  %v964 = vpop.f32.mrb[0].mxu0
  %965 = vmatprep.mubr.bf16.mxu0 0
  %966 = vmatmul.mubr.bf16.gmra.mrb[0].mxu0 %v387
  %v967 = vpop.f32.mrb[0].mxu0
  %v968 = vadd.f32 %v729, %v967
  %v969 = vpop.f32.mrb[0].mxu0
  %v970 = vpop.f32.mrb[0].mxu0
  %v971 = vadd.f32 %v734, %v970
  %v972 = vpop.f32.mrb[0].mxu0
  %973 = vdwg.mxu0
  %v974 = vmul.f32 %v794, %v869
  %v975 = vmul.f32 %v797, %v872
  %v976 = vmul.f32 %v802, %v877
  %v977 = vmul.f32 %v805, %v880
  %v978 = vmul.f32 %v810, %v885
  %v979 = vmul.f32 %v813, %v888
  %v980 = vmul.f32 %v818, %v893
  %v981 = vmul.f32 %v821, %v896
  %v983 = vsel %vm552, %v974, 0
  %v986 = vsel %vm552, %v975, 0
  %v989 = vsel %vm552, %v976, 0
  %v992 = vsel %vm552, %v977, 0
  %v995 = vsel %vm552, %v978, 0
  %v998 = vsel %vm552, %v979, 0
  %v1001 = vsel %vm552, %v980, 0
  %v1004 = vsel %vm552, %v981, 0
  %v1007 = vsel %vm552, %v348, 0
  %1009 = vmatprep.subr.mxu0 0.0
  %1010 = vmatpush1.xpose.msra.mxu0 %v1007
  %1011 = vmatprep.subr.mxu0 0.0
  %1012 = vmatpush1.xpose.msra.mxu0 0.0
  %1013 = vmatprep.subr.mxu0 0.0
  %1014 = vmatpush1.xpose.msra.mxu0 0.0
  %1015 = vmatprep.subr.mxu0 0.0
  %1016 = vmatpush1.xpose.msra.mxu0 0.0
  %1017 = vmatprep.subr.mxu0 0.0
  %1018 = vmatpush1.xpose.msra.mxu0 0.0
  %1019 = vmatprep.subr.mxu0 0.0
  %1020 = vmatpush1.xpose.msra.mxu0 0.0
  %1021 = vmatprep.subr.mxu0 0.0
  %1022 = vmatpush1.xpose.msra.mxu0 0.0
  %1023 = vmatprep.subr.mxu0 0.0
  %1024 = vmatpush1.xpose.msra.mxu0 0.0
  %1025 = vmatprep.subr.mxu0 0.0
  %1026 = vmatpush1.xpose.msra.mxu0 0.0
  %1027 = vmatprep.subr.mxu0 0.0
  %1028 = vmatpush1.xpose.msra.mxu0 0.0
  %1029 = vmatprep.subr.mxu0 0.0
  %1030 = vmatpush1.xpose.msra.mxu0 0.0
  %1031 = vmatprep.subr.mxu0 0.0
  %1032 = vmatpush1.xpose.msra.mxu0 0.0
  %1033 = vmatprep.subr.mxu0 0.0
  %1034 = vmatpush1.xpose.msra.mxu0 0.0
  %1035 = vmatprep.subr.mxu0 0.0
  %1036 = vmatpush1.xpose.msra.mxu0 0.0
  %1037 = vmatprep.subr.mxu0 0.0
  %1038 = vmatpush1.xpose.msra.mxu0 0.0
  %1039 = vmatprep.subr.mxu0 0.0
  %1040 = vmatpush1.xpose.msra.mxu0 0.0
  %1041 = vmatprep.subr.mxu0 0.0
  %1042 = vmatpush1.xpose.msra.mxu0 0.0
  %1043 = vmatprep.subr.mxu0 0.0
  %1044 = vmatpush1.xpose.msra.mxu0 0.0
  %1045 = vmatprep.subr.mxu0 0.0
  %1046 = vmatpush1.xpose.msra.mxu0 0.0
  %1047 = vmatprep.subr.mxu0 0.0
  %1048 = vmatpush1.xpose.msra.mxu0 0.0
  %1049 = vmatprep.subr.mxu0 0.0
  %1050 = vmatpush1.xpose.msra.mxu0 0.0
  %1051 = vmatprep.subr.mxu0 0.0
  %1052 = vmatpush1.xpose.msra.mxu0 0.0
  %1053 = vmatprep.subr.mxu0 0.0
  %1054 = vmatpush1.xpose.msra.mxu0 0.0
  %1055 = vmatprep.subr.mxu0 0.0
  %1056 = vmatpush1.xpose.msra.mxu0 0.0
  %1057 = vmatprep.subr.mxu0 0.0
  %1058 = vmatpush1.xpose.msra.mxu0 0.0
  %1059 = vmatprep.subr.mxu0 0.0
  %1060 = vmatpush1.xpose.msra.mxu0 0.0
  %1061 = vmatprep.subr.mxu0 0.0
  %1062 = vmatpush1.xpose.msra.mxu0 0.0
  %1063 = vmatprep.subr.mxu0 0.0
  %1064 = vmatpush1.xpose.msra.mxu0 0.0
  %1065 = vmatprep.subr.mxu0 0.0
  %1066 = vmatpush1.xpose.msra.mxu0 0.0
  %1067 = vmatprep.subr.mxu0 0.0
  %1068 = vmatpush1.xpose.msra.mxu0 0.0
  %1069 = vmatprep.subr.mxu0 0.0
  %1070 = vmatpush1.xpose.msra.mxu0 0.0
  %1071 = vmatprep.subr.mxu0 0.0
  %1072 = vmatpush1.xpose.msra.mxu0 0.0
  %1073 = vmatprep.mubr.f32.mxu0 0.0
  %1074 = vmatmul.mubr.f32.gmra.mrb[0].mxu0 %v983
  %v1075 = vpop.f32.mrb[0].mxu0
  %v1076 = vadd.f32 0.0, %v1075
  %v1077 = vpop.f32.mrb[0].mxu0
  %1078 = vmatprep.mubr.f32.mxu0 0.0
  %1079 = vmatmul.mubr.f32.gmra.mrb[0].mxu0 %v986
  %v1080 = vpop.f32.mrb[0].mxu0
  %v1081 = vadd.f32 0.0, %v1080
  %v1082 = vpop.f32.mrb[0].mxu0
  %1083 = vmatprep.mubr.f32.mxu0 0.0
  %1084 = vmatmul.mubr.f32.gmra.mrb[0].mxu0 %v989
  %v1085 = vpop.f32.mrb[0].mxu0
  %v1086 = vadd.f32 0.0, %v1085
  %v1087 = vpop.f32.mrb[0].mxu0
  %1088 = vmatprep.mubr.f32.mxu0 0.0
  %1089 = vmatmul.mubr.f32.gmra.mrb[0].mxu0 %v992
  %v1090 = vpop.f32.mrb[0].mxu0
  %v1091 = vadd.f32 0.0, %v1090
  %v1092 = vpop.f32.mrb[0].mxu0
  %1093 = vmatprep.mubr.f32.mxu0 0.0
  %1094 = vmatmul.mubr.f32.gmra.mrb[0].mxu0 %v995
  %v1095 = vpop.f32.mrb[0].mxu0
  %v1096 = vadd.f32 0.0, %v1095
  %v1097 = vpop.f32.mrb[0].mxu0
  %1098 = vmatprep.mubr.f32.mxu0 0.0
  %1099 = vmatmul.mubr.f32.gmra.mrb[0].mxu0 %v998
  %v1100 = vpop.f32.mrb[0].mxu0
  %v1101 = vadd.f32 0.0, %v1100
  %v1102 = vpop.f32.mrb[0].mxu0
  %1103 = vmatprep.mubr.f32.mxu0 0.0
  %1104 = vmatmul.mubr.f32.gmra.mrb[0].mxu0 %v1001
  %v1105 = vpop.f32.mrb[0].mxu0
  %v1106 = vadd.f32 0.0, %v1105
  %v1107 = vpop.f32.mrb[0].mxu0
  %1108 = vmatprep.mubr.f32.mxu0 0.0
  %1109 = vmatmul.mubr.f32.gmra.mrb[0].mxu0 %v1004
  %v1110 = vpop.f32.mrb[0].mxu0
  %v1111 = vadd.f32 0.0, %v1110
  %v1112 = vpop.f32.mrb[0].mxu0
  %1113 = vdwg.mxu0
  %v1114 = vmul.f32 %v1076, 0.25
  %v1115 = vmul.f32 %v1081, 0.25
  %v1116 = vmul.f32 %v1086, 0.25
  %v1117 = vmul.f32 %v1091, 0.25
  %v1118 = vmul.f32 %v1096, 0.25
  %v1119 = vmul.f32 %v1101, 0.25
  %v1120 = vmul.f32 %v1106, 0.25
  %v1121 = vmul.f32 %v1111, 0.25
  %v1122 = vsub.f32 %v1114, %v340
  %v1123 = vsub.f32 %v1115, %v341
  %v1124 = vsub.f32 %v1116, %v342
  %v1125 = vsub.f32 %v1117, %v343
  %v1126 = vsub.f32 %v1118, %v344
  %v1127 = vsub.f32 %v1119, %v345
  %v1128 = vsub.f32 %v1120, %v346
  %v1129 = vsub.f32 %v1121, %v347
  %v1131 = vsel %vm603, %v1122, 0
  %v1134 = vsel %vm603, %v1123, 0
  %v1137 = vsel %vm603, %v1124, 0
  %v1140 = vsel %vm603, %v1125, 0
  %v1143 = vsel %vm603, %v1126, 0
  %v1146 = vsel %vm603, %v1127, 0
  %v1149 = vsel %vm603, %v1128, 0
  %v1152 = vsel %vm603, %v1129, 0
  %v1154 = vsel %vm628, %v348, 0
  %1156 = vmatprep.subr.mxu0 0.0
  %1157 = vmatpush1.msra.mxu0 %v1154
  %1158 = vmatprep.subr.mxu0 0.0
  %1159 = vmatpush1.msra.mxu0 0.0
  %1160 = vmatprep.subr.mxu0 0.0
  %1161 = vmatpush1.msra.mxu0 0.0
  %1162 = vmatprep.subr.mxu0 0.0
  %1163 = vmatpush1.msra.mxu0 0.0
  %1164 = vmatprep.subr.mxu0 0.0
  %1165 = vmatpush1.msra.mxu0 0.0
  %1166 = vmatprep.subr.mxu0 0.0
  %1167 = vmatpush1.msra.mxu0 0.0
  %1168 = vmatprep.subr.mxu0 0.0
  %1169 = vmatpush1.msra.mxu0 0.0
  %1170 = vmatprep.subr.mxu0 0.0
  %1171 = vmatpush1.msra.mxu0 0.0
  %1172 = vmatprep.subr.mxu0 0.0
  %1173 = vmatpush1.msra.mxu0 0.0
  %1174 = vmatprep.subr.mxu0 0.0
  %1175 = vmatpush1.msra.mxu0 0.0
  %1176 = vmatprep.subr.mxu0 0.0
  %1177 = vmatpush1.msra.mxu0 0.0
  %1178 = vmatprep.subr.mxu0 0.0
  %1179 = vmatpush1.msra.mxu0 0.0
  %1180 = vmatprep.subr.mxu0 0.0
  %1181 = vmatpush1.msra.mxu0 0.0
  %1182 = vmatprep.subr.mxu0 0.0
  %1183 = vmatpush1.msra.mxu0 0.0
  %1184 = vmatprep.subr.mxu0 0.0
  %1185 = vmatpush1.msra.mxu0 0.0
  %1186 = vmatprep.subr.mxu0 0.0
  %1187 = vmatpush1.msra.mxu0 0.0
  %1188 = vmatprep.subr.mxu0 0.0
  %1189 = vmatpush1.msra.mxu0 0.0
  %1190 = vmatprep.subr.mxu0 0.0
  %1191 = vmatpush1.msra.mxu0 0.0
  %1192 = vmatprep.subr.mxu0 0.0
  %1193 = vmatpush1.msra.mxu0 0.0
  %1194 = vmatprep.subr.mxu0 0.0
  %1195 = vmatpush1.msra.mxu0 0.0
  %1196 = vmatprep.subr.mxu0 0.0
  %1197 = vmatpush1.msra.mxu0 0.0
  %1198 = vmatprep.subr.mxu0 0.0
  %1199 = vmatpush1.msra.mxu0 0.0
  %1200 = vmatprep.subr.mxu0 0.0
  %1201 = vmatpush1.msra.mxu0 0.0
  %1202 = vmatprep.subr.mxu0 0.0
  %1203 = vmatpush1.msra.mxu0 0.0
  %1204 = vmatprep.subr.mxu0 0.0
  %1205 = vmatpush1.msra.mxu0 0.0
  %1206 = vmatprep.subr.mxu0 0.0
  %1207 = vmatpush1.msra.mxu0 0.0
  %1208 = vmatprep.subr.mxu0 0.0
  %1209 = vmatpush1.msra.mxu0 0.0
  %1210 = vmatprep.subr.mxu0 0.0
  %1211 = vmatpush1.msra.mxu0 0.0
  %1212 = vmatprep.subr.mxu0 0.0
  %1213 = vmatpush1.msra.mxu0 0.0
  %1214 = vmatprep.subr.mxu0 0.0
  %1215 = vmatpush1.msra.mxu0 0.0
  %1216 = vmatprep.subr.mxu0 0.0
  %1217 = vmatpush1.msra.mxu0 0.0
  %1218 = vmatprep.subr.mxu0 0.0
  %1219 = vmatpush1.msra.mxu0 0.0
  %1220 = vmatprep.mubr.f32.mxu0 0.0
  %1221 = vmatmul.mubr.f32.gmra.mrb[0].mxu0 %v1131
  %v1222 = vpop.f32.mrb[0].mxu0
  %v1223 = vadd.f32 0.0, %v1222
  %v1224 = vpop.f32.mrb[0].mxu0
  %1225 = vmatprep.mubr.f32.mxu0 0.0
  %1226 = vmatmul.mubr.f32.gmra.mrb[0].mxu0 %v1134
  %v1227 = vpop.f32.mrb[0].mxu0
  %v1228 = vadd.f32 0.0, %v1227
  %v1229 = vpop.f32.mrb[0].mxu0
  %1230 = vmatprep.mubr.f32.mxu0 0.0
  %1231 = vmatmul.mubr.f32.gmra.mrb[0].mxu0 %v1137
  %v1232 = vpop.f32.mrb[0].mxu0
  %v1233 = vadd.f32 0.0, %v1232
  %v1234 = vpop.f32.mrb[0].mxu0
  %1235 = vmatprep.mubr.f32.mxu0 0.0
  %1236 = vmatmul.mubr.f32.gmra.mrb[0].mxu0 %v1140
  %v1237 = vpop.f32.mrb[0].mxu0
  %v1238 = vadd.f32 0.0, %v1237
  %v1239 = vpop.f32.mrb[0].mxu0
  %1240 = vmatprep.mubr.f32.mxu0 0.0
  %1241 = vmatmul.mubr.f32.gmra.mrb[0].mxu0 %v1143
  %v1242 = vpop.f32.mrb[0].mxu0
  %v1243 = vadd.f32 0.0, %v1242
  %v1244 = vpop.f32.mrb[0].mxu0
  %1245 = vmatprep.mubr.f32.mxu0 0.0
  %1246 = vmatmul.mubr.f32.gmra.mrb[0].mxu0 %v1146
  %v1247 = vpop.f32.mrb[0].mxu0
  %v1248 = vadd.f32 0.0, %v1247
  %v1249 = vpop.f32.mrb[0].mxu0
  %1250 = vmatprep.mubr.f32.mxu0 0.0
  %1251 = vmatmul.mubr.f32.gmra.mrb[0].mxu0 %v1149
  %v1252 = vpop.f32.mrb[0].mxu0
  %v1253 = vadd.f32 0.0, %v1252
  %v1254 = vpop.f32.mrb[0].mxu0
  %1255 = vmatprep.mubr.f32.mxu0 0.0
  %1256 = vmatmul.mubr.f32.gmra.mrb[0].mxu0 %v1152
  %v1257 = vpop.f32.mrb[0].mxu0
  %v1258 = vadd.f32 0.0, %v1257
  %v1259 = vpop.f32.mrb[0].mxu0
  %1260 = vdwg.mxu0
  %v1261 = vmul.f32 %v1223, 1.442695
  %v1262 = vpow.pop %v1261
  %v1263 = vmul.f32 %v1228, 1.442695
  %v1264 = vpow.pop %v1263
  %v1265 = vmul.f32 %v1233, 1.442695
  %v1266 = vpow.pop %v1265
  %v1267 = vmul.f32 %v1238, 1.442695
  %v1268 = vpow.pop %v1267
  %v1269 = vmul.f32 %v1243, 1.442695
  %v1270 = vpow.pop %v1269
  %v1271 = vmul.f32 %v1248, 1.442695
  %v1272 = vpow.pop %v1271
  %v1273 = vmul.f32 %v1253, 1.442695
  %v1274 = vpow.pop %v1273
  %v1275 = vmul.f32 %v1258, 1.442695
  %v1276 = vpow.pop %v1275
  %v1277 = vld [vmem:[#allocation6] sm:$0xff]
  %v1278 = vld [vmem:[#allocation6 + $0x8] sm:$0xf]
  %v1279 = vmul.f32 %v944, %v1262
  %v1280 = vmul.f32 %v947, %v1264
  %v1281 = vmul.f32 %v952, %v1266
  %v1282 = vmul.f32 %v955, %v1268
  %v1283 = vmul.f32 %v960, %v1270
  %v1284 = vmul.f32 %v963, %v1272
  %v1285 = vmul.f32 %v968, %v1274
  %v1286 = vmul.f32 %v971, %v1276
  %v1287 = vpack.c.bf16 %v1280, %v1279
  %v1288 = vpack.c.bf16 %v1282, %v1281
  %v1289 = vpack.c.bf16 %v1284, %v1283
  %v1290 = vpack.c.bf16 %v1286, %v1285
  %1291 = vmatprep.subr.bf16.mxu0 0
  %1292 = vmatpush1.bf16.msra.mxu0 %v1287
  %1293 = vmatprep.subr.bf16.mxu0 0
  %1294 = vmatpush1.bf16.msra.mxu0 %v1288
  %1295 = vmatprep.subr.bf16.mxu0 0
  %1296 = vmatpush1.bf16.msra.mxu0 %v1289
  %1297 = vmatprep.subr.bf16.mxu0 0
  %1298 = vmatpush1.bf16.msra.mxu0 %v1290
  %1299 = vmatprep.subr.bf16.mxu0 0
  %1300 = vmatpush1.bf16.msra.mxu0 0
  %1301 = vmatprep.subr.bf16.mxu0 0
  %1302 = vmatpush1.bf16.msra.mxu0 0
  %1303 = vmatprep.subr.bf16.mxu0 0
  %1304 = vmatpush1.bf16.msra.mxu0 0
  %1305 = vmatprep.subr.bf16.mxu0 0
  %1306 = vmatpush1.bf16.msra.mxu0 0
  %1307 = vmatprep.subr.bf16.mxu0 0
  %1308 = vmatpush1.bf16.msra.mxu0 0
  %1309 = vmatprep.subr.bf16.mxu0 0
  %1310 = vmatpush1.bf16.msra.mxu0 0
  %1311 = vmatprep.subr.bf16.mxu0 0
  %1312 = vmatpush1.bf16.msra.mxu0 0
  %1313 = vmatprep.subr.bf16.mxu0 0
  %1314 = vmatpush1.bf16.msra.mxu0 0
  %1315 = vmatprep.subr.bf16.mxu0 0
  %1316 = vmatpush1.bf16.msra.mxu0 0
  %1317 = vmatprep.subr.bf16.mxu0 0
  %1318 = vmatpush1.bf16.msra.mxu0 0
  %1319 = vmatprep.subr.bf16.mxu0 0
  %1320 = vmatpush1.bf16.msra.mxu0 0
  %1321 = vmatprep.subr.bf16.mxu0 0
  %1322 = vmatpush1.bf16.msra.mxu0 0
  %1323 = vmatprep.mubr.bf16.mxu0 0
  %1324 = vmatmul.mubr.bf16.gmra.mrb[0].mxu0 %v554
  %v1325 = vpop.f32.mrb[0].mxu0
  %v1326 = vadd.f32 0.0, %v1325
  %v1327 = vpop.f32.mrb[0].mxu0
  %v1328 = vpop.f32.mrb[0].mxu0
  %v1329 = vadd.f32 0.0, %v1328
  %v1330 = vpop.f32.mrb[0].mxu0
  %1331 = vdwg.mxu0
  %v1332 = vadd.f32 %v1277, %v1326
  %v1333 = vadd.f32 %v1278, %v1329
  %1334 = vst.msk [vmem:[#allocation6] sm:$0xff] %vm552, %v1332
  %1335 = vst.msk [vmem:[#allocation6 + $0x8] sm:$0xf] %vm600, %v1333
  %v1336 = vld [vmem:[#allocation7] sm:$0xff]
  %v1337 = vld [vmem:[#allocation7 + $0x8] sm:$0xf]
  %v1338 = vpack.c.bf16 %v1264, %v1262
  %v1339 = vpack.c.bf16 %v1268, %v1266
  %v1340 = vpack.c.bf16 %v1272, %v1270
  %v1341 = vpack.c.bf16 %v1276, %v1274
  %1342 = vmatprep.subr.bf16.mxu0 0
  %1343 = vmatpush1.bf16.msra.mxu0 %v1338
  %1344 = vmatprep.subr.bf16.mxu0 0
  %1345 = vmatpush1.bf16.msra.mxu0 %v1339
  %1346 = vmatprep.subr.bf16.mxu0 0
  %1347 = vmatpush1.bf16.msra.mxu0 %v1340
  %1348 = vmatprep.subr.bf16.mxu0 0
  %1349 = vmatpush1.bf16.msra.mxu0 %v1341
  %1350 = vmatprep.subr.bf16.mxu0 0
  %1351 = vmatpush1.bf16.msra.mxu0 0
  %1352 = vmatprep.subr.bf16.mxu0 0
  %1353 = vmatpush1.bf16.msra.mxu0 0
  %1354 = vmatprep.subr.bf16.mxu0 0
  %1355 = vmatpush1.bf16.msra.mxu0 0
  %1356 = vmatprep.subr.bf16.mxu0 0
  %1357 = vmatpush1.bf16.msra.mxu0 0
  %1358 = vmatprep.subr.bf16.mxu0 0
  %1359 = vmatpush1.bf16.msra.mxu0 0
  %1360 = vmatprep.subr.bf16.mxu0 0
  %1361 = vmatpush1.bf16.msra.mxu0 0
  %1362 = vmatprep.subr.bf16.mxu0 0
  %1363 = vmatpush1.bf16.msra.mxu0 0
  %1364 = vmatprep.subr.bf16.mxu0 0
  %1365 = vmatpush1.bf16.msra.mxu0 0
  %1366 = vmatprep.subr.bf16.mxu0 0
  %1367 = vmatpush1.bf16.msra.mxu0 0
  %1368 = vmatprep.subr.bf16.mxu0 0
  %1369 = vmatpush1.bf16.msra.mxu0 0
  %1370 = vmatprep.subr.bf16.mxu0 0
  %1371 = vmatpush1.bf16.msra.mxu0 0
  %1372 = vmatprep.subr.bf16.mxu0 0
  %1373 = vmatpush1.bf16.msra.mxu0 0
  %1374 = vmatprep.mubr.bf16.mxu0 0
  %1375 = vmatmul.mubr.bf16.gmra.mrb[0].mxu0 %v554
  %v1376 = vpop.f32.mrb[0].mxu0
  %v1377 = vadd.f32 0.0, %v1376
  %v1378 = vpop.f32.mrb[0].mxu0
  %v1379 = vpop.f32.mrb[0].mxu0
  %v1380 = vadd.f32 0.0, %v1379
  %v1381 = vpop.f32.mrb[0].mxu0
  %1382 = vdwg.mxu0
  %v1383 = vadd.f32 %v1336, %v1377
  %v1384 = vadd.f32 %v1337, %v1380
  %1385 = vst.msk [vmem:[#allocation7] sm:$0xff] %vm552, %v1383
  %1386 = vst.msk [vmem:[#allocation7 + $0x8] sm:$0xf] %vm600, %v1384
  // Predicated region
  $region74: #{graph_encoder_forward.6} parent=0 // pred_check
    %p1387 = pneg %p57
  $region75: #{graph_encoder_forward.6} parent=0 // pred_check_branch
    %1389 = sbr.rel (%p1387) target = $region77
  $region76: #{graph_encoder_forward.6} parent=0 // pred_region
    %v1390 = vld [vmem:[#allocation6] sm:$0xff]
    %v1391 = vld [vmem:[#allocation6 + $0x8] sm:$0xf]
    %v1392 = vld [vmem:[#allocation7] sm:$0xff]
    %v1393 = vld [vmem:[#allocation7 + $0x8] sm:$0xf]
    %v1394 = vadd.f32 %v1392, 1e-20
    %v1395 = vadd.f32 %v1393, 1e-20
    %v1396 = vrcp.pop %v1394
    %v1397 = vmul.f32 %v1390, %v1396
    %v1398 = vrcp.pop %v1395
    %v1399 = vmul.f32 %v1391, %v1398
    %v1400 = vld [vmem:[#allocation8] sm:$0xff]
    %v1401 = vld [vmem:[#allocation8 + $0x8] sm:$0xf]
    %v1402 = vadd.f32 %v1400, %v1397
    %v1403 = vadd.f32 %v1401, %v1399
    %v1404 = vld [vmem:[%s11] sm:$0xff]
    %v1405 = vld [vmem:[%s11 + $0x8] sm:$0xff]
    %v1406 = vld [vmem:[%s11 + $0x10] sm:$0xff]
    %v1407 = vld [vmem:[%s11 + $0x18] sm:$0xff]
    %v1408 = vld [vmem:[%s11 + $0x20] sm:$0xff]
    %v1409 = vld [vmem:[%s11 + $0x28] sm:$0xff]
    %v1410 = vld [vmem:[%s11 + $0x30] sm:$0xff]
    %v1411 = vld [vmem:[%s11 + $0x38] sm:$0xff]
    %v1412 = vld [vmem:[%s12] sm:$0x1]
    %v1414 = vlaneseq
    %v1415 = vshrl.u32 %v1414, 7
    %v1416 = vsub.s32 0, %v1415
    %v1417 = vrot.slane %v1412, %v1416
    %v1420 = vsel %vm552, %v1402, 0
    %v1423 = vsel %vm552, %v1403, 0
    %1425 = vmatprep.subr.mxu0 0.0
    %1426 = vmatpush1.msra.mxu0 %v1404
    %1427 = vmatprep.subr.mxu0 0.0
    %1428 = vmatpush1.msra.mxu0 %v1405
    %1429 = vmatprep.subr.mxu0 0.0
    %1430 = vmatpush1.msra.mxu0 %v1406
    %1431 = vmatprep.subr.mxu0 0.0
    %1432 = vmatpush1.msra.mxu0 %v1407
    %1433 = vmatprep.subr.mxu0 0.0
    %1434 = vmatpush1.msra.mxu0 %v1408
    %1435 = vmatprep.subr.mxu0 0.0
    %1436 = vmatpush1.msra.mxu0 %v1409
    %1437 = vmatprep.subr.mxu0 0.0
    %1438 = vmatpush1.msra.mxu0 %v1410
    %1439 = vmatprep.subr.mxu0 0.0
    %1440 = vmatpush1.msra.mxu0 %v1411
    %1441 = vmatprep.subr.mxu0 0.0
    %1442 = vmatpush1.msra.mxu0 0.0
    %1443 = vmatprep.subr.mxu0 0.0
    %1444 = vmatpush1.msra.mxu0 0.0
    %1445 = vmatprep.subr.mxu0 0.0
    %1446 = vmatpush1.msra.mxu0 0.0
    %1447 = vmatprep.subr.mxu0 0.0
    %1448 = vmatpush1.msra.mxu0 0.0
    %1449 = vmatprep.subr.mxu0 0.0
    %1450 = vmatpush1.msra.mxu0 0.0
    %1451 = vmatprep.subr.mxu0 0.0
    %1452 = vmatpush1.msra.mxu0 0.0
    %1453 = vmatprep.subr.mxu0 0.0
    %1454 = vmatpush1.msra.mxu0 0.0
    %1455 = vmatprep.subr.mxu0 0.0
    %1456 = vmatpush1.msra.mxu0 0.0
    %1457 = vmatprep.subr.mxu0 0.0
    %1458 = vmatpush1.msra.mxu0 0.0
    %1459 = vmatprep.subr.mxu0 0.0
    %1460 = vmatpush1.msra.mxu0 0.0
    %1461 = vmatprep.subr.mxu0 0.0
    %1462 = vmatpush1.msra.mxu0 0.0
    %1463 = vmatprep.subr.mxu0 0.0
    %1464 = vmatpush1.msra.mxu0 0.0
    %1465 = vmatprep.subr.mxu0 0.0
    %1466 = vmatpush1.msra.mxu0 0.0
    %1467 = vmatprep.subr.mxu0 0.0
    %1468 = vmatpush1.msra.mxu0 0.0
    %1469 = vmatprep.subr.mxu0 0.0
    %1470 = vmatpush1.msra.mxu0 0.0
    %1471 = vmatprep.subr.mxu0 0.0
    %1472 = vmatpush1.msra.mxu0 0.0
    %1473 = vmatprep.subr.mxu0 0.0
    %1474 = vmatpush1.msra.mxu0 0.0
    %1475 = vmatprep.subr.mxu0 0.0
    %1476 = vmatpush1.msra.mxu0 0.0
    %1477 = vmatprep.subr.mxu0 0.0
    %1478 = vmatpush1.msra.mxu0 0.0
    %1479 = vmatprep.subr.mxu0 0.0
    %1480 = vmatpush1.msra.mxu0 0.0
    %1481 = vmatprep.subr.mxu0 0.0
    %1482 = vmatpush1.msra.mxu0 0.0
    %1483 = vmatprep.subr.mxu0 0.0
    %1484 = vmatpush1.msra.mxu0 0.0
    %1485 = vmatprep.subr.mxu0 0.0
    %1486 = vmatpush1.msra.mxu0 0.0
    %1487 = vmatprep.subr.mxu0 0.0
    %1488 = vmatpush1.msra.mxu0 0.0
    %1489 = vmatprep.mubr.f32.mxu0 0.0
    %1490 = vmatmul.mubr.f32.gmra.mrb[0].mxu0 %v1420
    %v1491 = vpop.f32.mrb[0].mxu0
    %v1492 = vadd.f32 %v1417, %v1491
    %v1493 = vpop.f32.mrb[0].mxu0
    %1494 = vmatprep.mubr.f32.mxu0 0.0
    %1495 = vmatmul.mubr.f32.gmra.mrb[0].mxu0 %v1423
    %v1496 = vpop.f32.mrb[0].mxu0
    %v1497 = vadd.f32 %v1417, %v1496
    %v1498 = vpop.f32.mrb[0].mxu0
    %1499 = vdwg.mxu0
    %v1500 = vmax.f32 %v1492, 0.0
    %v1501 = vmax.f32 %v1497, 0.0
    %v1502 = vld [vmem:[%s15] sm:$0x1]
    %v1504 = vlaneseq
    %v1505 = vshrl.u32 %v1504, 7
    %v1506 = vsub.s32 0, %v1505
    %v1507 = vrot.slane %v1502, %v1506
    %v1509 = vsub.f32 %v1500, %v1507
    %v1510 = vsub.f32 %v1501, %v1507
    %v1511 = vld [vmem:[%s16] sm:$0x1]
    %v1512 = vadd.f32 %v1511, 1e-05
    %v1513 = vrsqrt.pop %v1512
    %v1515 = vlaneseq
    %v1516 = vshrl.u32 %v1515, 7
    %v1517 = vsub.s32 0, %v1516
    %v1518 = vrot.slane %v1513, %v1517
    %v1520 = vmul.f32 %v1509, %v1518
    %v1521 = vmul.f32 %v1510, %v1518
    %v1522 = vld [vmem:[%s13] sm:$0x1]
    %v1524 = vlaneseq
    %v1525 = vshrl.u32 %v1524, 7
    %v1526 = vsub.s32 0, %v1525
    %v1527 = vrot.slane %v1522, %v1526
    %v1529 = vmul.f32 %v1520, %v1527
    %v1530 = vmul.f32 %v1521, %v1527
    %v1531 = vld [vmem:[%s14] sm:$0x1]
    %v1533 = vlaneseq
    %v1534 = vshrl.u32 %v1533, 7
    %v1535 = vsub.s32 0, %v1534
    %v1536 = vrot.slane %v1531, %v1535
    %v1538 = vadd.f32 %v1529, %v1536
    %v1539 = vadd.f32 %v1530, %v1536
    %vm1540 = vcmask 130048
    %1541 = vst.msk [vmem:[%s17] sm:$0xff] %vm1540, %v1538
    %vm1542 = vcmask 125952
    %1543 = vst.msk [vmem:[%s17 + $0x8] sm:$0xf] %vm1542, %v1539
  $region77: #{graph_encoder_forward.6} parent=0 // pred_fallthru
    _
  // Predicated region
  $region78: #{graph_encoder_forward.6} parent=0 // pred_check
    _
  $region79: #{graph_encoder_forward.6} parent=0 // pred_check_branch
    %1545 = sbr.rel (0) target = $region81
  $region80: #{graph_encoder_forward.6} parent=0 // pred_region
    _
  $region81: #{graph_encoder_forward.6} parent=0 // pred_fallthru
    _
  // Predicated region
  $region82: #{graph_encoder_forward.6} parent=0 // pred_check
    _
  $region83: #{graph_encoder_forward.6} parent=0 // pred_check_branch
    %1547 = sbr.rel (0) target = $region85
  $region84: #{graph_encoder_forward.6} parent=0 // pred_region
    _
  $region85: #{graph_encoder_forward.6} parent=0 // pred_fallthru
    _

// kernel: graph_encoder_forward.11
$region0: #{graph_encoder_forward.11}
  #allocation0 [shape = 'u32[]', space=smem, size = 0x4, offset = 0x4, fixed_abs, tag = 'smem constant byte address 0x4 - core index']
  #allocation1 [shape = 'u32[144,128]{1,0:T(1,128)}', space=vmem, size = 0x12000, scoped, tag = 'internal scratch']
  %s0 = inlined_call_operand.vmem [shape: f32[4,16], index: 0, kind: input, shape index: {}]
  %s1 = inlined_call_operand.vmem [shape: f32[4,2], index: 1, kind: input, shape index: {}]
  %s2 = inlined_call_operand.vmem [shape: f32[2,1], index: 2, kind: input, shape index: {}]
  %s3 = inlined_call_operand.vmem [shape: f32[2,32], index: 3, kind: output, shape index: {}]
  %s4 = sld [smem:[#allocation0]]
  $region22: #{graph_encoder_forward.11} parent=0
    _
  %s6 = ssub.s32 1, %s4
  %s7 = scalar_select 0, %s6, %s4
  // Predicated region
  $region2: #{graph_encoder_forward.11} parent=0 // pred_check
    _
  $region3: #{graph_encoder_forward.11} parent=0 // pred_check_branch
    %9 = sbr.rel (0) target = $region5
  $region4: #{graph_encoder_forward.11} parent=0 // pred_region
    _
  $region5: #{graph_encoder_forward.11} parent=0 // pred_fallthru
    _
  // Predicated region
  $region6: #{graph_encoder_forward.11} parent=0 // pred_check
    _
  $region7: #{graph_encoder_forward.11} parent=0 // pred_check_branch
    %11 = sbr.rel (0) target = $region9
  $region8: #{graph_encoder_forward.11} parent=0 // pred_region
    _
  $region9: #{graph_encoder_forward.11} parent=0 // pred_fallthru
    _
  // Predicated region
  $region10: #{graph_encoder_forward.11} parent=0 // pred_check
    _
  $region11: #{graph_encoder_forward.11} parent=0 // pred_check_branch
    %13 = sbr.rel (0) target = $region13
  $region12: #{graph_encoder_forward.11} parent=0 // pred_region
    _
  $region13: #{graph_encoder_forward.11} parent=0 // pred_fallthru
    _
  %v14 = vld [vmem:[%s0] sm:$0xf]
  %v15 = vld [vmem:[%s1] sm:$0xf]
  %16 = vxpose.xlu0.b32.start [1/16] %v15, 128
  %17 = vxpose.xlu0.b32.cont [2/16] 0.0, 128
  %18 = vxpose.xlu0.b32.cont [3/16] 0.0, 128
  %19 = vxpose.xlu0.b32.cont [4/16] 0.0, 128
  %20 = vxpose.xlu0.b32.cont [5/16] 0.0, 128
  %21 = vxpose.xlu0.b32.cont [6/16] 0.0, 128
  %22 = vxpose.xlu0.b32.cont [7/16] 0.0, 128
  %23 = vxpose.xlu0.b32.cont [8/16] 0.0, 128
  %24 = vxpose.xlu0.b32.cont [9/16] 0.0, 128
  %25 = vxpose.xlu0.b32.cont [10/16] 0.0, 128
  %26 = vxpose.xlu0.b32.cont [11/16] 0.0, 128
  %27 = vxpose.xlu0.b32.cont [12/16] 0.0, 128
  %28 = vxpose.xlu0.b32.cont [13/16] 0.0, 128
  %29 = vxpose.xlu0.b32.cont [14/16] 0.0, 128
  %30 = vxpose.xlu0.b32.cont [15/16] 0.0, 128
  %31 = vxpose.xlu0.b32.end [16/16] 0.0, 128
  %v32 = vpop.trf.xlu0
  %v33 = vpop.trf.xlu0
  %v34 = vpop.trf.xlu0
  %v35 = vpop.trf.xlu0
  %v36 = vpop.trf.xlu0
  %v37 = vpop.trf.xlu0
  %v38 = vpop.trf.xlu0
  %v39 = vpop.trf.xlu0
  %v40 = vpop.trf.xlu0
  %v41 = vpop.trf.xlu0
  %v42 = vpop.trf.xlu0
  %v43 = vpop.trf.xlu0
  %v44 = vpop.trf.xlu0
  %v45 = vpop.trf.xlu0
  %v46 = vpop.trf.xlu0
  %v47 = vpop.trf.xlu0
  %vm48 = vcmask 31744
  %v50 = vsel %vm48, %v32, 0
  %vm52 = vcmask 1043456
  %v54 = vsel %vm52, %v14, 0
  %56 = vmatprep.subr.mxu0 0.0
  %57 = vmatpush1.msra.mxu0 %v54
  %58 = vmatprep.subr.mxu0 0.0
  %59 = vmatpush1.msra.mxu0 0.0
  %60 = vmatprep.subr.mxu0 0.0
  %61 = vmatpush1.msra.mxu0 0.0
  %62 = vmatprep.subr.mxu0 0.0
  %63 = vmatpush1.msra.mxu0 0.0
  %64 = vmatprep.subr.mxu0 0.0
  %65 = vmatpush1.msra.mxu0 0.0
  %66 = vmatprep.subr.mxu0 0.0
  %67 = vmatpush1.msra.mxu0 0.0
  %68 = vmatprep.subr.mxu0 0.0
  %69 = vmatpush1.msra.mxu0 0.0
  %70 = vmatprep.subr.mxu0 0.0
  %71 = vmatpush1.msra.mxu0 0.0
  %72 = vmatprep.subr.mxu0 0.0
  %73 = vmatpush1.msra.mxu0 0.0
  %74 = vmatprep.subr.mxu0 0.0
  %75 = vmatpush1.msra.mxu0 0.0
  %76 = vmatprep.subr.mxu0 0.0
  %77 = vmatpush1.msra.mxu0 0.0
  %78 = vmatprep.subr.mxu0 0.0
  %79 = vmatpush1.msra.mxu0 0.0
  %80 = vmatprep.subr.mxu0 0.0
  %81 = vmatpush1.msra.mxu0 0.0
  %82 = vmatprep.subr.mxu0 0.0
  %83 = vmatpush1.msra.mxu0 0.0
  %84 = vmatprep.subr.mxu0 0.0
  %85 = vmatpush1.msra.mxu0 0.0
  %86 = vmatprep.subr.mxu0 0.0
  %87 = vmatpush1.msra.mxu0 0.0
  %88 = vmatprep.subr.mxu0 0.0
  %89 = vmatpush1.msra.mxu0 0.0
  %90 = vmatprep.subr.mxu0 0.0
  %91 = vmatpush1.msra.mxu0 0.0
  %92 = vmatprep.subr.mxu0 0.0
  %93 = vmatpush1.msra.mxu0 0.0
  %94 = vmatprep.subr.mxu0 0.0
  %95 = vmatpush1.msra.mxu0 0.0
  %96 = vmatprep.subr.mxu0 0.0
  %97 = vmatpush1.msra.mxu0 0.0
  %98 = vmatprep.subr.mxu0 0.0
  %99 = vmatpush1.msra.mxu0 0.0
  %100 = vmatprep.subr.mxu0 0.0
  %101 = vmatpush1.msra.mxu0 0.0
  %102 = vmatprep.subr.mxu0 0.0
  %103 = vmatpush1.msra.mxu0 0.0
  %104 = vmatprep.subr.mxu0 0.0
  %105 = vmatpush1.msra.mxu0 0.0
  %106 = vmatprep.subr.mxu0 0.0
  %107 = vmatpush1.msra.mxu0 0.0
  %108 = vmatprep.subr.mxu0 0.0
  %109 = vmatpush1.msra.mxu0 0.0
  %110 = vmatprep.subr.mxu0 0.0
  %111 = vmatpush1.msra.mxu0 0.0
  %112 = vmatprep.subr.mxu0 0.0
  %113 = vmatpush1.msra.mxu0 0.0
  %114 = vmatprep.subr.mxu0 0.0
  %115 = vmatpush1.msra.mxu0 0.0
  %116 = vmatprep.subr.mxu0 0.0
  %117 = vmatpush1.msra.mxu0 0.0
  %118 = vmatprep.subr.mxu0 0.0
  %119 = vmatpush1.msra.mxu0 0.0
  %120 = vmatprep.mubr.f32.mxu0 0.0
  %121 = vmatmul.mubr.f32.gmra.mrb[0].mxu0 %v50
  %v122 = vpop.f32.mrb[0].mxu0
  %v123 = vadd.f32 0.0, %v122
  %v124 = vpop.f32.mrb[0].mxu0
  %125 = vdwg.mxu0
  %v126 = vld [vmem:[%s2] sm:$0x3]
  %128 = vset.pattern.permute.xlu0 0
  %129 = vperm.xlu0 %128, %v126
  %v130 = vpop.permute.xlu0 %129
  %v132 = vrcp.pop %v130
  %v133 = vmul.f32 %v123, %v132
  %vm134 = vcmp.gt.f32.partialorder %v15, 0.0
  %v135 = vsel %vm134, 1, 0
  %136 = vset.pattern.permute.xlu0 0
  %137 = vperm.xlu0 %136, %v135
  %v138 = vpop.permute.xlu0 %137
  %vm139 = vcmp.eq.s32.totalorder %v138, 1
  %v140 = vsel %vm139, %v14, -1e+30
  %vm141 = vcmask 125952
  %v142 = vsel %vm141, %v140, -inf
  %v143 = vrot.slane %v142, 4
  %v144 = vmax.f32 %v142, %v143
  %v145 = vrot.slane %v144, 2
  %v146 = vmax.f32 %v144, %v145
  %v147 = vrot.slane %v146, 1
  %v148 = vmax.f32 %v146, %v147
  %149 = vset.pattern.permute.xlu0 1
  %150 = vperm.xlu0 %149, %v135
  %v151 = vpop.permute.xlu0 %150
  %vm152 = vcmp.eq.s32.totalorder %v151, 1
  %v153 = vsel %vm152, %v14, -1e+30
  %v154 = vsel %vm141, %v153, -inf
  %v155 = vrot.slane %v154, 4
  %v156 = vmax.f32 %v154, %v155
  %v157 = vrot.slane %v156, 2
  %v158 = vmax.f32 %v156, %v157
  %v159 = vrot.slane %v158, 1
  %v160 = vmax.f32 %v158, %v159
  %vm161 = vcmask 1040384
  %v162 = vsel %vm161, %v148, %v160
  %164 = vrot.lane.b32.xlu0 %v133, 16
  %v165 = vpop.permute.xlu0 %164
  %vm167 = vcmask 130048
  %v168 = vsel %vm167, %v162, %v165
  %vm169 = vcmask 254976
  %170 = vst.msk [vmem:[%s3] sm:$0x3] %vm169, %v168
  // Predicated region
  $region14: #{graph_encoder_forward.11} parent=0 // pred_check
    _
  $region15: #{graph_encoder_forward.11} parent=0 // pred_check_branch
    %172 = sbr.rel (0) target = $region17
  $region16: #{graph_encoder_forward.11} parent=0 // pred_region
    _
  $region17: #{graph_encoder_forward.11} parent=0 // pred_fallthru
    _
  // Predicated region
  $region18: #{graph_encoder_forward.11} parent=0 // pred_check
    _
  $region19: #{graph_encoder_forward.11} parent=0 // pred_check_branch
    %174 = sbr.rel (0) target = $region21
  $region20: #{graph_encoder_forward.11} parent=0 // pred_region
    _
  $region21: #{graph_encoder_forward.11} parent=0 // pred_fallthru
    _

// kernel: graph_encoder_forward.8
$region0: #{graph_encoder_forward.8}
  #allocation0 [shape = 'u32[]', space=smem, size = 0x4, offset = 0x4, fixed_abs, tag = 'smem constant byte address 0x4 - core index']
  #allocation1 [shape = 'u32[144,128]{1,0:T(1,128)}', space=vmem, size = 0x12000, scoped, tag = 'internal scratch']
  %s0 = inlined_call_operand.vmem [shape: f32[6,16], index: 0, kind: input, shape index: {}]
  %s1 = inlined_call_operand.vmem [shape: f32[6,2], index: 1, kind: input, shape index: {}]
  %s2 = inlined_call_operand.vmem [shape: f32[2,1], index: 2, kind: input, shape index: {}]
  %s3 = inlined_call_operand.vmem [shape: f32[2,32], index: 3, kind: output, shape index: {}]
  %s4 = sld [smem:[#allocation0]]
  $region22: #{graph_encoder_forward.8} parent=0
    _
  %s6 = ssub.s32 1, %s4
  %s7 = scalar_select 0, %s6, %s4
  // Predicated region
  $region2: #{graph_encoder_forward.8} parent=0 // pred_check
    _
  $region3: #{graph_encoder_forward.8} parent=0 // pred_check_branch
    %9 = sbr.rel (0) target = $region5
  $region4: #{graph_encoder_forward.8} parent=0 // pred_region
    _
  $region5: #{graph_encoder_forward.8} parent=0 // pred_fallthru
    _
  // Predicated region
  $region6: #{graph_encoder_forward.8} parent=0 // pred_check
    _
  $region7: #{graph_encoder_forward.8} parent=0 // pred_check_branch
    %11 = sbr.rel (0) target = $region9
  $region8: #{graph_encoder_forward.8} parent=0 // pred_region
    _
  $region9: #{graph_encoder_forward.8} parent=0 // pred_fallthru
    _
  // Predicated region
  $region10: #{graph_encoder_forward.8} parent=0 // pred_check
    _
  $region11: #{graph_encoder_forward.8} parent=0 // pred_check_branch
    %13 = sbr.rel (0) target = $region13
  $region12: #{graph_encoder_forward.8} parent=0 // pred_region
    _
  $region13: #{graph_encoder_forward.8} parent=0 // pred_fallthru
    _
  %v14 = vld [vmem:[%s0] sm:$0x3f]
  %v15 = vld [vmem:[%s1] sm:$0x3f]
  %16 = vxpose.xlu0.b32.start [1/16] %v15, 128
  %17 = vxpose.xlu0.b32.cont [2/16] 0.0, 128
  %18 = vxpose.xlu0.b32.cont [3/16] 0.0, 128
  %19 = vxpose.xlu0.b32.cont [4/16] 0.0, 128
  %20 = vxpose.xlu0.b32.cont [5/16] 0.0, 128
  %21 = vxpose.xlu0.b32.cont [6/16] 0.0, 128
  %22 = vxpose.xlu0.b32.cont [7/16] 0.0, 128
  %23 = vxpose.xlu0.b32.cont [8/16] 0.0, 128
  %24 = vxpose.xlu0.b32.cont [9/16] 0.0, 128
  %25 = vxpose.xlu0.b32.cont [10/16] 0.0, 128
  %26 = vxpose.xlu0.b32.cont [11/16] 0.0, 128
  %27 = vxpose.xlu0.b32.cont [12/16] 0.0, 128
  %28 = vxpose.xlu0.b32.cont [13/16] 0.0, 128
  %29 = vxpose.xlu0.b32.cont [14/16] 0.0, 128
  %30 = vxpose.xlu0.b32.cont [15/16] 0.0, 128
  %31 = vxpose.xlu0.b32.end [16/16] 0.0, 128
  %v32 = vpop.trf.xlu0
  %v33 = vpop.trf.xlu0
  %v34 = vpop.trf.xlu0
  %v35 = vpop.trf.xlu0
  %v36 = vpop.trf.xlu0
  %v37 = vpop.trf.xlu0
  %v38 = vpop.trf.xlu0
  %v39 = vpop.trf.xlu0
  %v40 = vpop.trf.xlu0
  %v41 = vpop.trf.xlu0
  %v42 = vpop.trf.xlu0
  %v43 = vpop.trf.xlu0
  %v44 = vpop.trf.xlu0
  %v45 = vpop.trf.xlu0
  %v46 = vpop.trf.xlu0
  %v47 = vpop.trf.xlu0
  %vm48 = vcmask 48128
  %v50 = vsel %vm48, %v32, 0
  %vm52 = vcmask 1045504
  %v54 = vsel %vm52, %v14, 0
  %56 = vmatprep.subr.mxu0 0.0
  %57 = vmatpush1.msra.mxu0 %v54
  %58 = vmatprep.subr.mxu0 0.0
  %59 = vmatpush1.msra.mxu0 0.0
  %60 = vmatprep.subr.mxu0 0.0
  %61 = vmatpush1.msra.mxu0 0.0
  %62 = vmatprep.subr.mxu0 0.0
  %63 = vmatpush1.msra.mxu0 0.0
  %64 = vmatprep.subr.mxu0 0.0
  %65 = vmatpush1.msra.mxu0 0.0
  %66 = vmatprep.subr.mxu0 0.0
  %67 = vmatpush1.msra.mxu0 0.0
  %68 = vmatprep.subr.mxu0 0.0
  %69 = vmatpush1.msra.mxu0 0.0
  %70 = vmatprep.subr.mxu0 0.0
  %71 = vmatpush1.msra.mxu0 0.0
  %72 = vmatprep.subr.mxu0 0.0
  %73 = vmatpush1.msra.mxu0 0.0
  %74 = vmatprep.subr.mxu0 0.0
  %75 = vmatpush1.msra.mxu0 0.0
  %76 = vmatprep.subr.mxu0 0.0
  %77 = vmatpush1.msra.mxu0 0.0
  %78 = vmatprep.subr.mxu0 0.0
  %79 = vmatpush1.msra.mxu0 0.0
  %80 = vmatprep.subr.mxu0 0.0
  %81 = vmatpush1.msra.mxu0 0.0
  %82 = vmatprep.subr.mxu0 0.0
  %83 = vmatpush1.msra.mxu0 0.0
  %84 = vmatprep.subr.mxu0 0.0
  %85 = vmatpush1.msra.mxu0 0.0
  %86 = vmatprep.subr.mxu0 0.0
  %87 = vmatpush1.msra.mxu0 0.0
  %88 = vmatprep.subr.mxu0 0.0
  %89 = vmatpush1.msra.mxu0 0.0
  %90 = vmatprep.subr.mxu0 0.0
  %91 = vmatpush1.msra.mxu0 0.0
  %92 = vmatprep.subr.mxu0 0.0
  %93 = vmatpush1.msra.mxu0 0.0
  %94 = vmatprep.subr.mxu0 0.0
  %95 = vmatpush1.msra.mxu0 0.0
  %96 = vmatprep.subr.mxu0 0.0
  %97 = vmatpush1.msra.mxu0 0.0
  %98 = vmatprep.subr.mxu0 0.0
  %99 = vmatpush1.msra.mxu0 0.0
  %100 = vmatprep.subr.mxu0 0.0
  %101 = vmatpush1.msra.mxu0 0.0
  %102 = vmatprep.subr.mxu0 0.0
  %103 = vmatpush1.msra.mxu0 0.0
  %104 = vmatprep.subr.mxu0 0.0
  %105 = vmatpush1.msra.mxu0 0.0
  %106 = vmatprep.subr.mxu0 0.0
  %107 = vmatpush1.msra.mxu0 0.0
  %108 = vmatprep.subr.mxu0 0.0
  %109 = vmatpush1.msra.mxu0 0.0
  %110 = vmatprep.subr.mxu0 0.0
  %111 = vmatpush1.msra.mxu0 0.0
  %112 = vmatprep.subr.mxu0 0.0
  %113 = vmatpush1.msra.mxu0 0.0
  %114 = vmatprep.subr.mxu0 0.0
  %115 = vmatpush1.msra.mxu0 0.0
  %116 = vmatprep.subr.mxu0 0.0
  %117 = vmatpush1.msra.mxu0 0.0
  %118 = vmatprep.subr.mxu0 0.0
  %119 = vmatpush1.msra.mxu0 0.0
  %120 = vmatprep.mubr.f32.mxu0 0.0
  %121 = vmatmul.mubr.f32.gmra.mrb[0].mxu0 %v50
  %v122 = vpop.f32.mrb[0].mxu0
  %v123 = vadd.f32 0.0, %v122
  %v124 = vpop.f32.mrb[0].mxu0
  %125 = vdwg.mxu0
  %v126 = vld [vmem:[%s2] sm:$0x3]
  %128 = vset.pattern.permute.xlu0 0
  %129 = vperm.xlu0 %128, %v126
  %v130 = vpop.permute.xlu0 %129
  %v132 = vrcp.pop %v130
  %v133 = vmul.f32 %v123, %v132
  %vm134 = vcmp.gt.f32.partialorder %v15, 0.0
  %v135 = vsel %vm134, 1, 0
  %136 = vset.pattern.permute.xlu0 0
  %137 = vperm.xlu0 %136, %v135
  %v138 = vpop.permute.xlu0 %137
  %vm139 = vcmp.eq.s32.totalorder %v138, 1
  %v140 = vsel %vm139, %v14, -1e+30
  %vm141 = vcmask 128000
  %v142 = vsel %vm141, %v140, -inf
  %v143 = vrot.slane %v142, 4
  %v144 = vmax.f32 %v142, %v143
  %v145 = vrot.slane %v144, 2
  %v146 = vmax.f32 %v144, %v145
  %v147 = vrot.slane %v146, 1
  %v148 = vmax.f32 %v146, %v147
  %149 = vset.pattern.permute.xlu0 1
  %150 = vperm.xlu0 %149, %v135
  %v151 = vpop.permute.xlu0 %150
  %vm152 = vcmp.eq.s32.totalorder %v151, 1
  %v153 = vsel %vm152, %v14, -1e+30
  %v154 = vsel %vm141, %v153, -inf
  %v155 = vrot.slane %v154, 4
  %v156 = vmax.f32 %v154, %v155
  %v157 = vrot.slane %v156, 2
  %v158 = vmax.f32 %v156, %v157
  %v159 = vrot.slane %v158, 1
  %v160 = vmax.f32 %v158, %v159
  %vm161 = vcmask 1040384
  %v162 = vsel %vm161, %v148, %v160
  %164 = vrot.lane.b32.xlu0 %v133, 16
  %v165 = vpop.permute.xlu0 %164
  %vm167 = vcmask 130048
  %v168 = vsel %vm167, %v162, %v165
  %vm169 = vcmask 254976
  %170 = vst.msk [vmem:[%s3] sm:$0x3] %vm169, %v168
  // Predicated region
  $region14: #{graph_encoder_forward.8} parent=0 // pred_check
    _
  $region15: #{graph_encoder_forward.8} parent=0 // pred_check_branch
    %172 = sbr.rel (0) target = $region17
  $region16: #{graph_encoder_forward.8} parent=0 // pred_region
    _
  $region17: #{graph_encoder_forward.8} parent=0 // pred_fallthru
    _
  // Predicated region
  $region18: #{graph_encoder_forward.8} parent=0 // pred_check
    _
  $region19: #{graph_encoder_forward.8} parent=0 // pred_check_branch
    %174 = sbr.rel (0) target = $region21
  $region20: #{graph_encoder_forward.8} parent=0 // pred_region
    _
  $region21: #{graph_encoder_forward.8} parent=0 // pred_fallthru
    _

// kernel: graph_encoder_forward.9
$region0: #{graph_encoder_forward.9}
  #allocation0 [shape = 'u32[]', space=smem, size = 0x4, offset = 0x4, fixed_abs, tag = 'smem constant byte address 0x4 - core index']
  #allocation1 [shape = 'u32[144,128]{1,0:T(1,128)}', space=vmem, size = 0x12000, scoped, tag = 'internal scratch']
  #allocation2 [shape = 'bf16[6,64]{1,0:T(8,128)(2,1)}', space=vmem, size = 0x800, scoped, tag = 'scratch operand']
  #allocation3 [shape = 'bf16[6,64]{1,0:T(8,128)(2,1)}', space=vmem, size = 0x800, scoped, tag = 'scratch operand']
  #allocation4 [shape = 'bf16[6,64]{1,0:T(8,128)(2,1)}', space=vmem, size = 0x800, scoped, tag = 'scratch operand']
  #allocation5 [shape = 'bf16[6,64]{1,0:T(8,128)(2,1)}', space=vmem, size = 0x800, scoped, tag = 'scratch operand']
  #allocation6 [shape = 'f32[6,64]{1,0:T(8,128)}', space=vmem, size = 0x1000, scoped, tag = 'scratch operand']
  #allocation7 [shape = 'f32[6,64]{1,0:T(8,128)}', space=vmem, size = 0x1000, scoped, tag = 'scratch operand']
  #allocation8 [shape = 'f32[6,64]{1,0:T(8,128)}', space=vmem, size = 0x1000, scoped, tag = 'scratch operand']
  %s0 = inlined_call_operand.vmem [shape: f32[6,16], index: 0, kind: input, shape index: {}]
  %s1 = inlined_call_operand.vmem [shape: bf16[64,6], index: 1, kind: input, shape index: {}]
  %s2 = inlined_call_operand.vmem [shape: bf16[64,6], index: 2, kind: input, shape index: {}]
  %s3 = inlined_call_operand.vmem [shape: f32[64,4], index: 3, kind: input, shape index: {}]
  %s4 = inlined_call_operand.vmem [shape: f32[64,1], index: 4, kind: input, shape index: {}]
  %s5 = inlined_call_operand.vmem [shape: f32[64,4], index: 5, kind: input, shape index: {}]
  %s6 = inlined_call_operand.vmem [shape: f32[16,320], index: 6, kind: input, shape index: {}]
  %s7 = inlined_call_operand.vmem [shape: f32[1,320], index: 7, kind: input, shape index: {}]
  %s8 = inlined_call_operand.vmem [shape: f32[4,64], index: 8, kind: input, shape index: {}]
  %s9 = inlined_call_operand.vmem [shape: f32[1,64], index: 9, kind: input, shape index: {}]
  %s10 = inlined_call_operand.vmem [shape: f32[4,64], index: 10, kind: input, shape index: {}]
  %s11 = inlined_call_operand.vmem [shape: f32[64,16], index: 11, kind: input, shape index: {}]
  %s12 = inlined_call_operand.vmem [shape: f32[1,16], index: 12, kind: input, shape index: {}]
  %s13 = inlined_call_operand.vmem [shape: f32[1,16], index: 13, kind: input, shape index: {}]
  %s14 = inlined_call_operand.vmem [shape: f32[1,16], index: 14, kind: input, shape index: {}]
  %s15 = inlined_call_operand.vmem [shape: f32[1,16], index: 15, kind: input, shape index: {}]
  %s16 = inlined_call_operand.vmem [shape: f32[1,16], index: 16, kind: input, shape index: {}]
  %s17 = inlined_call_operand.vmem [shape: f32[6,16], index: 17, kind: output, shape index: {}]
  %s18 = sld [smem:[#allocation0]]
  $region86: #{graph_encoder_forward.9} parent=0
    _
  %s20 = ssub.s32 1, %s18
  %s21 = scalar_select 0, %s20, %s18
  // Predicated region
  $region2: #{graph_encoder_forward.9} parent=0 // pred_check
    _
  $region3: #{graph_encoder_forward.9} parent=0 // pred_check_branch
    %23 = sbr.rel (0) target = $region5
  $region4: #{graph_encoder_forward.9} parent=0 // pred_region
    _
  $region5: #{graph_encoder_forward.9} parent=0 // pred_fallthru
    _
  // Predicated region
  $region6: #{graph_encoder_forward.9} parent=0 // pred_check
    _
  $region7: #{graph_encoder_forward.9} parent=0 // pred_check_branch
    %25 = sbr.rel (0) target = $region9
  $region8: #{graph_encoder_forward.9} parent=0 // pred_region
    _
  $region9: #{graph_encoder_forward.9} parent=0 // pred_fallthru
    _
  // Predicated region
  $region10: #{graph_encoder_forward.9} parent=0 // pred_check
    _
  $region11: #{graph_encoder_forward.9} parent=0 // pred_check_branch
    %27 = sbr.rel (0) target = $region13
  $region12: #{graph_encoder_forward.9} parent=0 // pred_region
    _
  $region13: #{graph_encoder_forward.9} parent=0 // pred_fallthru
    _
  // Predicated region
  $region14: #{graph_encoder_forward.9} parent=0 // pred_check
    _
  $region15: #{graph_encoder_forward.9} parent=0 // pred_check_branch
    %29 = sbr.rel (0) target = $region17
  $region16: #{graph_encoder_forward.9} parent=0 // pred_region
    _
  $region17: #{graph_encoder_forward.9} parent=0 // pred_fallthru
    _
  // Predicated region
  $region18: #{graph_encoder_forward.9} parent=0 // pred_check
    _
  $region19: #{graph_encoder_forward.9} parent=0 // pred_check_branch
    %31 = sbr.rel (0) target = $region21
  $region20: #{graph_encoder_forward.9} parent=0 // pred_region
    _
  $region21: #{graph_encoder_forward.9} parent=0 // pred_fallthru
    _
  // Predicated region
  $region22: #{graph_encoder_forward.9} parent=0 // pred_check
    _
  $region23: #{graph_encoder_forward.9} parent=0 // pred_check_branch
    %33 = sbr.rel (0) target = $region25
  $region24: #{graph_encoder_forward.9} parent=0 // pred_region
    _
  $region25: #{graph_encoder_forward.9} parent=0 // pred_fallthru
    _
  // Predicated region
  $region26: #{graph_encoder_forward.9} parent=0 // pred_check
    _
  $region27: #{graph_encoder_forward.9} parent=0 // pred_check_branch
    %35 = sbr.rel (0) target = $region29
  $region28: #{graph_encoder_forward.9} parent=0 // pred_region
    _
  $region29: #{graph_encoder_forward.9} parent=0 // pred_fallthru
    _
  // Predicated region
  $region30: #{graph_encoder_forward.9} parent=0 // pred_check
    _
  $region31: #{graph_encoder_forward.9} parent=0 // pred_check_branch
    %37 = sbr.rel (0) target = $region33
  $region32: #{graph_encoder_forward.9} parent=0 // pred_region
    _
  $region33: #{graph_encoder_forward.9} parent=0 // pred_fallthru
    _
  // Predicated region
  $region34: #{graph_encoder_forward.9} parent=0 // pred_check
    _
  $region35: #{graph_encoder_forward.9} parent=0 // pred_check_branch
    %39 = sbr.rel (0) target = $region37
  $region36: #{graph_encoder_forward.9} parent=0 // pred_region
    _
  $region37: #{graph_encoder_forward.9} parent=0 // pred_fallthru
    _
  // Predicated region
  $region38: #{graph_encoder_forward.9} parent=0 // pred_check
    _
  $region39: #{graph_encoder_forward.9} parent=0 // pred_check_branch
    %41 = sbr.rel (0) target = $region41
  $region40: #{graph_encoder_forward.9} parent=0 // pred_region
    _
  $region41: #{graph_encoder_forward.9} parent=0 // pred_fallthru
    _
  // Predicated region
  $region42: #{graph_encoder_forward.9} parent=0 // pred_check
    _
  $region43: #{graph_encoder_forward.9} parent=0 // pred_check_branch
    %43 = sbr.rel (0) target = $region45
  $region44: #{graph_encoder_forward.9} parent=0 // pred_region
    _
  $region45: #{graph_encoder_forward.9} parent=0 // pred_fallthru
    _
  // Predicated region
  $region46: #{graph_encoder_forward.9} parent=0 // pred_check
    _
  $region47: #{graph_encoder_forward.9} parent=0 // pred_check_branch
    %45 = sbr.rel (0) target = $region49
  $region48: #{graph_encoder_forward.9} parent=0 // pred_region
    _
  $region49: #{graph_encoder_forward.9} parent=0 // pred_fallthru
    _
  // Predicated region
  $region50: #{graph_encoder_forward.9} parent=0 // pred_check
    _
  $region51: #{graph_encoder_forward.9} parent=0 // pred_check_branch
    %47 = sbr.rel (0) target = $region53
  $region52: #{graph_encoder_forward.9} parent=0 // pred_region
    _
  $region53: #{graph_encoder_forward.9} parent=0 // pred_fallthru
    _
  // Predicated region
  $region54: #{graph_encoder_forward.9} parent=0 // pred_check
    _
  $region55: #{graph_encoder_forward.9} parent=0 // pred_check_branch
    %49 = sbr.rel (0) target = $region57
  $region56: #{graph_encoder_forward.9} parent=0 // pred_region
    _
  $region57: #{graph_encoder_forward.9} parent=0 // pred_fallthru
    _
  // Predicated region
  $region58: #{graph_encoder_forward.9} parent=0 // pred_check
    _
  $region59: #{graph_encoder_forward.9} parent=0 // pred_check_branch
    %51 = sbr.rel (0) target = $region61
  $region60: #{graph_encoder_forward.9} parent=0 // pred_region
    _
  $region61: #{graph_encoder_forward.9} parent=0 // pred_fallthru
    _
  // Predicated region
  $region62: #{graph_encoder_forward.9} parent=0 // pred_check
    _
  $region63: #{graph_encoder_forward.9} parent=0 // pred_check_branch
    %53 = sbr.rel (0) target = $region65
  $region64: #{graph_encoder_forward.9} parent=0 // pred_region
    _
  $region65: #{graph_encoder_forward.9} parent=0 // pred_fallthru
    _
  // Predicated region
  $region66: #{graph_encoder_forward.9} parent=0 // pred_check
    _
  $region67: #{graph_encoder_forward.9} parent=0 // pred_check_branch
    %55 = sbr.rel (0) target = $region69
  $region68: #{graph_encoder_forward.9} parent=0 // pred_region
    _
  $region69: #{graph_encoder_forward.9} parent=0 // pred_fallthru
    _
  %p57 = scmp.eq.s32.totalorder 0, 0
  // Predicated region
  $region70: #{graph_encoder_forward.9} parent=0 // pred_check
    %p58 = pneg %p57
  $region71: #{graph_encoder_forward.9} parent=0 // pred_check_branch
    %60 = sbr.rel (%p58) target = $region73
  $region72: #{graph_encoder_forward.9} parent=0 // pred_region
    %v61 = vld [vmem:[%s0] sm:$0x3f]
    %v62 = vld [vmem:[%s6] sm:$0xff]
    %v63 = vld [vmem:[%s6 + $0x8] sm:$0xff]
    %v64 = vld [vmem:[%s6 + $0x10] sm:$0xff]
    %v65 = vld [vmem:[%s6 + $0x18] sm:$0xff]
    %v66 = vld [vmem:[%s6 + $0x20] sm:$0xff]
    %v67 = vld [vmem:[%s6 + $0x28] sm:$0xff]
    %v68 = vld [vmem:[%s7] sm:$0x7]
    %v70 = vlaneseq
    %v71 = vshrl.u32 %v70, 7
    %v72 = vsub.s32 0, %v71
    %v73 = vrot.slane %v68, %v72
    %v74 = vlaneseq
    %v75 = vshrl.u32 %v74, 7
    %v76 = vsub.s32 1, %v75
    %v77 = vrot.slane %v68, %v76
    %v78 = vlaneseq
    %v79 = vshrl.u32 %v78, 7
    %v80 = vsub.s32 2, %v79
    %v81 = vrot.slane %v68, %v80
    %vm85 = vcmask 130048
    %v87 = vsel %vm85, %v61, 0
    %89 = vmatprep.subr.mxu0 %v63
    %90 = vmatpush1.msra.mxu0 %v62
    %91 = vmatprep.subr.mxu0 %v66
    %92 = vmatpush1.msra.mxu0 %v65
    %93 = vmatprep.subr.mxu0 0.0
    %94 = vmatpush1.msra.mxu0 0.0
    %95 = vmatprep.subr.mxu0 0.0
    %96 = vmatpush1.msra.mxu0 0.0
    %97 = vmatprep.subr.mxu0 0.0
    %98 = vmatpush1.msra.mxu0 0.0
    %99 = vmatprep.subr.mxu0 0.0
    %100 = vmatpush1.msra.mxu0 0.0
    %101 = vmatprep.subr.mxu0 0.0
    %102 = vmatpush1.msra.mxu0 0.0
    %103 = vmatprep.subr.mxu0 0.0
    %104 = vmatpush1.msra.mxu0 0.0
    %105 = vmatprep.subr.mxu0 0.0
    %106 = vmatpush1.msra.mxu0 0.0
    %107 = vmatprep.subr.mxu0 0.0
    %108 = vmatpush1.msra.mxu0 0.0
    %109 = vmatprep.subr.mxu0 0.0
    %110 = vmatpush1.msra.mxu0 0.0
    %111 = vmatprep.subr.mxu0 0.0
    %112 = vmatpush1.msra.mxu0 0.0
    %113 = vmatprep.subr.mxu0 0.0
    %114 = vmatpush1.msra.mxu0 0.0
    %115 = vmatprep.subr.mxu0 0.0
    %116 = vmatpush1.msra.mxu0 0.0
    %117 = vmatprep.subr.mxu0 0.0
    %118 = vmatpush1.msra.mxu0 0.0
    %119 = vmatprep.subr.mxu0 0.0
    %120 = vmatpush1.msra.mxu0 0.0
    %121 = vmatprep.subr.mxu0 0.0
    %122 = vmatpush1.msra.mxu0 0.0
    %123 = vmatprep.subr.mxu0 0.0
    %124 = vmatpush1.msra.mxu0 0.0
    %125 = vmatprep.subr.mxu0 0.0
    %126 = vmatpush1.msra.mxu0 0.0
    %127 = vmatprep.subr.mxu0 0.0
    %128 = vmatpush1.msra.mxu0 0.0
    %129 = vmatprep.subr.mxu0 0.0
    %130 = vmatpush1.msra.mxu0 0.0
    %131 = vmatprep.subr.mxu0 0.0
    %132 = vmatpush1.msra.mxu0 0.0
    %133 = vmatprep.subr.mxu0 0.0
    %134 = vmatpush1.msra.mxu0 0.0
    %135 = vmatprep.subr.mxu0 0.0
    %136 = vmatpush1.msra.mxu0 0.0
    %137 = vmatprep.subr.mxu0 0.0
    %138 = vmatpush1.msra.mxu0 0.0
    %139 = vmatprep.subr.mxu0 0.0
    %140 = vmatpush1.msra.mxu0 0.0
    %141 = vmatprep.subr.mxu0 0.0
    %142 = vmatpush1.msra.mxu0 0.0
    %143 = vmatprep.subr.mxu0 0.0
    %144 = vmatpush1.msra.mxu0 0.0
    %145 = vmatprep.subr.mxu0 0.0
    %146 = vmatpush1.msra.mxu0 0.0
    %147 = vmatprep.subr.mxu0 0.0
    %148 = vmatpush1.msra.mxu0 0.0
    %149 = vmatprep.subr.mxu0 0.0
    %150 = vmatpush1.msra.mxu0 0.0
    %151 = vmatprep.subr.mxu0 0.0
    %152 = vmatpush1.msra.mxu0 0.0
    %153 = vmatprep.mubr.f32.mxu0 0.0
    %154 = vmatmul.mubr.f32.gmra.mrb[0].mxu0 %v87
    %v155 = vpop.f32.mrb[0].mxu0
    %v156 = vadd.f32 %v73, %v155
    %v157 = vpop.f32.mrb[0].mxu0
    %v158 = vadd.f32 %v77, %v157
    %159 = vdwg.mxu0
    %160 = vmatprep.subr.mxu0 0.0
    %161 = vmatpush1.msra.mxu0 %v64
    %162 = vmatprep.subr.mxu0 0.0
    %163 = vmatpush1.msra.mxu0 %v67
    %164 = vmatprep.subr.mxu0 0.0
    %165 = vmatpush1.msra.mxu0 0.0
    %166 = vmatprep.subr.mxu0 0.0
    %167 = vmatpush1.msra.mxu0 0.0
    %168 = vmatprep.subr.mxu0 0.0
    %169 = vmatpush1.msra.mxu0 0.0
    %170 = vmatprep.subr.mxu0 0.0
    %171 = vmatpush1.msra.mxu0 0.0
    %172 = vmatprep.subr.mxu0 0.0
    %173 = vmatpush1.msra.mxu0 0.0
    %174 = vmatprep.subr.mxu0 0.0
    %175 = vmatpush1.msra.mxu0 0.0
    %176 = vmatprep.subr.mxu0 0.0
    %177 = vmatpush1.msra.mxu0 0.0
    %178 = vmatprep.subr.mxu0 0.0
    %179 = vmatpush1.msra.mxu0 0.0
    %180 = vmatprep.subr.mxu0 0.0
    %181 = vmatpush1.msra.mxu0 0.0
    %182 = vmatprep.subr.mxu0 0.0
    %183 = vmatpush1.msra.mxu0 0.0
    %184 = vmatprep.subr.mxu0 0.0
    %185 = vmatpush1.msra.mxu0 0.0
    %186 = vmatprep.subr.mxu0 0.0
    %187 = vmatpush1.msra.mxu0 0.0
    %188 = vmatprep.subr.mxu0 0.0
    %189 = vmatpush1.msra.mxu0 0.0
    %190 = vmatprep.subr.mxu0 0.0
    %191 = vmatpush1.msra.mxu0 0.0
    %192 = vmatprep.subr.mxu0 0.0
    %193 = vmatpush1.msra.mxu0 0.0
    %194 = vmatprep.subr.mxu0 0.0
    %195 = vmatpush1.msra.mxu0 0.0
    %196 = vmatprep.subr.mxu0 0.0
    %197 = vmatpush1.msra.mxu0 0.0
    %198 = vmatprep.subr.mxu0 0.0
    %199 = vmatpush1.msra.mxu0 0.0
    %200 = vmatprep.subr.mxu0 0.0
    %201 = vmatpush1.msra.mxu0 0.0
    %202 = vmatprep.subr.mxu0 0.0
    %203 = vmatpush1.msra.mxu0 0.0
    %204 = vmatprep.subr.mxu0 0.0
    %205 = vmatpush1.msra.mxu0 0.0
    %206 = vmatprep.subr.mxu0 0.0
    %207 = vmatpush1.msra.mxu0 0.0
    %208 = vmatprep.subr.mxu0 0.0
    %209 = vmatpush1.msra.mxu0 0.0
    %210 = vmatprep.subr.mxu0 0.0
    %211 = vmatpush1.msra.mxu0 0.0
    %212 = vmatprep.subr.mxu0 0.0
    %213 = vmatpush1.msra.mxu0 0.0
    %214 = vmatprep.subr.mxu0 0.0
    %215 = vmatpush1.msra.mxu0 0.0
    %216 = vmatprep.subr.mxu0 0.0
    %217 = vmatpush1.msra.mxu0 0.0
    %218 = vmatprep.subr.mxu0 0.0
    %219 = vmatpush1.msra.mxu0 0.0
    %220 = vmatprep.subr.mxu0 0.0
    %221 = vmatpush1.msra.mxu0 0.0
    %222 = vmatprep.subr.mxu0 0.0
    %223 = vmatpush1.msra.mxu0 0.0
    %224 = vmatprep.mubr.f32.mxu0 0.0
    %225 = vmatmul.mubr.f32.gmra.mrb[0].mxu0 %v87
    %v226 = vpop.f32.mrb[0].mxu0
    %v227 = vadd.f32 %v81, %v226
    %v228 = vpop.f32.mrb[0].mxu0
    %229 = vdwg.mxu0
    %v230 = vpack.c.bf16 %v156, %v156
    %vm231 = vcmask 518144
    %232 = vst.msk [vmem:[#allocation2] sm:$0x7] %vm231, %v230
    %v234 = vunpack.c.l.b16 %v230
    %v235 = vpack.c.b16 %v234, %v234
    %236 = vrot.lane.b32.xlu0 %v235, 64
    %v237 = vpop.permute.xlu0 %236
    %239 = vst.msk [vmem:[#allocation3] sm:$0x7] %vm231, %v237
    %v240 = vpack.c.bf16 %v158, %v158
    %241 = vst.msk [vmem:[#allocation4] sm:$0x7] %vm231, %v240
    %v242 = vpack.c.bf16 %v227, %v227
    %243 = vst.msk [vmem:[#allocation5] sm:$0x7] %vm231, %v242
    %v244 = vld [vmem:[%s9] sm:$0x1]
    %v246 = vlaneseq
    %v247 = vshrl.u32 %v246, 7
    %v248 = vsub.s32 0, %v247
    %v249 = vrot.slane %v244, %v248
    %250 = vrot.lane.b32.xlu0 %v249, 64
    %v251 = vpop.permute.xlu0 %250
    %v253 = vadd.f32 %v158, %v251
    %255 = vrot.lane.b32.xlu0 %v253, 64
    %v256 = vpop.permute.xlu0 %255
    %vm258 = vcmask 521216
    %259 = vst.msk [vmem:[#allocation8] sm:$0x3f] %vm258, %v256
    %260 = vst.msk [vmem:[#allocation6] sm:$0x3f] %vm258, 0.0
    %261 = vst.msk [vmem:[#allocation7] sm:$0x3f] %vm258, 0.0
  $region73: #{graph_encoder_forward.9} parent=0 // pred_fallthru
    _
  %v262 = vld [vmem:[%s1] sm:$0xf]
  %v263 = vld [vmem:[%s1 + $0x4] sm:$0xf]
  %v264 = vld [vmem:[%s1 + $0x8] sm:$0xf]
  %v265 = vld [vmem:[%s1 + $0xc] sm:$0xf]
  %v266 = vld [vmem:[%s1 + $0x10] sm:$0xf]
  %v267 = vld [vmem:[%s1 + $0x14] sm:$0xf]
  %v268 = vld [vmem:[%s1 + $0x18] sm:$0xf]
  %v269 = vld [vmem:[%s1 + $0x1c] sm:$0xf]
  %v270 = vld [vmem:[%s2] sm:$0xf]
  %v271 = vld [vmem:[%s2 + $0x4] sm:$0xf]
  %v272 = vld [vmem:[%s2 + $0x8] sm:$0xf]
  %v273 = vld [vmem:[%s2 + $0xc] sm:$0xf]
  %v274 = vld [vmem:[%s2 + $0x10] sm:$0xf]
  %v275 = vld [vmem:[%s2 + $0x14] sm:$0xf]
  %v276 = vld [vmem:[%s2 + $0x18] sm:$0xf]
  %v277 = vld [vmem:[%s2 + $0x1c] sm:$0xf]
  %v278 = vld [vmem:[%s3] sm:$0xff]
  %v279 = vld [vmem:[%s3 + $0x8] sm:$0xff]
  %v280 = vld [vmem:[%s3 + $0x10] sm:$0xff]
  %v281 = vld [vmem:[%s3 + $0x18] sm:$0xff]
  %v282 = vld [vmem:[%s3 + $0x20] sm:$0xff]
  %v283 = vld [vmem:[%s3 + $0x28] sm:$0xff]
  %v284 = vld [vmem:[%s3 + $0x30] sm:$0xff]
  %v285 = vld [vmem:[%s3 + $0x38] sm:$0xff]
  %v286 = vld [vmem:[%s4] sm:$0xff]
  %v287 = vld [vmem:[%s4 + $0x8] sm:$0xff]
  %v288 = vld [vmem:[%s4 + $0x10] sm:$0xff]
  %v289 = vld [vmem:[%s4 + $0x18] sm:$0xff]
  %v290 = vld [vmem:[%s4 + $0x20] sm:$0xff]
  %v291 = vld [vmem:[%s4 + $0x28] sm:$0xff]
  %v292 = vld [vmem:[%s4 + $0x30] sm:$0xff]
  %v293 = vld [vmem:[%s4 + $0x38] sm:$0xff]
  %v294 = vld [vmem:[%s5] sm:$0xff]
  %v295 = vld [vmem:[%s5 + $0x8] sm:$0xff]
  %v296 = vld [vmem:[%s5 + $0x10] sm:$0xff]
  %v297 = vld [vmem:[%s5 + $0x18] sm:$0xff]
  %v298 = vld [vmem:[%s5 + $0x20] sm:$0xff]
  %v299 = vld [vmem:[%s5 + $0x28] sm:$0xff]
  %v300 = vld [vmem:[%s5 + $0x30] sm:$0xff]
  %v301 = vld [vmem:[%s5 + $0x38] sm:$0xff]
  %v302 = vld [vmem:[%s10] sm:$0xf]
  %v303 = vld [vmem:[#allocation5] sm:$0x7]
  %v312 = vunpack.c.l.b16 %v262
  %v313 = vunpack.c.l.b16 %v263
  %v314 = vunpack.c.l.b16 %v264
  %v315 = vunpack.c.l.b16 %v265
  %v316 = vunpack.c.l.b16 %v266
  %v317 = vunpack.c.l.b16 %v267
  %v318 = vunpack.c.l.b16 %v268
  %v319 = vunpack.c.l.b16 %v269
  %v320 = vpack.c.b16 %v313, %v312
  %v321 = vpack.c.b16 %v315, %v314
  %v322 = vpack.c.b16 %v317, %v316
  %v323 = vpack.c.b16 %v319, %v318
  %vm324 = vcmask 48128
  %v326 = vsel %vm324, %v320, 0
  %v329 = vsel %vm324, %v321, 0
  %v332 = vsel %vm324, %v322, 0
  %v335 = vsel %vm324, %v323, 0
  %vm337 = vcmask 1042432
  %v339 = vsel %vm337, %v303, 0
  %341 = vmatprep.subr.bf16.mxu0 0
  %342 = vmatpush1.bf16.msra.mxu0 %v339
  %343 = vmatprep.subr.bf16.mxu0 0
  %344 = vmatpush1.bf16.msra.mxu0 0
  %345 = vmatprep.subr.bf16.mxu0 0
  %346 = vmatpush1.bf16.msra.mxu0 0
  %347 = vmatprep.subr.bf16.mxu0 0
  %348 = vmatpush1.bf16.msra.mxu0 0
  %349 = vmatprep.subr.bf16.mxu0 0
  %350 = vmatpush1.bf16.msra.mxu0 0
  %351 = vmatprep.subr.bf16.mxu0 0
  %352 = vmatpush1.bf16.msra.mxu0 0
  %353 = vmatprep.subr.bf16.mxu0 0
  %354 = vmatpush1.bf16.msra.mxu0 0
  %355 = vmatprep.subr.bf16.mxu0 0
  %356 = vmatpush1.bf16.msra.mxu0 0
  %357 = vmatprep.subr.bf16.mxu0 0
  %358 = vmatpush1.bf16.msra.mxu0 0
  %359 = vmatprep.subr.bf16.mxu0 0
  %360 = vmatpush1.bf16.msra.mxu0 0
  %361 = vmatprep.subr.bf16.mxu0 0
  %362 = vmatpush1.bf16.msra.mxu0 0
  %363 = vmatprep.subr.bf16.mxu0 0
  %364 = vmatpush1.bf16.msra.mxu0 0
  %365 = vmatprep.subr.bf16.mxu0 0
  %366 = vmatpush1.bf16.msra.mxu0 0
  %367 = vmatprep.subr.bf16.mxu0 0
  %368 = vmatpush1.bf16.msra.mxu0 0
  %369 = vmatprep.subr.bf16.mxu0 0
  %370 = vmatpush1.bf16.msra.mxu0 0
  %371 = vmatprep.subr.bf16.mxu0 0
  %372 = vmatpush1.bf16.msra.mxu0 0
  %373 = vmatprep.mubr.bf16.mxu0 0
  %374 = vmatmul.mubr.bf16.gmra.mrb[0].mxu0 %v326
  %v375 = vpop.f32.mrb[0].mxu0
  %v376 = vadd.f32 0.0, %v375
  %v377 = vpop.f32.mrb[0].mxu0
  %v378 = vpop.f32.mrb[0].mxu0
  %v379 = vadd.f32 0.0, %v378
  %v380 = vpop.f32.mrb[0].mxu0
  %381 = vmatprep.mubr.bf16.mxu0 0
  %382 = vmatmul.mubr.bf16.gmra.mrb[0].mxu0 %v329
  %v383 = vpop.f32.mrb[0].mxu0
  %v384 = vadd.f32 0.0, %v383
  %v385 = vpop.f32.mrb[0].mxu0
  %v386 = vpop.f32.mrb[0].mxu0
  %v387 = vadd.f32 0.0, %v386
  %v388 = vpop.f32.mrb[0].mxu0
  %389 = vmatprep.mubr.bf16.mxu0 0
  %390 = vmatmul.mubr.bf16.gmra.mrb[0].mxu0 %v332
  %v391 = vpop.f32.mrb[0].mxu0
  %v392 = vadd.f32 0.0, %v391
  %v393 = vpop.f32.mrb[0].mxu0
  %v394 = vpop.f32.mrb[0].mxu0
  %v395 = vadd.f32 0.0, %v394
  %v396 = vpop.f32.mrb[0].mxu0
  %397 = vmatprep.mubr.bf16.mxu0 0
  %398 = vmatmul.mubr.bf16.gmra.mrb[0].mxu0 %v335
  %v399 = vpop.f32.mrb[0].mxu0
  %v400 = vadd.f32 0.0, %v399
  %v401 = vpop.f32.mrb[0].mxu0
  %v402 = vpop.f32.mrb[0].mxu0
  %v403 = vadd.f32 0.0, %v402
  %v404 = vpop.f32.mrb[0].mxu0
  %405 = vdwg.mxu0
  %v406 = vld [vmem:[#allocation8] sm:$0x3f]
  %408 = vset.pattern.permute.xlu0 0
  %409 = vperm.xlu0 %408, %v286
  %v410 = vpop.permute.xlu0 %409
  %413 = vset.pattern.permute.xlu0 0
  %414 = vperm.xlu0 %413, %v287
  %v415 = vpop.permute.xlu0 %414
  %418 = vset.pattern.permute.xlu0 0
  %419 = vperm.xlu0 %418, %v288
  %v420 = vpop.permute.xlu0 %419
  %423 = vset.pattern.permute.xlu0 0
  %424 = vperm.xlu0 %423, %v289
  %v425 = vpop.permute.xlu0 %424
  %428 = vset.pattern.permute.xlu0 0
  %429 = vperm.xlu0 %428, %v290
  %v430 = vpop.permute.xlu0 %429
  %433 = vset.pattern.permute.xlu0 0
  %434 = vperm.xlu0 %433, %v291
  %v435 = vpop.permute.xlu0 %434
  %438 = vset.pattern.permute.xlu0 0
  %439 = vperm.xlu0 %438, %v292
  %v440 = vpop.permute.xlu0 %439
  %443 = vset.pattern.permute.xlu0 0
  %444 = vperm.xlu0 %443, %v293
  %v445 = vpop.permute.xlu0 %444
  %v447 = vmul.f32 %v410, %v376
  %v448 = vmul.f32 %v415, %v379
  %v449 = vmul.f32 %v420, %v384
  %v450 = vmul.f32 %v425, %v387
  %v451 = vmul.f32 %v430, %v392
  %v452 = vmul.f32 %v435, %v395
  %v453 = vmul.f32 %v440, %v400
  %v454 = vmul.f32 %v445, %v403
  %v455 = vpack.c.bf16 %v448, %v447
  %v456 = vpack.c.bf16 %v450, %v449
  %v457 = vpack.c.bf16 %v452, %v451
  %v458 = vpack.c.bf16 %v454, %v453
  %v467 = vunpack.c.l.b16 %v270
  %v468 = vunpack.c.l.b16 %v271
  %v469 = vunpack.c.l.b16 %v272
  %v470 = vunpack.c.l.b16 %v273
  %v471 = vunpack.c.l.b16 %v274
  %v472 = vunpack.c.l.b16 %v275
  %v473 = vunpack.c.l.b16 %v276
  %v474 = vunpack.c.l.b16 %v277
  %v475 = vpack.c.b16 %v468, %v467
  %v476 = vpack.c.b16 %v470, %v469
  %v477 = vpack.c.b16 %v472, %v471
  %v478 = vpack.c.b16 %v474, %v473
  %483 = vxpose.xlu0.c.b16.start [1/8] %v475, 128
  %484 = vxpose.xlu0.c.b16.cont [2/8] %v476, 128
  %485 = vxpose.xlu0.c.b16.cont [3/8] %v477, 128
  %486 = vxpose.xlu0.c.b16.cont [4/8] %v478, 128
  %487 = vxpose.xlu0.c.b16.cont [5/8] 0, 128
  %488 = vxpose.xlu0.c.b16.cont [6/8] 0, 128
  %489 = vxpose.xlu0.c.b16.cont [7/8] 0, 128
  %490 = vxpose.xlu0.c.b16.end [8/8] 0, 128
  %v491 = vpop.trf.xlu0
  %v492 = vpop.trf.xlu0
  %v493 = vpop.trf.xlu0
  %v494 = vpop.trf.xlu0
  %v495 = vpop.trf.xlu0
  %v496 = vpop.trf.xlu0
  %v497 = vpop.trf.xlu0
  %v498 = vpop.trf.xlu0
  %vm499 = vcmask 523264
  %v501 = vsel %vm499, %v491, 0
  %503 = vmatprep.subr.bf16.mxu0 0
  %504 = vmatpush1.bf16.msra.mxu0 %v455
  %505 = vmatprep.subr.bf16.mxu0 0
  %506 = vmatpush1.bf16.msra.mxu0 %v456
  %507 = vmatprep.subr.bf16.mxu0 0
  %508 = vmatpush1.bf16.msra.mxu0 %v457
  %509 = vmatprep.subr.bf16.mxu0 0
  %510 = vmatpush1.bf16.msra.mxu0 %v458
  %511 = vmatprep.subr.bf16.mxu0 0
  %512 = vmatpush1.bf16.msra.mxu0 0
  %513 = vmatprep.subr.bf16.mxu0 0
  %514 = vmatpush1.bf16.msra.mxu0 0
  %515 = vmatprep.subr.bf16.mxu0 0
  %516 = vmatpush1.bf16.msra.mxu0 0
  %517 = vmatprep.subr.bf16.mxu0 0
  %518 = vmatpush1.bf16.msra.mxu0 0
  %519 = vmatprep.subr.bf16.mxu0 0
  %520 = vmatpush1.bf16.msra.mxu0 0
  %521 = vmatprep.subr.bf16.mxu0 0
  %522 = vmatpush1.bf16.msra.mxu0 0
  %523 = vmatprep.subr.bf16.mxu0 0
  %524 = vmatpush1.bf16.msra.mxu0 0
  %525 = vmatprep.subr.bf16.mxu0 0
  %526 = vmatpush1.bf16.msra.mxu0 0
  %527 = vmatprep.subr.bf16.mxu0 0
  %528 = vmatpush1.bf16.msra.mxu0 0
  %529 = vmatprep.subr.bf16.mxu0 0
  %530 = vmatpush1.bf16.msra.mxu0 0
  %531 = vmatprep.subr.bf16.mxu0 0
  %532 = vmatpush1.bf16.msra.mxu0 0
  %533 = vmatprep.subr.bf16.mxu0 0
  %534 = vmatpush1.bf16.msra.mxu0 0
  %535 = vmatprep.mubr.bf16.mxu0 0
  %536 = vmatmul.mubr.bf16.gmra.mrb[0].mxu0 %v501
  %v537 = vpop.f32.mrb[0].mxu0
  %v538 = vadd.f32 0.0, %v537
  %v539 = vpop.f32.mrb[0].mxu0
  %v540 = vpop.f32.mrb[0].mxu0
  %v541 = vpop.f32.mrb[0].mxu0
  %542 = vdwg.mxu0
  %v543 = vadd.f32 %v406, %v538
  %vm544 = vcmask 521216
  %545 = vst.msk [vmem:[#allocation8] sm:$0x3f] %vm544, %v543
  %v546 = vld [vmem:[%s8] sm:$0xf]
  %vm547 = vcmask 31744
  %v549 = vsel %vm547, %v278, 0
  %v552 = vsel %vm547, %v279, 0
  %v555 = vsel %vm547, %v280, 0
  %v558 = vsel %vm547, %v281, 0
  %v561 = vsel %vm547, %v282, 0
  %v564 = vsel %vm547, %v283, 0
  %v567 = vsel %vm547, %v284, 0
  %v570 = vsel %vm547, %v285, 0
  %vm572 = vcmask 1043456
  %v574 = vsel %vm572, %v546, 0
  %576 = vmatprep.subr.mxu0 0.0
  %577 = vmatpush1.msra.mxu0 %v574
  %578 = vmatprep.subr.mxu0 0.0
  %579 = vmatpush1.msra.mxu0 0.0
  %580 = vmatprep.subr.mxu0 0.0
  %581 = vmatpush1.msra.mxu0 0.0
  %582 = vmatprep.subr.mxu0 0.0
  %583 = vmatpush1.msra.mxu0 0.0
  %584 = vmatprep.subr.mxu0 0.0
  %585 = vmatpush1.msra.mxu0 0.0
  %586 = vmatprep.subr.mxu0 0.0
  %587 = vmatpush1.msra.mxu0 0.0
  %588 = vmatprep.subr.mxu0 0.0
  %589 = vmatpush1.msra.mxu0 0.0
  %590 = vmatprep.subr.mxu0 0.0
  %591 = vmatpush1.msra.mxu0 0.0
  %592 = vmatprep.subr.mxu0 0.0
  %593 = vmatpush1.msra.mxu0 0.0
  %594 = vmatprep.subr.mxu0 0.0
  %595 = vmatpush1.msra.mxu0 0.0
  %596 = vmatprep.subr.mxu0 0.0
  %597 = vmatpush1.msra.mxu0 0.0
  %598 = vmatprep.subr.mxu0 0.0
  %599 = vmatpush1.msra.mxu0 0.0
  %600 = vmatprep.subr.mxu0 0.0
  %601 = vmatpush1.msra.mxu0 0.0
  %602 = vmatprep.subr.mxu0 0.0
  %603 = vmatpush1.msra.mxu0 0.0
  %604 = vmatprep.subr.mxu0 0.0
  %605 = vmatpush1.msra.mxu0 0.0
  %606 = vmatprep.subr.mxu0 0.0
  %607 = vmatpush1.msra.mxu0 0.0
  %608 = vmatprep.subr.mxu0 0.0
  %609 = vmatpush1.msra.mxu0 0.0
  %610 = vmatprep.subr.mxu0 0.0
  %611 = vmatpush1.msra.mxu0 0.0
  %612 = vmatprep.subr.mxu0 0.0
  %613 = vmatpush1.msra.mxu0 0.0
  %614 = vmatprep.subr.mxu0 0.0
  %615 = vmatpush1.msra.mxu0 0.0
  %616 = vmatprep.subr.mxu0 0.0
  %617 = vmatpush1.msra.mxu0 0.0
  %618 = vmatprep.subr.mxu0 0.0
  %619 = vmatpush1.msra.mxu0 0.0
  %620 = vmatprep.subr.mxu0 0.0
  %621 = vmatpush1.msra.mxu0 0.0
  %622 = vmatprep.subr.mxu0 0.0
  %623 = vmatpush1.msra.mxu0 0.0
  %624 = vmatprep.subr.mxu0 0.0
  %625 = vmatpush1.msra.mxu0 0.0
  %626 = vmatprep.subr.mxu0 0.0
  %627 = vmatpush1.msra.mxu0 0.0
  %628 = vmatprep.subr.mxu0 0.0
  %629 = vmatpush1.msra.mxu0 0.0
  %630 = vmatprep.subr.mxu0 0.0
  %631 = vmatpush1.msra.mxu0 0.0
  %632 = vmatprep.subr.mxu0 0.0
  %633 = vmatpush1.msra.mxu0 0.0
  %634 = vmatprep.subr.mxu0 0.0
  %635 = vmatpush1.msra.mxu0 0.0
  %636 = vmatprep.subr.mxu0 0.0
  %637 = vmatpush1.msra.mxu0 0.0
  %638 = vmatprep.subr.mxu0 0.0
  %639 = vmatpush1.msra.mxu0 0.0
  %640 = vmatprep.mubr.f32.mxu0 0.0
  %641 = vmatmul.mubr.f32.gmra.mrb[0].mxu0 %v549
  %v642 = vpop.f32.mrb[0].mxu0
  %v643 = vadd.f32 0.0, %v642
  %v644 = vpop.f32.mrb[0].mxu0
  %645 = vmatprep.mubr.f32.mxu0 0.0
  %646 = vmatmul.mubr.f32.gmra.mrb[0].mxu0 %v552
  %v647 = vpop.f32.mrb[0].mxu0
  %v648 = vadd.f32 0.0, %v647
  %v649 = vpop.f32.mrb[0].mxu0
  %650 = vmatprep.mubr.f32.mxu0 0.0
  %651 = vmatmul.mubr.f32.gmra.mrb[0].mxu0 %v555
  %v652 = vpop.f32.mrb[0].mxu0
  %v653 = vadd.f32 0.0, %v652
  %v654 = vpop.f32.mrb[0].mxu0
  %655 = vmatprep.mubr.f32.mxu0 0.0
  %656 = vmatmul.mubr.f32.gmra.mrb[0].mxu0 %v558
  %v657 = vpop.f32.mrb[0].mxu0
  %v658 = vadd.f32 0.0, %v657
  %v659 = vpop.f32.mrb[0].mxu0
  %660 = vmatprep.mubr.f32.mxu0 0.0
  %661 = vmatmul.mubr.f32.gmra.mrb[0].mxu0 %v561
  %v662 = vpop.f32.mrb[0].mxu0
  %v663 = vadd.f32 0.0, %v662
  %v664 = vpop.f32.mrb[0].mxu0
  %665 = vmatprep.mubr.f32.mxu0 0.0
  %666 = vmatmul.mubr.f32.gmra.mrb[0].mxu0 %v564
  %v667 = vpop.f32.mrb[0].mxu0
  %v668 = vadd.f32 0.0, %v667
  %v669 = vpop.f32.mrb[0].mxu0
  %670 = vmatprep.mubr.f32.mxu0 0.0
  %671 = vmatmul.mubr.f32.gmra.mrb[0].mxu0 %v567
  %v672 = vpop.f32.mrb[0].mxu0
  %v673 = vadd.f32 0.0, %v672
  %v674 = vpop.f32.mrb[0].mxu0
  %675 = vmatprep.mubr.f32.mxu0 0.0
  %676 = vmatmul.mubr.f32.gmra.mrb[0].mxu0 %v570
  %v677 = vpop.f32.mrb[0].mxu0
  %v678 = vadd.f32 0.0, %v677
  %v679 = vpop.f32.mrb[0].mxu0
  %680 = vdwg.mxu0
  %v681 = vld [vmem:[#allocation2] sm:$0x7]
  %v683 = vsel %vm324, %v475, 0
  %v686 = vsel %vm324, %v476, 0
  %v689 = vsel %vm324, %v477, 0
  %v692 = vsel %vm324, %v478, 0
  %v695 = vsel %vm337, %v681, 0
  %697 = vmatprep.subr.bf16.mxu0 0
  %698 = vmatpush1.bf16.msra.mxu0 %v695
  %699 = vmatprep.subr.bf16.mxu0 0
  %700 = vmatpush1.bf16.msra.mxu0 0
  %701 = vmatprep.subr.bf16.mxu0 0
  %702 = vmatpush1.bf16.msra.mxu0 0
  %703 = vmatprep.subr.bf16.mxu0 0
  %704 = vmatpush1.bf16.msra.mxu0 0
  %705 = vmatprep.subr.bf16.mxu0 0
  %706 = vmatpush1.bf16.msra.mxu0 0
  %707 = vmatprep.subr.bf16.mxu0 0
  %708 = vmatpush1.bf16.msra.mxu0 0
  %709 = vmatprep.subr.bf16.mxu0 0
  %710 = vmatpush1.bf16.msra.mxu0 0
  %711 = vmatprep.subr.bf16.mxu0 0
  %712 = vmatpush1.bf16.msra.mxu0 0
  %713 = vmatprep.subr.bf16.mxu0 0
  %714 = vmatpush1.bf16.msra.mxu0 0
  %715 = vmatprep.subr.bf16.mxu0 0
  %716 = vmatpush1.bf16.msra.mxu0 0
  %717 = vmatprep.subr.bf16.mxu0 0
  %718 = vmatpush1.bf16.msra.mxu0 0
  %719 = vmatprep.subr.bf16.mxu0 0
  %720 = vmatpush1.bf16.msra.mxu0 0
  %721 = vmatprep.subr.bf16.mxu0 0
  %722 = vmatpush1.bf16.msra.mxu0 0
  %723 = vmatprep.subr.bf16.mxu0 0
  %724 = vmatpush1.bf16.msra.mxu0 0
  %725 = vmatprep.subr.bf16.mxu0 0
  %726 = vmatpush1.bf16.msra.mxu0 0
  %727 = vmatprep.subr.bf16.mxu0 0
  %728 = vmatpush1.bf16.msra.mxu0 0
  %729 = vmatprep.mubr.bf16.mxu0 0
  %730 = vmatmul.mubr.bf16.gmra.mrb[0].mxu0 %v683
  %v731 = vpop.f32.mrb[0].mxu0
  %v732 = vadd.f32 0.0, %v731
  %v733 = vpop.f32.mrb[0].mxu0
  %v734 = vpop.f32.mrb[0].mxu0
  %v735 = vadd.f32 0.0, %v734
  %v736 = vpop.f32.mrb[0].mxu0
  %737 = vmatprep.mubr.bf16.mxu0 0
  %738 = vmatmul.mubr.bf16.gmra.mrb[0].mxu0 %v686
  %v739 = vpop.f32.mrb[0].mxu0
  %v740 = vadd.f32 0.0, %v739
  %v741 = vpop.f32.mrb[0].mxu0
  %v742 = vpop.f32.mrb[0].mxu0
  %v743 = vadd.f32 0.0, %v742
  %v744 = vpop.f32.mrb[0].mxu0
  %745 = vmatprep.mubr.bf16.mxu0 0
  %746 = vmatmul.mubr.bf16.gmra.mrb[0].mxu0 %v689
  %v747 = vpop.f32.mrb[0].mxu0
  %v748 = vadd.f32 0.0, %v747
  %v749 = vpop.f32.mrb[0].mxu0
  %v750 = vpop.f32.mrb[0].mxu0
  %v751 = vadd.f32 0.0, %v750
  %v752 = vpop.f32.mrb[0].mxu0
  %753 = vmatprep.mubr.bf16.mxu0 0
  %754 = vmatmul.mubr.bf16.gmra.mrb[0].mxu0 %v692
  %v755 = vpop.f32.mrb[0].mxu0
  %v756 = vadd.f32 0.0, %v755
  %v757 = vpop.f32.mrb[0].mxu0
  %v758 = vpop.f32.mrb[0].mxu0
  %v759 = vadd.f32 0.0, %v758
  %v760 = vpop.f32.mrb[0].mxu0
  %761 = vdwg.mxu0
  %v762 = vld [vmem:[#allocation3] sm:$0x7]
  %v764 = vsel %vm337, %v762, 0
  %766 = vmatprep.subr.bf16.mxu0 0
  %767 = vmatpush1.bf16.msra.mxu0 %v764
  %768 = vmatprep.subr.bf16.mxu0 0
  %769 = vmatpush1.bf16.msra.mxu0 0
  %770 = vmatprep.subr.bf16.mxu0 0
  %771 = vmatpush1.bf16.msra.mxu0 0
  %772 = vmatprep.subr.bf16.mxu0 0
  %773 = vmatpush1.bf16.msra.mxu0 0
  %774 = vmatprep.subr.bf16.mxu0 0
  %775 = vmatpush1.bf16.msra.mxu0 0
  %776 = vmatprep.subr.bf16.mxu0 0
  %777 = vmatpush1.bf16.msra.mxu0 0
  %778 = vmatprep.subr.bf16.mxu0 0
  %779 = vmatpush1.bf16.msra.mxu0 0
  %780 = vmatprep.subr.bf16.mxu0 0
  %781 = vmatpush1.bf16.msra.mxu0 0
  %782 = vmatprep.subr.bf16.mxu0 0
  %783 = vmatpush1.bf16.msra.mxu0 0
  %784 = vmatprep.subr.bf16.mxu0 0
  %785 = vmatpush1.bf16.msra.mxu0 0
  %786 = vmatprep.subr.bf16.mxu0 0
  %787 = vmatpush1.bf16.msra.mxu0 0
  %788 = vmatprep.subr.bf16.mxu0 0
  %789 = vmatpush1.bf16.msra.mxu0 0
  %790 = vmatprep.subr.bf16.mxu0 0
  %791 = vmatpush1.bf16.msra.mxu0 0
  %792 = vmatprep.subr.bf16.mxu0 0
  %793 = vmatpush1.bf16.msra.mxu0 0
  %794 = vmatprep.subr.bf16.mxu0 0
  %795 = vmatpush1.bf16.msra.mxu0 0
  %796 = vmatprep.subr.bf16.mxu0 0
  %797 = vmatpush1.bf16.msra.mxu0 0
  %798 = vmatprep.mubr.bf16.mxu0 0
  %799 = vmatmul.mubr.bf16.gmra.mrb[0].mxu0 %v326
  %v800 = vpop.f32.mrb[0].mxu0
  %v801 = vadd.f32 %v643, %v800
  %v802 = vpop.f32.mrb[0].mxu0
  %v803 = vpop.f32.mrb[0].mxu0
  %v804 = vadd.f32 %v648, %v803
  %v805 = vpop.f32.mrb[0].mxu0
  %806 = vmatprep.mubr.bf16.mxu0 0
  %807 = vmatmul.mubr.bf16.gmra.mrb[0].mxu0 %v329
  %v808 = vpop.f32.mrb[0].mxu0
  %v809 = vadd.f32 %v653, %v808
  %v810 = vpop.f32.mrb[0].mxu0
  %v811 = vpop.f32.mrb[0].mxu0
  %v812 = vadd.f32 %v658, %v811
  %v813 = vpop.f32.mrb[0].mxu0
  %814 = vmatprep.mubr.bf16.mxu0 0
  %815 = vmatmul.mubr.bf16.gmra.mrb[0].mxu0 %v332
  %v816 = vpop.f32.mrb[0].mxu0
  %v817 = vadd.f32 %v663, %v816
  %v818 = vpop.f32.mrb[0].mxu0
  %v819 = vpop.f32.mrb[0].mxu0
  %v820 = vadd.f32 %v668, %v819
  %v821 = vpop.f32.mrb[0].mxu0
  %822 = vmatprep.mubr.bf16.mxu0 0
  %823 = vmatmul.mubr.bf16.gmra.mrb[0].mxu0 %v335
  %v824 = vpop.f32.mrb[0].mxu0
  %v825 = vadd.f32 %v673, %v824
  %v826 = vpop.f32.mrb[0].mxu0
  %v827 = vpop.f32.mrb[0].mxu0
  %v828 = vadd.f32 %v678, %v827
  %v829 = vpop.f32.mrb[0].mxu0
  %830 = vdwg.mxu0
  %v831 = vld [vmem:[#allocation4] sm:$0x7]
  %v833 = vsel %vm337, %v831, 0
  %835 = vmatprep.subr.bf16.mxu0 0
  %836 = vmatpush1.bf16.msra.mxu0 %v833
  %837 = vmatprep.subr.bf16.mxu0 0
  %838 = vmatpush1.bf16.msra.mxu0 0
  %839 = vmatprep.subr.bf16.mxu0 0
  %840 = vmatpush1.bf16.msra.mxu0 0
  %841 = vmatprep.subr.bf16.mxu0 0
  %842 = vmatpush1.bf16.msra.mxu0 0
  %843 = vmatprep.subr.bf16.mxu0 0
  %844 = vmatpush1.bf16.msra.mxu0 0
  %845 = vmatprep.subr.bf16.mxu0 0
  %846 = vmatpush1.bf16.msra.mxu0 0
  %847 = vmatprep.subr.bf16.mxu0 0
  %848 = vmatpush1.bf16.msra.mxu0 0
  %849 = vmatprep.subr.bf16.mxu0 0
  %850 = vmatpush1.bf16.msra.mxu0 0
  %851 = vmatprep.subr.bf16.mxu0 0
  %852 = vmatpush1.bf16.msra.mxu0 0
  %853 = vmatprep.subr.bf16.mxu0 0
  %854 = vmatpush1.bf16.msra.mxu0 0
  %855 = vmatprep.subr.bf16.mxu0 0
  %856 = vmatpush1.bf16.msra.mxu0 0
  %857 = vmatprep.subr.bf16.mxu0 0
  %858 = vmatpush1.bf16.msra.mxu0 0
  %859 = vmatprep.subr.bf16.mxu0 0
  %860 = vmatpush1.bf16.msra.mxu0 0
  %861 = vmatprep.subr.bf16.mxu0 0
  %862 = vmatpush1.bf16.msra.mxu0 0
  %863 = vmatprep.subr.bf16.mxu0 0
  %864 = vmatpush1.bf16.msra.mxu0 0
  %865 = vmatprep.subr.bf16.mxu0 0
  %866 = vmatpush1.bf16.msra.mxu0 0
  %867 = vmatprep.mubr.bf16.mxu0 0
  %868 = vmatmul.mubr.bf16.gmra.mrb[0].mxu0 %v326
  %v869 = vpop.f32.mrb[0].mxu0
  %v870 = vadd.f32 %v643, %v869
  %v871 = vpop.f32.mrb[0].mxu0
  %v872 = vpop.f32.mrb[0].mxu0
  %v873 = vadd.f32 %v648, %v872
  %v874 = vpop.f32.mrb[0].mxu0
  %875 = vmatprep.mubr.bf16.mxu0 0
  %876 = vmatmul.mubr.bf16.gmra.mrb[0].mxu0 %v329
  %v877 = vpop.f32.mrb[0].mxu0
  %v878 = vadd.f32 %v653, %v877
  %v879 = vpop.f32.mrb[0].mxu0
  %v880 = vpop.f32.mrb[0].mxu0
  %v881 = vadd.f32 %v658, %v880
  %v882 = vpop.f32.mrb[0].mxu0
  %883 = vmatprep.mubr.bf16.mxu0 0
  %884 = vmatmul.mubr.bf16.gmra.mrb[0].mxu0 %v332
  %v885 = vpop.f32.mrb[0].mxu0
  %v886 = vadd.f32 %v663, %v885
  %v887 = vpop.f32.mrb[0].mxu0
  %v888 = vpop.f32.mrb[0].mxu0
  %v889 = vadd.f32 %v668, %v888
  %v890 = vpop.f32.mrb[0].mxu0
  %891 = vmatprep.mubr.bf16.mxu0 0
  %892 = vmatmul.mubr.bf16.gmra.mrb[0].mxu0 %v335
  %v893 = vpop.f32.mrb[0].mxu0
  %v894 = vadd.f32 %v673, %v893
  %v895 = vpop.f32.mrb[0].mxu0
  %v896 = vpop.f32.mrb[0].mxu0
  %v897 = vadd.f32 %v678, %v896
  %v898 = vpop.f32.mrb[0].mxu0
  %899 = vdwg.mxu0
  %v900 = vmul.f32 %v732, %v801
  %v901 = vmul.f32 %v735, %v804
  %v902 = vmul.f32 %v740, %v809
  %v903 = vmul.f32 %v743, %v812
  %v904 = vmul.f32 %v748, %v817
  %v905 = vmul.f32 %v751, %v820
  %v906 = vmul.f32 %v756, %v825
  %v907 = vmul.f32 %v759, %v828
  %v909 = vsel %vm499, %v900, 0
  %v912 = vsel %vm499, %v901, 0
  %v915 = vsel %vm499, %v902, 0
  %v918 = vsel %vm499, %v903, 0
  %v921 = vsel %vm499, %v904, 0
  %v924 = vsel %vm499, %v905, 0
  %v927 = vsel %vm499, %v906, 0
  %v930 = vsel %vm499, %v907, 0
  %v933 = vsel %vm499, %v302, 0
  %935 = vmatprep.subr.mxu0 0.0
  %936 = vmatpush1.xpose.msra.mxu0 %v933
  %937 = vmatprep.subr.mxu0 0.0
  %938 = vmatpush1.xpose.msra.mxu0 0.0
  %939 = vmatprep.subr.mxu0 0.0
  %940 = vmatpush1.xpose.msra.mxu0 0.0
  %941 = vmatprep.subr.mxu0 0.0
  %942 = vmatpush1.xpose.msra.mxu0 0.0
  %943 = vmatprep.subr.mxu0 0.0
  %944 = vmatpush1.xpose.msra.mxu0 0.0
  %945 = vmatprep.subr.mxu0 0.0
  %946 = vmatpush1.xpose.msra.mxu0 0.0
  %947 = vmatprep.subr.mxu0 0.0
  %948 = vmatpush1.xpose.msra.mxu0 0.0
  %949 = vmatprep.subr.mxu0 0.0
  %950 = vmatpush1.xpose.msra.mxu0 0.0
  %951 = vmatprep.subr.mxu0 0.0
  %952 = vmatpush1.xpose.msra.mxu0 0.0
  %953 = vmatprep.subr.mxu0 0.0
  %954 = vmatpush1.xpose.msra.mxu0 0.0
  %955 = vmatprep.subr.mxu0 0.0
  %956 = vmatpush1.xpose.msra.mxu0 0.0
  %957 = vmatprep.subr.mxu0 0.0
  %958 = vmatpush1.xpose.msra.mxu0 0.0
  %959 = vmatprep.subr.mxu0 0.0
  %960 = vmatpush1.xpose.msra.mxu0 0.0
  %961 = vmatprep.subr.mxu0 0.0
  %962 = vmatpush1.xpose.msra.mxu0 0.0
  %963 = vmatprep.subr.mxu0 0.0
  %964 = vmatpush1.xpose.msra.mxu0 0.0
  %965 = vmatprep.subr.mxu0 0.0
  %966 = vmatpush1.xpose.msra.mxu0 0.0
  %967 = vmatprep.subr.mxu0 0.0
  %968 = vmatpush1.xpose.msra.mxu0 0.0
  %969 = vmatprep.subr.mxu0 0.0
  %970 = vmatpush1.xpose.msra.mxu0 0.0
  %971 = vmatprep.subr.mxu0 0.0
  %972 = vmatpush1.xpose.msra.mxu0 0.0
  %973 = vmatprep.subr.mxu0 0.0
  %974 = vmatpush1.xpose.msra.mxu0 0.0
  %975 = vmatprep.subr.mxu0 0.0
  %976 = vmatpush1.xpose.msra.mxu0 0.0
  %977 = vmatprep.subr.mxu0 0.0
  %978 = vmatpush1.xpose.msra.mxu0 0.0
  %979 = vmatprep.subr.mxu0 0.0
  %980 = vmatpush1.xpose.msra.mxu0 0.0
  %981 = vmatprep.subr.mxu0 0.0
  %982 = vmatpush1.xpose.msra.mxu0 0.0
  %983 = vmatprep.subr.mxu0 0.0
  %984 = vmatpush1.xpose.msra.mxu0 0.0
  %985 = vmatprep.subr.mxu0 0.0
  %986 = vmatpush1.xpose.msra.mxu0 0.0
  %987 = vmatprep.subr.mxu0 0.0
  %988 = vmatpush1.xpose.msra.mxu0 0.0
  %989 = vmatprep.subr.mxu0 0.0
  %990 = vmatpush1.xpose.msra.mxu0 0.0
  %991 = vmatprep.subr.mxu0 0.0
  %992 = vmatpush1.xpose.msra.mxu0 0.0
  %993 = vmatprep.subr.mxu0 0.0
  %994 = vmatpush1.xpose.msra.mxu0 0.0
  %995 = vmatprep.subr.mxu0 0.0
  %996 = vmatpush1.xpose.msra.mxu0 0.0
  %997 = vmatprep.subr.mxu0 0.0
  %998 = vmatpush1.xpose.msra.mxu0 0.0
  %999 = vmatprep.mubr.f32.mxu0 0.0
  %1000 = vmatmul.mubr.f32.gmra.mrb[0].mxu0 %v909
  %v1001 = vpop.f32.mrb[0].mxu0
  %v1002 = vadd.f32 0.0, %v1001
  %v1003 = vpop.f32.mrb[0].mxu0
  %1004 = vmatprep.mubr.f32.mxu0 0.0
  %1005 = vmatmul.mubr.f32.gmra.mrb[0].mxu0 %v912
  %v1006 = vpop.f32.mrb[0].mxu0
  %v1007 = vadd.f32 0.0, %v1006
  %v1008 = vpop.f32.mrb[0].mxu0
  %1009 = vmatprep.mubr.f32.mxu0 0.0
  %1010 = vmatmul.mubr.f32.gmra.mrb[0].mxu0 %v915
  %v1011 = vpop.f32.mrb[0].mxu0
  %v1012 = vadd.f32 0.0, %v1011
  %v1013 = vpop.f32.mrb[0].mxu0
  %1014 = vmatprep.mubr.f32.mxu0 0.0
  %1015 = vmatmul.mubr.f32.gmra.mrb[0].mxu0 %v918
  %v1016 = vpop.f32.mrb[0].mxu0
  %v1017 = vadd.f32 0.0, %v1016
  %v1018 = vpop.f32.mrb[0].mxu0
  %1019 = vmatprep.mubr.f32.mxu0 0.0
  %1020 = vmatmul.mubr.f32.gmra.mrb[0].mxu0 %v921
  %v1021 = vpop.f32.mrb[0].mxu0
  %v1022 = vadd.f32 0.0, %v1021
  %v1023 = vpop.f32.mrb[0].mxu0
  %1024 = vmatprep.mubr.f32.mxu0 0.0
  %1025 = vmatmul.mubr.f32.gmra.mrb[0].mxu0 %v924
  %v1026 = vpop.f32.mrb[0].mxu0
  %v1027 = vadd.f32 0.0, %v1026
  %v1028 = vpop.f32.mrb[0].mxu0
  %1029 = vmatprep.mubr.f32.mxu0 0.0
  %1030 = vmatmul.mubr.f32.gmra.mrb[0].mxu0 %v927
  %v1031 = vpop.f32.mrb[0].mxu0
  %v1032 = vadd.f32 0.0, %v1031
  %v1033 = vpop.f32.mrb[0].mxu0
  %1034 = vmatprep.mubr.f32.mxu0 0.0
  %1035 = vmatmul.mubr.f32.gmra.mrb[0].mxu0 %v930
  %v1036 = vpop.f32.mrb[0].mxu0
  %v1037 = vadd.f32 0.0, %v1036
  %v1038 = vpop.f32.mrb[0].mxu0
  %1039 = vdwg.mxu0
  %v1040 = vmul.f32 %v1002, 0.25
  %v1041 = vmul.f32 %v1007, 0.25
  %v1042 = vmul.f32 %v1012, 0.25
  %v1043 = vmul.f32 %v1017, 0.25
  %v1044 = vmul.f32 %v1022, 0.25
  %v1045 = vmul.f32 %v1027, 0.25
  %v1046 = vmul.f32 %v1032, 0.25
  %v1047 = vmul.f32 %v1037, 0.25
  %v1048 = vsub.f32 %v1040, %v294
  %v1049 = vsub.f32 %v1041, %v295
  %v1050 = vsub.f32 %v1042, %v296
  %v1051 = vsub.f32 %v1043, %v297
  %v1052 = vsub.f32 %v1044, %v298
  %v1053 = vsub.f32 %v1045, %v299
  %v1054 = vsub.f32 %v1046, %v300
  %v1055 = vsub.f32 %v1047, %v301
  %v1057 = vsel %vm547, %v1048, 0
  %v1060 = vsel %vm547, %v1049, 0
  %v1063 = vsel %vm547, %v1050, 0
  %v1066 = vsel %vm547, %v1051, 0
  %v1069 = vsel %vm547, %v1052, 0
  %v1072 = vsel %vm547, %v1053, 0
  %v1075 = vsel %vm547, %v1054, 0
  %v1078 = vsel %vm547, %v1055, 0
  %v1080 = vsel %vm572, %v302, 0
  %1082 = vmatprep.subr.mxu0 0.0
  %1083 = vmatpush1.msra.mxu0 %v1080
  %1084 = vmatprep.subr.mxu0 0.0
  %1085 = vmatpush1.msra.mxu0 0.0
  %1086 = vmatprep.subr.mxu0 0.0
  %1087 = vmatpush1.msra.mxu0 0.0
  %1088 = vmatprep.subr.mxu0 0.0
  %1089 = vmatpush1.msra.mxu0 0.0
  %1090 = vmatprep.subr.mxu0 0.0
  %1091 = vmatpush1.msra.mxu0 0.0
  %1092 = vmatprep.subr.mxu0 0.0
  %1093 = vmatpush1.msra.mxu0 0.0
  %1094 = vmatprep.subr.mxu0 0.0
  %1095 = vmatpush1.msra.mxu0 0.0
  %1096 = vmatprep.subr.mxu0 0.0
  %1097 = vmatpush1.msra.mxu0 0.0
  %1098 = vmatprep.subr.mxu0 0.0
  %1099 = vmatpush1.msra.mxu0 0.0
  %1100 = vmatprep.subr.mxu0 0.0
  %1101 = vmatpush1.msra.mxu0 0.0
  %1102 = vmatprep.subr.mxu0 0.0
  %1103 = vmatpush1.msra.mxu0 0.0
  %1104 = vmatprep.subr.mxu0 0.0
  %1105 = vmatpush1.msra.mxu0 0.0
  %1106 = vmatprep.subr.mxu0 0.0
  %1107 = vmatpush1.msra.mxu0 0.0
  %1108 = vmatprep.subr.mxu0 0.0
  %1109 = vmatpush1.msra.mxu0 0.0
  %1110 = vmatprep.subr.mxu0 0.0
  %1111 = vmatpush1.msra.mxu0 0.0
  %1112 = vmatprep.subr.mxu0 0.0
  %1113 = vmatpush1.msra.mxu0 0.0
  %1114 = vmatprep.subr.mxu0 0.0
  %1115 = vmatpush1.msra.mxu0 0.0
  %1116 = vmatprep.subr.mxu0 0.0
  %1117 = vmatpush1.msra.mxu0 0.0
  %1118 = vmatprep.subr.mxu0 0.0
  %1119 = vmatpush1.msra.mxu0 0.0
  %1120 = vmatprep.subr.mxu0 0.0
  %1121 = vmatpush1.msra.mxu0 0.0
  %1122 = vmatprep.subr.mxu0 0.0
  %1123 = vmatpush1.msra.mxu0 0.0
  %1124 = vmatprep.subr.mxu0 0.0
  %1125 = vmatpush1.msra.mxu0 0.0
  %1126 = vmatprep.subr.mxu0 0.0
  %1127 = vmatpush1.msra.mxu0 0.0
  %1128 = vmatprep.subr.mxu0 0.0
  %1129 = vmatpush1.msra.mxu0 0.0
  %1130 = vmatprep.subr.mxu0 0.0
  %1131 = vmatpush1.msra.mxu0 0.0
  %1132 = vmatprep.subr.mxu0 0.0
  %1133 = vmatpush1.msra.mxu0 0.0
  %1134 = vmatprep.subr.mxu0 0.0
  %1135 = vmatpush1.msra.mxu0 0.0
  %1136 = vmatprep.subr.mxu0 0.0
  %1137 = vmatpush1.msra.mxu0 0.0
  %1138 = vmatprep.subr.mxu0 0.0
  %1139 = vmatpush1.msra.mxu0 0.0
  %1140 = vmatprep.subr.mxu0 0.0
  %1141 = vmatpush1.msra.mxu0 0.0
  %1142 = vmatprep.subr.mxu0 0.0
  %1143 = vmatpush1.msra.mxu0 0.0
  %1144 = vmatprep.subr.mxu0 0.0
  %1145 = vmatpush1.msra.mxu0 0.0
  %1146 = vmatprep.mubr.f32.mxu0 0.0
  %1147 = vmatmul.mubr.f32.gmra.mrb[0].mxu0 %v1057
  %v1148 = vpop.f32.mrb[0].mxu0
  %v1149 = vadd.f32 0.0, %v1148
  %v1150 = vpop.f32.mrb[0].mxu0
  %1151 = vmatprep.mubr.f32.mxu0 0.0
  %1152 = vmatmul.mubr.f32.gmra.mrb[0].mxu0 %v1060
  %v1153 = vpop.f32.mrb[0].mxu0
  %v1154 = vadd.f32 0.0, %v1153
  %v1155 = vpop.f32.mrb[0].mxu0
  %1156 = vmatprep.mubr.f32.mxu0 0.0
  %1157 = vmatmul.mubr.f32.gmra.mrb[0].mxu0 %v1063
  %v1158 = vpop.f32.mrb[0].mxu0
  %v1159 = vadd.f32 0.0, %v1158
  %v1160 = vpop.f32.mrb[0].mxu0
  %1161 = vmatprep.mubr.f32.mxu0 0.0
  %1162 = vmatmul.mubr.f32.gmra.mrb[0].mxu0 %v1066
  %v1163 = vpop.f32.mrb[0].mxu0
  %v1164 = vadd.f32 0.0, %v1163
  %v1165 = vpop.f32.mrb[0].mxu0
  %1166 = vmatprep.mubr.f32.mxu0 0.0
  %1167 = vmatmul.mubr.f32.gmra.mrb[0].mxu0 %v1069
  %v1168 = vpop.f32.mrb[0].mxu0
  %v1169 = vadd.f32 0.0, %v1168
  %v1170 = vpop.f32.mrb[0].mxu0
  %1171 = vmatprep.mubr.f32.mxu0 0.0
  %1172 = vmatmul.mubr.f32.gmra.mrb[0].mxu0 %v1072
  %v1173 = vpop.f32.mrb[0].mxu0
  %v1174 = vadd.f32 0.0, %v1173
  %v1175 = vpop.f32.mrb[0].mxu0
  %1176 = vmatprep.mubr.f32.mxu0 0.0
  %1177 = vmatmul.mubr.f32.gmra.mrb[0].mxu0 %v1075
  %v1178 = vpop.f32.mrb[0].mxu0
  %v1179 = vadd.f32 0.0, %v1178
  %v1180 = vpop.f32.mrb[0].mxu0
  %1181 = vmatprep.mubr.f32.mxu0 0.0
  %1182 = vmatmul.mubr.f32.gmra.mrb[0].mxu0 %v1078
  %v1183 = vpop.f32.mrb[0].mxu0
  %v1184 = vadd.f32 0.0, %v1183
  %v1185 = vpop.f32.mrb[0].mxu0
  %1186 = vdwg.mxu0
  %v1187 = vmul.f32 %v1149, 1.442695
  %v1188 = vpow.pop %v1187
  %v1189 = vmul.f32 %v1154, 1.442695
  %v1190 = vpow.pop %v1189
  %v1191 = vmul.f32 %v1159, 1.442695
  %v1192 = vpow.pop %v1191
  %v1193 = vmul.f32 %v1164, 1.442695
  %v1194 = vpow.pop %v1193
  %v1195 = vmul.f32 %v1169, 1.442695
  %v1196 = vpow.pop %v1195
  %v1197 = vmul.f32 %v1174, 1.442695
  %v1198 = vpow.pop %v1197
  %v1199 = vmul.f32 %v1179, 1.442695
  %v1200 = vpow.pop %v1199
  %v1201 = vmul.f32 %v1184, 1.442695
  %v1202 = vpow.pop %v1201
  %v1203 = vld [vmem:[#allocation6] sm:$0x3f]
  %v1204 = vmul.f32 %v870, %v1188
  %v1205 = vmul.f32 %v873, %v1190
  %v1206 = vmul.f32 %v878, %v1192
  %v1207 = vmul.f32 %v881, %v1194
  %v1208 = vmul.f32 %v886, %v1196
  %v1209 = vmul.f32 %v889, %v1198
  %v1210 = vmul.f32 %v894, %v1200
  %v1211 = vmul.f32 %v897, %v1202
  %v1212 = vpack.c.bf16 %v1205, %v1204
  %v1213 = vpack.c.bf16 %v1207, %v1206
  %v1214 = vpack.c.bf16 %v1209, %v1208
  %v1215 = vpack.c.bf16 %v1211, %v1210
  %1216 = vmatprep.subr.bf16.mxu0 0
  %1217 = vmatpush1.bf16.msra.mxu0 %v1212
  %1218 = vmatprep.subr.bf16.mxu0 0
  %1219 = vmatpush1.bf16.msra.mxu0 %v1213
  %1220 = vmatprep.subr.bf16.mxu0 0
  %1221 = vmatpush1.bf16.msra.mxu0 %v1214
  %1222 = vmatprep.subr.bf16.mxu0 0
  %1223 = vmatpush1.bf16.msra.mxu0 %v1215
  %1224 = vmatprep.subr.bf16.mxu0 0
  %1225 = vmatpush1.bf16.msra.mxu0 0
  %1226 = vmatprep.subr.bf16.mxu0 0
  %1227 = vmatpush1.bf16.msra.mxu0 0
  %1228 = vmatprep.subr.bf16.mxu0 0
  %1229 = vmatpush1.bf16.msra.mxu0 0
  %1230 = vmatprep.subr.bf16.mxu0 0
  %1231 = vmatpush1.bf16.msra.mxu0 0
  %1232 = vmatprep.subr.bf16.mxu0 0
  %1233 = vmatpush1.bf16.msra.mxu0 0
  %1234 = vmatprep.subr.bf16.mxu0 0
  %1235 = vmatpush1.bf16.msra.mxu0 0
  %1236 = vmatprep.subr.bf16.mxu0 0
  %1237 = vmatpush1.bf16.msra.mxu0 0
  %1238 = vmatprep.subr.bf16.mxu0 0
  %1239 = vmatpush1.bf16.msra.mxu0 0
  %1240 = vmatprep.subr.bf16.mxu0 0
  %1241 = vmatpush1.bf16.msra.mxu0 0
  %1242 = vmatprep.subr.bf16.mxu0 0
  %1243 = vmatpush1.bf16.msra.mxu0 0
  %1244 = vmatprep.subr.bf16.mxu0 0
  %1245 = vmatpush1.bf16.msra.mxu0 0
  %1246 = vmatprep.subr.bf16.mxu0 0
  %1247 = vmatpush1.bf16.msra.mxu0 0
  %1248 = vmatprep.mubr.bf16.mxu0 0
  %1249 = vmatmul.mubr.bf16.gmra.mrb[0].mxu0 %v501
  %v1250 = vpop.f32.mrb[0].mxu0
  %v1251 = vadd.f32 0.0, %v1250
  %v1252 = vpop.f32.mrb[0].mxu0
  %v1253 = vpop.f32.mrb[0].mxu0
  %v1254 = vpop.f32.mrb[0].mxu0
  %1255 = vdwg.mxu0
  %v1256 = vadd.f32 %v1203, %v1251
  %1257 = vst.msk [vmem:[#allocation6] sm:$0x3f] %vm544, %v1256
  %v1258 = vld [vmem:[#allocation7] sm:$0x3f]
  %v1259 = vpack.c.bf16 %v1190, %v1188
  %v1260 = vpack.c.bf16 %v1194, %v1192
  %v1261 = vpack.c.bf16 %v1198, %v1196
  %v1262 = vpack.c.bf16 %v1202, %v1200
  %1263 = vmatprep.subr.bf16.mxu0 0
  %1264 = vmatpush1.bf16.msra.mxu0 %v1259
  %1265 = vmatprep.subr.bf16.mxu0 0
  %1266 = vmatpush1.bf16.msra.mxu0 %v1260
  %1267 = vmatprep.subr.bf16.mxu0 0
  %1268 = vmatpush1.bf16.msra.mxu0 %v1261
  %1269 = vmatprep.subr.bf16.mxu0 0
  %1270 = vmatpush1.bf16.msra.mxu0 %v1262
  %1271 = vmatprep.subr.bf16.mxu0 0
  %1272 = vmatpush1.bf16.msra.mxu0 0
  %1273 = vmatprep.subr.bf16.mxu0 0
  %1274 = vmatpush1.bf16.msra.mxu0 0
  %1275 = vmatprep.subr.bf16.mxu0 0
  %1276 = vmatpush1.bf16.msra.mxu0 0
  %1277 = vmatprep.subr.bf16.mxu0 0
  %1278 = vmatpush1.bf16.msra.mxu0 0
  %1279 = vmatprep.subr.bf16.mxu0 0
  %1280 = vmatpush1.bf16.msra.mxu0 0
  %1281 = vmatprep.subr.bf16.mxu0 0
  %1282 = vmatpush1.bf16.msra.mxu0 0
  %1283 = vmatprep.subr.bf16.mxu0 0
  %1284 = vmatpush1.bf16.msra.mxu0 0
  %1285 = vmatprep.subr.bf16.mxu0 0
  %1286 = vmatpush1.bf16.msra.mxu0 0
  %1287 = vmatprep.subr.bf16.mxu0 0
  %1288 = vmatpush1.bf16.msra.mxu0 0
  %1289 = vmatprep.subr.bf16.mxu0 0
  %1290 = vmatpush1.bf16.msra.mxu0 0
  %1291 = vmatprep.subr.bf16.mxu0 0
  %1292 = vmatpush1.bf16.msra.mxu0 0
  %1293 = vmatprep.subr.bf16.mxu0 0
  %1294 = vmatpush1.bf16.msra.mxu0 0
  %1295 = vmatprep.mubr.bf16.mxu0 0
  %1296 = vmatmul.mubr.bf16.gmra.mrb[0].mxu0 %v501
  %v1297 = vpop.f32.mrb[0].mxu0
  %v1298 = vadd.f32 0.0, %v1297
  %v1299 = vpop.f32.mrb[0].mxu0
  %v1300 = vpop.f32.mrb[0].mxu0
  %v1301 = vpop.f32.mrb[0].mxu0
  %1302 = vdwg.mxu0
  %v1303 = vadd.f32 %v1258, %v1298
  %1304 = vst.msk [vmem:[#allocation7] sm:$0x3f] %vm544, %v1303
  // Predicated region
  $region74: #{graph_encoder_forward.9} parent=0 // pred_check
    %p1305 = pneg %p57
  $region75: #{graph_encoder_forward.9} parent=0 // pred_check_branch
    %1307 = sbr.rel (%p1305) target = $region77
  $region76: #{graph_encoder_forward.9} parent=0 // pred_region
    %v1308 = vld [vmem:[#allocation6] sm:$0x3f]
    %v1309 = vld [vmem:[#allocation7] sm:$0x3f]
    %v1310 = vadd.f32 %v1309, 1e-20
    %v1311 = vrcp.pop %v1310
    %v1312 = vmul.f32 %v1308, %v1311
    %v1313 = vld [vmem:[#allocation8] sm:$0x3f]
    %v1314 = vadd.f32 %v1313, %v1312
    %v1315 = vld [vmem:[%s11] sm:$0xff]
    %v1316 = vld [vmem:[%s11 + $0x8] sm:$0xff]
    %v1317 = vld [vmem:[%s11 + $0x10] sm:$0xff]
    %v1318 = vld [vmem:[%s11 + $0x18] sm:$0xff]
    %v1319 = vld [vmem:[%s11 + $0x20] sm:$0xff]
    %v1320 = vld [vmem:[%s11 + $0x28] sm:$0xff]
    %v1321 = vld [vmem:[%s11 + $0x30] sm:$0xff]
    %v1322 = vld [vmem:[%s11 + $0x38] sm:$0xff]
    %v1323 = vld [vmem:[%s12] sm:$0x1]
    %v1325 = vlaneseq
    %v1326 = vshrl.u32 %v1325, 7
    %v1327 = vsub.s32 0, %v1326
    %v1328 = vrot.slane %v1323, %v1327
    %v1331 = vsel %vm499, %v1314, 0
    %1333 = vmatprep.subr.mxu0 0.0
    %1334 = vmatpush1.msra.mxu0 %v1315
    %1335 = vmatprep.subr.mxu0 0.0
    %1336 = vmatpush1.msra.mxu0 %v1316
    %1337 = vmatprep.subr.mxu0 0.0
    %1338 = vmatpush1.msra.mxu0 %v1317
    %1339 = vmatprep.subr.mxu0 0.0
    %1340 = vmatpush1.msra.mxu0 %v1318
    %1341 = vmatprep.subr.mxu0 0.0
    %1342 = vmatpush1.msra.mxu0 %v1319
    %1343 = vmatprep.subr.mxu0 0.0
    %1344 = vmatpush1.msra.mxu0 %v1320
    %1345 = vmatprep.subr.mxu0 0.0
    %1346 = vmatpush1.msra.mxu0 %v1321
    %1347 = vmatprep.subr.mxu0 0.0
    %1348 = vmatpush1.msra.mxu0 %v1322
    %1349 = vmatprep.subr.mxu0 0.0
    %1350 = vmatpush1.msra.mxu0 0.0
    %1351 = vmatprep.subr.mxu0 0.0
    %1352 = vmatpush1.msra.mxu0 0.0
    %1353 = vmatprep.subr.mxu0 0.0
    %1354 = vmatpush1.msra.mxu0 0.0
    %1355 = vmatprep.subr.mxu0 0.0
    %1356 = vmatpush1.msra.mxu0 0.0
    %1357 = vmatprep.subr.mxu0 0.0
    %1358 = vmatpush1.msra.mxu0 0.0
    %1359 = vmatprep.subr.mxu0 0.0
    %1360 = vmatpush1.msra.mxu0 0.0
    %1361 = vmatprep.subr.mxu0 0.0
    %1362 = vmatpush1.msra.mxu0 0.0
    %1363 = vmatprep.subr.mxu0 0.0
    %1364 = vmatpush1.msra.mxu0 0.0
    %1365 = vmatprep.subr.mxu0 0.0
    %1366 = vmatpush1.msra.mxu0 0.0
    %1367 = vmatprep.subr.mxu0 0.0
    %1368 = vmatpush1.msra.mxu0 0.0
    %1369 = vmatprep.subr.mxu0 0.0
    %1370 = vmatpush1.msra.mxu0 0.0
    %1371 = vmatprep.subr.mxu0 0.0
    %1372 = vmatpush1.msra.mxu0 0.0
    %1373 = vmatprep.subr.mxu0 0.0
    %1374 = vmatpush1.msra.mxu0 0.0
    %1375 = vmatprep.subr.mxu0 0.0
    %1376 = vmatpush1.msra.mxu0 0.0
    %1377 = vmatprep.subr.mxu0 0.0
    %1378 = vmatpush1.msra.mxu0 0.0
    %1379 = vmatprep.subr.mxu0 0.0
    %1380 = vmatpush1.msra.mxu0 0.0
    %1381 = vmatprep.subr.mxu0 0.0
    %1382 = vmatpush1.msra.mxu0 0.0
    %1383 = vmatprep.subr.mxu0 0.0
    %1384 = vmatpush1.msra.mxu0 0.0
    %1385 = vmatprep.subr.mxu0 0.0
    %1386 = vmatpush1.msra.mxu0 0.0
    %1387 = vmatprep.subr.mxu0 0.0
    %1388 = vmatpush1.msra.mxu0 0.0
    %1389 = vmatprep.subr.mxu0 0.0
    %1390 = vmatpush1.msra.mxu0 0.0
    %1391 = vmatprep.subr.mxu0 0.0
    %1392 = vmatpush1.msra.mxu0 0.0
    %1393 = vmatprep.subr.mxu0 0.0
    %1394 = vmatpush1.msra.mxu0 0.0
    %1395 = vmatprep.subr.mxu0 0.0
    %1396 = vmatpush1.msra.mxu0 0.0
    %1397 = vmatprep.mubr.f32.mxu0 0.0
    %1398 = vmatmul.mubr.f32.gmra.mrb[0].mxu0 %v1331
    %v1399 = vpop.f32.mrb[0].mxu0
    %v1400 = vadd.f32 %v1328, %v1399
    %v1401 = vpop.f32.mrb[0].mxu0
    %1402 = vdwg.mxu0
    %v1403 = vmax.f32 %v1400, 0.0
    %v1404 = vld [vmem:[%s15] sm:$0x1]
    %v1406 = vlaneseq
    %v1407 = vshrl.u32 %v1406, 7
    %v1408 = vsub.s32 0, %v1407
    %v1409 = vrot.slane %v1404, %v1408
    %v1411 = vsub.f32 %v1403, %v1409
    %v1412 = vld [vmem:[%s16] sm:$0x1]
    %v1413 = vadd.f32 %v1412, 1e-05
    %v1414 = vrsqrt.pop %v1413
    %v1416 = vlaneseq
    %v1417 = vshrl.u32 %v1416, 7
    %v1418 = vsub.s32 0, %v1417
    %v1419 = vrot.slane %v1414, %v1418
    %v1421 = vmul.f32 %v1411, %v1419
    %v1422 = vld [vmem:[%s13] sm:$0x1]
    %v1424 = vlaneseq
    %v1425 = vshrl.u32 %v1424, 7
    %v1426 = vsub.s32 0, %v1425
    %v1427 = vrot.slane %v1422, %v1426
    %v1429 = vmul.f32 %v1421, %v1427
    %v1430 = vld [vmem:[%s14] sm:$0x1]
    %v1432 = vlaneseq
    %v1433 = vshrl.u32 %v1432, 7
    %v1434 = vsub.s32 0, %v1433
    %v1435 = vrot.slane %v1430, %v1434
    %v1437 = vadd.f32 %v1429, %v1435
    %vm1438 = vcmask 128000
    %1439 = vst.msk [vmem:[%s17] sm:$0x3f] %vm1438, %v1437
  $region77: #{graph_encoder_forward.9} parent=0 // pred_fallthru
    _
  // Predicated region
  $region78: #{graph_encoder_forward.9} parent=0 // pred_check
    _
  $region79: #{graph_encoder_forward.9} parent=0 // pred_check_branch
    %1441 = sbr.rel (0) target = $region81
  $region80: #{graph_encoder_forward.9} parent=0 // pred_region
    _
  $region81: #{graph_encoder_forward.9} parent=0 // pred_fallthru
    _
  // Predicated region
  $region82: #{graph_encoder_forward.9} parent=0 // pred_check
    _
  $region83: #{graph_encoder_forward.9} parent=0 // pred_check_branch
    %1443 = sbr.rel (0) target = $region85
  $region84: #{graph_encoder_forward.9} parent=0 // pred_region
    _
  $region85: #{graph_encoder_forward.9} parent=0 // pred_fallthru
    _

</llo_original>
